<compile_context>
chip_gen: v7x
topology: tpu7x:2x2x1
jax: 0.10.0
libtpu: 0.0.40
codegen_flags: <defaults>
</compile_context>

<pallas_src>
import jax
import jax.numpy as jnp
from jax import lax
from jax.experimental import pallas as pl
from jax.experimental.pallas import tpu as pltpu

LN_EPS = 1e-5                      # PyTorch nn.LayerNorm default eps
GELU_APPROX = True                 # tanh GELU (EUP slot); False = exact erf (PyTorch default)
VMEM_LIMIT = 32 * 1024 * 1024      # safe scoped-VMEM budget on v5e / v6e / v7x


def _gelu(x):
    if GELU_APPROX:
        # tanh approximation -> EUP (separate, otherwise-idle VLIW slot); max abs error
        # vs the exact erf form is ~3e-4, well inside the bf16 comparison tolerance.
        return 0.5 * x * (1.0 + jnp.tanh(0.7978845608028654 * (x + 0.044715 * x * x * x)))
    return 0.5 * x * (1.0 + lax.erf(x * 0.7071067811865475))   # exact (PyTorch nn.GELU())


def _layernorm(x, gamma, beta):
    # One-pass statistics: E[x] and E[x*x] reduced together, var = E[x^2] - mu^2.
    mu = jnp.mean(x, axis=-1, keepdims=True)
    m2 = jnp.mean(x * x, axis=-1, keepdims=True)
    var = jnp.maximum(m2 - mu * mu, 0.0)
    return (x - mu) * lax.rsqrt(var + LN_EPS) * gamma + beta


# ---------------------------------------------------------------------------
# Fully fused kernel: patch-embed projection + L MixerBlocks + final LN/mean/head.
# One grid step = BB batch elements; the (BB*N, D) residual stream lives in x_ref (VMEM).
# ---------------------------------------------------------------------------
def _make_fused_kernel(*, N, D, BB, L, CH, n_chunks):
    def kernel(xp_ref,                      # (BB*N, KP) f32   patch pixels, this batch group
               cw_ref, cb_ref,              # (KP, D) bf16, (1, D) f32
               g1_ref, b1_ref,              # (L, 1, D) f32                       LayerNorm1
               wt1t_ref, bt1_ref,           # (L, T, N) bf16, (L, T, 1) f32       token MLP 1 (W^T)
               wt2t_ref, bt2_ref,           # (L, N, T) bf16, (L, N, 1) f32       token MLP 2 (W^T)
               g2_ref, b2_ref,              # (L, 1, D) f32                       LayerNorm2
               wc1_ref, bc1_ref,            # (L, D, C) bf16, (L, 1, C) f32       channel MLP 1
               wc2_ref, bc2_ref,            # (L, C, D) bf16, (L, 1, D) f32       channel MLP 2
               ng_ref, nb_ref,              # (1, D) f32                          final LayerNorm
               hw_ref, hb_ref,              # (D, NCP) f32, (1, NCP) f32          head (lane-padded)
               o_ref,                       # (1, BB, NCP) f32                    logits out
               x_ref):                      # VMEM scratch (BB*N, D) f32: residual stream

        # ---- patch-embed projection (Conv2d k=s=P == flatten + Linear), chunked -------
        cw = cw_ref[...]
        cb = cb_ref[...]

        def pe_body(c, carry):
            r0 = pl.multiple_of(c * CH, CH)
            xp_c = xp_ref[pl.ds(r0, CH), :].astype(jnp.bfloat16)
            x_ref[pl.ds(r0, CH), :] = (
                jnp.dot(xp_c, cw, preferred_element_type=jnp.float32) + cb)
            return carry
        lax.fori_loop(0, n_chunks, pe_body, 0, unroll=True)

        # ---- all L MixerBlocks; activations never leave VMEM --------------------------
        for l in range(L):
            # token-mixing MLP: transpose-free (pre-transposed weights) + lane-wide merge.
            g1 = g1_ref[l]
            b1 = b1_ref[l]
            cols = []
            for b in range(BB):                               # LN1 per batch slice
                xb = x_ref[b * N:(b + 1) * N, :]              # (N, D) f32
                cols.append(_layernorm(xb, g1, b1).astype(jnp.bfloat16))
            xn_wide = jnp.concatenate(cols, axis=1)           # (N, BB*D) bf16

            hT = jnp.dot(wt1t_ref[l], xn_wide,
                         preferred_element_type=jnp.float32) + bt1_ref[l]      # (T, BB*D)
            hT = _gelu(hT).astype(jnp.bfloat16)
            tok = jnp.dot(wt2t_ref[l], hT,
                          preferred_element_type=jnp.float32) + bt2_ref[l]     # (N, BB*D)

            # residual (TinyAttention head == 0 for tn_attn=False)
            for b in range(BB):
                x_ref[b * N:(b + 1) * N, :] = (
                    x_ref[b * N:(b + 1) * N, :] + tok[:, b * D:(b + 1) * D])

            # channel-mixing MLP, tiled over CH-row chunks (bounded live f32 -> no spills).
            g2 = g2_ref[l]
            b2 = b2_ref[l]

            def ch_body(c, carry):
                r0 = pl.multiple_of(c * CH, CH)
                xc = x_ref[pl.ds(r0, CH), :]                  # (CH, D) f32
                xn2 = _layernorm(xc, g2, b2).astype(jnp.bfloat16)
                h = jnp.dot(xn2, wc1_ref[l],
                            preferred_element_type=jnp.float32) + bc1_ref[l]   # (CH, C)
                h = _gelu(h).astype(jnp.bfloat16)
                ch = jnp.dot(h, wc2_ref[l],
                             preferred_element_type=jnp.float32) + bc2_ref[l]  # (CH, D)
                x_ref[pl.ds(r0, CH), :] = ch + xc
                return carry
            lax.fori_loop(0, n_chunks, ch_body, 0, unroll=True)

        # ---- final LayerNorm + token-mean + classifier head (lane-dense output) -------
        ng = ng_ref[...]
        nb = nb_ref[...]
        rows = []
        for b in range(BB):
            xb = x_ref[b * N:(b + 1) * N, :]
            rows.append(jnp.mean(_layernorm(xb, ng, nb), axis=0, keepdims=True))   # (1, D)
        xm = jnp.concatenate(rows, axis=0)                    # (BB, D) f32
        logits = jnp.dot(xm, hw_ref[...],
                         preferred_element_type=jnp.float32) + hb_ref[...]
        o_ref[0] = logits.astype(o_ref.dtype)

    return kernel


# ---------------------------------------------------------------------------
# Full forward: host-side layout / bf16 weight prep + one fused pallas_call.
# ---------------------------------------------------------------------------
def mlp_mixer_forward(x_img, params, cfg):
    assert not cfg.get("tn_attn", False), "tn_attn=True (TinyAttention) is not implemented"
    # TODO(synk): tn_attn=True (TinyAttention head term) not implemented; module default
    #             is tn_attn=False so head == 0.

    P = cfg["patch"]
    B, Cin, H, W = x_img.shape
    nh, nw = H // P, W // P
    N = nh * nw
    D = cfg["hidden"]
    T = cfg["tokens_mlp_dim"]
    C = cfg["channels_mlp_dim"]
    L = cfg["num_blocks"]
    NC = cfg["num_classes"]
    assert N == cfg["num_patches"]
    # Alignment assumptions used by the in-kernel slicing (sublane / lane alignment).
    assert D % 128 == 0 and C % 128 == 0 and N % 8 == 0 and T % 8 == 0

    # BB batch elements per grid step; keep >= 2 grid steps so both v7x TCs get work
    # (on single-TC v5e/v6e the extra step is ~0.35us — negligible).
    BB = min(cfg.get("block_batch") or max(B // 2, 1), B)
    assert B % BB == 0
    G = B // BB
    MB = BB * N
    CH = min(128, MB)                      # channel-path / patch-embed row chunk
    assert MB % CH == 0 and CH % 8 == 0
    n_chunks = MB // CH

    K = Cin * P * P
    KP = 128 * pl.cdiv(K, 128)             # lane-pad conv K (3*P*P) -> dense loads
    NCP = 128 * pl.cdiv(NC, 128)           # lane-pad classifier output -> dense stores

    # ---- host-side (XLA) layout & bf16 weight prep; fused/hoisted under jit ----------
    xp = x_img.reshape(B, Cin, nh, P, nw, P).transpose(0, 2, 4, 1, 3, 5).reshape(B * N, K)
    xp = jnp.pad(xp, ((0, 0), (0, KP - K)))
    cw = jnp.pad(params["conv_w"], ((0, KP - K), (0, 0))).astype(jnp.bfloat16)
    cb = params["conv_b"]

    blocks = params["blocks"]
    stk = lambda nm: jnp.stack([blk[nm] for blk in blocks])
    g1, b1, g2, b2 = stk("g1"), stk("b1"), stk("g2"), stk("b2")                 # (L, 1, D)
    wt1t = jnp.stack([blk["wt1"].T for blk in blocks]).astype(jnp.bfloat16)     # (L, T, N)
    wt2t = jnp.stack([blk["wt2"].T for blk in blocks]).astype(jnp.bfloat16)     # (L, N, T)
    bt1 = jnp.stack([blk["bt1"].reshape(T, 1) for blk in blocks])               # (L, T, 1)
    bt2 = jnp.stack([blk["bt2"].reshape(N, 1) for blk in blocks])               # (L, N, 1)
    wc1 = stk("wc1").astype(jnp.bfloat16)                                       # (L, D, C)
    bc1 = stk("bc1")                                                            # (L, 1, C)
    wc2 = stk("wc2").astype(jnp.bfloat16)                                       # (L, C, D)
    bc2 = stk("bc2")                                                            # (L, 1, D)
    hw = jnp.pad(params["head_w"], ((0, 0), (0, NCP - NC)))                     # (D, NCP) f32
    hb = jnp.pad(params["head_b"], ((0, 0), (0, NCP - NC)))                     # (1, NCP) f32

    def rep(shape):                        # replicated operand (not tiled over the grid)
        return pl.BlockSpec(shape, lambda i: (0,) * len(shape))

    flops = 2 * B * N * KP * D + 4 * L * B * N * D * (T + C) + 2 * B * D * NCP
    transcendentals = L * B * (D * T + N * C)
    w_bytes = (2 * (KP * D + L * (2 * T * N + 2 * D * C))
               + 4 * L * (T + N + C + 5 * D) + 4 * (D * NCP + NCP + 3 * D))
    bytes_accessed = 4 * B * N * KP + w_bytes + 4 * B * NCP
    cost = pl.CostEstimate(flops=int(flops), transcendentals=int(transcendentals),
                           bytes_accessed=int(bytes_accessed))

    out = pl.pallas_call(
        _make_fused_kernel(N=N, D=D, BB=BB, L=L, CH=CH, n_chunks=n_chunks),
        out_shape=jax.ShapeDtypeStruct((G, BB, NCP), jnp.float32),
        grid_spec=pltpu.PrefetchScalarGridSpec(
            num_scalar_prefetch=0,
            grid=(G,),
            in_specs=[
                pl.BlockSpec((MB, KP), lambda i: (i, 0)),      # patch pixels, tiled over batch
                rep((KP, D)), rep((1, D)),                     # conv (patch embed)
                rep((L, 1, D)), rep((L, 1, D)),                # norm1 gamma/beta
                rep((L, T, N)), rep((L, T, 1)),                # token MLP 1 (pre-transposed, bf16)
                rep((L, N, T)), rep((L, N, 1)),                # token MLP 2 (pre-transposed, bf16)
                rep((L, 1, D)), rep((L, 1, D)),                # norm2 gamma/beta
                rep((L, D, C)), rep((L, 1, C)),                # channel MLP 1 (bf16)
                rep((L, C, D)), rep((L, 1, D)),                # channel MLP 2 (bf16)
                rep((1, D)), rep((1, D)),                      # final norm gamma/beta
                rep((D, NCP)), rep((1, NCP)),                  # head (lane-padded)
            ],
            out_specs=pl.BlockSpec((1, BB, NCP), lambda i: (i, 0, 0)),
            scratch_shapes=[pltpu.VMEM((MB, D), jnp.float32)],
        ),
        compiler_params=pltpu.CompilerParams(
            dimension_semantics=("parallel",),
            vmem_limit_bytes=VMEM_LIMIT),
        cost_estimate=cost,
    )(xp, cw, cb,
      g1, b1, wt1t, bt1, wt2t, bt2, g2, b2, wc1, bc1, wc2, bc2,
      params["norm_g"], params["norm_b"], hw, hb)

    return out.reshape(B, NCP)[:, :NC]


# ---------------------------------------------------------------------------
# Parameters & pure-JAX reference.
# ---------------------------------------------------------------------------
def init_params(key, cfg):
    """Deterministic synthetic parameters. Dense weights stored (in, out) for y = x @ W + b."""
    D, N = cfg["hidden"], cfg["num_patches"]
    T, C = cfg["tokens_mlp_dim"], cfg["channels_mlp_dim"]
    K = 3 * cfg["patch"] * cfg["patch"]
    NC = cfg["num_classes"]
    keys = iter(jax.random.split(key, 4 + 8 * cfg["num_blocks"]))
    s = 0.05

    def rnd(shape):
        return s * jax.random.normal(next(keys), shape, jnp.float32)

    blocks = []
    for _ in range(cfg["num_blocks"]):
        blocks.append({
            "g1": jnp.ones((1, D), jnp.float32), "b1": jnp.zeros((1, D), jnp.float32),
            "g2": jnp.ones((1, D), jnp.float32), "b2": jnp.zeros((1, D), jnp.float32),
            "wt1": rnd((N, T)), "bt1": rnd((1, T)),
            "wt2": rnd((T, N)), "bt2": rnd((1, N)),
            "wc1": rnd((D, C)), "bc1": rnd((1, C)),
            "wc2": rnd((C, D)), "bc2": rnd((1, D)),
        })
    return {
        "conv_w": rnd((K, D)), "conv_b": rnd((1, D)),
        "blocks": blocks,
        "norm_g": jnp.ones((1, D), jnp.float32), "norm_b": jnp.zeros((1, D), jnp.float32),
        "head_w": rnd((D, NC)), "head_b": rnd((1, NC)),
    }


def mlp_mixer_reference(x_img, params, cfg):
    """Pure-JAX f32 reference mirroring the PyTorch MlpMixer forward (tn_attn=False)."""
    P = cfg["patch"]
    B, C, H, W = x_img.shape
    nh, nw = H // P, W // P
    N = nh * nw
    xp = x_img.reshape(B, C, nh, P, nw, P).transpose(0, 2, 4, 1, 3, 5).reshape(B, N, C * P * P)
    x = xp @ params["conv_w"] + params["conv_b"]           # conv(k=s=P) + 'n c h w -> n (h w) c'

    def ln(v, g, b):
        mu = v.mean(-1, keepdims=True)
        var = ((v - mu) ** 2).mean(-1, keepdims=True)
        return (v - mu) / jnp.sqrt(var + LN_EPS) * g + b

    for blk in params["blocks"]:
        out = ln(x, blk["g1"], blk["b1"])
        t = jnp.swapaxes(out, 1, 2)                        # b n d -> b d n
        t = jax.nn.gelu(t @ blk["wt1"] + blk["bt1"], approximate=False)
        t = t @ blk["wt2"] + blk["bt2"]
        out = jnp.swapaxes(t, 1, 2)                        # b d n -> b n d
        x2 = out + x                                       # head == 0
        out = ln(x2, blk["g2"], blk["b2"])
        out = jax.nn.gelu(out @ blk["wc1"] + blk["bc1"], approximate=False)
        out = out @ blk["wc2"] + blk["bc2"]
        x = out + x2
    x = ln(x, params["norm_g"], params["norm_b"])
    x = x.mean(axis=1)
    return x @ params["head_w"] + params["head_b"]


if __name__ == "__main__":
    cfg = dict(
        patch=4, hidden=128, num_patches=64,       # 32x32 image, 4x4 patches -> 64 tokens
        tokens_mlp_dim=128, channels_mlp_dim=256,
        num_blocks=2, num_classes=10,
        block_batch=4,                             # batch elements per grid step (grid=2)
    )
    B, H = 8, 32

    key = jax.random.PRNGKey(0)
    kx, kp = jax.random.split(key)
    x_img = jax.random.normal(kx, (B, 3, H, H), jnp.float32)
    params = init_params(kp, cfg)

    fwd = jax.jit(lambda xi, p: mlp_mixer_forward(xi, p, cfg))
    out = jax.block_until_ready(fwd(x_img, params))

    ref = mlp_mixer_reference(x_img, params, cfg)
    assert out.shape == (B, cfg["num_classes"])
    max_err = float(jnp.max(jnp.abs(out - ref)))
    # bf16 matmul operands (f32 accumulation) + tanh-GELU -> relaxed tolerance vs f32/erf ref.
    assert jnp.allclose(out, ref, atol=2e-2, rtol=2e-2), f"max abs err {max_err}"
    print("KERNEL_OK")
</pallas_src>

<mosaic_0001>
module attributes {stable_mosaic.version = 11 : i64} {
  func.func @kernel(%arg0: i32, %arg1: memref<256x128xf32, #tpu.memory_space<vmem>>, %arg2: memref<128x128xbf16, #tpu.memory_space<vmem>>, %arg3: memref<1x128xf32, #tpu.memory_space<vmem>>, %arg4: memref<2x1x128xf32, #tpu.memory_space<vmem>>, %arg5: memref<2x1x128xf32, #tpu.memory_space<vmem>>, %arg6: memref<2x128x64xbf16, #tpu.memory_space<vmem>>, %arg7: memref<2x128x1xf32, #tpu.memory_space<vmem>>, %arg8: memref<2x64x128xbf16, #tpu.memory_space<vmem>>, %arg9: memref<2x64x1xf32, #tpu.memory_space<vmem>>, %arg10: memref<2x1x128xf32, #tpu.memory_space<vmem>>, %arg11: memref<2x1x128xf32, #tpu.memory_space<vmem>>, %arg12: memref<2x128x256xbf16, #tpu.memory_space<vmem>>, %arg13: memref<2x1x256xf32, #tpu.memory_space<vmem>>, %arg14: memref<2x256x128xbf16, #tpu.memory_space<vmem>>, %arg15: memref<2x1x128xf32, #tpu.memory_space<vmem>>, %arg16: memref<1x128xf32, #tpu.memory_space<vmem>>, %arg17: memref<1x128xf32, #tpu.memory_space<vmem>>, %arg18: memref<128x128xf32, #tpu.memory_space<vmem>>, %arg19: memref<1x128xf32, #tpu.memory_space<vmem>>, %arg20: memref<1x4x128xf32, #tpu.memory_space<vmem>>, %arg21: memref<256x128xf32, #tpu.memory_space<vmem>>) attributes {dimension_semantics = [#tpu.dimension_semantics<parallel>], iteration_bounds = array<i64: 2>, scalar_prefetch = 0 : i64, scratch_operands = 1 : i64, tpu.core_type = #tpu.core_type<tc>, window_params = [{transform_indices = @transform_0, window_bounds = array<i64: 256, 128>}, {pipeline_mode = #tpu.pipeline_mode<synchronous>, transform_indices = @transform_1, window_bounds = array<i64: 128, 128>}, {pipeline_mode = #tpu.pipeline_mode<synchronous>, transform_indices = @transform_2, window_bounds = array<i64: 1, 128>}, {pipeline_mode = #tpu.pipeline_mode<synchronous>, transform_indices = @transform_3, window_bounds = array<i64: 2, 1, 128>}, {pipeline_mode = #tpu.pipeline_mode<synchronous>, transform_indices = @transform_4, window_bounds = array<i64: 2, 1, 128>}, {pipeline_mode = #tpu.pipeline_mode<synchronous>, transform_indices = @transform_5, window_bounds = array<i64: 2, 128, 64>}, {pipeline_mode = #tpu.pipeline_mode<synchronous>, transform_indices = @transform_6, window_bounds = array<i64: 2, 128, 1>}, {pipeline_mode = #tpu.pipeline_mode<synchronous>, transform_indices = @transform_7, window_bounds = array<i64: 2, 64, 128>}, {pipeline_mode = #tpu.pipeline_mode<synchronous>, transform_indices = @transform_8, window_bounds = array<i64: 2, 64, 1>}, {pipeline_mode = #tpu.pipeline_mode<synchronous>, transform_indices = @transform_9, window_bounds = array<i64: 2, 1, 128>}, {pipeline_mode = #tpu.pipeline_mode<synchronous>, transform_indices = @transform_10, window_bounds = array<i64: 2, 1, 128>}, {pipeline_mode = #tpu.pipeline_mode<synchronous>, transform_indices = @transform_11, window_bounds = array<i64: 2, 128, 256>}, {pipeline_mode = #tpu.pipeline_mode<synchronous>, transform_indices = @transform_12, window_bounds = array<i64: 2, 1, 256>}, {pipeline_mode = #tpu.pipeline_mode<synchronous>, transform_indices = @transform_13, window_bounds = array<i64: 2, 256, 128>}, {pipeline_mode = #tpu.pipeline_mode<synchronous>, transform_indices = @transform_14, window_bounds = array<i64: 2, 1, 128>}, {pipeline_mode = #tpu.pipeline_mode<synchronous>, transform_indices = @transform_15, window_bounds = array<i64: 1, 128>}, {pipeline_mode = #tpu.pipeline_mode<synchronous>, transform_indices = @transform_16, window_bounds = array<i64: 1, 128>}, {pipeline_mode = #tpu.pipeline_mode<synchronous>, transform_indices = @transform_17, window_bounds = array<i64: 128, 128>}, {pipeline_mode = #tpu.pipeline_mode<synchronous>, transform_indices = @transform_18, window_bounds = array<i64: 1, 128>}, {transform_indices = @transform_19, window_bounds = array<i64: 1, 4, 128>}]} {
    %c0 = arith.constant 0 : index
    %c0_0 = arith.constant 0 : index
    %0 = vector.load %arg2[%c0, %c0_0] : memref<128x128xbf16, #tpu.memory_space<vmem>>, vector<128x128xbf16>
    %c0_1 = arith.constant 0 : index
    %c0_2 = arith.constant 0 : index
    %1 = vector.load %arg3[%c0_1, %c0_2] : memref<1x128xf32, #tpu.memory_space<vmem>>, vector<1x128xf32>
    %c0_i32 = arith.constant 0 : i32
    %c128_i32 = arith.constant 128 : i32
    %2 = arith.muli %c0_i32, %c128_i32 : i32
    %3 = tpu.assume_multiple %2, 128 : i32
    %4 = arith.index_cast %3 : i32 to index
    %c0_3 = arith.constant 0 : index
    %5 = vector.load %arg1[%4, %c0_3] : memref<256x128xf32, #tpu.memory_space<vmem>>, vector<128x128xf32>
    %6 = arith.truncf %5 : vector<128x128xf32> to vector<128x128xbf16>
    %cst = arith.constant dense<0.000000e+00> : vector<128x128xf32>
    %7 = tpu.matmul %6, %0, %cst {dimension_numbers = #tpu.dot_dimension_numbers<[1], [0], [0], [1], [0, 0, 1, 1], [], []>} : vector<128x128xbf16>, vector<128x128xbf16>, vector<128x128xf32> -> vector<128x128xf32>
    %8 = vector.broadcast %1 : vector<1x128xf32> to vector<128x128xf32>
    %9 = arith.addf %7, %8 : vector<128x128xf32>
    %10 = arith.index_cast %3 : i32 to index
    %c0_4 = arith.constant 0 : index
    %11 = vector.load %arg21[%10, %c0_4] : memref<256x128xf32, #tpu.memory_space<vmem>>, vector<128x128xf32>
    tpu.vector_store %arg21[%10, %c0_4], %9 {strides = array<i32>} : memref<256x128xf32, #tpu.memory_space<vmem>>, vector<128x128xf32>,
    %c1_i32 = arith.constant 1 : i32
    %c128_i32_5 = arith.constant 128 : i32
    %12 = arith.muli %c1_i32, %c128_i32_5 : i32
    %13 = tpu.assume_multiple %12, 128 : i32
    %14 = arith.index_cast %13 : i32 to index
    %c0_6 = arith.constant 0 : index
    %15 = vector.load %arg1[%14, %c0_6] : memref<256x128xf32, #tpu.memory_space<vmem>>, vector<128x128xf32>
    %16 = arith.truncf %15 : vector<128x128xf32> to vector<128x128xbf16>
    %cst_7 = arith.constant dense<0.000000e+00> : vector<128x128xf32>
    %17 = tpu.matmul %16, %0, %cst_7 {dimension_numbers = #tpu.dot_dimension_numbers<[1], [0], [0], [1], [0, 0, 1, 1], [], []>} : vector<128x128xbf16>, vector<128x128xbf16>, vector<128x128xf32> -> vector<128x128xf32>
    %18 = vector.broadcast %1 : vector<1x128xf32> to vector<128x128xf32>
    %19 = arith.addf %17, %18 : vector<128x128xf32>
    %20 = arith.index_cast %13 : i32 to index
    %c0_8 = arith.constant 0 : index
    %21 = vector.load %arg21[%20, %c0_8] : memref<256x128xf32, #tpu.memory_space<vmem>>, vector<128x128xf32>
    tpu.vector_store %arg21[%20, %c0_8], %19 {strides = array<i32>} : memref<256x128xf32, #tpu.memory_space<vmem>>, vector<128x128xf32>,
    %c2_i32 = arith.constant 2 : i32
    %c0_9 = arith.constant 0 : index
    %c0_10 = arith.constant 0 : index
    %c0_11 = arith.constant 0 : index
    %22 = vector.load %arg4[%c0_9, %c0_10, %c0_11] : memref<2x1x128xf32, #tpu.memory_space<vmem>>, vector<1x1x128xf32>
    %23 = vector.shape_cast %22 : vector<1x1x128xf32> to vector<1x128xf32>
    %c0_12 = arith.constant 0 : index
    %c0_13 = arith.constant 0 : index
    %c0_14 = arith.constant 0 : index
    %24 = vector.load %arg5[%c0_12, %c0_13, %c0_14] : memref<2x1x128xf32, #tpu.memory_space<vmem>>, vector<1x1x128xf32>
    %25 = vector.shape_cast %24 : vector<1x1x128xf32> to vector<1x128xf32>
    %c0_15 = arith.constant 0 : index
    %c0_16 = arith.constant 0 : index
    %26 = vector.load %arg21[%c0_15, %c0_16] : memref<256x128xf32, #tpu.memory_space<vmem>>, vector<64x128xf32>
    %cst_17 = arith.constant dense<0.000000e+00> : vector<64xf32>
    %27 = vector.multi_reduction <add>, %26, %cst_17 [1] : vector<64x128xf32> to vector<64xf32>
    %28 = vector.shape_cast %27 : vector<64xf32> to vector<64x1xf32>
    %cst_18 = arith.constant 1.280000e+02 : f32
    %29 = vector.broadcast %cst_18 : f32 to vector<64x1xf32>
    %30 = arith.divf %28, %29 : vector<64x1xf32>
    %31 = arith.mulf %26, %26 : vector<64x128xf32>
    %cst_19 = arith.constant dense<0.000000e+00> : vector<64xf32>
    %32 = vector.multi_reduction <add>, %31, %cst_19 [1] : vector<64x128xf32> to vector<64xf32>
    %33 = vector.shape_cast %32 : vector<64xf32> to vector<64x1xf32>
    %cst_20 = arith.constant 1.280000e+02 : f32
    %34 = vector.broadcast %cst_20 : f32 to vector<64x1xf32>
    %35 = arith.divf %33, %34 : vector<64x1xf32>
    %36 = arith.mulf %30, %30 : vector<64x1xf32>
    %37 = arith.subf %35, %36 : vector<64x1xf32>
    %cst_21 = arith.constant 0.000000e+00 : f32
    %38 = vector.broadcast %cst_21 : f32 to vector<64x1xf32>
    %39 = arith.maximumf %37, %38 : vector<64x1xf32>
    %40 = vector.broadcast %30 : vector<64x1xf32> to vector<64x128xf32>
    %41 = arith.subf %26, %40 : vector<64x128xf32>
    %cst_22 = arith.constant 9.99999974E-6 : f32
    %42 = vector.broadcast %cst_22 : f32 to vector<64x1xf32>
    %43 = arith.addf %39, %42 : vector<64x1xf32>
    %44 = math.rsqrt %43 : vector<64x1xf32>
    %45 = vector.broadcast %44 : vector<64x1xf32> to vector<64x128xf32>
    %46 = arith.mulf %41, %45 : vector<64x128xf32>
    %47 = vector.broadcast %23 : vector<1x128xf32> to vector<64x128xf32>
    %48 = arith.mulf %46, %47 : vector<64x128xf32>
    %49 = vector.broadcast %25 : vector<1x128xf32> to vector<64x128xf32>
    %50 = arith.addf %48, %49 : vector<64x128xf32>
    %51 = arith.truncf %50 : vector<64x128xf32> to vector<64x128xbf16>
    %c64 = arith.constant 64 : index
    %c0_23 = arith.constant 0 : index
    %52 = vector.load %arg21[%c64, %c0_23] : memref<256x128xf32, #tpu.memory_space<vmem>>, vector<64x128xf32>
    %cst_24 = arith.constant dense<0.000000e+00> : vector<64xf32>
    %53 = vector.multi_reduction <add>, %52, %cst_24 [1] : vector<64x128xf32> to vector<64xf32>
    %54 = vector.shape_cast %53 : vector<64xf32> to vector<64x1xf32>
    %cst_25 = arith.constant 1.280000e+02 : f32
    %55 = vector.broadcast %cst_25 : f32 to vector<64x1xf32>
    %56 = arith.divf %54, %55 : vector<64x1xf32>
    %57 = arith.mulf %52, %52 : vector<64x128xf32>
    %cst_26 = arith.constant dense<0.000000e+00> : vector<64xf32>
    %58 = vector.multi_reduction <add>, %57, %cst_26 [1] : vector<64x128xf32> to vector<64xf32>
    %59 = vector.shape_cast %58 : vector<64xf32> to vector<64x1xf32>
    %cst_27 = arith.constant 1.280000e+02 : f32
    %60 = vector.broadcast %cst_27 : f32 to vector<64x1xf32>
    %61 = arith.divf %59, %60 : vector<64x1xf32>
    %62 = arith.mulf %56, %56 : vector<64x1xf32>
    %63 = arith.subf %61, %62 : vector<64x1xf32>
    %cst_28 = arith.constant 0.000000e+00 : f32
    %64 = vector.broadcast %cst_28 : f32 to vector<64x1xf32>
    %65 = arith.maximumf %63, %64 : vector<64x1xf32>
    %66 = vector.broadcast %56 : vector<64x1xf32> to vector<64x128xf32>
    %67 = arith.subf %52, %66 : vector<64x128xf32>
    %cst_29 = arith.constant 9.99999974E-6 : f32
    %68 = vector.broadcast %cst_29 : f32 to vector<64x1xf32>
    %69 = arith.addf %65, %68 : vector<64x1xf32>
    %70 = math.rsqrt %69 : vector<64x1xf32>
    %71 = vector.broadcast %70 : vector<64x1xf32> to vector<64x128xf32>
    %72 = arith.mulf %67, %71 : vector<64x128xf32>
    %73 = vector.broadcast %23 : vector<1x128xf32> to vector<64x128xf32>
    %74 = arith.mulf %72, %73 : vector<64x128xf32>
    %75 = vector.broadcast %25 : vector<1x128xf32> to vector<64x128xf32>
    %76 = arith.addf %74, %75 : vector<64x128xf32>
    %77 = arith.truncf %76 : vector<64x128xf32> to vector<64x128xbf16>
    %c128 = arith.constant 128 : index
    %c0_30 = arith.constant 0 : index
    %78 = vector.load %arg21[%c128, %c0_30] : memref<256x128xf32, #tpu.memory_space<vmem>>, vector<64x128xf32>
    %cst_31 = arith.constant dense<0.000000e+00> : vector<64xf32>
    %79 = vector.multi_reduction <add>, %78, %cst_31 [1] : vector<64x128xf32> to vector<64xf32>
    %80 = vector.shape_cast %79 : vector<64xf32> to vector<64x1xf32>
    %cst_32 = arith.constant 1.280000e+02 : f32
    %81 = vector.broadcast %cst_32 : f32 to vector<64x1xf32>
    %82 = arith.divf %80, %81 : vector<64x1xf32>
    %83 = arith.mulf %78, %78 : vector<64x128xf32>
    %cst_33 = arith.constant dense<0.000000e+00> : vector<64xf32>
    %84 = vector.multi_reduction <add>, %83, %cst_33 [1] : vector<64x128xf32> to vector<64xf32>
    %85 = vector.shape_cast %84 : vector<64xf32> to vector<64x1xf32>
    %cst_34 = arith.constant 1.280000e+02 : f32
    %86 = vector.broadcast %cst_34 : f32 to vector<64x1xf32>
    %87 = arith.divf %85, %86 : vector<64x1xf32>
    %88 = arith.mulf %82, %82 : vector<64x1xf32>
    %89 = arith.subf %87, %88 : vector<64x1xf32>
    %cst_35 = arith.constant 0.000000e+00 : f32
    %90 = vector.broadcast %cst_35 : f32 to vector<64x1xf32>
    %91 = arith.maximumf %89, %90 : vector<64x1xf32>
    %92 = vector.broadcast %82 : vector<64x1xf32> to vector<64x128xf32>
    %93 = arith.subf %78, %92 : vector<64x128xf32>
    %cst_36 = arith.constant 9.99999974E-6 : f32
    %94 = vector.broadcast %cst_36 : f32 to vector<64x1xf32>
    %95 = arith.addf %91, %94 : vector<64x1xf32>
    %96 = math.rsqrt %95 : vector<64x1xf32>
    %97 = vector.broadcast %96 : vector<64x1xf32> to vector<64x128xf32>
    %98 = arith.mulf %93, %97 : vector<64x128xf32>
    %99 = vector.broadcast %23 : vector<1x128xf32> to vector<64x128xf32>
    %100 = arith.mulf %98, %99 : vector<64x128xf32>
    %101 = vector.broadcast %25 : vector<1x128xf32> to vector<64x128xf32>
    %102 = arith.addf %100, %101 : vector<64x128xf32>
    %103 = arith.truncf %102 : vector<64x128xf32> to vector<64x128xbf16>
    %c192 = arith.constant 192 : index
    %c0_37 = arith.constant 0 : index
    %104 = vector.load %arg21[%c192, %c0_37] : memref<256x128xf32, #tpu.memory_space<vmem>>, vector<64x128xf32>
    %cst_38 = arith.constant dense<0.000000e+00> : vector<64xf32>
    %105 = vector.multi_reduction <add>, %104, %cst_38 [1] : vector<64x128xf32> to vector<64xf32>
    %106 = vector.shape_cast %105 : vector<64xf32> to vector<64x1xf32>
    %cst_39 = arith.constant 1.280000e+02 : f32
    %107 = vector.broadcast %cst_39 : f32 to vector<64x1xf32>
    %108 = arith.divf %106, %107 : vector<64x1xf32>
    %109 = arith.mulf %104, %104 : vector<64x128xf32>
    %cst_40 = arith.constant dense<0.000000e+00> : vector<64xf32>
    %110 = vector.multi_reduction <add>, %109, %cst_40 [1] : vector<64x128xf32> to vector<64xf32>
    %111 = vector.shape_cast %110 : vector<64xf32> to vector<64x1xf32>
    %cst_41 = arith.constant 1.280000e+02 : f32
    %112 = vector.broadcast %cst_41 : f32 to vector<64x1xf32>
    %113 = arith.divf %111, %112 : vector<64x1xf32>
    %114 = arith.mulf %108, %108 : vector<64x1xf32>
    %115 = arith.subf %113, %114 : vector<64x1xf32>
    %cst_42 = arith.constant 0.000000e+00 : f32
    %116 = vector.broadcast %cst_42 : f32 to vector<64x1xf32>
    %117 = arith.maximumf %115, %116 : vector<64x1xf32>
    %118 = vector.broadcast %108 : vector<64x1xf32> to vector<64x128xf32>
    %119 = arith.subf %104, %118 : vector<64x128xf32>
    %cst_43 = arith.constant 9.99999974E-6 : f32
    %120 = vector.broadcast %cst_43 : f32 to vector<64x1xf32>
    %121 = arith.addf %117, %120 : vector<64x1xf32>
    %122 = math.rsqrt %121 : vector<64x1xf32>
    %123 = vector.broadcast %122 : vector<64x1xf32> to vector<64x128xf32>
    %124 = arith.mulf %119, %123 : vector<64x128xf32>
    %125 = vector.broadcast %23 : vector<1x128xf32> to vector<64x128xf32>
    %126 = arith.mulf %124, %125 : vector<64x128xf32>
    %127 = vector.broadcast %25 : vector<1x128xf32> to vector<64x128xf32>
    %128 = arith.addf %126, %127 : vector<64x128xf32>
    %129 = arith.truncf %128 : vector<64x128xf32> to vector<64x128xbf16>
    %130 = tpu.concatenate %51, %77, %103, %129 in 1 : vector<64x128xbf16>, vector<64x128xbf16>, vector<64x128xbf16>, vector<64x128xbf16> -> vector<64x512xbf16>
    %c0_44 = arith.constant 0 : index
    %c0_45 = arith.constant 0 : index
    %c0_46 = arith.constant 0 : index
    %131 = vector.load %arg6[%c0_44, %c0_45, %c0_46] : memref<2x128x64xbf16, #tpu.memory_space<vmem>>, vector<1x128x64xbf16>
    %132 = vector.shape_cast %131 : vector<1x128x64xbf16> to vector<128x64xbf16>
    %cst_47 = arith.constant dense<0.000000e+00> : vector<128x512xf32>
    %133 = tpu.matmul %132, %130, %cst_47 {dimension_numbers = #tpu.dot_dimension_numbers<[1], [0], [0], [1], [0, 0, 1, 1], [], []>} : vector<128x64xbf16>, vector<64x512xbf16>, vector<128x512xf32> -> vector<128x512xf32>
    %c0_48 = arith.constant 0 : index
    %c0_49 = arith.constant 0 : index
    %c0_50 = arith.constant 0 : index
    %134 = vector.load %arg7[%c0_48, %c0_49, %c0_50] : memref<2x128x1xf32, #tpu.memory_space<vmem>>, vector<1x128x1xf32>
    %135 = vector.shape_cast %134 : vector<1x128x1xf32> to vector<128x1xf32>
    %136 = vector.broadcast %135 : vector<128x1xf32> to vector<128x512xf32>
    %137 = arith.addf %133, %136 : vector<128x512xf32>
    %cst_51 = arith.constant 5.000000e-01 : f32
    %138 = vector.broadcast %cst_51 : f32 to vector<128x512xf32>
    %139 = arith.mulf %138, %137 : vector<128x512xf32>
    %cst_52 = arith.constant 4.471500e-02 : f32
    %140 = vector.broadcast %cst_52 : f32 to vector<128x512xf32>
    %141 = arith.mulf %140, %137 : vector<128x512xf32>
    %142 = arith.mulf %141, %137 : vector<128x512xf32>
    %143 = arith.mulf %142, %137 : vector<128x512xf32>
    %144 = arith.addf %137, %143 : vector<128x512xf32>
    %cst_53 = arith.constant 0.797884583 : f32
    %145 = vector.broadcast %cst_53 : f32 to vector<128x512xf32>
    %146 = arith.mulf %145, %144 : vector<128x512xf32>
    %147 = math.tanh %146 : vector<128x512xf32>
    %cst_54 = arith.constant 1.000000e+00 : f32
    %148 = vector.broadcast %cst_54 : f32 to vector<128x512xf32>
    %149 = arith.addf %148, %147 : vector<128x512xf32>
    %150 = arith.mulf %139, %149 : vector<128x512xf32>
    %151 = arith.truncf %150 : vector<128x512xf32> to vector<128x512xbf16>
    %c0_55 = arith.constant 0 : index
    %c0_56 = arith.constant 0 : index
    %c0_57 = arith.constant 0 : index
    %152 = vector.load %arg8[%c0_55, %c0_56, %c0_57] : memref<2x64x128xbf16, #tpu.memory_space<vmem>>, vector<1x64x128xbf16>
    %153 = vector.shape_cast %152 : vector<1x64x128xbf16> to vector<64x128xbf16>
    %cst_58 = arith.constant dense<0.000000e+00> : vector<64x512xf32>
    %154 = tpu.matmul %153, %151, %cst_58 {dimension_numbers = #tpu.dot_dimension_numbers<[1], [0], [0], [1], [0, 0, 1, 1], [], []>} : vector<64x128xbf16>, vector<128x512xbf16>, vector<64x512xf32> -> vector<64x512xf32>
    %c0_59 = arith.constant 0 : index
    %c0_60 = arith.constant 0 : index
    %c0_61 = arith.constant 0 : index
    %155 = vector.load %arg9[%c0_59, %c0_60, %c0_61] : memref<2x64x1xf32, #tpu.memory_space<vmem>>, vector<1x64x1xf32>
    %156 = vector.shape_cast %155 : vector<1x64x1xf32> to vector<64x1xf32>
    %157 = vector.broadcast %156 : vector<64x1xf32> to vector<64x512xf32>
    %158 = arith.addf %154, %157 : vector<64x512xf32>
    %c0_62 = arith.constant 0 : index
    %c0_63 = arith.constant 0 : index
    %159 = vector.load %arg21[%c0_62, %c0_63] : memref<256x128xf32, #tpu.memory_space<vmem>>, vector<64x128xf32>
    %160 = vector.extract_strided_slice %158 {offsets = [0, 0], sizes = [64, 128], strides = [1, 1]} : vector<64x512xf32> to vector<64x128xf32>
    %161 = arith.addf %159, %160 : vector<64x128xf32>
    %c0_64 = arith.constant 0 : index
    %c0_65 = arith.constant 0 : index
    %162 = vector.load %arg21[%c0_64, %c0_65] : memref<256x128xf32, #tpu.memory_space<vmem>>, vector<64x128xf32>
    tpu.vector_store %arg21[%c0_64, %c0_65], %161 {strides = array<i32>} : memref<256x128xf32, #tpu.memory_space<vmem>>, vector<64x128xf32>,
    %c64_66 = arith.constant 64 : index
    %c0_67 = arith.constant 0 : index
    %163 = vector.load %arg21[%c64_66, %c0_67] : memref<256x128xf32, #tpu.memory_space<vmem>>, vector<64x128xf32>
    %164 = vector.extract_strided_slice %158 {offsets = [0, 128], sizes = [64, 128], strides = [1, 1]} : vector<64x512xf32> to vector<64x128xf32>
    %165 = arith.addf %163, %164 : vector<64x128xf32>
    %c64_68 = arith.constant 64 : index
    %c0_69 = arith.constant 0 : index
    %166 = vector.load %arg21[%c64_68, %c0_69] : memref<256x128xf32, #tpu.memory_space<vmem>>, vector<64x128xf32>
    tpu.vector_store %arg21[%c64_68, %c0_69], %165 {strides = array<i32>} : memref<256x128xf32, #tpu.memory_space<vmem>>, vector<64x128xf32>,
    %c128_70 = arith.constant 128 : index
    %c0_71 = arith.constant 0 : index
    %167 = vector.load %arg21[%c128_70, %c0_71] : memref<256x128xf32, #tpu.memory_space<vmem>>, vector<64x128xf32>
    %168 = vector.extract_strided_slice %158 {offsets = [0, 256], sizes = [64, 128], strides = [1, 1]} : vector<64x512xf32> to vector<64x128xf32>
    %169 = arith.addf %167, %168 : vector<64x128xf32>
    %c128_72 = arith.constant 128 : index
    %c0_73 = arith.constant 0 : index
    %170 = vector.load %arg21[%c128_72, %c0_73] : memref<256x128xf32, #tpu.memory_space<vmem>>, vector<64x128xf32>
    tpu.vector_store %arg21[%c128_72, %c0_73], %169 {strides = array<i32>} : memref<256x128xf32, #tpu.memory_space<vmem>>, vector<64x128xf32>,
    %c192_74 = arith.constant 192 : index
    %c0_75 = arith.constant 0 : index
    %171 = vector.load %arg21[%c192_74, %c0_75] : memref<256x128xf32, #tpu.memory_space<vmem>>, vector<64x128xf32>
    %172 = vector.extract_strided_slice %158 {offsets = [0, 384], sizes = [64, 128], strides = [1, 1]} : vector<64x512xf32> to vector<64x128xf32>
    %173 = arith.addf %171, %172 : vector<64x128xf32>
    %c192_76 = arith.constant 192 : index
    %c0_77 = arith.constant 0 : index
    %174 = vector.load %arg21[%c192_76, %c0_77] : memref<256x128xf32, #tpu.memory_space<vmem>>, vector<64x128xf32>
    tpu.vector_store %arg21[%c192_76, %c0_77], %173 {strides = array<i32>} : memref<256x128xf32, #tpu.memory_space<vmem>>, vector<64x128xf32>,
    %c0_78 = arith.constant 0 : index
    %c0_79 = arith.constant 0 : index
    %c0_80 = arith.constant 0 : index
    %175 = vector.load %arg10[%c0_78, %c0_79, %c0_80] : memref<2x1x128xf32, #tpu.memory_space<vmem>>, vector<1x1x128xf32>
    %176 = vector.shape_cast %175 : vector<1x1x128xf32> to vector<1x128xf32>
    %c0_81 = arith.constant 0 : index
    %c0_82 = arith.constant 0 : index
    %c0_83 = arith.constant 0 : index
    %177 = vector.load %arg11[%c0_81, %c0_82, %c0_83] : memref<2x1x128xf32, #tpu.memory_space<vmem>>, vector<1x1x128xf32>
    %178 = vector.shape_cast %177 : vector<1x1x128xf32> to vector<1x128xf32>
    %c0_i32_84 = arith.constant 0 : i32
    %c128_i32_85 = arith.constant 128 : i32
    %179 = arith.muli %c0_i32_84, %c128_i32_85 : i32
    %180 = tpu.assume_multiple %179, 128 : i32
    %181 = arith.index_cast %180 : i32 to index
    %c0_86 = arith.constant 0 : index
    %182 = vector.load %arg21[%181, %c0_86] : memref<256x128xf32, #tpu.memory_space<vmem>>, vector<128x128xf32>
    %cst_87 = arith.constant dense<0.000000e+00> : vector<128xf32>
    %183 = vector.multi_reduction <add>, %182, %cst_87 [1] : vector<128x128xf32> to vector<128xf32>
    %184 = vector.shape_cast %183 : vector<128xf32> to vector<128x1xf32>
    %cst_88 = arith.constant 1.280000e+02 : f32
    %185 = vector.broadcast %cst_88 : f32 to vector<128x1xf32>
    %186 = arith.divf %184, %185 : vector<128x1xf32>
    %187 = arith.mulf %182, %182 : vector<128x128xf32>
    %cst_89 = arith.constant dense<0.000000e+00> : vector<128xf32>
    %188 = vector.multi_reduction <add>, %187, %cst_89 [1] : vector<128x128xf32> to vector<128xf32>
    %189 = vector.shape_cast %188 : vector<128xf32> to vector<128x1xf32>
    %cst_90 = arith.constant 1.280000e+02 : f32
    %190 = vector.broadcast %cst_90 : f32 to vector<128x1xf32>
    %191 = arith.divf %189, %190 : vector<128x1xf32>
    %192 = arith.mulf %186, %186 : vector<128x1xf32>
    %193 = arith.subf %191, %192 : vector<128x1xf32>
    %cst_91 = arith.constant 0.000000e+00 : f32
    %194 = vector.broadcast %cst_91 : f32 to vector<128x1xf32>
    %195 = arith.maximumf %193, %194 : vector<128x1xf32>
    %196 = vector.broadcast %186 : vector<128x1xf32> to vector<128x128xf32>
    %197 = arith.subf %182, %196 : vector<128x128xf32>
    %cst_92 = arith.constant 9.99999974E-6 : f32
    %198 = vector.broadcast %cst_92 : f32 to vector<128x1xf32>
    %199 = arith.addf %195, %198 : vector<128x1xf32>
    %200 = math.rsqrt %199 : vector<128x1xf32>
    %201 = vector.broadcast %200 : vector<128x1xf32> to vector<128x128xf32>
    %202 = arith.mulf %197, %201 : vector<128x128xf32>
    %203 = vector.broadcast %176 : vector<1x128xf32> to vector<128x128xf32>
    %204 = arith.mulf %202, %203 : vector<128x128xf32>
    %205 = vector.broadcast %178 : vector<1x128xf32> to vector<128x128xf32>
    %206 = arith.addf %204, %205 : vector<128x128xf32>
    %207 = arith.truncf %206 : vector<128x128xf32> to vector<128x128xbf16>
    %c0_93 = arith.constant 0 : index
    %c0_94 = arith.constant 0 : index
    %c0_95 = arith.constant 0 : index
    %208 = vector.load %arg12[%c0_93, %c0_94, %c0_95] : memref<2x128x256xbf16, #tpu.memory_space<vmem>>, vector<1x128x256xbf16>
    %209 = vector.shape_cast %208 : vector<1x128x256xbf16> to vector<128x256xbf16>
    %cst_96 = arith.constant dense<0.000000e+00> : vector<128x256xf32>
    %210 = tpu.matmul %207, %209, %cst_96 {dimension_numbers = #tpu.dot_dimension_numbers<[1], [0], [0], [1], [0, 0, 1, 1], [], []>} : vector<128x128xbf16>, vector<128x256xbf16>, vector<128x256xf32> -> vector<128x256xf32>
    %c0_97 = arith.constant 0 : index
    %c0_98 = arith.constant 0 : index
    %c0_99 = arith.constant 0 : index
    %211 = vector.load %arg13[%c0_97, %c0_98, %c0_99] : memref<2x1x256xf32, #tpu.memory_space<vmem>>, vector<1x1x256xf32>
    %212 = vector.shape_cast %211 : vector<1x1x256xf32> to vector<1x256xf32>
    %213 = vector.broadcast %212 : vector<1x256xf32> to vector<128x256xf32>
    %214 = arith.addf %210, %213 : vector<128x256xf32>
    %cst_100 = arith.constant 5.000000e-01 : f32
    %215 = vector.broadcast %cst_100 : f32 to vector<128x256xf32>
    %216 = arith.mulf %215, %214 : vector<128x256xf32>
    %cst_101 = arith.constant 4.471500e-02 : f32
    %217 = vector.broadcast %cst_101 : f32 to vector<128x256xf32>
    %218 = arith.mulf %217, %214 : vector<128x256xf32>
    %219 = arith.mulf %218, %214 : vector<128x256xf32>
    %220 = arith.mulf %219, %214 : vector<128x256xf32>
    %221 = arith.addf %214, %220 : vector<128x256xf32>
    %cst_102 = arith.constant 0.797884583 : f32
    %222 = vector.broadcast %cst_102 : f32 to vector<128x256xf32>
    %223 = arith.mulf %222, %221 : vector<128x256xf32>
    %224 = math.tanh %223 : vector<128x256xf32>
    %cst_103 = arith.constant 1.000000e+00 : f32
    %225 = vector.broadcast %cst_103 : f32 to vector<128x256xf32>
    %226 = arith.addf %225, %224 : vector<128x256xf32>
    %227 = arith.mulf %216, %226 : vector<128x256xf32>
    %228 = arith.truncf %227 : vector<128x256xf32> to vector<128x256xbf16>
    %c0_104 = arith.constant 0 : index
    %c0_105 = arith.constant 0 : index
    %c0_106 = arith.constant 0 : index
    %229 = vector.load %arg14[%c0_104, %c0_105, %c0_106] : memref<2x256x128xbf16, #tpu.memory_space<vmem>>, vector<1x256x128xbf16>
    %230 = vector.shape_cast %229 : vector<1x256x128xbf16> to vector<256x128xbf16>
    %cst_107 = arith.constant dense<0.000000e+00> : vector<128x128xf32>
    %231 = tpu.matmul %228, %230, %cst_107 {dimension_numbers = #tpu.dot_dimension_numbers<[1], [0], [0], [1], [0, 0, 1, 1], [], []>} : vector<128x256xbf16>, vector<256x128xbf16>, vector<128x128xf32> -> vector<128x128xf32>
    %c0_108 = arith.constant 0 : index
    %c0_109 = arith.constant 0 : index
    %c0_110 = arith.constant 0 : index
    %232 = vector.load %arg15[%c0_108, %c0_109, %c0_110] : memref<2x1x128xf32, #tpu.memory_space<vmem>>, vector<1x1x128xf32>
    %233 = vector.shape_cast %232 : vector<1x1x128xf32> to vector<1x128xf32>
    %234 = vector.broadcast %233 : vector<1x128xf32> to vector<128x128xf32>
    %235 = arith.addf %231, %234 : vector<128x128xf32>
    %236 = arith.addf %235, %182 : vector<128x128xf32>
    %237 = arith.index_cast %180 : i32 to index
    %c0_111 = arith.constant 0 : index
    %238 = vector.load %arg21[%237, %c0_111] : memref<256x128xf32, #tpu.memory_space<vmem>>, vector<128x128xf32>
    tpu.vector_store %arg21[%237, %c0_111], %236 {strides = array<i32>} : memref<256x128xf32, #tpu.memory_space<vmem>>, vector<128x128xf32>,
    %c1_i32_112 = arith.constant 1 : i32
    %c128_i32_113 = arith.constant 128 : i32
    %239 = arith.muli %c1_i32_112, %c128_i32_113 : i32
    %240 = tpu.assume_multiple %239, 128 : i32
    %241 = arith.index_cast %240 : i32 to index
    %c0_114 = arith.constant 0 : index
    %242 = vector.load %arg21[%241, %c0_114] : memref<256x128xf32, #tpu.memory_space<vmem>>, vector<128x128xf32>
    %cst_115 = arith.constant dense<0.000000e+00> : vector<128xf32>
    %243 = vector.multi_reduction <add>, %242, %cst_115 [1] : vector<128x128xf32> to vector<128xf32>
    %244 = vector.shape_cast %243 : vector<128xf32> to vector<128x1xf32>
    %cst_116 = arith.constant 1.280000e+02 : f32
    %245 = vector.broadcast %cst_116 : f32 to vector<128x1xf32>
    %246 = arith.divf %244, %245 : vector<128x1xf32>
    %247 = arith.mulf %242, %242 : vector<128x128xf32>
    %cst_117 = arith.constant dense<0.000000e+00> : vector<128xf32>
    %248 = vector.multi_reduction <add>, %247, %cst_117 [1] : vector<128x128xf32> to vector<128xf32>
    %249 = vector.shape_cast %248 : vector<128xf32> to vector<128x1xf32>
    %cst_118 = arith.constant 1.280000e+02 : f32
    %250 = vector.broadcast %cst_118 : f32 to vector<128x1xf32>
    %251 = arith.divf %249, %250 : vector<128x1xf32>
    %252 = arith.mulf %246, %246 : vector<128x1xf32>
    %253 = arith.subf %251, %252 : vector<128x1xf32>
    %cst_119 = arith.constant 0.000000e+00 : f32
    %254 = vector.broadcast %cst_119 : f32 to vector<128x1xf32>
    %255 = arith.maximumf %253, %254 : vector<128x1xf32>
    %256 = vector.broadcast %246 : vector<128x1xf32> to vector<128x128xf32>
    %257 = arith.subf %242, %256 : vector<128x128xf32>
    %cst_120 = arith.constant 9.99999974E-6 : f32
    %258 = vector.broadcast %cst_120 : f32 to vector<128x1xf32>
    %259 = arith.addf %255, %258 : vector<128x1xf32>
    %260 = math.rsqrt %259 : vector<128x1xf32>
    %261 = vector.broadcast %260 : vector<128x1xf32> to vector<128x128xf32>
    %262 = arith.mulf %257, %261 : vector<128x128xf32>
    %263 = vector.broadcast %176 : vector<1x128xf32> to vector<128x128xf32>
    %264 = arith.mulf %262, %263 : vector<128x128xf32>
    %265 = vector.broadcast %178 : vector<1x128xf32> to vector<128x128xf32>
    %266 = arith.addf %264, %265 : vector<128x128xf32>
    %267 = arith.truncf %266 : vector<128x128xf32> to vector<128x128xbf16>
    %c0_121 = arith.constant 0 : index
    %c0_122 = arith.constant 0 : index
    %c0_123 = arith.constant 0 : index
    %268 = vector.load %arg12[%c0_121, %c0_122, %c0_123] : memref<2x128x256xbf16, #tpu.memory_space<vmem>>, vector<1x128x256xbf16>
    %269 = vector.shape_cast %268 : vector<1x128x256xbf16> to vector<128x256xbf16>
    %cst_124 = arith.constant dense<0.000000e+00> : vector<128x256xf32>
    %270 = tpu.matmul %267, %269, %cst_124 {dimension_numbers = #tpu.dot_dimension_numbers<[1], [0], [0], [1], [0, 0, 1, 1], [], []>} : vector<128x128xbf16>, vector<128x256xbf16>, vector<128x256xf32> -> vector<128x256xf32>
    %c0_125 = arith.constant 0 : index
    %c0_126 = arith.constant 0 : index
    %c0_127 = arith.constant 0 : index
    %271 = vector.load %arg13[%c0_125, %c0_126, %c0_127] : memref<2x1x256xf32, #tpu.memory_space<vmem>>, vector<1x1x256xf32>
    %272 = vector.shape_cast %271 : vector<1x1x256xf32> to vector<1x256xf32>
    %273 = vector.broadcast %272 : vector<1x256xf32> to vector<128x256xf32>
    %274 = arith.addf %270, %273 : vector<128x256xf32>
    %cst_128 = arith.constant 5.000000e-01 : f32
    %275 = vector.broadcast %cst_128 : f32 to vector<128x256xf32>
    %276 = arith.mulf %275, %274 : vector<128x256xf32>
    %cst_129 = arith.constant 4.471500e-02 : f32
    %277 = vector.broadcast %cst_129 : f32 to vector<128x256xf32>
    %278 = arith.mulf %277, %274 : vector<128x256xf32>
    %279 = arith.mulf %278, %274 : vector<128x256xf32>
    %280 = arith.mulf %279, %274 : vector<128x256xf32>
    %281 = arith.addf %274, %280 : vector<128x256xf32>
    %cst_130 = arith.constant 0.797884583 : f32
    %282 = vector.broadcast %cst_130 : f32 to vector<128x256xf32>
    %283 = arith.mulf %282, %281 : vector<128x256xf32>
    %284 = math.tanh %283 : vector<128x256xf32>
    %cst_131 = arith.constant 1.000000e+00 : f32
    %285 = vector.broadcast %cst_131 : f32 to vector<128x256xf32>
    %286 = arith.addf %285, %284 : vector<128x256xf32>
    %287 = arith.mulf %276, %286 : vector<128x256xf32>
    %288 = arith.truncf %287 : vector<128x256xf32> to vector<128x256xbf16>
    %c0_132 = arith.constant 0 : index
    %c0_133 = arith.constant 0 : index
    %c0_134 = arith.constant 0 : index
    %289 = vector.load %arg14[%c0_132, %c0_133, %c0_134] : memref<2x256x128xbf16, #tpu.memory_space<vmem>>, vector<1x256x128xbf16>
    %290 = vector.shape_cast %289 : vector<1x256x128xbf16> to vector<256x128xbf16>
    %cst_135 = arith.constant dense<0.000000e+00> : vector<128x128xf32>
    %291 = tpu.matmul %288, %290, %cst_135 {dimension_numbers = #tpu.dot_dimension_numbers<[1], [0], [0], [1], [0, 0, 1, 1], [], []>} : vector<128x256xbf16>, vector<256x128xbf16>, vector<128x128xf32> -> vector<128x128xf32>
    %c0_136 = arith.constant 0 : index
    %c0_137 = arith.constant 0 : index
    %c0_138 = arith.constant 0 : index
    %292 = vector.load %arg15[%c0_136, %c0_137, %c0_138] : memref<2x1x128xf32, #tpu.memory_space<vmem>>, vector<1x1x128xf32>
    %293 = vector.shape_cast %292 : vector<1x1x128xf32> to vector<1x128xf32>
    %294 = vector.broadcast %293 : vector<1x128xf32> to vector<128x128xf32>
    %295 = arith.addf %291, %294 : vector<128x128xf32>
    %296 = arith.addf %295, %242 : vector<128x128xf32>
    %297 = arith.index_cast %240 : i32 to index
    %c0_139 = arith.constant 0 : index
    %298 = vector.load %arg21[%297, %c0_139] : memref<256x128xf32, #tpu.memory_space<vmem>>, vector<128x128xf32>
    tpu.vector_store %arg21[%297, %c0_139], %296 {strides = array<i32>} : memref<256x128xf32, #tpu.memory_space<vmem>>, vector<128x128xf32>,
    %c2_i32_140 = arith.constant 2 : i32
    %c1 = arith.constant 1 : index
    %c0_141 = arith.constant 0 : index
    %c0_142 = arith.constant 0 : index
    %299 = vector.load %arg4[%c1, %c0_141, %c0_142] : memref<2x1x128xf32, #tpu.memory_space<vmem>>, vector<1x1x128xf32>
    %300 = vector.shape_cast %299 : vector<1x1x128xf32> to vector<1x128xf32>
    %c1_143 = arith.constant 1 : index
    %c0_144 = arith.constant 0 : index
    %c0_145 = arith.constant 0 : index
    %301 = vector.load %arg5[%c1_143, %c0_144, %c0_145] : memref<2x1x128xf32, #tpu.memory_space<vmem>>, vector<1x1x128xf32>
    %302 = vector.shape_cast %301 : vector<1x1x128xf32> to vector<1x128xf32>
    %c0_146 = arith.constant 0 : index
    %c0_147 = arith.constant 0 : index
    %303 = vector.load %arg21[%c0_146, %c0_147] : memref<256x128xf32, #tpu.memory_space<vmem>>, vector<64x128xf32>
    %cst_148 = arith.constant dense<0.000000e+00> : vector<64xf32>
    %304 = vector.multi_reduction <add>, %303, %cst_148 [1] : vector<64x128xf32> to vector<64xf32>
    %305 = vector.shape_cast %304 : vector<64xf32> to vector<64x1xf32>
    %cst_149 = arith.constant 1.280000e+02 : f32
    %306 = vector.broadcast %cst_149 : f32 to vector<64x1xf32>
    %307 = arith.divf %305, %306 : vector<64x1xf32>
    %308 = arith.mulf %303, %303 : vector<64x128xf32>
    %cst_150 = arith.constant dense<0.000000e+00> : vector<64xf32>
    %309 = vector.multi_reduction <add>, %308, %cst_150 [1] : vector<64x128xf32> to vector<64xf32>
    %310 = vector.shape_cast %309 : vector<64xf32> to vector<64x1xf32>
    %cst_151 = arith.constant 1.280000e+02 : f32
    %311 = vector.broadcast %cst_151 : f32 to vector<64x1xf32>
    %312 = arith.divf %310, %311 : vector<64x1xf32>
    %313 = arith.mulf %307, %307 : vector<64x1xf32>
    %314 = arith.subf %312, %313 : vector<64x1xf32>
    %cst_152 = arith.constant 0.000000e+00 : f32
    %315 = vector.broadcast %cst_152 : f32 to vector<64x1xf32>
    %316 = arith.maximumf %314, %315 : vector<64x1xf32>
    %317 = vector.broadcast %307 : vector<64x1xf32> to vector<64x128xf32>
    %318 = arith.subf %303, %317 : vector<64x128xf32>
    %cst_153 = arith.constant 9.99999974E-6 : f32
    %319 = vector.broadcast %cst_153 : f32 to vector<64x1xf32>
    %320 = arith.addf %316, %319 : vector<64x1xf32>
    %321 = math.rsqrt %320 : vector<64x1xf32>
    %322 = vector.broadcast %321 : vector<64x1xf32> to vector<64x128xf32>
    %323 = arith.mulf %318, %322 : vector<64x128xf32>
    %324 = vector.broadcast %300 : vector<1x128xf32> to vector<64x128xf32>
    %325 = arith.mulf %323, %324 : vector<64x128xf32>
    %326 = vector.broadcast %302 : vector<1x128xf32> to vector<64x128xf32>
    %327 = arith.addf %325, %326 : vector<64x128xf32>
    %328 = arith.truncf %327 : vector<64x128xf32> to vector<64x128xbf16>
    %c64_154 = arith.constant 64 : index
    %c0_155 = arith.constant 0 : index
    %329 = vector.load %arg21[%c64_154, %c0_155] : memref<256x128xf32, #tpu.memory_space<vmem>>, vector<64x128xf32>
    %cst_156 = arith.constant dense<0.000000e+00> : vector<64xf32>
    %330 = vector.multi_reduction <add>, %329, %cst_156 [1] : vector<64x128xf32> to vector<64xf32>
    %331 = vector.shape_cast %330 : vector<64xf32> to vector<64x1xf32>
    %cst_157 = arith.constant 1.280000e+02 : f32
    %332 = vector.broadcast %cst_157 : f32 to vector<64x1xf32>
    %333 = arith.divf %331, %332 : vector<64x1xf32>
    %334 = arith.mulf %329, %329 : vector<64x128xf32>
    %cst_158 = arith.constant dense<0.000000e+00> : vector<64xf32>
    %335 = vector.multi_reduction <add>, %334, %cst_158 [1] : vector<64x128xf32> to vector<64xf32>
    %336 = vector.shape_cast %335 : vector<64xf32> to vector<64x1xf32>
    %cst_159 = arith.constant 1.280000e+02 : f32
    %337 = vector.broadcast %cst_159 : f32 to vector<64x1xf32>
    %338 = arith.divf %336, %337 : vector<64x1xf32>
    %339 = arith.mulf %333, %333 : vector<64x1xf32>
    %340 = arith.subf %338, %339 : vector<64x1xf32>
    %cst_160 = arith.constant 0.000000e+00 : f32
    %341 = vector.broadcast %cst_160 : f32 to vector<64x1xf32>
    %342 = arith.maximumf %340, %341 : vector<64x1xf32>
    %343 = vector.broadcast %333 : vector<64x1xf32> to vector<64x128xf32>
    %344 = arith.subf %329, %343 : vector<64x128xf32>
    %cst_161 = arith.constant 9.99999974E-6 : f32
    %345 = vector.broadcast %cst_161 : f32 to vector<64x1xf32>
    %346 = arith.addf %342, %345 : vector<64x1xf32>
    %347 = math.rsqrt %346 : vector<64x1xf32>
    %348 = vector.broadcast %347 : vector<64x1xf32> to vector<64x128xf32>
    %349 = arith.mulf %344, %348 : vector<64x128xf32>
    %350 = vector.broadcast %300 : vector<1x128xf32> to vector<64x128xf32>
    %351 = arith.mulf %349, %350 : vector<64x128xf32>
    %352 = vector.broadcast %302 : vector<1x128xf32> to vector<64x128xf32>
    %353 = arith.addf %351, %352 : vector<64x128xf32>
    %354 = arith.truncf %353 : vector<64x128xf32> to vector<64x128xbf16>
    %c128_162 = arith.constant 128 : index
    %c0_163 = arith.constant 0 : index
    %355 = vector.load %arg21[%c128_162, %c0_163] : memref<256x128xf32, #tpu.memory_space<vmem>>, vector<64x128xf32>
    %cst_164 = arith.constant dense<0.000000e+00> : vector<64xf32>
    %356 = vector.multi_reduction <add>, %355, %cst_164 [1] : vector<64x128xf32> to vector<64xf32>
    %357 = vector.shape_cast %356 : vector<64xf32> to vector<64x1xf32>
    %cst_165 = arith.constant 1.280000e+02 : f32
    %358 = vector.broadcast %cst_165 : f32 to vector<64x1xf32>
    %359 = arith.divf %357, %358 : vector<64x1xf32>
    %360 = arith.mulf %355, %355 : vector<64x128xf32>
    %cst_166 = arith.constant dense<0.000000e+00> : vector<64xf32>
    %361 = vector.multi_reduction <add>, %360, %cst_166 [1] : vector<64x128xf32> to vector<64xf32>
    %362 = vector.shape_cast %361 : vector<64xf32> to vector<64x1xf32>
    %cst_167 = arith.constant 1.280000e+02 : f32
    %363 = vector.broadcast %cst_167 : f32 to vector<64x1xf32>
    %364 = arith.divf %362, %363 : vector<64x1xf32>
    %365 = arith.mulf %359, %359 : vector<64x1xf32>
    %366 = arith.subf %364, %365 : vector<64x1xf32>
    %cst_168 = arith.constant 0.000000e+00 : f32
    %367 = vector.broadcast %cst_168 : f32 to vector<64x1xf32>
    %368 = arith.maximumf %366, %367 : vector<64x1xf32>
    %369 = vector.broadcast %359 : vector<64x1xf32> to vector<64x128xf32>
    %370 = arith.subf %355, %369 : vector<64x128xf32>
    %cst_169 = arith.constant 9.99999974E-6 : f32
    %371 = vector.broadcast %cst_169 : f32 to vector<64x1xf32>
    %372 = arith.addf %368, %371 : vector<64x1xf32>
    %373 = math.rsqrt %372 : vector<64x1xf32>
    %374 = vector.broadcast %373 : vector<64x1xf32> to vector<64x128xf32>
    %375 = arith.mulf %370, %374 : vector<64x128xf32>
    %376 = vector.broadcast %300 : vector<1x128xf32> to vector<64x128xf32>
    %377 = arith.mulf %375, %376 : vector<64x128xf32>
    %378 = vector.broadcast %302 : vector<1x128xf32> to vector<64x128xf32>
    %379 = arith.addf %377, %378 : vector<64x128xf32>
    %380 = arith.truncf %379 : vector<64x128xf32> to vector<64x128xbf16>
    %c192_170 = arith.constant 192 : index
    %c0_171 = arith.constant 0 : index
    %381 = vector.load %arg21[%c192_170, %c0_171] : memref<256x128xf32, #tpu.memory_space<vmem>>, vector<64x128xf32>
    %cst_172 = arith.constant dense<0.000000e+00> : vector<64xf32>
    %382 = vector.multi_reduction <add>, %381, %cst_172 [1] : vector<64x128xf32> to vector<64xf32>
    %383 = vector.shape_cast %382 : vector<64xf32> to vector<64x1xf32>
    %cst_173 = arith.constant 1.280000e+02 : f32
    %384 = vector.broadcast %cst_173 : f32 to vector<64x1xf32>
    %385 = arith.divf %383, %384 : vector<64x1xf32>
    %386 = arith.mulf %381, %381 : vector<64x128xf32>
    %cst_174 = arith.constant dense<0.000000e+00> : vector<64xf32>
    %387 = vector.multi_reduction <add>, %386, %cst_174 [1] : vector<64x128xf32> to vector<64xf32>
    %388 = vector.shape_cast %387 : vector<64xf32> to vector<64x1xf32>
    %cst_175 = arith.constant 1.280000e+02 : f32
    %389 = vector.broadcast %cst_175 : f32 to vector<64x1xf32>
    %390 = arith.divf %388, %389 : vector<64x1xf32>
    %391 = arith.mulf %385, %385 : vector<64x1xf32>
    %392 = arith.subf %390, %391 : vector<64x1xf32>
    %cst_176 = arith.constant 0.000000e+00 : f32
    %393 = vector.broadcast %cst_176 : f32 to vector<64x1xf32>
    %394 = arith.maximumf %392, %393 : vector<64x1xf32>
    %395 = vector.broadcast %385 : vector<64x1xf32> to vector<64x128xf32>
    %396 = arith.subf %381, %395 : vector<64x128xf32>
    %cst_177 = arith.constant 9.99999974E-6 : f32
    %397 = vector.broadcast %cst_177 : f32 to vector<64x1xf32>
    %398 = arith.addf %394, %397 : vector<64x1xf32>
    %399 = math.rsqrt %398 : vector<64x1xf32>
    %400 = vector.broadcast %399 : vector<64x1xf32> to vector<64x128xf32>
    %401 = arith.mulf %396, %400 : vector<64x128xf32>
    %402 = vector.broadcast %300 : vector<1x128xf32> to vector<64x128xf32>
    %403 = arith.mulf %401, %402 : vector<64x128xf32>
    %404 = vector.broadcast %302 : vector<1x128xf32> to vector<64x128xf32>
    %405 = arith.addf %403, %404 : vector<64x128xf32>
    %406 = arith.truncf %405 : vector<64x128xf32> to vector<64x128xbf16>
    %407 = tpu.concatenate %328, %354, %380, %406 in 1 : vector<64x128xbf16>, vector<64x128xbf16>, vector<64x128xbf16>, vector<64x128xbf16> -> vector<64x512xbf16>
    %c1_178 = arith.constant 1 : index
    %c0_179 = arith.constant 0 : index
    %c0_180 = arith.constant 0 : index
    %408 = vector.load %arg6[%c1_178, %c0_179, %c0_180] : memref<2x128x64xbf16, #tpu.memory_space<vmem>>, vector<1x128x64xbf16>
    %409 = vector.shape_cast %408 : vector<1x128x64xbf16> to vector<128x64xbf16>
    %cst_181 = arith.constant dense<0.000000e+00> : vector<128x512xf32>
    %410 = tpu.matmul %409, %407, %cst_181 {dimension_numbers = #tpu.dot_dimension_numbers<[1], [0], [0], [1], [0, 0, 1, 1], [], []>} : vector<128x64xbf16>, vector<64x512xbf16>, vector<128x512xf32> -> vector<128x512xf32>
    %c1_182 = arith.constant 1 : index
    %c0_183 = arith.constant 0 : index
    %c0_184 = arith.constant 0 : index
    %411 = vector.load %arg7[%c1_182, %c0_183, %c0_184] : memref<2x128x1xf32, #tpu.memory_space<vmem>>, vector<1x128x1xf32>
    %412 = vector.shape_cast %411 : vector<1x128x1xf32> to vector<128x1xf32>
    %413 = vector.broadcast %412 : vector<128x1xf32> to vector<128x512xf32>
    %414 = arith.addf %410, %413 : vector<128x512xf32>
    %cst_185 = arith.constant 5.000000e-01 : f32
    %415 = vector.broadcast %cst_185 : f32 to vector<128x512xf32>
    %416 = arith.mulf %415, %414 : vector<128x512xf32>
    %cst_186 = arith.constant 4.471500e-02 : f32
    %417 = vector.broadcast %cst_186 : f32 to vector<128x512xf32>
    %418 = arith.mulf %417, %414 : vector<128x512xf32>
    %419 = arith.mulf %418, %414 : vector<128x512xf32>
    %420 = arith.mulf %419, %414 : vector<128x512xf32>
    %421 = arith.addf %414, %420 : vector<128x512xf32>
    %cst_187 = arith.constant 0.797884583 : f32
    %422 = vector.broadcast %cst_187 : f32 to vector<128x512xf32>
    %423 = arith.mulf %422, %421 : vector<128x512xf32>
    %424 = math.tanh %423 : vector<128x512xf32>
    %cst_188 = arith.constant 1.000000e+00 : f32
    %425 = vector.broadcast %cst_188 : f32 to vector<128x512xf32>
    %426 = arith.addf %425, %424 : vector<128x512xf32>
    %427 = arith.mulf %416, %426 : vector<128x512xf32>
    %428 = arith.truncf %427 : vector<128x512xf32> to vector<128x512xbf16>
    %c1_189 = arith.constant 1 : index
    %c0_190 = arith.constant 0 : index
    %c0_191 = arith.constant 0 : index
    %429 = vector.load %arg8[%c1_189, %c0_190, %c0_191] : memref<2x64x128xbf16, #tpu.memory_space<vmem>>, vector<1x64x128xbf16>
    %430 = vector.shape_cast %429 : vector<1x64x128xbf16> to vector<64x128xbf16>
    %cst_192 = arith.constant dense<0.000000e+00> : vector<64x512xf32>
    %431 = tpu.matmul %430, %428, %cst_192 {dimension_numbers = #tpu.dot_dimension_numbers<[1], [0], [0], [1], [0, 0, 1, 1], [], []>} : vector<64x128xbf16>, vector<128x512xbf16>, vector<64x512xf32> -> vector<64x512xf32>
    %c1_193 = arith.constant 1 : index
    %c0_194 = arith.constant 0 : index
    %c0_195 = arith.constant 0 : index
    %432 = vector.load %arg9[%c1_193, %c0_194, %c0_195] : memref<2x64x1xf32, #tpu.memory_space<vmem>>, vector<1x64x1xf32>
    %433 = vector.shape_cast %432 : vector<1x64x1xf32> to vector<64x1xf32>
    %434 = vector.broadcast %433 : vector<64x1xf32> to vector<64x512xf32>
    %435 = arith.addf %431, %434 : vector<64x512xf32>
    %c0_196 = arith.constant 0 : index
    %c0_197 = arith.constant 0 : index
    %436 = vector.load %arg21[%c0_196, %c0_197] : memref<256x128xf32, #tpu.memory_space<vmem>>, vector<64x128xf32>
    %437 = vector.extract_strided_slice %435 {offsets = [0, 0], sizes = [64, 128], strides = [1, 1]} : vector<64x512xf32> to vector<64x128xf32>
    %438 = arith.addf %436, %437 : vector<64x128xf32>
    %c0_198 = arith.constant 0 : index
    %c0_199 = arith.constant 0 : index
    %439 = vector.load %arg21[%c0_198, %c0_199] : memref<256x128xf32, #tpu.memory_space<vmem>>, vector<64x128xf32>
    tpu.vector_store %arg21[%c0_198, %c0_199], %438 {strides = array<i32>} : memref<256x128xf32, #tpu.memory_space<vmem>>, vector<64x128xf32>,
    %c64_200 = arith.constant 64 : index
    %c0_201 = arith.constant 0 : index
    %440 = vector.load %arg21[%c64_200, %c0_201] : memref<256x128xf32, #tpu.memory_space<vmem>>, vector<64x128xf32>
    %441 = vector.extract_strided_slice %435 {offsets = [0, 128], sizes = [64, 128], strides = [1, 1]} : vector<64x512xf32> to vector<64x128xf32>
    %442 = arith.addf %440, %441 : vector<64x128xf32>
    %c64_202 = arith.constant 64 : index
    %c0_203 = arith.constant 0 : index
    %443 = vector.load %arg21[%c64_202, %c0_203] : memref<256x128xf32, #tpu.memory_space<vmem>>, vector<64x128xf32>
    tpu.vector_store %arg21[%c64_202, %c0_203], %442 {strides = array<i32>} : memref<256x128xf32, #tpu.memory_space<vmem>>, vector<64x128xf32>,
    %c128_204 = arith.constant 128 : index
    %c0_205 = arith.constant 0 : index
    %444 = vector.load %arg21[%c128_204, %c0_205] : memref<256x128xf32, #tpu.memory_space<vmem>>, vector<64x128xf32>
    %445 = vector.extract_strided_slice %435 {offsets = [0, 256], sizes = [64, 128], strides = [1, 1]} : vector<64x512xf32> to vector<64x128xf32>
    %446 = arith.addf %444, %445 : vector<64x128xf32>
    %c128_206 = arith.constant 128 : index
    %c0_207 = arith.constant 0 : index
    %447 = vector.load %arg21[%c128_206, %c0_207] : memref<256x128xf32, #tpu.memory_space<vmem>>, vector<64x128xf32>
    tpu.vector_store %arg21[%c128_206, %c0_207], %446 {strides = array<i32>} : memref<256x128xf32, #tpu.memory_space<vmem>>, vector<64x128xf32>,
    %c192_208 = arith.constant 192 : index
    %c0_209 = arith.constant 0 : index
    %448 = vector.load %arg21[%c192_208, %c0_209] : memref<256x128xf32, #tpu.memory_space<vmem>>, vector<64x128xf32>
    %449 = vector.extract_strided_slice %435 {offsets = [0, 384], sizes = [64, 128], strides = [1, 1]} : vector<64x512xf32> to vector<64x128xf32>
    %450 = arith.addf %448, %449 : vector<64x128xf32>
    %c192_210 = arith.constant 192 : index
    %c0_211 = arith.constant 0 : index
    %451 = vector.load %arg21[%c192_210, %c0_211] : memref<256x128xf32, #tpu.memory_space<vmem>>, vector<64x128xf32>
    tpu.vector_store %arg21[%c192_210, %c0_211], %450 {strides = array<i32>} : memref<256x128xf32, #tpu.memory_space<vmem>>, vector<64x128xf32>,
    %c1_212 = arith.constant 1 : index
    %c0_213 = arith.constant 0 : index
    %c0_214 = arith.constant 0 : index
    %452 = vector.load %arg10[%c1_212, %c0_213, %c0_214] : memref<2x1x128xf32, #tpu.memory_space<vmem>>, vector<1x1x128xf32>
    %453 = vector.shape_cast %452 : vector<1x1x128xf32> to vector<1x128xf32>
    %c1_215 = arith.constant 1 : index
    %c0_216 = arith.constant 0 : index
    %c0_217 = arith.constant 0 : index
    %454 = vector.load %arg11[%c1_215, %c0_216, %c0_217] : memref<2x1x128xf32, #tpu.memory_space<vmem>>, vector<1x1x128xf32>
    %455 = vector.shape_cast %454 : vector<1x1x128xf32> to vector<1x128xf32>
    %c0_i32_218 = arith.constant 0 : i32
    %c128_i32_219 = arith.constant 128 : i32
    %456 = arith.muli %c0_i32_218, %c128_i32_219 : i32
    %457 = tpu.assume_multiple %456, 128 : i32
    %458 = arith.index_cast %457 : i32 to index
    %c0_220 = arith.constant 0 : index
    %459 = vector.load %arg21[%458, %c0_220] : memref<256x128xf32, #tpu.memory_space<vmem>>, vector<128x128xf32>
    %cst_221 = arith.constant dense<0.000000e+00> : vector<128xf32>
    %460 = vector.multi_reduction <add>, %459, %cst_221 [1] : vector<128x128xf32> to vector<128xf32>
    %461 = vector.shape_cast %460 : vector<128xf32> to vector<128x1xf32>
    %cst_222 = arith.constant 1.280000e+02 : f32
    %462 = vector.broadcast %cst_222 : f32 to vector<128x1xf32>
    %463 = arith.divf %461, %462 : vector<128x1xf32>
    %464 = arith.mulf %459, %459 : vector<128x128xf32>
    %cst_223 = arith.constant dense<0.000000e+00> : vector<128xf32>
    %465 = vector.multi_reduction <add>, %464, %cst_223 [1] : vector<128x128xf32> to vector<128xf32>
    %466 = vector.shape_cast %465 : vector<128xf32> to vector<128x1xf32>
    %cst_224 = arith.constant 1.280000e+02 : f32
    %467 = vector.broadcast %cst_224 : f32 to vector<128x1xf32>
    %468 = arith.divf %466, %467 : vector<128x1xf32>
    %469 = arith.mulf %463, %463 : vector<128x1xf32>
    %470 = arith.subf %468, %469 : vector<128x1xf32>
    %cst_225 = arith.constant 0.000000e+00 : f32
    %471 = vector.broadcast %cst_225 : f32 to vector<128x1xf32>
    %472 = arith.maximumf %470, %471 : vector<128x1xf32>
    %473 = vector.broadcast %463 : vector<128x1xf32> to vector<128x128xf32>
    %474 = arith.subf %459, %473 : vector<128x128xf32>
    %cst_226 = arith.constant 9.99999974E-6 : f32
    %475 = vector.broadcast %cst_226 : f32 to vector<128x1xf32>
    %476 = arith.addf %472, %475 : vector<128x1xf32>
    %477 = math.rsqrt %476 : vector<128x1xf32>
    %478 = vector.broadcast %477 : vector<128x1xf32> to vector<128x128xf32>
    %479 = arith.mulf %474, %478 : vector<128x128xf32>
    %480 = vector.broadcast %453 : vector<1x128xf32> to vector<128x128xf32>
    %481 = arith.mulf %479, %480 : vector<128x128xf32>
    %482 = vector.broadcast %455 : vector<1x128xf32> to vector<128x128xf32>
    %483 = arith.addf %481, %482 : vector<128x128xf32>
    %484 = arith.truncf %483 : vector<128x128xf32> to vector<128x128xbf16>
    %c1_227 = arith.constant 1 : index
    %c0_228 = arith.constant 0 : index
    %c0_229 = arith.constant 0 : index
    %485 = vector.load %arg12[%c1_227, %c0_228, %c0_229] : memref<2x128x256xbf16, #tpu.memory_space<vmem>>, vector<1x128x256xbf16>
    %486 = vector.shape_cast %485 : vector<1x128x256xbf16> to vector<128x256xbf16>
    %cst_230 = arith.constant dense<0.000000e+00> : vector<128x256xf32>
    %487 = tpu.matmul %484, %486, %cst_230 {dimension_numbers = #tpu.dot_dimension_numbers<[1], [0], [0], [1], [0, 0, 1, 1], [], []>} : vector<128x128xbf16>, vector<128x256xbf16>, vector<128x256xf32> -> vector<128x256xf32>
    %c1_231 = arith.constant 1 : index
    %c0_232 = arith.constant 0 : index
    %c0_233 = arith.constant 0 : index
    %488 = vector.load %arg13[%c1_231, %c0_232, %c0_233] : memref<2x1x256xf32, #tpu.memory_space<vmem>>, vector<1x1x256xf32>
    %489 = vector.shape_cast %488 : vector<1x1x256xf32> to vector<1x256xf32>
    %490 = vector.broadcast %489 : vector<1x256xf32> to vector<128x256xf32>
    %491 = arith.addf %487, %490 : vector<128x256xf32>
    %cst_234 = arith.constant 5.000000e-01 : f32
    %492 = vector.broadcast %cst_234 : f32 to vector<128x256xf32>
    %493 = arith.mulf %492, %491 : vector<128x256xf32>
    %cst_235 = arith.constant 4.471500e-02 : f32
    %494 = vector.broadcast %cst_235 : f32 to vector<128x256xf32>
    %495 = arith.mulf %494, %491 : vector<128x256xf32>
    %496 = arith.mulf %495, %491 : vector<128x256xf32>
    %497 = arith.mulf %496, %491 : vector<128x256xf32>
    %498 = arith.addf %491, %497 : vector<128x256xf32>
    %cst_236 = arith.constant 0.797884583 : f32
    %499 = vector.broadcast %cst_236 : f32 to vector<128x256xf32>
    %500 = arith.mulf %499, %498 : vector<128x256xf32>
    %501 = math.tanh %500 : vector<128x256xf32>
    %cst_237 = arith.constant 1.000000e+00 : f32
    %502 = vector.broadcast %cst_237 : f32 to vector<128x256xf32>
    %503 = arith.addf %502, %501 : vector<128x256xf32>
    %504 = arith.mulf %493, %503 : vector<128x256xf32>
    %505 = arith.truncf %504 : vector<128x256xf32> to vector<128x256xbf16>
    %c1_238 = arith.constant 1 : index
    %c0_239 = arith.constant 0 : index
    %c0_240 = arith.constant 0 : index
    %506 = vector.load %arg14[%c1_238, %c0_239, %c0_240] : memref<2x256x128xbf16, #tpu.memory_space<vmem>>, vector<1x256x128xbf16>
    %507 = vector.shape_cast %506 : vector<1x256x128xbf16> to vector<256x128xbf16>
    %cst_241 = arith.constant dense<0.000000e+00> : vector<128x128xf32>
    %508 = tpu.matmul %505, %507, %cst_241 {dimension_numbers = #tpu.dot_dimension_numbers<[1], [0], [0], [1], [0, 0, 1, 1], [], []>} : vector<128x256xbf16>, vector<256x128xbf16>, vector<128x128xf32> -> vector<128x128xf32>
    %c1_242 = arith.constant 1 : index
    %c0_243 = arith.constant 0 : index
    %c0_244 = arith.constant 0 : index
    %509 = vector.load %arg15[%c1_242, %c0_243, %c0_244] : memref<2x1x128xf32, #tpu.memory_space<vmem>>, vector<1x1x128xf32>
    %510 = vector.shape_cast %509 : vector<1x1x128xf32> to vector<1x128xf32>
    %511 = vector.broadcast %510 : vector<1x128xf32> to vector<128x128xf32>
    %512 = arith.addf %508, %511 : vector<128x128xf32>
    %513 = arith.addf %512, %459 : vector<128x128xf32>
    %514 = arith.index_cast %457 : i32 to index
    %c0_245 = arith.constant 0 : index
    %515 = vector.load %arg21[%514, %c0_245] : memref<256x128xf32, #tpu.memory_space<vmem>>, vector<128x128xf32>
    tpu.vector_store %arg21[%514, %c0_245], %513 {strides = array<i32>} : memref<256x128xf32, #tpu.memory_space<vmem>>, vector<128x128xf32>,
    %c1_i32_246 = arith.constant 1 : i32
    %c128_i32_247 = arith.constant 128 : i32
    %516 = arith.muli %c1_i32_246, %c128_i32_247 : i32
    %517 = tpu.assume_multiple %516, 128 : i32
    %518 = arith.index_cast %517 : i32 to index
    %c0_248 = arith.constant 0 : index
    %519 = vector.load %arg21[%518, %c0_248] : memref<256x128xf32, #tpu.memory_space<vmem>>, vector<128x128xf32>
    %cst_249 = arith.constant dense<0.000000e+00> : vector<128xf32>
    %520 = vector.multi_reduction <add>, %519, %cst_249 [1] : vector<128x128xf32> to vector<128xf32>
    %521 = vector.shape_cast %520 : vector<128xf32> to vector<128x1xf32>
    %cst_250 = arith.constant 1.280000e+02 : f32
    %522 = vector.broadcast %cst_250 : f32 to vector<128x1xf32>
    %523 = arith.divf %521, %522 : vector<128x1xf32>
    %524 = arith.mulf %519, %519 : vector<128x128xf32>
    %cst_251 = arith.constant dense<0.000000e+00> : vector<128xf32>
    %525 = vector.multi_reduction <add>, %524, %cst_251 [1] : vector<128x128xf32> to vector<128xf32>
    %526 = vector.shape_cast %525 : vector<128xf32> to vector<128x1xf32>
    %cst_252 = arith.constant 1.280000e+02 : f32
    %527 = vector.broadcast %cst_252 : f32 to vector<128x1xf32>
    %528 = arith.divf %526, %527 : vector<128x1xf32>
    %529 = arith.mulf %523, %523 : vector<128x1xf32>
    %530 = arith.subf %528, %529 : vector<128x1xf32>
    %cst_253 = arith.constant 0.000000e+00 : f32
    %531 = vector.broadcast %cst_253 : f32 to vector<128x1xf32>
    %532 = arith.maximumf %530, %531 : vector<128x1xf32>
    %533 = vector.broadcast %523 : vector<128x1xf32> to vector<128x128xf32>
    %534 = arith.subf %519, %533 : vector<128x128xf32>
    %cst_254 = arith.constant 9.99999974E-6 : f32
    %535 = vector.broadcast %cst_254 : f32 to vector<128x1xf32>
    %536 = arith.addf %532, %535 : vector<128x1xf32>
    %537 = math.rsqrt %536 : vector<128x1xf32>
    %538 = vector.broadcast %537 : vector<128x1xf32> to vector<128x128xf32>
    %539 = arith.mulf %534, %538 : vector<128x128xf32>
    %540 = vector.broadcast %453 : vector<1x128xf32> to vector<128x128xf32>
    %541 = arith.mulf %539, %540 : vector<128x128xf32>
    %542 = vector.broadcast %455 : vector<1x128xf32> to vector<128x128xf32>
    %543 = arith.addf %541, %542 : vector<128x128xf32>
    %544 = arith.truncf %543 : vector<128x128xf32> to vector<128x128xbf16>
    %c1_255 = arith.constant 1 : index
    %c0_256 = arith.constant 0 : index
    %c0_257 = arith.constant 0 : index
    %545 = vector.load %arg12[%c1_255, %c0_256, %c0_257] : memref<2x128x256xbf16, #tpu.memory_space<vmem>>, vector<1x128x256xbf16>
    %546 = vector.shape_cast %545 : vector<1x128x256xbf16> to vector<128x256xbf16>
    %cst_258 = arith.constant dense<0.000000e+00> : vector<128x256xf32>
    %547 = tpu.matmul %544, %546, %cst_258 {dimension_numbers = #tpu.dot_dimension_numbers<[1], [0], [0], [1], [0, 0, 1, 1], [], []>} : vector<128x128xbf16>, vector<128x256xbf16>, vector<128x256xf32> -> vector<128x256xf32>
    %c1_259 = arith.constant 1 : index
    %c0_260 = arith.constant 0 : index
    %c0_261 = arith.constant 0 : index
    %548 = vector.load %arg13[%c1_259, %c0_260, %c0_261] : memref<2x1x256xf32, #tpu.memory_space<vmem>>, vector<1x1x256xf32>
    %549 = vector.shape_cast %548 : vector<1x1x256xf32> to vector<1x256xf32>
    %550 = vector.broadcast %549 : vector<1x256xf32> to vector<128x256xf32>
    %551 = arith.addf %547, %550 : vector<128x256xf32>
    %cst_262 = arith.constant 5.000000e-01 : f32
    %552 = vector.broadcast %cst_262 : f32 to vector<128x256xf32>
    %553 = arith.mulf %552, %551 : vector<128x256xf32>
    %cst_263 = arith.constant 4.471500e-02 : f32
    %554 = vector.broadcast %cst_263 : f32 to vector<128x256xf32>
    %555 = arith.mulf %554, %551 : vector<128x256xf32>
    %556 = arith.mulf %555, %551 : vector<128x256xf32>
    %557 = arith.mulf %556, %551 : vector<128x256xf32>
    %558 = arith.addf %551, %557 : vector<128x256xf32>
    %cst_264 = arith.constant 0.797884583 : f32
    %559 = vector.broadcast %cst_264 : f32 to vector<128x256xf32>
    %560 = arith.mulf %559, %558 : vector<128x256xf32>
    %561 = math.tanh %560 : vector<128x256xf32>
    %cst_265 = arith.constant 1.000000e+00 : f32
    %562 = vector.broadcast %cst_265 : f32 to vector<128x256xf32>
    %563 = arith.addf %562, %561 : vector<128x256xf32>
    %564 = arith.mulf %553, %563 : vector<128x256xf32>
    %565 = arith.truncf %564 : vector<128x256xf32> to vector<128x256xbf16>
    %c1_266 = arith.constant 1 : index
    %c0_267 = arith.constant 0 : index
    %c0_268 = arith.constant 0 : index
    %566 = vector.load %arg14[%c1_266, %c0_267, %c0_268] : memref<2x256x128xbf16, #tpu.memory_space<vmem>>, vector<1x256x128xbf16>
    %567 = vector.shape_cast %566 : vector<1x256x128xbf16> to vector<256x128xbf16>
    %cst_269 = arith.constant dense<0.000000e+00> : vector<128x128xf32>
    %568 = tpu.matmul %565, %567, %cst_269 {dimension_numbers = #tpu.dot_dimension_numbers<[1], [0], [0], [1], [0, 0, 1, 1], [], []>} : vector<128x256xbf16>, vector<256x128xbf16>, vector<128x128xf32> -> vector<128x128xf32>
    %c1_270 = arith.constant 1 : index
    %c0_271 = arith.constant 0 : index
    %c0_272 = arith.constant 0 : index
    %569 = vector.load %arg15[%c1_270, %c0_271, %c0_272] : memref<2x1x128xf32, #tpu.memory_space<vmem>>, vector<1x1x128xf32>
    %570 = vector.shape_cast %569 : vector<1x1x128xf32> to vector<1x128xf32>
    %571 = vector.broadcast %570 : vector<1x128xf32> to vector<128x128xf32>
    %572 = arith.addf %568, %571 : vector<128x128xf32>
    %573 = arith.addf %572, %519 : vector<128x128xf32>
    %574 = arith.index_cast %517 : i32 to index
    %c0_273 = arith.constant 0 : index
    %575 = vector.load %arg21[%574, %c0_273] : memref<256x128xf32, #tpu.memory_space<vmem>>, vector<128x128xf32>
    tpu.vector_store %arg21[%574, %c0_273], %573 {strides = array<i32>} : memref<256x128xf32, #tpu.memory_space<vmem>>, vector<128x128xf32>,
    %c2_i32_274 = arith.constant 2 : i32
    %c0_275 = arith.constant 0 : index
    %c0_276 = arith.constant 0 : index
    %576 = vector.load %arg16[%c0_275, %c0_276] : memref<1x128xf32, #tpu.memory_space<vmem>>, vector<1x128xf32>
    %c0_277 = arith.constant 0 : index
    %c0_278 = arith.constant 0 : index
    %577 = vector.load %arg17[%c0_277, %c0_278] : memref<1x128xf32, #tpu.memory_space<vmem>>, vector<1x128xf32>
    %c0_279 = arith.constant 0 : index
    %c0_280 = arith.constant 0 : index
    %578 = vector.load %arg21[%c0_279, %c0_280] : memref<256x128xf32, #tpu.memory_space<vmem>>, vector<64x128xf32>
    %cst_281 = arith.constant dense<0.000000e+00> : vector<64xf32>
    %579 = vector.multi_reduction <add>, %578, %cst_281 [1] : vector<64x128xf32> to vector<64xf32>
    %580 = vector.shape_cast %579 : vector<64xf32> to vector<64x1xf32>
    %cst_282 = arith.constant 1.280000e+02 : f32
    %581 = vector.broadcast %cst_282 : f32 to vector<64x1xf32>
    %582 = arith.divf %580, %581 : vector<64x1xf32>
    %583 = arith.mulf %578, %578 : vector<64x128xf32>
    %cst_283 = arith.constant dense<0.000000e+00> : vector<64xf32>
    %584 = vector.multi_reduction <add>, %583, %cst_283 [1] : vector<64x128xf32> to vector<64xf32>
    %585 = vector.shape_cast %584 : vector<64xf32> to vector<64x1xf32>
    %cst_284 = arith.constant 1.280000e+02 : f32
    %586 = vector.broadcast %cst_284 : f32 to vector<64x1xf32>
    %587 = arith.divf %585, %586 : vector<64x1xf32>
    %588 = arith.mulf %582, %582 : vector<64x1xf32>
    %589 = arith.subf %587, %588 : vector<64x1xf32>
    %cst_285 = arith.constant 0.000000e+00 : f32
    %590 = vector.broadcast %cst_285 : f32 to vector<64x1xf32>
    %591 = arith.maximumf %589, %590 : vector<64x1xf32>
    %592 = vector.broadcast %582 : vector<64x1xf32> to vector<64x128xf32>
    %593 = arith.subf %578, %592 : vector<64x128xf32>
    %cst_286 = arith.constant 9.99999974E-6 : f32
    %594 = vector.broadcast %cst_286 : f32 to vector<64x1xf32>
    %595 = arith.addf %591, %594 : vector<64x1xf32>
    %596 = math.rsqrt %595 : vector<64x1xf32>
    %597 = vector.broadcast %596 : vector<64x1xf32> to vector<64x128xf32>
    %598 = arith.mulf %593, %597 : vector<64x128xf32>
    %599 = vector.broadcast %576 : vector<1x128xf32> to vector<64x128xf32>
    %600 = arith.mulf %598, %599 : vector<64x128xf32>
    %601 = vector.broadcast %577 : vector<1x128xf32> to vector<64x128xf32>
    %602 = arith.addf %600, %601 : vector<64x128xf32>
    %cst_287 = arith.constant dense<0.000000e+00> : vector<128xf32>
    %603 = vector.multi_reduction <add>, %602, %cst_287 [0] : vector<64x128xf32> to vector<128xf32>
    %604 = vector.shape_cast %603 : vector<128xf32> to vector<1x128xf32>
    %cst_288 = arith.constant 6.400000e+01 : f32
    %605 = vector.broadcast %cst_288 : f32 to vector<1x128xf32>
    %606 = arith.divf %604, %605 : vector<1x128xf32>
    %c64_289 = arith.constant 64 : index
    %c0_290 = arith.constant 0 : index
    %607 = vector.load %arg21[%c64_289, %c0_290] : memref<256x128xf32, #tpu.memory_space<vmem>>, vector<64x128xf32>
    %cst_291 = arith.constant dense<0.000000e+00> : vector<64xf32>
    %608 = vector.multi_reduction <add>, %607, %cst_291 [1] : vector<64x128xf32> to vector<64xf32>
    %609 = vector.shape_cast %608 : vector<64xf32> to vector<64x1xf32>
    %cst_292 = arith.constant 1.280000e+02 : f32
    %610 = vector.broadcast %cst_292 : f32 to vector<64x1xf32>
    %611 = arith.divf %609, %610 : vector<64x1xf32>
    %612 = arith.mulf %607, %607 : vector<64x128xf32>
    %cst_293 = arith.constant dense<0.000000e+00> : vector<64xf32>
    %613 = vector.multi_reduction <add>, %612, %cst_293 [1] : vector<64x128xf32> to vector<64xf32>
    %614 = vector.shape_cast %613 : vector<64xf32> to vector<64x1xf32>
    %cst_294 = arith.constant 1.280000e+02 : f32
    %615 = vector.broadcast %cst_294 : f32 to vector<64x1xf32>
    %616 = arith.divf %614, %615 : vector<64x1xf32>
    %617 = arith.mulf %611, %611 : vector<64x1xf32>
    %618 = arith.subf %616, %617 : vector<64x1xf32>
    %cst_295 = arith.constant 0.000000e+00 : f32
    %619 = vector.broadcast %cst_295 : f32 to vector<64x1xf32>
    %620 = arith.maximumf %618, %619 : vector<64x1xf32>
    %621 = vector.broadcast %611 : vector<64x1xf32> to vector<64x128xf32>
    %622 = arith.subf %607, %621 : vector<64x128xf32>
    %cst_296 = arith.constant 9.99999974E-6 : f32
    %623 = vector.broadcast %cst_296 : f32 to vector<64x1xf32>
    %624 = arith.addf %620, %623 : vector<64x1xf32>
    %625 = math.rsqrt %624 : vector<64x1xf32>
    %626 = vector.broadcast %625 : vector<64x1xf32> to vector<64x128xf32>
    %627 = arith.mulf %622, %626 : vector<64x128xf32>
    %628 = vector.broadcast %576 : vector<1x128xf32> to vector<64x128xf32>
    %629 = arith.mulf %627, %628 : vector<64x128xf32>
    %630 = vector.broadcast %577 : vector<1x128xf32> to vector<64x128xf32>
    %631 = arith.addf %629, %630 : vector<64x128xf32>
    %cst_297 = arith.constant dense<0.000000e+00> : vector<128xf32>
    %632 = vector.multi_reduction <add>, %631, %cst_297 [0] : vector<64x128xf32> to vector<128xf32>
    %633 = vector.shape_cast %632 : vector<128xf32> to vector<1x128xf32>
    %cst_298 = arith.constant 6.400000e+01 : f32
    %634 = vector.broadcast %cst_298 : f32 to vector<1x128xf32>
    %635 = arith.divf %633, %634 : vector<1x128xf32>
    %c128_299 = arith.constant 128 : index
    %c0_300 = arith.constant 0 : index
    %636 = vector.load %arg21[%c128_299, %c0_300] : memref<256x128xf32, #tpu.memory_space<vmem>>, vector<64x128xf32>
    %cst_301 = arith.constant dense<0.000000e+00> : vector<64xf32>
    %637 = vector.multi_reduction <add>, %636, %cst_301 [1] : vector<64x128xf32> to vector<64xf32>
    %638 = vector.shape_cast %637 : vector<64xf32> to vector<64x1xf32>
    %cst_302 = arith.constant 1.280000e+02 : f32
    %639 = vector.broadcast %cst_302 : f32 to vector<64x1xf32>
    %640 = arith.divf %638, %639 : vector<64x1xf32>
    %641 = arith.mulf %636, %636 : vector<64x128xf32>
    %cst_303 = arith.constant dense<0.000000e+00> : vector<64xf32>
    %642 = vector.multi_reduction <add>, %641, %cst_303 [1] : vector<64x128xf32> to vector<64xf32>
    %643 = vector.shape_cast %642 : vector<64xf32> to vector<64x1xf32>
    %cst_304 = arith.constant 1.280000e+02 : f32
    %644 = vector.broadcast %cst_304 : f32 to vector<64x1xf32>
    %645 = arith.divf %643, %644 : vector<64x1xf32>
    %646 = arith.mulf %640, %640 : vector<64x1xf32>
    %647 = arith.subf %645, %646 : vector<64x1xf32>
    %cst_305 = arith.constant 0.000000e+00 : f32
    %648 = vector.broadcast %cst_305 : f32 to vector<64x1xf32>
    %649 = arith.maximumf %647, %648 : vector<64x1xf32>
    %650 = vector.broadcast %640 : vector<64x1xf32> to vector<64x128xf32>
    %651 = arith.subf %636, %650 : vector<64x128xf32>
    %cst_306 = arith.constant 9.99999974E-6 : f32
    %652 = vector.broadcast %cst_306 : f32 to vector<64x1xf32>
    %653 = arith.addf %649, %652 : vector<64x1xf32>
    %654 = math.rsqrt %653 : vector<64x1xf32>
    %655 = vector.broadcast %654 : vector<64x1xf32> to vector<64x128xf32>
    %656 = arith.mulf %651, %655 : vector<64x128xf32>
    %657 = vector.broadcast %576 : vector<1x128xf32> to vector<64x128xf32>
    %658 = arith.mulf %656, %657 : vector<64x128xf32>
    %659 = vector.broadcast %577 : vector<1x128xf32> to vector<64x128xf32>
    %660 = arith.addf %658, %659 : vector<64x128xf32>
    %cst_307 = arith.constant dense<0.000000e+00> : vector<128xf32>
    %661 = vector.multi_reduction <add>, %660, %cst_307 [0] : vector<64x128xf32> to vector<128xf32>
    %662 = vector.shape_cast %661 : vector<128xf32> to vector<1x128xf32>
    %cst_308 = arith.constant 6.400000e+01 : f32
    %663 = vector.broadcast %cst_308 : f32 to vector<1x128xf32>
    %664 = arith.divf %662, %663 : vector<1x128xf32>
    %c192_309 = arith.constant 192 : index
    %c0_310 = arith.constant 0 : index
    %665 = vector.load %arg21[%c192_309, %c0_310] : memref<256x128xf32, #tpu.memory_space<vmem>>, vector<64x128xf32>
    %cst_311 = arith.constant dense<0.000000e+00> : vector<64xf32>
    %666 = vector.multi_reduction <add>, %665, %cst_311 [1] : vector<64x128xf32> to vector<64xf32>
    %667 = vector.shape_cast %666 : vector<64xf32> to vector<64x1xf32>
    %cst_312 = arith.constant 1.280000e+02 : f32
    %668 = vector.broadcast %cst_312 : f32 to vector<64x1xf32>
    %669 = arith.divf %667, %668 : vector<64x1xf32>
    %670 = arith.mulf %665, %665 : vector<64x128xf32>
    %cst_313 = arith.constant dense<0.000000e+00> : vector<64xf32>
    %671 = vector.multi_reduction <add>, %670, %cst_313 [1] : vector<64x128xf32> to vector<64xf32>
    %672 = vector.shape_cast %671 : vector<64xf32> to vector<64x1xf32>
    %cst_314 = arith.constant 1.280000e+02 : f32
    %673 = vector.broadcast %cst_314 : f32 to vector<64x1xf32>
    %674 = arith.divf %672, %673 : vector<64x1xf32>
    %675 = arith.mulf %669, %669 : vector<64x1xf32>
    %676 = arith.subf %674, %675 : vector<64x1xf32>
    %cst_315 = arith.constant 0.000000e+00 : f32
    %677 = vector.broadcast %cst_315 : f32 to vector<64x1xf32>
    %678 = arith.maximumf %676, %677 : vector<64x1xf32>
    %679 = vector.broadcast %669 : vector<64x1xf32> to vector<64x128xf32>
    %680 = arith.subf %665, %679 : vector<64x128xf32>
    %cst_316 = arith.constant 9.99999974E-6 : f32
    %681 = vector.broadcast %cst_316 : f32 to vector<64x1xf32>
    %682 = arith.addf %678, %681 : vector<64x1xf32>
    %683 = math.rsqrt %682 : vector<64x1xf32>
    %684 = vector.broadcast %683 : vector<64x1xf32> to vector<64x128xf32>
    %685 = arith.mulf %680, %684 : vector<64x128xf32>
    %686 = vector.broadcast %576 : vector<1x128xf32> to vector<64x128xf32>
    %687 = arith.mulf %685, %686 : vector<64x128xf32>
    %688 = vector.broadcast %577 : vector<1x128xf32> to vector<64x128xf32>
    %689 = arith.addf %687, %688 : vector<64x128xf32>
    %cst_317 = arith.constant dense<0.000000e+00> : vector<128xf32>
    %690 = vector.multi_reduction <add>, %689, %cst_317 [0] : vector<64x128xf32> to vector<128xf32>
    %691 = vector.shape_cast %690 : vector<128xf32> to vector<1x128xf32>
    %cst_318 = arith.constant 6.400000e+01 : f32
    %692 = vector.broadcast %cst_318 : f32 to vector<1x128xf32>
    %693 = arith.divf %691, %692 : vector<1x128xf32>
    %694 = tpu.concatenate %606, %635, %664, %693 in 0 : vector<1x128xf32>, vector<1x128xf32>, vector<1x128xf32>, vector<1x128xf32> -> vector<4x128xf32>
    %c0_319 = arith.constant 0 : index
    %c0_320 = arith.constant 0 : index
    %695 = vector.load %arg18[%c0_319, %c0_320] : memref<128x128xf32, #tpu.memory_space<vmem>>, vector<128x128xf32>
    %cst_321 = arith.constant dense<0.000000e+00> : vector<4x128xf32>
    %696 = tpu.matmul %694, %695, %cst_321 {dimension_numbers = #tpu.dot_dimension_numbers<[1], [0], [0], [1], [0, 0, 1, 1], [], []>} : vector<4x128xf32>, vector<128x128xf32>, vector<4x128xf32> -> vector<4x128xf32>
    %c0_322 = arith.constant 0 : index
    %c0_323 = arith.constant 0 : index
    %697 = vector.load %arg19[%c0_322, %c0_323] : memref<1x128xf32, #tpu.memory_space<vmem>>, vector<1x128xf32>
    %698 = vector.broadcast %697 : vector<1x128xf32> to vector<4x128xf32>
    %699 = arith.addf %696, %698 : vector<4x128xf32>
    %c0_324 = arith.constant 0 : index
    %c0_325 = arith.constant 0 : index
    %c0_326 = arith.constant 0 : index
    %700 = vector.load %arg20[%c0_324, %c0_325, %c0_326] : memref<1x4x128xf32, #tpu.memory_space<vmem>>, vector<1x4x128xf32>
    %701 = vector.shape_cast %700 : vector<1x4x128xf32> to vector<4x128xf32>
    %702 = vector.shape_cast %699 : vector<4x128xf32> to vector<1x4x128xf32>
    tpu.vector_store %arg20[%c0_324, %c0_325, %c0_326], %702 {strides = array<i32>} : memref<1x4x128xf32, #tpu.memory_space<vmem>>, vector<1x4x128xf32>,
    return
  }
  func.func @transform_0(%arg0: i32) -> (i32, i32) {
    %c0_i32 = arith.constant 0 : i32
    %c0_i32_0 = arith.constant 0 : i32
    return %arg0, %c0_i32 : i32, i32
  }
  func.func @transform_1(%arg0: i32) -> (i32, i32) {
    %c0_i32 = arith.constant 0 : i32
    %c0_i32_0 = arith.constant 0 : i32
    %c0_i32_1 = arith.constant 0 : i32
    return %c0_i32, %c0_i32_0 : i32, i32
  }
  func.func @transform_2(%arg0: i32) -> (i32, i32) {
    %c0_i32 = arith.constant 0 : i32
    %c0_i32_0 = arith.constant 0 : i32
    %c0_i32_1 = arith.constant 0 : i32
    return %c0_i32, %c0_i32_0 : i32, i32
  }
  func.func @transform_3(%arg0: i32) -> (i32, i32, i32) {
    %c0_i32 = arith.constant 0 : i32
    %c0_i32_0 = arith.constant 0 : i32
    %c0_i32_1 = arith.constant 0 : i32
    %c0_i32_2 = arith.constant 0 : i32
    return %c0_i32, %c0_i32_0, %c0_i32_1 : i32, i32, i32
  }
  func.func @transform_4(%arg0: i32) -> (i32, i32, i32) {
    %c0_i32 = arith.constant 0 : i32
    %c0_i32_0 = arith.constant 0 : i32
    %c0_i32_1 = arith.constant 0 : i32
    %c0_i32_2 = arith.constant 0 : i32
    return %c0_i32, %c0_i32_0, %c0_i32_1 : i32, i32, i32
  }
  func.func @transform_5(%arg0: i32) -> (i32, i32, i32) {
    %c0_i32 = arith.constant 0 : i32
    %c0_i32_0 = arith.constant 0 : i32
    %c0_i32_1 = arith.constant 0 : i32
    %c0_i32_2 = arith.constant 0 : i32
    return %c0_i32, %c0_i32_0, %c0_i32_1 : i32, i32, i32
  }
  func.func @transform_6(%arg0: i32) -> (i32, i32, i32) {
    %c0_i32 = arith.constant 0 : i32
    %c0_i32_0 = arith.constant 0 : i32
    %c0_i32_1 = arith.constant 0 : i32
    %c0_i32_2 = arith.constant 0 : i32
    return %c0_i32, %c0_i32_0, %c0_i32_1 : i32, i32, i32
  }
  func.func @transform_7(%arg0: i32) -> (i32, i32, i32) {
    %c0_i32 = arith.constant 0 : i32
    %c0_i32_0 = arith.constant 0 : i32
    %c0_i32_1 = arith.constant 0 : i32
    %c0_i32_2 = arith.constant 0 : i32
    return %c0_i32, %c0_i32_0, %c0_i32_1 : i32, i32, i32
  }
  func.func @transform_8(%arg0: i32) -> (i32, i32, i32) {
    %c0_i32 = arith.constant 0 : i32
    %c0_i32_0 = arith.constant 0 : i32
    %c0_i32_1 = arith.constant 0 : i32
    %c0_i32_2 = arith.constant 0 : i32
    return %c0_i32, %c0_i32_0, %c0_i32_1 : i32, i32, i32
  }
  func.func @transform_9(%arg0: i32) -> (i32, i32, i32) {
    %c0_i32 = arith.constant 0 : i32
    %c0_i32_0 = arith.constant 0 : i32
    %c0_i32_1 = arith.constant 0 : i32
    %c0_i32_2 = arith.constant 0 : i32
    return %c0_i32, %c0_i32_0, %c0_i32_1 : i32, i32, i32
  }
  func.func @transform_10(%arg0: i32) -> (i32, i32, i32) {
    %c0_i32 = arith.constant 0 : i32
    %c0_i32_0 = arith.constant 0 : i32
    %c0_i32_1 = arith.constant 0 : i32
    %c0_i32_2 = arith.constant 0 : i32
    return %c0_i32, %c0_i32_0, %c0_i32_1 : i32, i32, i32
  }
  func.func @transform_11(%arg0: i32) -> (i32, i32, i32) {
    %c0_i32 = arith.constant 0 : i32
    %c0_i32_0 = arith.constant 0 : i32
    %c0_i32_1 = arith.constant 0 : i32
    %c0_i32_2 = arith.constant 0 : i32
    return %c0_i32, %c0_i32_0, %c0_i32_1 : i32, i32, i32
  }
  func.func @transform_12(%arg0: i32) -> (i32, i32, i32) {
    %c0_i32 = arith.constant 0 : i32
    %c0_i32_0 = arith.constant 0 : i32
    %c0_i32_1 = arith.constant 0 : i32
    %c0_i32_2 = arith.constant 0 : i32
    return %c0_i32, %c0_i32_0, %c0_i32_1 : i32, i32, i32
  }
  func.func @transform_13(%arg0: i32) -> (i32, i32, i32) {
    %c0_i32 = arith.constant 0 : i32
    %c0_i32_0 = arith.constant 0 : i32
    %c0_i32_1 = arith.constant 0 : i32
    %c0_i32_2 = arith.constant 0 : i32
    return %c0_i32, %c0_i32_0, %c0_i32_1 : i32, i32, i32
  }
  func.func @transform_14(%arg0: i32) -> (i32, i32, i32) {
    %c0_i32 = arith.constant 0 : i32
    %c0_i32_0 = arith.constant 0 : i32
    %c0_i32_1 = arith.constant 0 : i32
    %c0_i32_2 = arith.constant 0 : i32
    return %c0_i32, %c0_i32_0, %c0_i32_1 : i32, i32, i32
  }
  func.func @transform_15(%arg0: i32) -> (i32, i32) {
    %c0_i32 = arith.constant 0 : i32
    %c0_i32_0 = arith.constant 0 : i32
    %c0_i32_1 = arith.constant 0 : i32
    return %c0_i32, %c0_i32_0 : i32, i32
  }
  func.func @transform_16(%arg0: i32) -> (i32, i32) {
    %c0_i32 = arith.constant 0 : i32
    %c0_i32_0 = arith.constant 0 : i32
    %c0_i32_1 = arith.constant 0 : i32
    return %c0_i32, %c0_i32_0 : i32, i32
  }
  func.func @transform_17(%arg0: i32) -> (i32, i32) {
    %c0_i32 = arith.constant 0 : i32
    %c0_i32_0 = arith.constant 0 : i32
    %c0_i32_1 = arith.constant 0 : i32
    return %c0_i32, %c0_i32_0 : i32, i32
  }
  func.func @transform_18(%arg0: i32) -> (i32, i32) {
    %c0_i32 = arith.constant 0 : i32
    %c0_i32_0 = arith.constant 0 : i32
    %c0_i32_1 = arith.constant 0 : i32
    return %c0_i32, %c0_i32_0 : i32, i32
  }
  func.func @transform_19(%arg0: i32) -> (i32, i32, i32) {
    %c0_i32 = arith.constant 0 : i32
    %c0_i32_0 = arith.constant 0 : i32
    %c0_i32_1 = arith.constant 0 : i32
    return %arg0, %c0_i32, %c0_i32_0 : i32, i32, i32
  }
}

</mosaic_0001>

<llo_original>
// kernel: _lambda_.1
$region0: #{_lambda_.1}
  #allocation0 [shape = 'u32[]', space=smem, size = 0x4, offset = 0x4, fixed_abs, tag = 'smem constant byte address 0x4 - core index']
  #allocation1 [shape = 'u32[144,128]{1,0:T(1,128)}', space=vmem, size = 0x12000, scoped, tag = 'internal scratch']
  #allocation2 [shape = 'f32[256,128]{1,0:T(8,128)}', space=vmem, size = 0x20000, scoped, tag = 'scratch operand']
  %s0 = inlined_call_operand.vmem [shape: f32[512,128], index: 0, kind: input, shape index: {}]
  %s1 = inlined_call_operand.vmem [shape: bf16[128,128], index: 1, kind: input, shape index: {}]
  %s2 = inlined_call_operand.vmem [shape: f32[1,128], index: 2, kind: input, shape index: {}]
  %s3 = inlined_call_operand.vmem [shape: f32[2,1,128], index: 3, kind: input, shape index: {}]
  %s4 = inlined_call_operand.vmem [shape: f32[2,1,128], index: 4, kind: input, shape index: {}]
  %s5 = inlined_call_operand.vmem [shape: bf16[2,128,64], index: 5, kind: input, shape index: {}]
  %s6 = inlined_call_operand.vmem [shape: f32[2,128,1], index: 6, kind: input, shape index: {}]
  %s7 = inlined_call_operand.vmem [shape: bf16[2,64,128], index: 7, kind: input, shape index: {}]
  %s8 = inlined_call_operand.vmem [shape: f32[2,64,1], index: 8, kind: input, shape index: {}]
  %s9 = inlined_call_operand.vmem [shape: f32[2,1,128], index: 9, kind: input, shape index: {}]
  %s10 = inlined_call_operand.vmem [shape: f32[2,1,128], index: 10, kind: input, shape index: {}]
  %s11 = inlined_call_operand.vmem [shape: bf16[2,128,256], index: 11, kind: input, shape index: {}]
  %s12 = inlined_call_operand.vmem [shape: f32[2,1,256], index: 12, kind: input, shape index: {}]
  %s13 = inlined_call_operand.vmem [shape: bf16[2,256,128], index: 13, kind: input, shape index: {}]
  %s14 = inlined_call_operand.vmem [shape: f32[2,1,128], index: 14, kind: input, shape index: {}]
  %s15 = inlined_call_operand.vmem [shape: f32[1,128], index: 15, kind: input, shape index: {}]
  %s16 = inlined_call_operand.vmem [shape: f32[1,128], index: 16, kind: input, shape index: {}]
  %s17 = inlined_call_operand.vmem [shape: f32[128,128], index: 17, kind: input, shape index: {}]
  %s18 = inlined_call_operand.vmem [shape: f32[1,128], index: 18, kind: input, shape index: {}]
  %s19 = inlined_call_operand.hbm [shape: f32[2,4,128], index: 19, kind: output, shape index: {}]
  %s20 = sld [smem:[#allocation0]]
  $region109: #{_lambda_.1} parent=0
    _
  %s22 = ssub.s32 1, %s20
  %s23 = scalar_select 0, %s22, %s20
  $region1: #{_lambda_.1} parent=0
    #allocation3 [shape = 'u8[4096]{0}', space=vmem, size = 0x1000, scoped, tag = 'output window, operand 0']
    #allocation4 [shape = 's32[2]{0}', space=sflag, size = 0x8, scoped, tag = 'scoped memory for _lambda_.1']
    %24 = vsyncpa [#allocation4], 0
    %s25 = scalar_lea.sflag [#allocation4], 1
    %26 = vsyncpa %s25, 0
    loop: start=0, step=1, limit=4
    $region2: #{_lambda_.1} parent=1 // loop_pre_header
      _
    $region3: #{_lambda_.1} parent=1 // loop_header
      %s28 = sphi 0, %s32
      %p29 = scmp.ge.s32.totalorder %s28, 4
      %s38 = sphi 0, %s40
      %s41 = sphi 0, %s38
      %s42 = sphi 0, %s41
      %s58 = sphi 0, %s42
      %s62 = sphi 0, %s62
      %s64 = sphi 0, %s62
      %s65 = sphi 0, %s64
      %s79 = sphi 0, %s65
      %s83 = sphi 0, %s83
      %s85 = sphi 0, %s83
      %s86 = sphi 0, %s85
      %s100 = sphi 0, %s86
      %s104 = sphi 0, %s104
      %s106 = sphi 0, %s104
      %s107 = sphi 0, %s106
      %s121 = sphi 0, %s107
      %s125 = sphi 0, %s125
      %s127 = sphi 0, %s125
      %s128 = sphi 0, %s127
      %s142 = sphi 0, %s128
      %s146 = sphi 0, %s146
      %s148 = sphi 0, %s146
      %s149 = sphi 0, %s148
      %s163 = sphi 0, %s149
      %s167 = sphi 0, %s167
      %s169 = sphi 0, %s167
      %s170 = sphi 0, %s169
      %s184 = sphi 0, %s170
      %s188 = sphi 0, %s188
      %s190 = sphi 0, %s188
      %s191 = sphi 0, %s190
      %s205 = sphi 0, %s191
      %s209 = sphi 0, %s209
      %s211 = sphi 0, %s209
      %s212 = sphi 0, %s211
      %s226 = sphi 0, %s212
      %s230 = sphi 0, %s230
      %s232 = sphi 0, %s230
      %s233 = sphi 0, %s232
      %s247 = sphi 0, %s233
      %s251 = sphi 0, %s251
      %s253 = sphi 0, %s251
      %s254 = sphi 0, %s253
      %s268 = sphi 0, %s254
      %s272 = sphi 0, %s272
      %s274 = sphi 0, %s272
      %s275 = sphi 0, %s274
      %s289 = sphi 0, %s275
      %s293 = sphi 0, %s293
      %s295 = sphi 0, %s293
      %s296 = sphi 0, %s295
      %s310 = sphi 0, %s296
      %s314 = sphi 0, %s314
      %s316 = sphi 0, %s314
      %s317 = sphi 0, %s316
      %s331 = sphi 0, %s317
      %s335 = sphi 0, %s335
      %s337 = sphi 0, %s335
      %s338 = sphi 0, %s337
      %s352 = sphi 0, %s338
      %s356 = sphi 0, %s356
      %s358 = sphi 0, %s356
      %s359 = sphi 0, %s358
      %s373 = sphi 0, %s359
      %s377 = sphi 0, %s377
      %s379 = sphi 0, %s377
      %s380 = sphi 0, %s379
      %s394 = sphi 0, %s380
      %s398 = sphi 0, %s398
      %s400 = sphi 0, %s398
      %s401 = sphi 0, %s400
      %s415 = sphi 0, %s401
      %s419 = sphi 0, %s419
      %s421 = sphi 0, %s419
      %s422 = sphi 0, %s421
      %s436 = sphi 0, %s422
      %s442 = sphi 0, %s444
      %s445 = sphi 0, %s442
      %s446 = sphi 0, %s445
      %s462 = sphi 0, %s446
    $region4: #{_lambda_.1} parent=1 // loop_header_branch
      %31 = sbr.rel (%p29) target = $region8
    $region5: #{_lambda_.1} parent=1 // loop_body
      %s33 = ssub.s32 %s28, 1
      %s34 = ssub.s32 %s28, 2
      %s35 = sadd.s32 %s28, 1
      %s36 = ssub.s32 %s28, %s35
      %p37 = scmp.eq.s32.totalorder %s36, 0
      %s39 = sadd.s32 %s38, 1
      %s40 = scalar_select %p37, %s38, %s39
      %p43 = pneg %p37
      %p44 = scmp.eq.s32.totalorder %s28, 1
      %p45 = por %p43, %p44
      %p46 = scmp.ne.s32.totalorder %s38, %s41
      %p47 = scmp.eq.s32.totalorder %s28, 0
      %p48 = por %p46, %p47
      %p49 = scmp.ne.s32.totalorder %s38, %s41
      %p50 = scmp.eq.s32.totalorder %s33, 1
      %p51 = por %p49, %p50
      %p52 = scmp.ne.s32.totalorder %s41, %s42
      %p53 = scmp.eq.s32.totalorder %s33, 0
      %p54 = por %p52, %p53
      %p55 = scmp.ne.s32.totalorder %s41, %s42
      %p56 = scmp.eq.s32.totalorder %s34, 1
      %p57 = por %p55, %p56
      %p59 = scmp.ne.s32.totalorder %s42, %s58
      %p60 = scmp.eq.s32.totalorder %s34, 0
      %p61 = por %p59, %p60
      %s63 = sadd.s32 %s62, 1
      %p66 = scmp.eq.s32.totalorder %s28, 1
      %p67 = scmp.ne.s32.totalorder %s62, %s64
      %p68 = scmp.eq.s32.totalorder %s28, 0
      %p69 = por %p67, %p68
      %p70 = scmp.ne.s32.totalorder %s62, %s64
      %p71 = scmp.eq.s32.totalorder %s33, 1
      %p72 = por %p70, %p71
      %p73 = scmp.ne.s32.totalorder %s64, %s65
      %p74 = scmp.eq.s32.totalorder %s33, 0
      %p75 = por %p73, %p74
      %p76 = scmp.ne.s32.totalorder %s64, %s65
      %p77 = scmp.eq.s32.totalorder %s34, 1
      %p78 = por %p76, %p77
      %p80 = scmp.ne.s32.totalorder %s65, %s79
      %p81 = scmp.eq.s32.totalorder %s34, 0
      %p82 = por %p80, %p81
      %s84 = sadd.s32 %s83, 1
      %p87 = scmp.eq.s32.totalorder %s28, 1
      %p88 = scmp.ne.s32.totalorder %s83, %s85
      %p89 = scmp.eq.s32.totalorder %s28, 0
      %p90 = por %p88, %p89
      %p91 = scmp.ne.s32.totalorder %s83, %s85
      %p92 = scmp.eq.s32.totalorder %s33, 1
      %p93 = por %p91, %p92
      %p94 = scmp.ne.s32.totalorder %s85, %s86
      %p95 = scmp.eq.s32.totalorder %s33, 0
      %p96 = por %p94, %p95
      %p97 = scmp.ne.s32.totalorder %s85, %s86
      %p98 = scmp.eq.s32.totalorder %s34, 1
      %p99 = por %p97, %p98
      %p101 = scmp.ne.s32.totalorder %s86, %s100
      %p102 = scmp.eq.s32.totalorder %s34, 0
      %p103 = por %p101, %p102
      %s105 = sadd.s32 %s104, 1
      %p108 = scmp.eq.s32.totalorder %s28, 1
      %p109 = scmp.ne.s32.totalorder %s104, %s106
      %p110 = scmp.eq.s32.totalorder %s28, 0
      %p111 = por %p109, %p110
      %p112 = scmp.ne.s32.totalorder %s104, %s106
      %p113 = scmp.eq.s32.totalorder %s33, 1
      %p114 = por %p112, %p113
      %p115 = scmp.ne.s32.totalorder %s106, %s107
      %p116 = scmp.eq.s32.totalorder %s33, 0
      %p117 = por %p115, %p116
      %p118 = scmp.ne.s32.totalorder %s106, %s107
      %p119 = scmp.eq.s32.totalorder %s34, 1
      %p120 = por %p118, %p119
      %p122 = scmp.ne.s32.totalorder %s107, %s121
      %p123 = scmp.eq.s32.totalorder %s34, 0
      %p124 = por %p122, %p123
      %s126 = sadd.s32 %s125, 1
      %p129 = scmp.eq.s32.totalorder %s28, 1
      %p130 = scmp.ne.s32.totalorder %s125, %s127
      %p131 = scmp.eq.s32.totalorder %s28, 0
      %p132 = por %p130, %p131
      %p133 = scmp.ne.s32.totalorder %s125, %s127
      %p134 = scmp.eq.s32.totalorder %s33, 1
      %p135 = por %p133, %p134
      %p136 = scmp.ne.s32.totalorder %s127, %s128
      %p137 = scmp.eq.s32.totalorder %s33, 0
      %p138 = por %p136, %p137
      %p139 = scmp.ne.s32.totalorder %s127, %s128
      %p140 = scmp.eq.s32.totalorder %s34, 1
      %p141 = por %p139, %p140
      %p143 = scmp.ne.s32.totalorder %s128, %s142
      %p144 = scmp.eq.s32.totalorder %s34, 0
      %p145 = por %p143, %p144
      %s147 = sadd.s32 %s146, 1
      %p150 = scmp.eq.s32.totalorder %s28, 1
      %p151 = scmp.ne.s32.totalorder %s146, %s148
      %p152 = scmp.eq.s32.totalorder %s28, 0
      %p153 = por %p151, %p152
      %p154 = scmp.ne.s32.totalorder %s146, %s148
      %p155 = scmp.eq.s32.totalorder %s33, 1
      %p156 = por %p154, %p155
      %p157 = scmp.ne.s32.totalorder %s148, %s149
      %p158 = scmp.eq.s32.totalorder %s33, 0
      %p159 = por %p157, %p158
      %p160 = scmp.ne.s32.totalorder %s148, %s149
      %p161 = scmp.eq.s32.totalorder %s34, 1
      %p162 = por %p160, %p161
      %p164 = scmp.ne.s32.totalorder %s149, %s163
      %p165 = scmp.eq.s32.totalorder %s34, 0
      %p166 = por %p164, %p165
      %s168 = sadd.s32 %s167, 1
      %p171 = scmp.eq.s32.totalorder %s28, 1
      %p172 = scmp.ne.s32.totalorder %s167, %s169
      %p173 = scmp.eq.s32.totalorder %s28, 0
      %p174 = por %p172, %p173
      %p175 = scmp.ne.s32.totalorder %s167, %s169
      %p176 = scmp.eq.s32.totalorder %s33, 1
      %p177 = por %p175, %p176
      %p178 = scmp.ne.s32.totalorder %s169, %s170
      %p179 = scmp.eq.s32.totalorder %s33, 0
      %p180 = por %p178, %p179
      %p181 = scmp.ne.s32.totalorder %s169, %s170
      %p182 = scmp.eq.s32.totalorder %s34, 1
      %p183 = por %p181, %p182
      %p185 = scmp.ne.s32.totalorder %s170, %s184
      %p186 = scmp.eq.s32.totalorder %s34, 0
      %p187 = por %p185, %p186
      %s189 = sadd.s32 %s188, 1
      %p192 = scmp.eq.s32.totalorder %s28, 1
      %p193 = scmp.ne.s32.totalorder %s188, %s190
      %p194 = scmp.eq.s32.totalorder %s28, 0
      %p195 = por %p193, %p194
      %p196 = scmp.ne.s32.totalorder %s188, %s190
      %p197 = scmp.eq.s32.totalorder %s33, 1
      %p198 = por %p196, %p197
      %p199 = scmp.ne.s32.totalorder %s190, %s191
      %p200 = scmp.eq.s32.totalorder %s33, 0
      %p201 = por %p199, %p200
      %p202 = scmp.ne.s32.totalorder %s190, %s191
      %p203 = scmp.eq.s32.totalorder %s34, 1
      %p204 = por %p202, %p203
      %p206 = scmp.ne.s32.totalorder %s191, %s205
      %p207 = scmp.eq.s32.totalorder %s34, 0
      %p208 = por %p206, %p207
      %s210 = sadd.s32 %s209, 1
      %p213 = scmp.eq.s32.totalorder %s28, 1
      %p214 = scmp.ne.s32.totalorder %s209, %s211
      %p215 = scmp.eq.s32.totalorder %s28, 0
      %p216 = por %p214, %p215
      %p217 = scmp.ne.s32.totalorder %s209, %s211
      %p218 = scmp.eq.s32.totalorder %s33, 1
      %p219 = por %p217, %p218
      %p220 = scmp.ne.s32.totalorder %s211, %s212
      %p221 = scmp.eq.s32.totalorder %s33, 0
      %p222 = por %p220, %p221
      %p223 = scmp.ne.s32.totalorder %s211, %s212
      %p224 = scmp.eq.s32.totalorder %s34, 1
      %p225 = por %p223, %p224
      %p227 = scmp.ne.s32.totalorder %s212, %s226
      %p228 = scmp.eq.s32.totalorder %s34, 0
      %p229 = por %p227, %p228
      %s231 = sadd.s32 %s230, 1
      %p234 = scmp.eq.s32.totalorder %s28, 1
      %p235 = scmp.ne.s32.totalorder %s230, %s232
      %p236 = scmp.eq.s32.totalorder %s28, 0
      %p237 = por %p235, %p236
      %p238 = scmp.ne.s32.totalorder %s230, %s232
      %p239 = scmp.eq.s32.totalorder %s33, 1
      %p240 = por %p238, %p239
      %p241 = scmp.ne.s32.totalorder %s232, %s233
      %p242 = scmp.eq.s32.totalorder %s33, 0
      %p243 = por %p241, %p242
      %p244 = scmp.ne.s32.totalorder %s232, %s233
      %p245 = scmp.eq.s32.totalorder %s34, 1
      %p246 = por %p244, %p245
      %p248 = scmp.ne.s32.totalorder %s233, %s247
      %p249 = scmp.eq.s32.totalorder %s34, 0
      %p250 = por %p248, %p249
      %s252 = sadd.s32 %s251, 1
      %p255 = scmp.eq.s32.totalorder %s28, 1
      %p256 = scmp.ne.s32.totalorder %s251, %s253
      %p257 = scmp.eq.s32.totalorder %s28, 0
      %p258 = por %p256, %p257
      %p259 = scmp.ne.s32.totalorder %s251, %s253
      %p260 = scmp.eq.s32.totalorder %s33, 1
      %p261 = por %p259, %p260
      %p262 = scmp.ne.s32.totalorder %s253, %s254
      %p263 = scmp.eq.s32.totalorder %s33, 0
      %p264 = por %p262, %p263
      %p265 = scmp.ne.s32.totalorder %s253, %s254
      %p266 = scmp.eq.s32.totalorder %s34, 1
      %p267 = por %p265, %p266
      %p269 = scmp.ne.s32.totalorder %s254, %s268
      %p270 = scmp.eq.s32.totalorder %s34, 0
      %p271 = por %p269, %p270
      %s273 = sadd.s32 %s272, 1
      %p276 = scmp.eq.s32.totalorder %s28, 1
      %p277 = scmp.ne.s32.totalorder %s272, %s274
      %p278 = scmp.eq.s32.totalorder %s28, 0
      %p279 = por %p277, %p278
      %p280 = scmp.ne.s32.totalorder %s272, %s274
      %p281 = scmp.eq.s32.totalorder %s33, 1
      %p282 = por %p280, %p281
      %p283 = scmp.ne.s32.totalorder %s274, %s275
      %p284 = scmp.eq.s32.totalorder %s33, 0
      %p285 = por %p283, %p284
      %p286 = scmp.ne.s32.totalorder %s274, %s275
      %p287 = scmp.eq.s32.totalorder %s34, 1
      %p288 = por %p286, %p287
      %p290 = scmp.ne.s32.totalorder %s275, %s289
      %p291 = scmp.eq.s32.totalorder %s34, 0
      %p292 = por %p290, %p291
      %s294 = sadd.s32 %s293, 1
      %p297 = scmp.eq.s32.totalorder %s28, 1
      %p298 = scmp.ne.s32.totalorder %s293, %s295
      %p299 = scmp.eq.s32.totalorder %s28, 0
      %p300 = por %p298, %p299
      %p301 = scmp.ne.s32.totalorder %s293, %s295
      %p302 = scmp.eq.s32.totalorder %s33, 1
      %p303 = por %p301, %p302
      %p304 = scmp.ne.s32.totalorder %s295, %s296
      %p305 = scmp.eq.s32.totalorder %s33, 0
      %p306 = por %p304, %p305
      %p307 = scmp.ne.s32.totalorder %s295, %s296
      %p308 = scmp.eq.s32.totalorder %s34, 1
      %p309 = por %p307, %p308
      %p311 = scmp.ne.s32.totalorder %s296, %s310
      %p312 = scmp.eq.s32.totalorder %s34, 0
      %p313 = por %p311, %p312
      %s315 = sadd.s32 %s314, 1
      %p318 = scmp.eq.s32.totalorder %s28, 1
      %p319 = scmp.ne.s32.totalorder %s314, %s316
      %p320 = scmp.eq.s32.totalorder %s28, 0
      %p321 = por %p319, %p320
      %p322 = scmp.ne.s32.totalorder %s314, %s316
      %p323 = scmp.eq.s32.totalorder %s33, 1
      %p324 = por %p322, %p323
      %p325 = scmp.ne.s32.totalorder %s316, %s317
      %p326 = scmp.eq.s32.totalorder %s33, 0
      %p327 = por %p325, %p326
      %p328 = scmp.ne.s32.totalorder %s316, %s317
      %p329 = scmp.eq.s32.totalorder %s34, 1
      %p330 = por %p328, %p329
      %p332 = scmp.ne.s32.totalorder %s317, %s331
      %p333 = scmp.eq.s32.totalorder %s34, 0
      %p334 = por %p332, %p333
      %s336 = sadd.s32 %s335, 1
      %p339 = scmp.eq.s32.totalorder %s28, 1
      %p340 = scmp.ne.s32.totalorder %s335, %s337
      %p341 = scmp.eq.s32.totalorder %s28, 0
      %p342 = por %p340, %p341
      %p343 = scmp.ne.s32.totalorder %s335, %s337
      %p344 = scmp.eq.s32.totalorder %s33, 1
      %p345 = por %p343, %p344
      %p346 = scmp.ne.s32.totalorder %s337, %s338
      %p347 = scmp.eq.s32.totalorder %s33, 0
      %p348 = por %p346, %p347
      %p349 = scmp.ne.s32.totalorder %s337, %s338
      %p350 = scmp.eq.s32.totalorder %s34, 1
      %p351 = por %p349, %p350
      %p353 = scmp.ne.s32.totalorder %s338, %s352
      %p354 = scmp.eq.s32.totalorder %s34, 0
      %p355 = por %p353, %p354
      %s357 = sadd.s32 %s356, 1
      %p360 = scmp.eq.s32.totalorder %s28, 1
      %p361 = scmp.ne.s32.totalorder %s356, %s358
      %p362 = scmp.eq.s32.totalorder %s28, 0
      %p363 = por %p361, %p362
      %p364 = scmp.ne.s32.totalorder %s356, %s358
      %p365 = scmp.eq.s32.totalorder %s33, 1
      %p366 = por %p364, %p365
      %p367 = scmp.ne.s32.totalorder %s358, %s359
      %p368 = scmp.eq.s32.totalorder %s33, 0
      %p369 = por %p367, %p368
      %p370 = scmp.ne.s32.totalorder %s358, %s359
      %p371 = scmp.eq.s32.totalorder %s34, 1
      %p372 = por %p370, %p371
      %p374 = scmp.ne.s32.totalorder %s359, %s373
      %p375 = scmp.eq.s32.totalorder %s34, 0
      %p376 = por %p374, %p375
      %s378 = sadd.s32 %s377, 1
      %p381 = scmp.eq.s32.totalorder %s28, 1
      %p382 = scmp.ne.s32.totalorder %s377, %s379
      %p383 = scmp.eq.s32.totalorder %s28, 0
      %p384 = por %p382, %p383
      %p385 = scmp.ne.s32.totalorder %s377, %s379
      %p386 = scmp.eq.s32.totalorder %s33, 1
      %p387 = por %p385, %p386
      %p388 = scmp.ne.s32.totalorder %s379, %s380
      %p389 = scmp.eq.s32.totalorder %s33, 0
      %p390 = por %p388, %p389
      %p391 = scmp.ne.s32.totalorder %s379, %s380
      %p392 = scmp.eq.s32.totalorder %s34, 1
      %p393 = por %p391, %p392
      %p395 = scmp.ne.s32.totalorder %s380, %s394
      %p396 = scmp.eq.s32.totalorder %s34, 0
      %p397 = por %p395, %p396
      %s399 = sadd.s32 %s398, 1
      %p402 = scmp.eq.s32.totalorder %s28, 1
      %p403 = scmp.ne.s32.totalorder %s398, %s400
      %p404 = scmp.eq.s32.totalorder %s28, 0
      %p405 = por %p403, %p404
      %p406 = scmp.ne.s32.totalorder %s398, %s400
      %p407 = scmp.eq.s32.totalorder %s33, 1
      %p408 = por %p406, %p407
      %p409 = scmp.ne.s32.totalorder %s400, %s401
      %p410 = scmp.eq.s32.totalorder %s33, 0
      %p411 = por %p409, %p410
      %p412 = scmp.ne.s32.totalorder %s400, %s401
      %p413 = scmp.eq.s32.totalorder %s34, 1
      %p414 = por %p412, %p413
      %p416 = scmp.ne.s32.totalorder %s401, %s415
      %p417 = scmp.eq.s32.totalorder %s34, 0
      %p418 = por %p416, %p417
      %s420 = sadd.s32 %s419, 1
      %p423 = scmp.eq.s32.totalorder %s28, 1
      %p424 = scmp.ne.s32.totalorder %s419, %s421
      %p425 = scmp.eq.s32.totalorder %s28, 0
      %p426 = por %p424, %p425
      %p427 = scmp.ne.s32.totalorder %s419, %s421
      %p428 = scmp.eq.s32.totalorder %s33, 1
      %p429 = por %p427, %p428
      %p430 = scmp.ne.s32.totalorder %s421, %s422
      %p431 = scmp.eq.s32.totalorder %s33, 0
      %p432 = por %p430, %p431
      %p433 = scmp.ne.s32.totalorder %s421, %s422
      %p434 = scmp.eq.s32.totalorder %s34, 1
      %p435 = por %p433, %p434
      %p437 = scmp.ne.s32.totalorder %s422, %s436
      %p438 = scmp.eq.s32.totalorder %s34, 0
      %p439 = por %p437, %p438
      %s440 = ssub.s32 %s28, %s35
      %p441 = scmp.eq.s32.totalorder %s440, 0
      %s443 = sadd.s32 %s442, 1
      %s444 = scalar_select %p441, %s442, %s443
      %p447 = pneg %p441
      %p448 = scmp.eq.s32.totalorder %s28, 1
      %p449 = por %p447, %p448
      %p450 = scmp.ne.s32.totalorder %s442, %s445
      %p451 = scmp.eq.s32.totalorder %s28, 0
      %p452 = por %p450, %p451
      %p453 = scmp.ne.s32.totalorder %s442, %s445
      %p454 = scmp.eq.s32.totalorder %s33, 1
      %p455 = por %p453, %p454
      %p456 = scmp.ne.s32.totalorder %s445, %s446
      %p457 = scmp.eq.s32.totalorder %s33, 0
      %p458 = por %p456, %p457
      %p459 = scmp.ne.s32.totalorder %s445, %s446
      %p460 = scmp.eq.s32.totalorder %s34, 1
      %p461 = por %p459, %p460
      %p463 = scmp.ne.s32.totalorder %s446, %s462
      %p464 = scmp.eq.s32.totalorder %s34, 0
      %p465 = por %p463, %p464
      %p466 = scmp.le.s32.totalorder 1, %s28
      %p467 = scmp.lt.s32.totalorder %s28, 3
      %p468 = pnand %p466, %p467
      %p469 = pneg %p468
      // Predicated region
      $region9: #{_lambda_.1} parent=5 // pred_check
        _
      $region10: #{_lambda_.1} parent=5 // pred_check_branch
        %471 = sbr.rel (%p468) target = $region12
      $region11: #{_lambda_.1} parent=5 // pred_region
        %s472 = ssub.s32 %s28, 1
        // Predicated region
        $region13: #{_lambda_.1} parent=11 // pred_check
          %p473 = pneg %p75
        $region14: #{_lambda_.1} parent=11 // pred_check_branch
          %475 = sbr.rel (%p473) target = $region16
        $region15: #{_lambda_.1} parent=11 // pred_region
          _
        $region16: #{_lambda_.1} parent=11 // pred_fallthru
          _
        // Predicated region
        $region17: #{_lambda_.1} parent=11 // pred_check
          %p476 = pneg %p96
        $region18: #{_lambda_.1} parent=11 // pred_check_branch
          %478 = sbr.rel (%p476) target = $region20
        $region19: #{_lambda_.1} parent=11 // pred_region
          _
        $region20: #{_lambda_.1} parent=11 // pred_fallthru
          _
        // Predicated region
        $region21: #{_lambda_.1} parent=11 // pred_check
          %p479 = pneg %p117
        $region22: #{_lambda_.1} parent=11 // pred_check_branch
          %481 = sbr.rel (%p479) target = $region24
        $region23: #{_lambda_.1} parent=11 // pred_region
          _
        $region24: #{_lambda_.1} parent=11 // pred_fallthru
          _
        // Predicated region
        $region25: #{_lambda_.1} parent=11 // pred_check
          %p482 = pneg %p138
        $region26: #{_lambda_.1} parent=11 // pred_check_branch
          %484 = sbr.rel (%p482) target = $region28
        $region27: #{_lambda_.1} parent=11 // pred_region
          _
        $region28: #{_lambda_.1} parent=11 // pred_fallthru
          _
        // Predicated region
        $region29: #{_lambda_.1} parent=11 // pred_check
          %p485 = pneg %p159
        $region30: #{_lambda_.1} parent=11 // pred_check_branch
          %487 = sbr.rel (%p485) target = $region32
        $region31: #{_lambda_.1} parent=11 // pred_region
          _
        $region32: #{_lambda_.1} parent=11 // pred_fallthru
          _
        // Predicated region
        $region33: #{_lambda_.1} parent=11 // pred_check
          %p488 = pneg %p180
        $region34: #{_lambda_.1} parent=11 // pred_check_branch
          %490 = sbr.rel (%p488) target = $region36
        $region35: #{_lambda_.1} parent=11 // pred_region
          _
        $region36: #{_lambda_.1} parent=11 // pred_fallthru
          _
        // Predicated region
        $region37: #{_lambda_.1} parent=11 // pred_check
          %p491 = pneg %p201
        $region38: #{_lambda_.1} parent=11 // pred_check_branch
          %493 = sbr.rel (%p491) target = $region40
        $region39: #{_lambda_.1} parent=11 // pred_region
          _
        $region40: #{_lambda_.1} parent=11 // pred_fallthru
          _
        // Predicated region
        $region41: #{_lambda_.1} parent=11 // pred_check
          %p494 = pneg %p222
        $region42: #{_lambda_.1} parent=11 // pred_check_branch
          %496 = sbr.rel (%p494) target = $region44
        $region43: #{_lambda_.1} parent=11 // pred_region
          _
        $region44: #{_lambda_.1} parent=11 // pred_fallthru
          _
        // Predicated region
        $region45: #{_lambda_.1} parent=11 // pred_check
          %p497 = pneg %p243
        $region46: #{_lambda_.1} parent=11 // pred_check_branch
          %499 = sbr.rel (%p497) target = $region48
        $region47: #{_lambda_.1} parent=11 // pred_region
          _
        $region48: #{_lambda_.1} parent=11 // pred_fallthru
          _
        // Predicated region
        $region49: #{_lambda_.1} parent=11 // pred_check
          %p500 = pneg %p264
        $region50: #{_lambda_.1} parent=11 // pred_check_branch
          %502 = sbr.rel (%p500) target = $region52
        $region51: #{_lambda_.1} parent=11 // pred_region
          _
        $region52: #{_lambda_.1} parent=11 // pred_fallthru
          _
        // Predicated region
        $region53: #{_lambda_.1} parent=11 // pred_check
          %p503 = pneg %p285
        $region54: #{_lambda_.1} parent=11 // pred_check_branch
          %505 = sbr.rel (%p503) target = $region56
        $region55: #{_lambda_.1} parent=11 // pred_region
          _
        $region56: #{_lambda_.1} parent=11 // pred_fallthru
          _
        // Predicated region
        $region57: #{_lambda_.1} parent=11 // pred_check
          %p506 = pneg %p306
        $region58: #{_lambda_.1} parent=11 // pred_check_branch
          %508 = sbr.rel (%p506) target = $region60
        $region59: #{_lambda_.1} parent=11 // pred_region
          _
        $region60: #{_lambda_.1} parent=11 // pred_fallthru
          _
        // Predicated region
        $region61: #{_lambda_.1} parent=11 // pred_check
          %p509 = pneg %p327
        $region62: #{_lambda_.1} parent=11 // pred_check_branch
          %511 = sbr.rel (%p509) target = $region64
        $region63: #{_lambda_.1} parent=11 // pred_region
          _
        $region64: #{_lambda_.1} parent=11 // pred_fallthru
          _
        // Predicated region
        $region65: #{_lambda_.1} parent=11 // pred_check
          %p512 = pneg %p348
        $region66: #{_lambda_.1} parent=11 // pred_check_branch
          %514 = sbr.rel (%p512) target = $region68
        $region67: #{_lambda_.1} parent=11 // pred_region
          _
        $region68: #{_lambda_.1} parent=11 // pred_fallthru
          _
        // Predicated region
        $region69: #{_lambda_.1} parent=11 // pred_check
          %p515 = pneg %p369
        $region70: #{_lambda_.1} parent=11 // pred_check_branch
          %517 = sbr.rel (%p515) target = $region72
        $region71: #{_lambda_.1} parent=11 // pred_region
          _
        $region72: #{_lambda_.1} parent=11 // pred_fallthru
          _
        // Predicated region
        $region73: #{_lambda_.1} parent=11 // pred_check
          %p518 = pneg %p390
        $region74: #{_lambda_.1} parent=11 // pred_check_branch
          %520 = sbr.rel (%p518) target = $region76
        $region75: #{_lambda_.1} parent=11 // pred_region
          _
        $region76: #{_lambda_.1} parent=11 // pred_fallthru
          _
        // Predicated region
        $region77: #{_lambda_.1} parent=11 // pred_check
          %p521 = pneg %p411
        $region78: #{_lambda_.1} parent=11 // pred_check_branch
          %523 = sbr.rel (%p521) target = $region80
        $region79: #{_lambda_.1} parent=11 // pred_region
          _
        $region80: #{_lambda_.1} parent=11 // pred_fallthru
          _
        // Predicated region
        $region81: #{_lambda_.1} parent=11 // pred_check
          %p524 = pneg %p432
        $region82: #{_lambda_.1} parent=11 // pred_check_branch
          %526 = sbr.rel (%p524) target = $region84
        $region83: #{_lambda_.1} parent=11 // pred_region
          _
        $region84: #{_lambda_.1} parent=11 // pred_fallthru
          _
      $region12: #{_lambda_.1} parent=5 // pred_fallthru
        _
      %p527 = scmp.lt.s32.totalorder %s28, 2
      // Predicated region
      $region85: #{_lambda_.1} parent=5 // pred_check
        %p528 = pneg %p527
      $region86: #{_lambda_.1} parent=5 // pred_check_branch
        %530 = sbr.rel (%p528) target = $region88
      $region87: #{_lambda_.1} parent=5 // pred_region
        // Predicated region
        $region89: #{_lambda_.1} parent=87 // pred_check
          %p531 = pneg %p48
        $region90: #{_lambda_.1} parent=87 // pred_check_branch
          %533 = sbr.rel (%p531) target = $region92
        $region91: #{_lambda_.1} parent=87 // pred_region
          %s534 = smul.u32 32, %s28
          %p535 = scmp.lt.s32.totalorder %s534, 63
          %s536 = scalar_select %p535, %s534, 63
          %s537 = smul.addr %s536, 8
          %s538 = scalar_lea.vmem %s0, %s537
          %s539 = smul.u32 32, %s28
        $region92: #{_lambda_.1} parent=87 // pred_fallthru
          _
      $region88: #{_lambda_.1} parent=5 // pred_fallthru
        _
      %p540 = scmp.le.s32.totalorder 1, %s28
      %p541 = scmp.lt.s32.totalorder %s28, 3
      %p542 = pnand %p540, %p541
      %p543 = pneg %p542
      // Predicated region
      $region93: #{_lambda_.1} parent=5 // pred_check
        _
      $region94: #{_lambda_.1} parent=5 // pred_check_branch
        %545 = sbr.rel (%p542) target = $region96
      $region95: #{_lambda_.1} parent=5 // pred_region
        %s546 = ssub.s32 %s28, 1
        %s547 = smul.u32 32, %s33
        %p548 = scmp.lt.s32.totalorder %s547, 63
        %s549 = scalar_select %p548, %s547, 63
        %s550 = smul.addr %s549, 8
        %s551 = scalar_lea.vmem %s0, %s550
        %p552 = pneg %p54
        %p553 = pneg %p51
        %p554 = pneg %p75
        %p555 = pneg %p72
        %p556 = pneg %p96
        %p557 = pneg %p93
        %p558 = pneg %p117
        %p559 = pneg %p114
        %p560 = pneg %p138
        %p561 = pneg %p135
        %p562 = pneg %p159
        %p563 = pneg %p156
        %p564 = pneg %p180
        %p565 = pneg %p177
        %p566 = pneg %p201
        %p567 = pneg %p198
        %p568 = pneg %p222
        %p569 = pneg %p219
        %p570 = pneg %p243
        %p571 = pneg %p240
        %p572 = pneg %p264
        %p573 = pneg %p261
        %p574 = pneg %p285
        %p575 = pneg %p282
        %p576 = pneg %p306
        %p577 = pneg %p303
        %p578 = pneg %p327
        %p579 = pneg %p324
        %p580 = pneg %p348
        %p581 = pneg %p345
        %p582 = pneg %p369
        %p583 = pneg %p366
        %p584 = pneg %p390
        %p585 = pneg %p387
        %p586 = pneg %p411
        %p587 = pneg %p408
        %p588 = pneg %p432
        %p589 = pneg %p429
        %p590 = pneg %p458
        %p591 = pneg %p455
        %s592 = sand.u32 %s445, 1
        %s593 = scalar_lea.sflag [#allocation4], %s592
        %s594 = sand.u32 %s445, 1
        %s595 = smul.addr %s594, 4
        %s596 = scalar_lea.vmem [#allocation3], %s595
        %s597 = smul.u32 32, %s33
        %p598 = scmp.lt.s32.totalorder %s597, 63
        %s599 = scalar_select %p598, %s597, 63
        %s600 = smul.addr %s599, 8
        %s601 = scalar_lea.vmem %s0, %s600
        %s602 = smul.u32 32, %s33
        %v604 = vld [vmem:[%s1] sm:$0xf]
        %v605 = vld [vmem:[%s1 + $0x4] sm:$0xf]
        %v606 = vld [vmem:[%s1 + $0x8] sm:$0xf]
        %v607 = vld [vmem:[%s1 + $0xc] sm:$0xf]
        %v608 = vld [vmem:[%s1 + $0x10] sm:$0xf]
        %v609 = vld [vmem:[%s1 + $0x14] sm:$0xf]
        %v610 = vld [vmem:[%s1 + $0x18] sm:$0xf]
        %v611 = vld [vmem:[%s1 + $0x1c] sm:$0xf]
        %v612 = vld [vmem:[%s1 + $0x20] sm:$0xf]
        %v613 = vld [vmem:[%s1 + $0x24] sm:$0xf]
        %v614 = vld [vmem:[%s1 + $0x28] sm:$0xf]
        %v615 = vld [vmem:[%s1 + $0x2c] sm:$0xf]
        %v616 = vld [vmem:[%s1 + $0x30] sm:$0xf]
        %v617 = vld [vmem:[%s1 + $0x34] sm:$0xf]
        %v618 = vld [vmem:[%s1 + $0x38] sm:$0xf]
        %v619 = vld [vmem:[%s1 + $0x3c] sm:$0xf]
        %v620 = vld [vmem:[%s2] sm:$0x1]
        %v621 = vld [vmem:[%s601] sm:$0xff]
        %v622 = vld [vmem:[%s601 + $0x8] sm:$0xff]
        %v623 = vld [vmem:[%s601 + $0x10] sm:$0xff]
        %v624 = vld [vmem:[%s601 + $0x18] sm:$0xff]
        %v625 = vld [vmem:[%s601 + $0x20] sm:$0xff]
        %v626 = vld [vmem:[%s601 + $0x28] sm:$0xff]
        %v627 = vld [vmem:[%s601 + $0x30] sm:$0xff]
        %v628 = vld [vmem:[%s601 + $0x38] sm:$0xff]
        %v629 = vld [vmem:[%s601 + $0x40] sm:$0xff]
        %v630 = vld [vmem:[%s601 + $0x48] sm:$0xff]
        %v631 = vld [vmem:[%s601 + $0x50] sm:$0xff]
        %v632 = vld [vmem:[%s601 + $0x58] sm:$0xff]
        %v633 = vld [vmem:[%s601 + $0x60] sm:$0xff]
        %v634 = vld [vmem:[%s601 + $0x68] sm:$0xff]
        %v635 = vld [vmem:[%s601 + $0x70] sm:$0xff]
        %v636 = vld [vmem:[%s601 + $0x78] sm:$0xff]
        %v637 = vpack.c.bf16 %v622, %v621
        %v638 = vpack.c.bf16 %v624, %v623
        %v639 = vpack.c.bf16 %v626, %v625
        %v640 = vpack.c.bf16 %v628, %v627
        %v641 = vpack.c.bf16 %v630, %v629
        %v642 = vpack.c.bf16 %v632, %v631
        %v643 = vpack.c.bf16 %v634, %v633
        %v644 = vpack.c.bf16 %v636, %v635
        %v646 = vlaneseq
        %v647 = vshrl.u32 %v646, 7
        %v648 = vsub.s32 0, %v647
        %v649 = vrot.slane %v620, %v648
        %v667 = vunpack.c.l.b16 %v604
        %v668 = vunpack.c.l.b16 %v605
        %v669 = vunpack.c.l.b16 %v606
        %v670 = vunpack.c.l.b16 %v607
        %v671 = vunpack.c.l.b16 %v608
        %v672 = vunpack.c.l.b16 %v609
        %v673 = vunpack.c.l.b16 %v610
        %v674 = vunpack.c.l.b16 %v611
        %v675 = vunpack.c.l.b16 %v612
        %v676 = vunpack.c.l.b16 %v613
        %v677 = vunpack.c.l.b16 %v614
        %v678 = vunpack.c.l.b16 %v615
        %v679 = vunpack.c.l.b16 %v616
        %v680 = vunpack.c.l.b16 %v617
        %v681 = vunpack.c.l.b16 %v618
        %v682 = vunpack.c.l.b16 %v619
        %v683 = vpack.c.b16 %v668, %v667
        %v684 = vpack.c.b16 %v670, %v669
        %v685 = vpack.c.b16 %v672, %v671
        %v686 = vpack.c.b16 %v674, %v673
        %v687 = vpack.c.b16 %v676, %v675
        %v688 = vpack.c.b16 %v678, %v677
        %v689 = vpack.c.b16 %v680, %v679
        %v690 = vpack.c.b16 %v682, %v681
        %699 = vmatprep.subr.bf16.mxu0 0
        %700 = vmatpush1.bf16.msra.mxu0 %v683
        %701 = vmatprep.subr.bf16.mxu0 0
        %702 = vmatpush1.bf16.msra.mxu0 %v684
        %703 = vmatprep.subr.bf16.mxu0 0
        %704 = vmatpush1.bf16.msra.mxu0 %v685
        %705 = vmatprep.subr.bf16.mxu0 0
        %706 = vmatpush1.bf16.msra.mxu0 %v686
        %707 = vmatprep.subr.bf16.mxu0 0
        %708 = vmatpush1.bf16.msra.mxu0 %v687
        %709 = vmatprep.subr.bf16.mxu0 0
        %710 = vmatpush1.bf16.msra.mxu0 %v688
        %711 = vmatprep.subr.bf16.mxu0 0
        %712 = vmatpush1.bf16.msra.mxu0 %v689
        %713 = vmatprep.subr.bf16.mxu0 0
        %714 = vmatpush1.bf16.msra.mxu0 %v690
        %715 = vmatprep.subr.bf16.mxu0 0
        %716 = vmatpush1.bf16.msra.mxu0 0
        %717 = vmatprep.subr.bf16.mxu0 0
        %718 = vmatpush1.bf16.msra.mxu0 0
        %719 = vmatprep.subr.bf16.mxu0 0
        %720 = vmatpush1.bf16.msra.mxu0 0
        %721 = vmatprep.subr.bf16.mxu0 0
        %722 = vmatpush1.bf16.msra.mxu0 0
        %723 = vmatprep.subr.bf16.mxu0 0
        %724 = vmatpush1.bf16.msra.mxu0 0
        %725 = vmatprep.subr.bf16.mxu0 0
        %726 = vmatpush1.bf16.msra.mxu0 0
        %727 = vmatprep.subr.bf16.mxu0 0
        %728 = vmatpush1.bf16.msra.mxu0 0
        %729 = vmatprep.subr.bf16.mxu0 0
        %730 = vmatpush1.bf16.msra.mxu0 0
        %731 = vmatprep.mubr.bf16.mxu0 0
        %732 = vmatmul.mubr.bf16.gmra.mrb[0].mxu0 %v637
        %v733 = vpop.f32.mrb[0].mxu0
        %v734 = vadd.f32 %v649, %v733
        %v735 = vpop.f32.mrb[0].mxu0
        %v736 = vpop.f32.mrb[0].mxu0
        %v737 = vadd.f32 %v649, %v736
        %v738 = vpop.f32.mrb[0].mxu0
        %739 = vmatprep.mubr.bf16.mxu0 0
        %740 = vmatmul.mubr.bf16.gmra.mrb[0].mxu0 %v638
        %v741 = vpop.f32.mrb[0].mxu0
        %v742 = vadd.f32 %v649, %v741
        %v743 = vpop.f32.mrb[0].mxu0
        %v744 = vpop.f32.mrb[0].mxu0
        %v745 = vadd.f32 %v649, %v744
        %v746 = vpop.f32.mrb[0].mxu0
        %747 = vmatprep.mubr.bf16.mxu0 0
        %748 = vmatmul.mubr.bf16.gmra.mrb[0].mxu0 %v639
        %v749 = vpop.f32.mrb[0].mxu0
        %v750 = vadd.f32 %v649, %v749
        %v751 = vpop.f32.mrb[0].mxu0
        %v752 = vpop.f32.mrb[0].mxu0
        %v753 = vadd.f32 %v649, %v752
        %v754 = vpop.f32.mrb[0].mxu0
        %755 = vmatprep.mubr.bf16.mxu0 0
        %756 = vmatmul.mubr.bf16.gmra.mrb[0].mxu0 %v640
        %v757 = vpop.f32.mrb[0].mxu0
        %v758 = vadd.f32 %v649, %v757
        %v759 = vpop.f32.mrb[0].mxu0
        %v760 = vpop.f32.mrb[0].mxu0
        %v761 = vadd.f32 %v649, %v760
        %v762 = vpop.f32.mrb[0].mxu0
        %763 = vmatprep.mubr.bf16.mxu0 0
        %764 = vmatmul.mubr.bf16.gmra.mrb[0].mxu0 %v641
        %v765 = vpop.f32.mrb[0].mxu0
        %v766 = vadd.f32 %v649, %v765
        %v767 = vpop.f32.mrb[0].mxu0
        %v768 = vpop.f32.mrb[0].mxu0
        %v769 = vadd.f32 %v649, %v768
        %v770 = vpop.f32.mrb[0].mxu0
        %771 = vmatprep.mubr.bf16.mxu0 0
        %772 = vmatmul.mubr.bf16.gmra.mrb[0].mxu0 %v642
        %v773 = vpop.f32.mrb[0].mxu0
        %v774 = vadd.f32 %v649, %v773
        %v775 = vpop.f32.mrb[0].mxu0
        %v776 = vpop.f32.mrb[0].mxu0
        %v777 = vadd.f32 %v649, %v776
        %v778 = vpop.f32.mrb[0].mxu0
        %779 = vmatprep.mubr.bf16.mxu0 0
        %780 = vmatmul.mubr.bf16.gmra.mrb[0].mxu0 %v643
        %v781 = vpop.f32.mrb[0].mxu0
        %v782 = vadd.f32 %v649, %v781
        %v783 = vpop.f32.mrb[0].mxu0
        %v784 = vpop.f32.mrb[0].mxu0
        %v785 = vadd.f32 %v649, %v784
        %v786 = vpop.f32.mrb[0].mxu0
        %787 = vmatprep.mubr.bf16.mxu0 0
        %788 = vmatmul.mubr.bf16.gmra.mrb[0].mxu0 %v644
        %v789 = vpop.f32.mrb[0].mxu0
        %v790 = vadd.f32 %v649, %v789
        %v791 = vpop.f32.mrb[0].mxu0
        %v792 = vpop.f32.mrb[0].mxu0
        %v793 = vadd.f32 %v649, %v792
        %v794 = vpop.f32.mrb[0].mxu0
        %795 = vdwg.mxu0
        %796 = vst [vmem:[#allocation2] sm:$0xff] %v734
        %797 = vst [vmem:[#allocation2 + $0x8] sm:$0xff] %v737
        %798 = vst [vmem:[#allocation2 + $0x10] sm:$0xff] %v742
        %799 = vst [vmem:[#allocation2 + $0x18] sm:$0xff] %v745
        %800 = vst [vmem:[#allocation2 + $0x20] sm:$0xff] %v750
        %801 = vst [vmem:[#allocation2 + $0x28] sm:$0xff] %v753
        %802 = vst [vmem:[#allocation2 + $0x30] sm:$0xff] %v758
        %803 = vst [vmem:[#allocation2 + $0x38] sm:$0xff] %v761
        %804 = vst [vmem:[#allocation2 + $0x40] sm:$0xff] %v766
        %805 = vst [vmem:[#allocation2 + $0x48] sm:$0xff] %v769
        %806 = vst [vmem:[#allocation2 + $0x50] sm:$0xff] %v774
        %807 = vst [vmem:[#allocation2 + $0x58] sm:$0xff] %v777
        %808 = vst [vmem:[#allocation2 + $0x60] sm:$0xff] %v782
        %809 = vst [vmem:[#allocation2 + $0x68] sm:$0xff] %v785
        %810 = vst [vmem:[#allocation2 + $0x70] sm:$0xff] %v790
        %811 = vst [vmem:[#allocation2 + $0x78] sm:$0xff] %v793
        %s812 = scalar_lea.vmem %s601, 128
        %v813 = vld [vmem:[%s812] sm:$0xff]
        %v814 = vld [vmem:[%s812 + $0x8] sm:$0xff]
        %v815 = vld [vmem:[%s812 + $0x10] sm:$0xff]
        %v816 = vld [vmem:[%s812 + $0x18] sm:$0xff]
        %v817 = vld [vmem:[%s812 + $0x20] sm:$0xff]
        %v818 = vld [vmem:[%s812 + $0x28] sm:$0xff]
        %v819 = vld [vmem:[%s812 + $0x30] sm:$0xff]
        %v820 = vld [vmem:[%s812 + $0x38] sm:$0xff]
        %v821 = vld [vmem:[%s812 + $0x40] sm:$0xff]
        %v822 = vld [vmem:[%s812 + $0x48] sm:$0xff]
        %v823 = vld [vmem:[%s812 + $0x50] sm:$0xff]
        %v824 = vld [vmem:[%s812 + $0x58] sm:$0xff]
        %v825 = vld [vmem:[%s812 + $0x60] sm:$0xff]
        %v826 = vld [vmem:[%s812 + $0x68] sm:$0xff]
        %v827 = vld [vmem:[%s812 + $0x70] sm:$0xff]
        %v828 = vld [vmem:[%s812 + $0x78] sm:$0xff]
        %v829 = vpack.c.bf16 %v814, %v813
        %v830 = vpack.c.bf16 %v816, %v815
        %v831 = vpack.c.bf16 %v818, %v817
        %v832 = vpack.c.bf16 %v820, %v819
        %v833 = vpack.c.bf16 %v822, %v821
        %v834 = vpack.c.bf16 %v824, %v823
        %v835 = vpack.c.bf16 %v826, %v825
        %v836 = vpack.c.bf16 %v828, %v827
        %837 = vmatprep.subr.bf16.mxu0 0
        %838 = vmatpush1.bf16.msra.mxu0 %v683
        %839 = vmatprep.subr.bf16.mxu0 0
        %840 = vmatpush1.bf16.msra.mxu0 %v684
        %841 = vmatprep.subr.bf16.mxu0 0
        %842 = vmatpush1.bf16.msra.mxu0 %v685
        %843 = vmatprep.subr.bf16.mxu0 0
        %844 = vmatpush1.bf16.msra.mxu0 %v686
        %845 = vmatprep.subr.bf16.mxu0 0
        %846 = vmatpush1.bf16.msra.mxu0 %v687
        %847 = vmatprep.subr.bf16.mxu0 0
        %848 = vmatpush1.bf16.msra.mxu0 %v688
        %849 = vmatprep.subr.bf16.mxu0 0
        %850 = vmatpush1.bf16.msra.mxu0 %v689
        %851 = vmatprep.subr.bf16.mxu0 0
        %852 = vmatpush1.bf16.msra.mxu0 %v690
        %853 = vmatprep.subr.bf16.mxu0 0
        %854 = vmatpush1.bf16.msra.mxu0 0
        %855 = vmatprep.subr.bf16.mxu0 0
        %856 = vmatpush1.bf16.msra.mxu0 0
        %857 = vmatprep.subr.bf16.mxu0 0
        %858 = vmatpush1.bf16.msra.mxu0 0
        %859 = vmatprep.subr.bf16.mxu0 0
        %860 = vmatpush1.bf16.msra.mxu0 0
        %861 = vmatprep.subr.bf16.mxu0 0
        %862 = vmatpush1.bf16.msra.mxu0 0
        %863 = vmatprep.subr.bf16.mxu0 0
        %864 = vmatpush1.bf16.msra.mxu0 0
        %865 = vmatprep.subr.bf16.mxu0 0
        %866 = vmatpush1.bf16.msra.mxu0 0
        %867 = vmatprep.subr.bf16.mxu0 0
        %868 = vmatpush1.bf16.msra.mxu0 0
        %869 = vmatprep.mubr.bf16.mxu0 0
        %870 = vmatmul.mubr.bf16.gmra.mrb[0].mxu0 %v829
        %v871 = vpop.f32.mrb[0].mxu0
        %v872 = vadd.f32 %v649, %v871
        %v873 = vpop.f32.mrb[0].mxu0
        %v874 = vpop.f32.mrb[0].mxu0
        %v875 = vadd.f32 %v649, %v874
        %v876 = vpop.f32.mrb[0].mxu0
        %877 = vmatprep.mubr.bf16.mxu0 0
        %878 = vmatmul.mubr.bf16.gmra.mrb[0].mxu0 %v830
        %v879 = vpop.f32.mrb[0].mxu0
        %v880 = vadd.f32 %v649, %v879
        %v881 = vpop.f32.mrb[0].mxu0
        %v882 = vpop.f32.mrb[0].mxu0
        %v883 = vadd.f32 %v649, %v882
        %v884 = vpop.f32.mrb[0].mxu0
        %885 = vmatprep.mubr.bf16.mxu0 0
        %886 = vmatmul.mubr.bf16.gmra.mrb[0].mxu0 %v831
        %v887 = vpop.f32.mrb[0].mxu0
        %v888 = vadd.f32 %v649, %v887
        %v889 = vpop.f32.mrb[0].mxu0
        %v890 = vpop.f32.mrb[0].mxu0
        %v891 = vadd.f32 %v649, %v890
        %v892 = vpop.f32.mrb[0].mxu0
        %893 = vmatprep.mubr.bf16.mxu0 0
        %894 = vmatmul.mubr.bf16.gmra.mrb[0].mxu0 %v832
        %v895 = vpop.f32.mrb[0].mxu0
        %v896 = vadd.f32 %v649, %v895
        %v897 = vpop.f32.mrb[0].mxu0
        %v898 = vpop.f32.mrb[0].mxu0
        %v899 = vadd.f32 %v649, %v898
        %v900 = vpop.f32.mrb[0].mxu0
        %901 = vmatprep.mubr.bf16.mxu0 0
        %902 = vmatmul.mubr.bf16.gmra.mrb[0].mxu0 %v833
        %v903 = vpop.f32.mrb[0].mxu0
        %v904 = vadd.f32 %v649, %v903
        %v905 = vpop.f32.mrb[0].mxu0
        %v906 = vpop.f32.mrb[0].mxu0
        %v907 = vadd.f32 %v649, %v906
        %v908 = vpop.f32.mrb[0].mxu0
        %909 = vmatprep.mubr.bf16.mxu0 0
        %910 = vmatmul.mubr.bf16.gmra.mrb[0].mxu0 %v834
        %v911 = vpop.f32.mrb[0].mxu0
        %v912 = vadd.f32 %v649, %v911
        %v913 = vpop.f32.mrb[0].mxu0
        %v914 = vpop.f32.mrb[0].mxu0
        %v915 = vadd.f32 %v649, %v914
        %v916 = vpop.f32.mrb[0].mxu0
        %917 = vmatprep.mubr.bf16.mxu0 0
        %918 = vmatmul.mubr.bf16.gmra.mrb[0].mxu0 %v835
        %v919 = vpop.f32.mrb[0].mxu0
        %v920 = vadd.f32 %v649, %v919
        %v921 = vpop.f32.mrb[0].mxu0
        %v922 = vpop.f32.mrb[0].mxu0
        %v923 = vadd.f32 %v649, %v922
        %v924 = vpop.f32.mrb[0].mxu0
        %925 = vmatprep.mubr.bf16.mxu0 0
        %926 = vmatmul.mubr.bf16.gmra.mrb[0].mxu0 %v836
        %v927 = vpop.f32.mrb[0].mxu0
        %v928 = vadd.f32 %v649, %v927
        %v929 = vpop.f32.mrb[0].mxu0
        %v930 = vpop.f32.mrb[0].mxu0
        %v931 = vadd.f32 %v649, %v930
        %v932 = vpop.f32.mrb[0].mxu0
        %933 = vdwg.mxu0
        %s934 = scalar_lea.vmem [#allocation2], 128
        %935 = vst [vmem:[%s934] sm:$0xff] %v872
        %936 = vst [vmem:[%s934 + $0x8] sm:$0xff] %v875
        %937 = vst [vmem:[%s934 + $0x10] sm:$0xff] %v880
        %938 = vst [vmem:[%s934 + $0x18] sm:$0xff] %v883
        %939 = vst [vmem:[%s934 + $0x20] sm:$0xff] %v888
        %940 = vst [vmem:[%s934 + $0x28] sm:$0xff] %v891
        %941 = vst [vmem:[%s934 + $0x30] sm:$0xff] %v896
        %942 = vst [vmem:[%s934 + $0x38] sm:$0xff] %v899
        %943 = vst [vmem:[%s934 + $0x40] sm:$0xff] %v904
        %944 = vst [vmem:[%s934 + $0x48] sm:$0xff] %v907
        %945 = vst [vmem:[%s934 + $0x50] sm:$0xff] %v912
        %946 = vst [vmem:[%s934 + $0x58] sm:$0xff] %v915
        %947 = vst [vmem:[%s934 + $0x60] sm:$0xff] %v920
        %948 = vst [vmem:[%s934 + $0x68] sm:$0xff] %v923
        %949 = vst [vmem:[%s934 + $0x70] sm:$0xff] %v928
        %950 = vst [vmem:[%s934 + $0x78] sm:$0xff] %v931
        %v951 = vld [vmem:[%s3] sm:$0x1]
        %v952 = vld [vmem:[%s4] sm:$0x1]
        %v953 = vld [vmem:[#allocation2] sm:$0xff]
        %v954 = vld [vmem:[#allocation2 + $0x8] sm:$0xff]
        %v955 = vld [vmem:[#allocation2 + $0x10] sm:$0xff]
        %v956 = vld [vmem:[#allocation2 + $0x18] sm:$0xff]
        %v957 = vld [vmem:[#allocation2 + $0x20] sm:$0xff]
        %v958 = vld [vmem:[#allocation2 + $0x28] sm:$0xff]
        %v959 = vld [vmem:[#allocation2 + $0x30] sm:$0xff]
        %v960 = vld [vmem:[#allocation2 + $0x38] sm:$0xff]
        %961 = vadd.xlane.f32.xlu0 %v953
        %v962 = vpop.xlane.xlu0 %961
        %963 = vadd.xlane.f32.xlu0 %v954
        %v964 = vpop.xlane.xlu0 %963
        %965 = vadd.xlane.f32.xlu0 %v955
        %v966 = vpop.xlane.xlu0 %965
        %967 = vadd.xlane.f32.xlu0 %v956
        %v968 = vpop.xlane.xlu0 %967
        %969 = vadd.xlane.f32.xlu0 %v957
        %v970 = vpop.xlane.xlu0 %969
        %971 = vadd.xlane.f32.xlu0 %v958
        %v972 = vpop.xlane.xlu0 %971
        %973 = vadd.xlane.f32.xlu0 %v959
        %v974 = vpop.xlane.xlu0 %973
        %975 = vadd.xlane.f32.xlu0 %v960
        %v976 = vpop.xlane.xlu0 %975
        %v977 = vrcp.pop 128.0
        %v978 = vmul.f32 %v962, %v977
        %v979 = vmul.f32 %v964, %v977
        %v980 = vmul.f32 %v966, %v977
        %v981 = vmul.f32 %v968, %v977
        %v982 = vmul.f32 %v970, %v977
        %v983 = vmul.f32 %v972, %v977
        %v984 = vmul.f32 %v974, %v977
        %v985 = vmul.f32 %v976, %v977
        %v986 = vmul.f32 %v953, %v953
        %v987 = vmul.f32 %v954, %v954
        %v988 = vmul.f32 %v955, %v955
        %v989 = vmul.f32 %v956, %v956
        %v990 = vmul.f32 %v957, %v957
        %v991 = vmul.f32 %v958, %v958
        %v992 = vmul.f32 %v959, %v959
        %v993 = vmul.f32 %v960, %v960
        %994 = vadd.xlane.f32.xlu0 %v986
        %v995 = vpop.xlane.xlu0 %994
        %996 = vadd.xlane.f32.xlu0 %v987
        %v997 = vpop.xlane.xlu0 %996
        %998 = vadd.xlane.f32.xlu0 %v988
        %v999 = vpop.xlane.xlu0 %998
        %1000 = vadd.xlane.f32.xlu0 %v989
        %v1001 = vpop.xlane.xlu0 %1000
        %1002 = vadd.xlane.f32.xlu0 %v990
        %v1003 = vpop.xlane.xlu0 %1002
        %1004 = vadd.xlane.f32.xlu0 %v991
        %v1005 = vpop.xlane.xlu0 %1004
        %1006 = vadd.xlane.f32.xlu0 %v992
        %v1007 = vpop.xlane.xlu0 %1006
        %1008 = vadd.xlane.f32.xlu0 %v993
        %v1009 = vpop.xlane.xlu0 %1008
        %v1010 = vmul.f32 %v995, %v977
        %v1011 = vmul.f32 %v997, %v977
        %v1012 = vmul.f32 %v999, %v977
        %v1013 = vmul.f32 %v1001, %v977
        %v1014 = vmul.f32 %v1003, %v977
        %v1015 = vmul.f32 %v1005, %v977
        %v1016 = vmul.f32 %v1007, %v977
        %v1017 = vmul.f32 %v1009, %v977
        %v1018 = vmul.f32 %v978, %v978
        %v1019 = vmul.f32 %v979, %v979
        %v1020 = vmul.f32 %v980, %v980
        %v1021 = vmul.f32 %v981, %v981
        %v1022 = vmul.f32 %v982, %v982
        %v1023 = vmul.f32 %v983, %v983
        %v1024 = vmul.f32 %v984, %v984
        %v1025 = vmul.f32 %v985, %v985
        %v1026 = vsub.f32 %v1010, %v1018
        %v1027 = vsub.f32 %v1011, %v1019
        %v1028 = vsub.f32 %v1012, %v1020
        %v1029 = vsub.f32 %v1013, %v1021
        %v1030 = vsub.f32 %v1014, %v1022
        %v1031 = vsub.f32 %v1015, %v1023
        %v1032 = vsub.f32 %v1016, %v1024
        %v1033 = vsub.f32 %v1017, %v1025
        %v1034 = vmax.f32 %v1026, 0.0
        %v1035 = vmax.f32 %v1027, 0.0
        %v1036 = vmax.f32 %v1028, 0.0
        %v1037 = vmax.f32 %v1029, 0.0
        %v1038 = vmax.f32 %v1030, 0.0
        %v1039 = vmax.f32 %v1031, 0.0
        %v1040 = vmax.f32 %v1032, 0.0
        %v1041 = vmax.f32 %v1033, 0.0
        %v1042 = vsub.f32 %v953, %v978
        %v1043 = vsub.f32 %v954, %v979
        %v1044 = vsub.f32 %v955, %v980
        %v1045 = vsub.f32 %v956, %v981
        %v1046 = vsub.f32 %v957, %v982
        %v1047 = vsub.f32 %v958, %v983
        %v1048 = vsub.f32 %v959, %v984
        %v1049 = vsub.f32 %v960, %v985
        %v1050 = vadd.f32 %v1034, 1e-05
        %v1051 = vadd.f32 %v1035, 1e-05
        %v1052 = vadd.f32 %v1036, 1e-05
        %v1053 = vadd.f32 %v1037, 1e-05
        %v1054 = vadd.f32 %v1038, 1e-05
        %v1055 = vadd.f32 %v1039, 1e-05
        %v1056 = vadd.f32 %v1040, 1e-05
        %v1057 = vadd.f32 %v1041, 1e-05
        %v1058 = vrsqrt.pop %v1050
        %v1059 = vrsqrt.pop %v1051
        %v1060 = vrsqrt.pop %v1052
        %v1061 = vrsqrt.pop %v1053
        %v1062 = vrsqrt.pop %v1054
        %v1063 = vrsqrt.pop %v1055
        %v1064 = vrsqrt.pop %v1056
        %v1065 = vrsqrt.pop %v1057
        %v1066 = vmul.f32 %v1042, %v1058
        %v1067 = vmul.f32 %v1043, %v1059
        %v1068 = vmul.f32 %v1044, %v1060
        %v1069 = vmul.f32 %v1045, %v1061
        %v1070 = vmul.f32 %v1046, %v1062
        %v1071 = vmul.f32 %v1047, %v1063
        %v1072 = vmul.f32 %v1048, %v1064
        %v1073 = vmul.f32 %v1049, %v1065
        %v1075 = vlaneseq
        %v1076 = vshrl.u32 %v1075, 7
        %v1077 = vsub.s32 0, %v1076
        %v1078 = vrot.slane %v951, %v1077
        %v1080 = vmul.f32 %v1066, %v1078
        %v1081 = vmul.f32 %v1067, %v1078
        %v1082 = vmul.f32 %v1068, %v1078
        %v1083 = vmul.f32 %v1069, %v1078
        %v1084 = vmul.f32 %v1070, %v1078
        %v1085 = vmul.f32 %v1071, %v1078
        %v1086 = vmul.f32 %v1072, %v1078
        %v1087 = vmul.f32 %v1073, %v1078
        %v1089 = vlaneseq
        %v1090 = vshrl.u32 %v1089, 7
        %v1091 = vsub.s32 0, %v1090
        %v1092 = vrot.slane %v952, %v1091
        %v1094 = vadd.f32 %v1080, %v1092
        %v1095 = vadd.f32 %v1081, %v1092
        %v1096 = vadd.f32 %v1082, %v1092
        %v1097 = vadd.f32 %v1083, %v1092
        %v1098 = vadd.f32 %v1084, %v1092
        %v1099 = vadd.f32 %v1085, %v1092
        %v1100 = vadd.f32 %v1086, %v1092
        %v1101 = vadd.f32 %v1087, %v1092
        %v1102 = vpack.c.bf16 %v1095, %v1094
        %v1103 = vpack.c.bf16 %v1097, %v1096
        %v1104 = vpack.c.bf16 %v1099, %v1098
        %v1105 = vpack.c.bf16 %v1101, %v1100
        %v1106 = vld [vmem:[#allocation2 + $0x40] sm:$0xff]
        %v1107 = vld [vmem:[#allocation2 + $0x48] sm:$0xff]
        %v1108 = vld [vmem:[#allocation2 + $0x50] sm:$0xff]
        %v1109 = vld [vmem:[#allocation2 + $0x58] sm:$0xff]
        %v1110 = vld [vmem:[#allocation2 + $0x60] sm:$0xff]
        %v1111 = vld [vmem:[#allocation2 + $0x68] sm:$0xff]
        %v1112 = vld [vmem:[#allocation2 + $0x70] sm:$0xff]
        %v1113 = vld [vmem:[#allocation2 + $0x78] sm:$0xff]
        %1114 = vadd.xlane.f32.xlu0 %v1106
        %v1115 = vpop.xlane.xlu0 %1114
        %1116 = vadd.xlane.f32.xlu0 %v1107
        %v1117 = vpop.xlane.xlu0 %1116
        %1118 = vadd.xlane.f32.xlu0 %v1108
        %v1119 = vpop.xlane.xlu0 %1118
        %1120 = vadd.xlane.f32.xlu0 %v1109
        %v1121 = vpop.xlane.xlu0 %1120
        %1122 = vadd.xlane.f32.xlu0 %v1110
        %v1123 = vpop.xlane.xlu0 %1122
        %1124 = vadd.xlane.f32.xlu0 %v1111
        %v1125 = vpop.xlane.xlu0 %1124
        %1126 = vadd.xlane.f32.xlu0 %v1112
        %v1127 = vpop.xlane.xlu0 %1126
        %1128 = vadd.xlane.f32.xlu0 %v1113
        %v1129 = vpop.xlane.xlu0 %1128
        %v1130 = vmul.f32 %v1115, %v977
        %v1131 = vmul.f32 %v1117, %v977
        %v1132 = vmul.f32 %v1119, %v977
        %v1133 = vmul.f32 %v1121, %v977
        %v1134 = vmul.f32 %v1123, %v977
        %v1135 = vmul.f32 %v1125, %v977
        %v1136 = vmul.f32 %v1127, %v977
        %v1137 = vmul.f32 %v1129, %v977
        %v1138 = vmul.f32 %v1106, %v1106
        %v1139 = vmul.f32 %v1107, %v1107
        %v1140 = vmul.f32 %v1108, %v1108
        %v1141 = vmul.f32 %v1109, %v1109
        %v1142 = vmul.f32 %v1110, %v1110
        %v1143 = vmul.f32 %v1111, %v1111
        %v1144 = vmul.f32 %v1112, %v1112
        %v1145 = vmul.f32 %v1113, %v1113
        %1146 = vadd.xlane.f32.xlu0 %v1138
        %v1147 = vpop.xlane.xlu0 %1146
        %1148 = vadd.xlane.f32.xlu0 %v1139
        %v1149 = vpop.xlane.xlu0 %1148
        %1150 = vadd.xlane.f32.xlu0 %v1140
        %v1151 = vpop.xlane.xlu0 %1150
        %1152 = vadd.xlane.f32.xlu0 %v1141
        %v1153 = vpop.xlane.xlu0 %1152
        %1154 = vadd.xlane.f32.xlu0 %v1142
        %v1155 = vpop.xlane.xlu0 %1154
        %1156 = vadd.xlane.f32.xlu0 %v1143
        %v1157 = vpop.xlane.xlu0 %1156
        %1158 = vadd.xlane.f32.xlu0 %v1144
        %v1159 = vpop.xlane.xlu0 %1158
        %1160 = vadd.xlane.f32.xlu0 %v1145
        %v1161 = vpop.xlane.xlu0 %1160
        %v1162 = vmul.f32 %v1147, %v977
        %v1163 = vmul.f32 %v1149, %v977
        %v1164 = vmul.f32 %v1151, %v977
        %v1165 = vmul.f32 %v1153, %v977
        %v1166 = vmul.f32 %v1155, %v977
        %v1167 = vmul.f32 %v1157, %v977
        %v1168 = vmul.f32 %v1159, %v977
        %v1169 = vmul.f32 %v1161, %v977
        %v1170 = vmul.f32 %v1130, %v1130
        %v1171 = vmul.f32 %v1131, %v1131
        %v1172 = vmul.f32 %v1132, %v1132
        %v1173 = vmul.f32 %v1133, %v1133
        %v1174 = vmul.f32 %v1134, %v1134
        %v1175 = vmul.f32 %v1135, %v1135
        %v1176 = vmul.f32 %v1136, %v1136
        %v1177 = vmul.f32 %v1137, %v1137
        %v1178 = vsub.f32 %v1162, %v1170
        %v1179 = vsub.f32 %v1163, %v1171
        %v1180 = vsub.f32 %v1164, %v1172
        %v1181 = vsub.f32 %v1165, %v1173
        %v1182 = vsub.f32 %v1166, %v1174
        %v1183 = vsub.f32 %v1167, %v1175
        %v1184 = vsub.f32 %v1168, %v1176
        %v1185 = vsub.f32 %v1169, %v1177
        %v1186 = vmax.f32 %v1178, 0.0
        %v1187 = vmax.f32 %v1179, 0.0
        %v1188 = vmax.f32 %v1180, 0.0
        %v1189 = vmax.f32 %v1181, 0.0
        %v1190 = vmax.f32 %v1182, 0.0
        %v1191 = vmax.f32 %v1183, 0.0
        %v1192 = vmax.f32 %v1184, 0.0
        %v1193 = vmax.f32 %v1185, 0.0
        %v1194 = vsub.f32 %v1106, %v1130
        %v1195 = vsub.f32 %v1107, %v1131
        %v1196 = vsub.f32 %v1108, %v1132
        %v1197 = vsub.f32 %v1109, %v1133
        %v1198 = vsub.f32 %v1110, %v1134
        %v1199 = vsub.f32 %v1111, %v1135
        %v1200 = vsub.f32 %v1112, %v1136
        %v1201 = vsub.f32 %v1113, %v1137
        %v1202 = vadd.f32 %v1186, 1e-05
        %v1203 = vadd.f32 %v1187, 1e-05
        %v1204 = vadd.f32 %v1188, 1e-05
        %v1205 = vadd.f32 %v1189, 1e-05
        %v1206 = vadd.f32 %v1190, 1e-05
        %v1207 = vadd.f32 %v1191, 1e-05
        %v1208 = vadd.f32 %v1192, 1e-05
        %v1209 = vadd.f32 %v1193, 1e-05
        %v1210 = vrsqrt.pop %v1202
        %v1211 = vrsqrt.pop %v1203
        %v1212 = vrsqrt.pop %v1204
        %v1213 = vrsqrt.pop %v1205
        %v1214 = vrsqrt.pop %v1206
        %v1215 = vrsqrt.pop %v1207
        %v1216 = vrsqrt.pop %v1208
        %v1217 = vrsqrt.pop %v1209
        %v1218 = vmul.f32 %v1194, %v1210
        %v1219 = vmul.f32 %v1195, %v1211
        %v1220 = vmul.f32 %v1196, %v1212
        %v1221 = vmul.f32 %v1197, %v1213
        %v1222 = vmul.f32 %v1198, %v1214
        %v1223 = vmul.f32 %v1199, %v1215
        %v1224 = vmul.f32 %v1200, %v1216
        %v1225 = vmul.f32 %v1201, %v1217
        %v1226 = vmul.f32 %v1218, %v1078
        %v1227 = vmul.f32 %v1219, %v1078
        %v1228 = vmul.f32 %v1220, %v1078
        %v1229 = vmul.f32 %v1221, %v1078
        %v1230 = vmul.f32 %v1222, %v1078
        %v1231 = vmul.f32 %v1223, %v1078
        %v1232 = vmul.f32 %v1224, %v1078
        %v1233 = vmul.f32 %v1225, %v1078
        %v1234 = vadd.f32 %v1226, %v1092
        %v1235 = vadd.f32 %v1227, %v1092
        %v1236 = vadd.f32 %v1228, %v1092
        %v1237 = vadd.f32 %v1229, %v1092
        %v1238 = vadd.f32 %v1230, %v1092
        %v1239 = vadd.f32 %v1231, %v1092
        %v1240 = vadd.f32 %v1232, %v1092
        %v1241 = vadd.f32 %v1233, %v1092
        %v1242 = vpack.c.bf16 %v1235, %v1234
        %v1243 = vpack.c.bf16 %v1237, %v1236
        %v1244 = vpack.c.bf16 %v1239, %v1238
        %v1245 = vpack.c.bf16 %v1241, %v1240
        %v1246 = vld [vmem:[#allocation2 + $0x80] sm:$0xff]
        %v1247 = vld [vmem:[#allocation2 + $0x88] sm:$0xff]
        %v1248 = vld [vmem:[#allocation2 + $0x90] sm:$0xff]
        %v1249 = vld [vmem:[#allocation2 + $0x98] sm:$0xff]
        %v1250 = vld [vmem:[#allocation2 + $0xa0] sm:$0xff]
        %v1251 = vld [vmem:[#allocation2 + $0xa8] sm:$0xff]
        %v1252 = vld [vmem:[#allocation2 + $0xb0] sm:$0xff]
        %v1253 = vld [vmem:[#allocation2 + $0xb8] sm:$0xff]
        %1254 = vadd.xlane.f32.xlu0 %v1246
        %v1255 = vpop.xlane.xlu0 %1254
        %1256 = vadd.xlane.f32.xlu0 %v1247
        %v1257 = vpop.xlane.xlu0 %1256
        %1258 = vadd.xlane.f32.xlu0 %v1248
        %v1259 = vpop.xlane.xlu0 %1258
        %1260 = vadd.xlane.f32.xlu0 %v1249
        %v1261 = vpop.xlane.xlu0 %1260
        %1262 = vadd.xlane.f32.xlu0 %v1250
        %v1263 = vpop.xlane.xlu0 %1262
        %1264 = vadd.xlane.f32.xlu0 %v1251
        %v1265 = vpop.xlane.xlu0 %1264
        %1266 = vadd.xlane.f32.xlu0 %v1252
        %v1267 = vpop.xlane.xlu0 %1266
        %1268 = vadd.xlane.f32.xlu0 %v1253
        %v1269 = vpop.xlane.xlu0 %1268
        %v1270 = vmul.f32 %v1255, %v977
        %v1271 = vmul.f32 %v1257, %v977
        %v1272 = vmul.f32 %v1259, %v977
        %v1273 = vmul.f32 %v1261, %v977
        %v1274 = vmul.f32 %v1263, %v977
        %v1275 = vmul.f32 %v1265, %v977
        %v1276 = vmul.f32 %v1267, %v977
        %v1277 = vmul.f32 %v1269, %v977
        %v1278 = vmul.f32 %v1246, %v1246
        %v1279 = vmul.f32 %v1247, %v1247
        %v1280 = vmul.f32 %v1248, %v1248
        %v1281 = vmul.f32 %v1249, %v1249
        %v1282 = vmul.f32 %v1250, %v1250
        %v1283 = vmul.f32 %v1251, %v1251
        %v1284 = vmul.f32 %v1252, %v1252
        %v1285 = vmul.f32 %v1253, %v1253
        %1286 = vadd.xlane.f32.xlu0 %v1278
        %v1287 = vpop.xlane.xlu0 %1286
        %1288 = vadd.xlane.f32.xlu0 %v1279
        %v1289 = vpop.xlane.xlu0 %1288
        %1290 = vadd.xlane.f32.xlu0 %v1280
        %v1291 = vpop.xlane.xlu0 %1290
        %1292 = vadd.xlane.f32.xlu0 %v1281
        %v1293 = vpop.xlane.xlu0 %1292
        %1294 = vadd.xlane.f32.xlu0 %v1282
        %v1295 = vpop.xlane.xlu0 %1294
        %1296 = vadd.xlane.f32.xlu0 %v1283
        %v1297 = vpop.xlane.xlu0 %1296
        %1298 = vadd.xlane.f32.xlu0 %v1284
        %v1299 = vpop.xlane.xlu0 %1298
        %1300 = vadd.xlane.f32.xlu0 %v1285
        %v1301 = vpop.xlane.xlu0 %1300
        %v1302 = vmul.f32 %v1287, %v977
        %v1303 = vmul.f32 %v1289, %v977
        %v1304 = vmul.f32 %v1291, %v977
        %v1305 = vmul.f32 %v1293, %v977
        %v1306 = vmul.f32 %v1295, %v977
        %v1307 = vmul.f32 %v1297, %v977
        %v1308 = vmul.f32 %v1299, %v977
        %v1309 = vmul.f32 %v1301, %v977
        %v1310 = vmul.f32 %v1270, %v1270
        %v1311 = vmul.f32 %v1271, %v1271
        %v1312 = vmul.f32 %v1272, %v1272
        %v1313 = vmul.f32 %v1273, %v1273
        %v1314 = vmul.f32 %v1274, %v1274
        %v1315 = vmul.f32 %v1275, %v1275
        %v1316 = vmul.f32 %v1276, %v1276
        %v1317 = vmul.f32 %v1277, %v1277
        %v1318 = vsub.f32 %v1302, %v1310
        %v1319 = vsub.f32 %v1303, %v1311
        %v1320 = vsub.f32 %v1304, %v1312
        %v1321 = vsub.f32 %v1305, %v1313
        %v1322 = vsub.f32 %v1306, %v1314
        %v1323 = vsub.f32 %v1307, %v1315
        %v1324 = vsub.f32 %v1308, %v1316
        %v1325 = vsub.f32 %v1309, %v1317
        %v1326 = vmax.f32 %v1318, 0.0
        %v1327 = vmax.f32 %v1319, 0.0
        %v1328 = vmax.f32 %v1320, 0.0
        %v1329 = vmax.f32 %v1321, 0.0
        %v1330 = vmax.f32 %v1322, 0.0
        %v1331 = vmax.f32 %v1323, 0.0
        %v1332 = vmax.f32 %v1324, 0.0
        %v1333 = vmax.f32 %v1325, 0.0
        %v1334 = vsub.f32 %v1246, %v1270
        %v1335 = vsub.f32 %v1247, %v1271
        %v1336 = vsub.f32 %v1248, %v1272
        %v1337 = vsub.f32 %v1249, %v1273
        %v1338 = vsub.f32 %v1250, %v1274
        %v1339 = vsub.f32 %v1251, %v1275
        %v1340 = vsub.f32 %v1252, %v1276
        %v1341 = vsub.f32 %v1253, %v1277
        %v1342 = vadd.f32 %v1326, 1e-05
        %v1343 = vadd.f32 %v1327, 1e-05
        %v1344 = vadd.f32 %v1328, 1e-05
        %v1345 = vadd.f32 %v1329, 1e-05
        %v1346 = vadd.f32 %v1330, 1e-05
        %v1347 = vadd.f32 %v1331, 1e-05
        %v1348 = vadd.f32 %v1332, 1e-05
        %v1349 = vadd.f32 %v1333, 1e-05
        %v1350 = vrsqrt.pop %v1342
        %v1351 = vrsqrt.pop %v1343
        %v1352 = vrsqrt.pop %v1344
        %v1353 = vrsqrt.pop %v1345
        %v1354 = vrsqrt.pop %v1346
        %v1355 = vrsqrt.pop %v1347
        %v1356 = vrsqrt.pop %v1348
        %v1357 = vrsqrt.pop %v1349
        %v1358 = vmul.f32 %v1334, %v1350
        %v1359 = vmul.f32 %v1335, %v1351
        %v1360 = vmul.f32 %v1336, %v1352
        %v1361 = vmul.f32 %v1337, %v1353
        %v1362 = vmul.f32 %v1338, %v1354
        %v1363 = vmul.f32 %v1339, %v1355
        %v1364 = vmul.f32 %v1340, %v1356
        %v1365 = vmul.f32 %v1341, %v1357
        %v1366 = vmul.f32 %v1358, %v1078
        %v1367 = vmul.f32 %v1359, %v1078
        %v1368 = vmul.f32 %v1360, %v1078
        %v1369 = vmul.f32 %v1361, %v1078
        %v1370 = vmul.f32 %v1362, %v1078
        %v1371 = vmul.f32 %v1363, %v1078
        %v1372 = vmul.f32 %v1364, %v1078
        %v1373 = vmul.f32 %v1365, %v1078
        %v1374 = vadd.f32 %v1366, %v1092
        %v1375 = vadd.f32 %v1367, %v1092
        %v1376 = vadd.f32 %v1368, %v1092
        %v1377 = vadd.f32 %v1369, %v1092
        %v1378 = vadd.f32 %v1370, %v1092
        %v1379 = vadd.f32 %v1371, %v1092
        %v1380 = vadd.f32 %v1372, %v1092
        %v1381 = vadd.f32 %v1373, %v1092
        %v1382 = vpack.c.bf16 %v1375, %v1374
        %v1383 = vpack.c.bf16 %v1377, %v1376
        %v1384 = vpack.c.bf16 %v1379, %v1378
        %v1385 = vpack.c.bf16 %v1381, %v1380
        %v1386 = vld [vmem:[#allocation2 + $0xc0] sm:$0xff]
        %v1387 = vld [vmem:[#allocation2 + $0xc8] sm:$0xff]
        %v1388 = vld [vmem:[#allocation2 + $0xd0] sm:$0xff]
        %v1389 = vld [vmem:[#allocation2 + $0xd8] sm:$0xff]
        %v1390 = vld [vmem:[#allocation2 + $0xe0] sm:$0xff]
        %v1391 = vld [vmem:[#allocation2 + $0xe8] sm:$0xff]
        %v1392 = vld [vmem:[#allocation2 + $0xf0] sm:$0xff]
        %v1393 = vld [vmem:[#allocation2 + $0xf8] sm:$0xff]
        %1394 = vadd.xlane.f32.xlu0 %v1386
        %v1395 = vpop.xlane.xlu0 %1394
        %1396 = vadd.xlane.f32.xlu0 %v1387
        %v1397 = vpop.xlane.xlu0 %1396
        %1398 = vadd.xlane.f32.xlu0 %v1388
        %v1399 = vpop.xlane.xlu0 %1398
        %1400 = vadd.xlane.f32.xlu0 %v1389
        %v1401 = vpop.xlane.xlu0 %1400
        %1402 = vadd.xlane.f32.xlu0 %v1390
        %v1403 = vpop.xlane.xlu0 %1402
        %1404 = vadd.xlane.f32.xlu0 %v1391
        %v1405 = vpop.xlane.xlu0 %1404
        %1406 = vadd.xlane.f32.xlu0 %v1392
        %v1407 = vpop.xlane.xlu0 %1406
        %1408 = vadd.xlane.f32.xlu0 %v1393
        %v1409 = vpop.xlane.xlu0 %1408
        %v1410 = vmul.f32 %v1395, %v977
        %v1411 = vmul.f32 %v1397, %v977
        %v1412 = vmul.f32 %v1399, %v977
        %v1413 = vmul.f32 %v1401, %v977
        %v1414 = vmul.f32 %v1403, %v977
        %v1415 = vmul.f32 %v1405, %v977
        %v1416 = vmul.f32 %v1407, %v977
        %v1417 = vmul.f32 %v1409, %v977
        %v1418 = vmul.f32 %v1386, %v1386
        %v1419 = vmul.f32 %v1387, %v1387
        %v1420 = vmul.f32 %v1388, %v1388
        %v1421 = vmul.f32 %v1389, %v1389
        %v1422 = vmul.f32 %v1390, %v1390
        %v1423 = vmul.f32 %v1391, %v1391
        %v1424 = vmul.f32 %v1392, %v1392
        %v1425 = vmul.f32 %v1393, %v1393
        %1426 = vadd.xlane.f32.xlu0 %v1418
        %v1427 = vpop.xlane.xlu0 %1426
        %1428 = vadd.xlane.f32.xlu0 %v1419
        %v1429 = vpop.xlane.xlu0 %1428
        %1430 = vadd.xlane.f32.xlu0 %v1420
        %v1431 = vpop.xlane.xlu0 %1430
        %1432 = vadd.xlane.f32.xlu0 %v1421
        %v1433 = vpop.xlane.xlu0 %1432
        %1434 = vadd.xlane.f32.xlu0 %v1422
        %v1435 = vpop.xlane.xlu0 %1434
        %1436 = vadd.xlane.f32.xlu0 %v1423
        %v1437 = vpop.xlane.xlu0 %1436
        %1438 = vadd.xlane.f32.xlu0 %v1424
        %v1439 = vpop.xlane.xlu0 %1438
        %1440 = vadd.xlane.f32.xlu0 %v1425
        %v1441 = vpop.xlane.xlu0 %1440
        %v1442 = vmul.f32 %v1427, %v977
        %v1443 = vmul.f32 %v1429, %v977
        %v1444 = vmul.f32 %v1431, %v977
        %v1445 = vmul.f32 %v1433, %v977
        %v1446 = vmul.f32 %v1435, %v977
        %v1447 = vmul.f32 %v1437, %v977
        %v1448 = vmul.f32 %v1439, %v977
        %v1449 = vmul.f32 %v1441, %v977
        %v1450 = vmul.f32 %v1410, %v1410
        %v1451 = vmul.f32 %v1411, %v1411
        %v1452 = vmul.f32 %v1412, %v1412
        %v1453 = vmul.f32 %v1413, %v1413
        %v1454 = vmul.f32 %v1414, %v1414
        %v1455 = vmul.f32 %v1415, %v1415
        %v1456 = vmul.f32 %v1416, %v1416
        %v1457 = vmul.f32 %v1417, %v1417
        %v1458 = vsub.f32 %v1442, %v1450
        %v1459 = vsub.f32 %v1443, %v1451
        %v1460 = vsub.f32 %v1444, %v1452
        %v1461 = vsub.f32 %v1445, %v1453
        %v1462 = vsub.f32 %v1446, %v1454
        %v1463 = vsub.f32 %v1447, %v1455
        %v1464 = vsub.f32 %v1448, %v1456
        %v1465 = vsub.f32 %v1449, %v1457
        %v1466 = vmax.f32 %v1458, 0.0
        %v1467 = vmax.f32 %v1459, 0.0
        %v1468 = vmax.f32 %v1460, 0.0
        %v1469 = vmax.f32 %v1461, 0.0
        %v1470 = vmax.f32 %v1462, 0.0
        %v1471 = vmax.f32 %v1463, 0.0
        %v1472 = vmax.f32 %v1464, 0.0
        %v1473 = vmax.f32 %v1465, 0.0
        %v1474 = vsub.f32 %v1386, %v1410
        %v1475 = vsub.f32 %v1387, %v1411
        %v1476 = vsub.f32 %v1388, %v1412
        %v1477 = vsub.f32 %v1389, %v1413
        %v1478 = vsub.f32 %v1390, %v1414
        %v1479 = vsub.f32 %v1391, %v1415
        %v1480 = vsub.f32 %v1392, %v1416
        %v1481 = vsub.f32 %v1393, %v1417
        %v1482 = vadd.f32 %v1466, 1e-05
        %v1483 = vadd.f32 %v1467, 1e-05
        %v1484 = vadd.f32 %v1468, 1e-05
        %v1485 = vadd.f32 %v1469, 1e-05
        %v1486 = vadd.f32 %v1470, 1e-05
        %v1487 = vadd.f32 %v1471, 1e-05
        %v1488 = vadd.f32 %v1472, 1e-05
        %v1489 = vadd.f32 %v1473, 1e-05
        %v1490 = vrsqrt.pop %v1482
        %v1491 = vrsqrt.pop %v1483
        %v1492 = vrsqrt.pop %v1484
        %v1493 = vrsqrt.pop %v1485
        %v1494 = vrsqrt.pop %v1486
        %v1495 = vrsqrt.pop %v1487
        %v1496 = vrsqrt.pop %v1488
        %v1497 = vrsqrt.pop %v1489
        %v1498 = vmul.f32 %v1474, %v1490
        %v1499 = vmul.f32 %v1475, %v1491
        %v1500 = vmul.f32 %v1476, %v1492
        %v1501 = vmul.f32 %v1477, %v1493
        %v1502 = vmul.f32 %v1478, %v1494
        %v1503 = vmul.f32 %v1479, %v1495
        %v1504 = vmul.f32 %v1480, %v1496
        %v1505 = vmul.f32 %v1481, %v1497
        %v1506 = vmul.f32 %v1498, %v1078
        %v1507 = vmul.f32 %v1499, %v1078
        %v1508 = vmul.f32 %v1500, %v1078
        %v1509 = vmul.f32 %v1501, %v1078
        %v1510 = vmul.f32 %v1502, %v1078
        %v1511 = vmul.f32 %v1503, %v1078
        %v1512 = vmul.f32 %v1504, %v1078
        %v1513 = vmul.f32 %v1505, %v1078
        %v1514 = vadd.f32 %v1506, %v1092
        %v1515 = vadd.f32 %v1507, %v1092
        %v1516 = vadd.f32 %v1508, %v1092
        %v1517 = vadd.f32 %v1509, %v1092
        %v1518 = vadd.f32 %v1510, %v1092
        %v1519 = vadd.f32 %v1511, %v1092
        %v1520 = vadd.f32 %v1512, %v1092
        %v1521 = vadd.f32 %v1513, %v1092
        %v1522 = vpack.c.bf16 %v1515, %v1514
        %v1523 = vpack.c.bf16 %v1517, %v1516
        %v1524 = vpack.c.bf16 %v1519, %v1518
        %v1525 = vpack.c.bf16 %v1521, %v1520
        %v1526 = vld [vmem:[%s5] sm:$0xf]
        %v1527 = vld [vmem:[%s5 + $0x4] sm:$0xf]
        %v1528 = vld [vmem:[%s5 + $0x8] sm:$0xf]
        %v1529 = vld [vmem:[%s5 + $0xc] sm:$0xf]
        %v1530 = vld [vmem:[%s5 + $0x10] sm:$0xf]
        %v1531 = vld [vmem:[%s5 + $0x14] sm:$0xf]
        %v1532 = vld [vmem:[%s5 + $0x18] sm:$0xf]
        %v1533 = vld [vmem:[%s5 + $0x1c] sm:$0xf]
        %v1534 = vld [vmem:[%s5 + $0x20] sm:$0xf]
        %v1535 = vld [vmem:[%s5 + $0x24] sm:$0xf]
        %v1536 = vld [vmem:[%s5 + $0x28] sm:$0xf]
        %v1537 = vld [vmem:[%s5 + $0x2c] sm:$0xf]
        %v1538 = vld [vmem:[%s5 + $0x30] sm:$0xf]
        %v1539 = vld [vmem:[%s5 + $0x34] sm:$0xf]
        %v1540 = vld [vmem:[%s5 + $0x38] sm:$0xf]
        %v1541 = vld [vmem:[%s5 + $0x3c] sm:$0xf]
        %v1542 = vld [vmem:[%s6] sm:$0xff]
        %v1543 = vld [vmem:[%s6 + $0x8] sm:$0xff]
        %v1544 = vld [vmem:[%s6 + $0x10] sm:$0xff]
        %v1545 = vld [vmem:[%s6 + $0x18] sm:$0xff]
        %v1546 = vld [vmem:[%s6 + $0x20] sm:$0xff]
        %v1547 = vld [vmem:[%s6 + $0x28] sm:$0xff]
        %v1548 = vld [vmem:[%s6 + $0x30] sm:$0xff]
        %v1549 = vld [vmem:[%s6 + $0x38] sm:$0xff]
        %v1550 = vld [vmem:[%s6 + $0x40] sm:$0xff]
        %v1551 = vld [vmem:[%s6 + $0x48] sm:$0xff]
        %v1552 = vld [vmem:[%s6 + $0x50] sm:$0xff]
        %v1553 = vld [vmem:[%s6 + $0x58] sm:$0xff]
        %v1554 = vld [vmem:[%s6 + $0x60] sm:$0xff]
        %v1555 = vld [vmem:[%s6 + $0x68] sm:$0xff]
        %v1556 = vld [vmem:[%s6 + $0x70] sm:$0xff]
        %v1557 = vld [vmem:[%s6 + $0x78] sm:$0xff]
        %1559 = vset.pattern.permute.xlu0 0
        %1560 = vperm.xlu0 %1559, %v1542
        %v1561 = vpop.permute.xlu0 %1560
        %1564 = vset.pattern.permute.xlu0 0
        %1565 = vperm.xlu0 %1564, %v1543
        %v1566 = vpop.permute.xlu0 %1565
        %1569 = vset.pattern.permute.xlu0 0
        %1570 = vperm.xlu0 %1569, %v1544
        %v1571 = vpop.permute.xlu0 %1570
        %1574 = vset.pattern.permute.xlu0 0
        %1575 = vperm.xlu0 %1574, %v1545
        %v1576 = vpop.permute.xlu0 %1575
        %1579 = vset.pattern.permute.xlu0 0
        %1580 = vperm.xlu0 %1579, %v1546
        %v1581 = vpop.permute.xlu0 %1580
        %1584 = vset.pattern.permute.xlu0 0
        %1585 = vperm.xlu0 %1584, %v1547
        %v1586 = vpop.permute.xlu0 %1585
        %1589 = vset.pattern.permute.xlu0 0
        %1590 = vperm.xlu0 %1589, %v1548
        %v1591 = vpop.permute.xlu0 %1590
        %1594 = vset.pattern.permute.xlu0 0
        %1595 = vperm.xlu0 %1594, %v1549
        %v1596 = vpop.permute.xlu0 %1595
        %1599 = vset.pattern.permute.xlu0 0
        %1600 = vperm.xlu0 %1599, %v1550
        %v1601 = vpop.permute.xlu0 %1600
        %1604 = vset.pattern.permute.xlu0 0
        %1605 = vperm.xlu0 %1604, %v1551
        %v1606 = vpop.permute.xlu0 %1605
        %1609 = vset.pattern.permute.xlu0 0
        %1610 = vperm.xlu0 %1609, %v1552
        %v1611 = vpop.permute.xlu0 %1610
        %1614 = vset.pattern.permute.xlu0 0
        %1615 = vperm.xlu0 %1614, %v1553
        %v1616 = vpop.permute.xlu0 %1615
        %1619 = vset.pattern.permute.xlu0 0
        %1620 = vperm.xlu0 %1619, %v1554
        %v1621 = vpop.permute.xlu0 %1620
        %1624 = vset.pattern.permute.xlu0 0
        %1625 = vperm.xlu0 %1624, %v1555
        %v1626 = vpop.permute.xlu0 %1625
        %1629 = vset.pattern.permute.xlu0 0
        %1630 = vperm.xlu0 %1629, %v1556
        %v1631 = vpop.permute.xlu0 %1630
        %1634 = vset.pattern.permute.xlu0 0
        %1635 = vperm.xlu0 %1634, %v1557
        %v1636 = vpop.permute.xlu0 %1635
        %v1654 = vunpack.c.l.b16 %v1526
        %v1655 = vunpack.c.l.b16 %v1527
        %v1656 = vunpack.c.l.b16 %v1528
        %v1657 = vunpack.c.l.b16 %v1529
        %v1658 = vunpack.c.l.b16 %v1530
        %v1659 = vunpack.c.l.b16 %v1531
        %v1660 = vunpack.c.l.b16 %v1532
        %v1661 = vunpack.c.l.b16 %v1533
        %v1662 = vunpack.c.l.b16 %v1534
        %v1663 = vunpack.c.l.b16 %v1535
        %v1664 = vunpack.c.l.b16 %v1536
        %v1665 = vunpack.c.l.b16 %v1537
        %v1666 = vunpack.c.l.b16 %v1538
        %v1667 = vunpack.c.l.b16 %v1539
        %v1668 = vunpack.c.l.b16 %v1540
        %v1669 = vunpack.c.l.b16 %v1541
        %v1670 = vpack.c.b16 %v1655, %v1654
        %v1671 = vpack.c.b16 %v1657, %v1656
        %v1672 = vpack.c.b16 %v1659, %v1658
        %v1673 = vpack.c.b16 %v1661, %v1660
        %v1674 = vpack.c.b16 %v1663, %v1662
        %v1675 = vpack.c.b16 %v1665, %v1664
        %v1676 = vpack.c.b16 %v1667, %v1666
        %v1677 = vpack.c.b16 %v1669, %v1668
        %vm1678 = vcmask 523264
        %v1680 = vsel %vm1678, %v1670, 0
        %v1683 = vsel %vm1678, %v1671, 0
        %v1686 = vsel %vm1678, %v1672, 0
        %v1689 = vsel %vm1678, %v1673, 0
        %v1692 = vsel %vm1678, %v1674, 0
        %v1695 = vsel %vm1678, %v1675, 0
        %v1698 = vsel %vm1678, %v1676, 0
        %v1701 = vsel %vm1678, %v1677, 0
        %1703 = vmatprep.subr.bf16.mxu0 %v1242
        %1704 = vmatpush1.bf16.msra.mxu0 %v1102
        %1705 = vmatprep.subr.bf16.mxu0 %v1243
        %1706 = vmatpush1.bf16.msra.mxu0 %v1103
        %1707 = vmatprep.subr.bf16.mxu0 %v1244
        %1708 = vmatpush1.bf16.msra.mxu0 %v1104
        %1709 = vmatprep.subr.bf16.mxu0 %v1245
        %1710 = vmatpush1.bf16.msra.mxu0 %v1105
        %1711 = vmatprep.subr.bf16.mxu0 0
        %1712 = vmatpush1.bf16.msra.mxu0 0
        %1713 = vmatprep.subr.bf16.mxu0 0
        %1714 = vmatpush1.bf16.msra.mxu0 0
        %1715 = vmatprep.subr.bf16.mxu0 0
        %1716 = vmatpush1.bf16.msra.mxu0 0
        %1717 = vmatprep.subr.bf16.mxu0 0
        %1718 = vmatpush1.bf16.msra.mxu0 0
        %1719 = vmatprep.subr.bf16.mxu0 0
        %1720 = vmatpush1.bf16.msra.mxu0 0
        %1721 = vmatprep.subr.bf16.mxu0 0
        %1722 = vmatpush1.bf16.msra.mxu0 0
        %1723 = vmatprep.subr.bf16.mxu0 0
        %1724 = vmatpush1.bf16.msra.mxu0 0
        %1725 = vmatprep.subr.bf16.mxu0 0
        %1726 = vmatpush1.bf16.msra.mxu0 0
        %1727 = vmatprep.subr.bf16.mxu0 0
        %1728 = vmatpush1.bf16.msra.mxu0 0
        %1729 = vmatprep.subr.bf16.mxu0 0
        %1730 = vmatpush1.bf16.msra.mxu0 0
        %1731 = vmatprep.subr.bf16.mxu0 0
        %1732 = vmatpush1.bf16.msra.mxu0 0
        %1733 = vmatprep.subr.bf16.mxu0 0
        %1734 = vmatpush1.bf16.msra.mxu0 0
        %1735 = vmatprep.mubr.bf16.mxu0 0
        %1736 = vmatmul.mubr.bf16.gmra.mrb[0].mxu0 %v1680
        %v1737 = vpop.f32.mrb[0].mxu0
        %v1738 = vadd.f32 %v1561, %v1737
        %v1739 = vpop.f32.mrb[0].mxu0
        %v1740 = vadd.f32 %v1561, %v1739
        %v1741 = vpop.f32.mrb[0].mxu0
        %v1742 = vadd.f32 %v1566, %v1741
        %v1743 = vpop.f32.mrb[0].mxu0
        %v1744 = vadd.f32 %v1566, %v1743
        %1745 = vmatprep.mubr.bf16.mxu0 0
        %1746 = vmatmul.mubr.bf16.gmra.mrb[0].mxu0 %v1683
        %v1747 = vpop.f32.mrb[0].mxu0
        %v1748 = vadd.f32 %v1571, %v1747
        %v1749 = vpop.f32.mrb[0].mxu0
        %v1750 = vadd.f32 %v1571, %v1749
        %v1751 = vpop.f32.mrb[0].mxu0
        %v1752 = vadd.f32 %v1576, %v1751
        %v1753 = vpop.f32.mrb[0].mxu0
        %v1754 = vadd.f32 %v1576, %v1753
        %1755 = vmatprep.mubr.bf16.mxu0 0
        %1756 = vmatmul.mubr.bf16.gmra.mrb[0].mxu0 %v1686
        %v1757 = vpop.f32.mrb[0].mxu0
        %v1758 = vadd.f32 %v1581, %v1757
        %v1759 = vpop.f32.mrb[0].mxu0
        %v1760 = vadd.f32 %v1581, %v1759
        %v1761 = vpop.f32.mrb[0].mxu0
        %v1762 = vadd.f32 %v1586, %v1761
        %v1763 = vpop.f32.mrb[0].mxu0
        %v1764 = vadd.f32 %v1586, %v1763
        %1765 = vmatprep.mubr.bf16.mxu0 0
        %1766 = vmatmul.mubr.bf16.gmra.mrb[0].mxu0 %v1689
        %v1767 = vpop.f32.mrb[0].mxu0
        %v1768 = vadd.f32 %v1591, %v1767
        %v1769 = vpop.f32.mrb[0].mxu0
        %v1770 = vadd.f32 %v1591, %v1769
        %v1771 = vpop.f32.mrb[0].mxu0
        %v1772 = vadd.f32 %v1596, %v1771
        %v1773 = vpop.f32.mrb[0].mxu0
        %v1774 = vadd.f32 %v1596, %v1773
        %1775 = vmatprep.mubr.bf16.mxu0 0
        %1776 = vmatmul.mubr.bf16.gmra.mrb[0].mxu0 %v1692
        %v1777 = vpop.f32.mrb[0].mxu0
        %v1778 = vadd.f32 %v1601, %v1777
        %v1779 = vpop.f32.mrb[0].mxu0
        %v1780 = vadd.f32 %v1601, %v1779
        %v1781 = vpop.f32.mrb[0].mxu0
        %v1782 = vadd.f32 %v1606, %v1781
        %v1783 = vpop.f32.mrb[0].mxu0
        %v1784 = vadd.f32 %v1606, %v1783
        %1785 = vmatprep.mubr.bf16.mxu0 0
        %1786 = vmatmul.mubr.bf16.gmra.mrb[0].mxu0 %v1695
        %v1787 = vpop.f32.mrb[0].mxu0
        %v1788 = vadd.f32 %v1611, %v1787
        %v1789 = vpop.f32.mrb[0].mxu0
        %v1790 = vadd.f32 %v1611, %v1789
        %v1791 = vpop.f32.mrb[0].mxu0
        %v1792 = vadd.f32 %v1616, %v1791
        %v1793 = vpop.f32.mrb[0].mxu0
        %v1794 = vadd.f32 %v1616, %v1793
        %1795 = vmatprep.mubr.bf16.mxu0 0
        %1796 = vmatmul.mubr.bf16.gmra.mrb[0].mxu0 %v1698
        %v1797 = vpop.f32.mrb[0].mxu0
        %v1798 = vadd.f32 %v1621, %v1797
        %v1799 = vpop.f32.mrb[0].mxu0
        %v1800 = vadd.f32 %v1621, %v1799
        %v1801 = vpop.f32.mrb[0].mxu0
        %v1802 = vadd.f32 %v1626, %v1801
        %v1803 = vpop.f32.mrb[0].mxu0
        %v1804 = vadd.f32 %v1626, %v1803
        %1805 = vmatprep.mubr.bf16.mxu0 0
        %1806 = vmatmul.mubr.bf16.gmra.mrb[0].mxu0 %v1701
        %v1807 = vpop.f32.mrb[0].mxu0
        %v1808 = vadd.f32 %v1631, %v1807
        %v1809 = vpop.f32.mrb[0].mxu0
        %v1810 = vadd.f32 %v1631, %v1809
        %v1811 = vpop.f32.mrb[0].mxu0
        %v1812 = vadd.f32 %v1636, %v1811
        %v1813 = vpop.f32.mrb[0].mxu0
        %v1814 = vadd.f32 %v1636, %v1813
        %1815 = vdwg.mxu0
        %1816 = vmatprep.subr.bf16.mxu0 %v1522
        %1817 = vmatpush1.bf16.msra.mxu0 %v1382
        %1818 = vmatprep.subr.bf16.mxu0 %v1523
        %1819 = vmatpush1.bf16.msra.mxu0 %v1383
        %1820 = vmatprep.subr.bf16.mxu0 %v1524
        %1821 = vmatpush1.bf16.msra.mxu0 %v1384
        %1822 = vmatprep.subr.bf16.mxu0 %v1525
        %1823 = vmatpush1.bf16.msra.mxu0 %v1385
        %1824 = vmatprep.subr.bf16.mxu0 0
        %1825 = vmatpush1.bf16.msra.mxu0 0
        %1826 = vmatprep.subr.bf16.mxu0 0
        %1827 = vmatpush1.bf16.msra.mxu0 0
        %1828 = vmatprep.subr.bf16.mxu0 0
        %1829 = vmatpush1.bf16.msra.mxu0 0
        %1830 = vmatprep.subr.bf16.mxu0 0
        %1831 = vmatpush1.bf16.msra.mxu0 0
        %1832 = vmatprep.subr.bf16.mxu0 0
        %1833 = vmatpush1.bf16.msra.mxu0 0
        %1834 = vmatprep.subr.bf16.mxu0 0
        %1835 = vmatpush1.bf16.msra.mxu0 0
        %1836 = vmatprep.subr.bf16.mxu0 0
        %1837 = vmatpush1.bf16.msra.mxu0 0
        %1838 = vmatprep.subr.bf16.mxu0 0
        %1839 = vmatpush1.bf16.msra.mxu0 0
        %1840 = vmatprep.subr.bf16.mxu0 0
        %1841 = vmatpush1.bf16.msra.mxu0 0
        %1842 = vmatprep.subr.bf16.mxu0 0
        %1843 = vmatpush1.bf16.msra.mxu0 0
        %1844 = vmatprep.subr.bf16.mxu0 0
        %1845 = vmatpush1.bf16.msra.mxu0 0
        %1846 = vmatprep.subr.bf16.mxu0 0
        %1847 = vmatpush1.bf16.msra.mxu0 0
        %1848 = vmatprep.mubr.bf16.mxu0 0
        %1849 = vmatmul.mubr.bf16.gmra.mrb[0].mxu0 %v1680
        %v1850 = vpop.f32.mrb[0].mxu0
        %v1851 = vadd.f32 %v1561, %v1850
        %v1852 = vpop.f32.mrb[0].mxu0
        %v1853 = vadd.f32 %v1561, %v1852
        %v1854 = vpop.f32.mrb[0].mxu0
        %v1855 = vadd.f32 %v1566, %v1854
        %v1856 = vpop.f32.mrb[0].mxu0
        %v1857 = vadd.f32 %v1566, %v1856
        %1858 = vmatprep.mubr.bf16.mxu0 0
        %1859 = vmatmul.mubr.bf16.gmra.mrb[0].mxu0 %v1683
        %v1860 = vpop.f32.mrb[0].mxu0
        %v1861 = vadd.f32 %v1571, %v1860
        %v1862 = vpop.f32.mrb[0].mxu0
        %v1863 = vadd.f32 %v1571, %v1862
        %v1864 = vpop.f32.mrb[0].mxu0
        %v1865 = vadd.f32 %v1576, %v1864
        %v1866 = vpop.f32.mrb[0].mxu0
        %v1867 = vadd.f32 %v1576, %v1866
        %1868 = vmatprep.mubr.bf16.mxu0 0
        %1869 = vmatmul.mubr.bf16.gmra.mrb[0].mxu0 %v1686
        %v1870 = vpop.f32.mrb[0].mxu0
        %v1871 = vadd.f32 %v1581, %v1870
        %v1872 = vpop.f32.mrb[0].mxu0
        %v1873 = vadd.f32 %v1581, %v1872
        %v1874 = vpop.f32.mrb[0].mxu0
        %v1875 = vadd.f32 %v1586, %v1874
        %v1876 = vpop.f32.mrb[0].mxu0
        %v1877 = vadd.f32 %v1586, %v1876
        %1878 = vmatprep.mubr.bf16.mxu0 0
        %1879 = vmatmul.mubr.bf16.gmra.mrb[0].mxu0 %v1689
        %v1880 = vpop.f32.mrb[0].mxu0
        %v1881 = vadd.f32 %v1591, %v1880
        %v1882 = vpop.f32.mrb[0].mxu0
        %v1883 = vadd.f32 %v1591, %v1882
        %v1884 = vpop.f32.mrb[0].mxu0
        %v1885 = vadd.f32 %v1596, %v1884
        %v1886 = vpop.f32.mrb[0].mxu0
        %v1887 = vadd.f32 %v1596, %v1886
        %1888 = vmatprep.mubr.bf16.mxu0 0
        %1889 = vmatmul.mubr.bf16.gmra.mrb[0].mxu0 %v1692
        %v1890 = vpop.f32.mrb[0].mxu0
        %v1891 = vadd.f32 %v1601, %v1890
        %v1892 = vpop.f32.mrb[0].mxu0
        %v1893 = vadd.f32 %v1601, %v1892
        %v1894 = vpop.f32.mrb[0].mxu0
        %v1895 = vadd.f32 %v1606, %v1894
        %v1896 = vpop.f32.mrb[0].mxu0
        %v1897 = vadd.f32 %v1606, %v1896
        %1898 = vmatprep.mubr.bf16.mxu0 0
        %1899 = vmatmul.mubr.bf16.gmra.mrb[0].mxu0 %v1695
        %v1900 = vpop.f32.mrb[0].mxu0
        %v1901 = vadd.f32 %v1611, %v1900
        %v1902 = vpop.f32.mrb[0].mxu0
        %v1903 = vadd.f32 %v1611, %v1902
        %v1904 = vpop.f32.mrb[0].mxu0
        %v1905 = vadd.f32 %v1616, %v1904
        %v1906 = vpop.f32.mrb[0].mxu0
        %v1907 = vadd.f32 %v1616, %v1906
        %1908 = vmatprep.mubr.bf16.mxu0 0
        %1909 = vmatmul.mubr.bf16.gmra.mrb[0].mxu0 %v1698
        %v1910 = vpop.f32.mrb[0].mxu0
        %v1911 = vadd.f32 %v1621, %v1910
        %v1912 = vpop.f32.mrb[0].mxu0
        %v1913 = vadd.f32 %v1621, %v1912
        %v1914 = vpop.f32.mrb[0].mxu0
        %v1915 = vadd.f32 %v1626, %v1914
        %v1916 = vpop.f32.mrb[0].mxu0
        %v1917 = vadd.f32 %v1626, %v1916
        %1918 = vmatprep.mubr.bf16.mxu0 0
        %1919 = vmatmul.mubr.bf16.gmra.mrb[0].mxu0 %v1701
        %v1920 = vpop.f32.mrb[0].mxu0
        %v1921 = vadd.f32 %v1631, %v1920
        %v1922 = vpop.f32.mrb[0].mxu0
        %v1923 = vadd.f32 %v1631, %v1922
        %v1924 = vpop.f32.mrb[0].mxu0
        %v1925 = vadd.f32 %v1636, %v1924
        %v1926 = vpop.f32.mrb[0].mxu0
        %v1927 = vadd.f32 %v1636, %v1926
        %1928 = vdwg.mxu0
        %v1929 = vmul.f32 %v1738, 0.5
        %v1930 = vmul.f32 %v1740, 0.5
        %v1931 = vmul.f32 %v1851, 0.5
        %v1932 = vmul.f32 %v1853, 0.5
        %v1933 = vmul.f32 %v1742, 0.5
        %v1934 = vmul.f32 %v1744, 0.5
        %v1935 = vmul.f32 %v1855, 0.5
        %v1936 = vmul.f32 %v1857, 0.5
        %v1937 = vmul.f32 %v1748, 0.5
        %v1938 = vmul.f32 %v1750, 0.5
        %v1939 = vmul.f32 %v1861, 0.5
        %v1940 = vmul.f32 %v1863, 0.5
        %v1941 = vmul.f32 %v1752, 0.5
        %v1942 = vmul.f32 %v1754, 0.5
        %v1943 = vmul.f32 %v1865, 0.5
        %v1944 = vmul.f32 %v1867, 0.5
        %v1945 = vmul.f32 %v1758, 0.5
        %v1946 = vmul.f32 %v1760, 0.5
        %v1947 = vmul.f32 %v1871, 0.5
        %v1948 = vmul.f32 %v1873, 0.5
        %v1949 = vmul.f32 %v1762, 0.5
        %v1950 = vmul.f32 %v1764, 0.5
        %v1951 = vmul.f32 %v1875, 0.5
        %v1952 = vmul.f32 %v1877, 0.5
        %v1953 = vmul.f32 %v1768, 0.5
        %v1954 = vmul.f32 %v1770, 0.5
        %v1955 = vmul.f32 %v1881, 0.5
        %v1956 = vmul.f32 %v1883, 0.5
        %v1957 = vmul.f32 %v1772, 0.5
        %v1958 = vmul.f32 %v1774, 0.5
        %v1959 = vmul.f32 %v1885, 0.5
        %v1960 = vmul.f32 %v1887, 0.5
        %v1961 = vmul.f32 %v1778, 0.5
        %v1962 = vmul.f32 %v1780, 0.5
        %v1963 = vmul.f32 %v1891, 0.5
        %v1964 = vmul.f32 %v1893, 0.5
        %v1965 = vmul.f32 %v1782, 0.5
        %v1966 = vmul.f32 %v1784, 0.5
        %v1967 = vmul.f32 %v1895, 0.5
        %v1968 = vmul.f32 %v1897, 0.5
        %v1969 = vmul.f32 %v1788, 0.5
        %v1970 = vmul.f32 %v1790, 0.5
        %v1971 = vmul.f32 %v1901, 0.5
        %v1972 = vmul.f32 %v1903, 0.5
        %v1973 = vmul.f32 %v1792, 0.5
        %v1974 = vmul.f32 %v1794, 0.5
        %v1975 = vmul.f32 %v1905, 0.5
        %v1976 = vmul.f32 %v1907, 0.5
        %v1977 = vmul.f32 %v1798, 0.5
        %v1978 = vmul.f32 %v1800, 0.5
        %v1979 = vmul.f32 %v1911, 0.5
        %v1980 = vmul.f32 %v1913, 0.5
        %v1981 = vmul.f32 %v1802, 0.5
        %v1982 = vmul.f32 %v1804, 0.5
        %v1983 = vmul.f32 %v1915, 0.5
        %v1984 = vmul.f32 %v1917, 0.5
        %v1985 = vmul.f32 %v1808, 0.5
        %v1986 = vmul.f32 %v1810, 0.5
        %v1987 = vmul.f32 %v1921, 0.5
        %v1988 = vmul.f32 %v1923, 0.5
        %v1989 = vmul.f32 %v1812, 0.5
        %v1990 = vmul.f32 %v1814, 0.5
        %v1991 = vmul.f32 %v1925, 0.5
        %v1992 = vmul.f32 %v1927, 0.5
        %v1993 = vmul.f32 %v1738, 0.044715
        %v1994 = vmul.f32 %v1740, 0.044715
        %v1995 = vmul.f32 %v1851, 0.044715
        %v1996 = vmul.f32 %v1853, 0.044715
        %v1997 = vmul.f32 %v1742, 0.044715
        %v1998 = vmul.f32 %v1744, 0.044715
        %v1999 = vmul.f32 %v1855, 0.044715
        %v2000 = vmul.f32 %v1857, 0.044715
        %v2001 = vmul.f32 %v1748, 0.044715
        %v2002 = vmul.f32 %v1750, 0.044715
        %v2003 = vmul.f32 %v1861, 0.044715
        %v2004 = vmul.f32 %v1863, 0.044715
        %v2005 = vmul.f32 %v1752, 0.044715
        %v2006 = vmul.f32 %v1754, 0.044715
        %v2007 = vmul.f32 %v1865, 0.044715
        %v2008 = vmul.f32 %v1867, 0.044715
        %v2009 = vmul.f32 %v1758, 0.044715
        %v2010 = vmul.f32 %v1760, 0.044715
        %v2011 = vmul.f32 %v1871, 0.044715
        %v2012 = vmul.f32 %v1873, 0.044715
        %v2013 = vmul.f32 %v1762, 0.044715
        %v2014 = vmul.f32 %v1764, 0.044715
        %v2015 = vmul.f32 %v1875, 0.044715
        %v2016 = vmul.f32 %v1877, 0.044715
        %v2017 = vmul.f32 %v1768, 0.044715
        %v2018 = vmul.f32 %v1770, 0.044715
        %v2019 = vmul.f32 %v1881, 0.044715
        %v2020 = vmul.f32 %v1883, 0.044715
        %v2021 = vmul.f32 %v1772, 0.044715
        %v2022 = vmul.f32 %v1774, 0.044715
        %v2023 = vmul.f32 %v1885, 0.044715
        %v2024 = vmul.f32 %v1887, 0.044715
        %v2025 = vmul.f32 %v1778, 0.044715
        %v2026 = vmul.f32 %v1780, 0.044715
        %v2027 = vmul.f32 %v1891, 0.044715
        %v2028 = vmul.f32 %v1893, 0.044715
        %v2029 = vmul.f32 %v1782, 0.044715
        %v2030 = vmul.f32 %v1784, 0.044715
        %v2031 = vmul.f32 %v1895, 0.044715
        %v2032 = vmul.f32 %v1897, 0.044715
        %v2033 = vmul.f32 %v1788, 0.044715
        %v2034 = vmul.f32 %v1790, 0.044715
        %v2035 = vmul.f32 %v1901, 0.044715
        %v2036 = vmul.f32 %v1903, 0.044715
        %v2037 = vmul.f32 %v1792, 0.044715
        %v2038 = vmul.f32 %v1794, 0.044715
        %v2039 = vmul.f32 %v1905, 0.044715
        %v2040 = vmul.f32 %v1907, 0.044715
        %v2041 = vmul.f32 %v1798, 0.044715
        %v2042 = vmul.f32 %v1800, 0.044715
        %v2043 = vmul.f32 %v1911, 0.044715
        %v2044 = vmul.f32 %v1913, 0.044715
        %v2045 = vmul.f32 %v1802, 0.044715
        %v2046 = vmul.f32 %v1804, 0.044715
        %v2047 = vmul.f32 %v1915, 0.044715
        %v2048 = vmul.f32 %v1917, 0.044715
        %v2049 = vmul.f32 %v1808, 0.044715
        %v2050 = vmul.f32 %v1810, 0.044715
        %v2051 = vmul.f32 %v1921, 0.044715
        %v2052 = vmul.f32 %v1923, 0.044715
        %v2053 = vmul.f32 %v1812, 0.044715
        %v2054 = vmul.f32 %v1814, 0.044715
        %v2055 = vmul.f32 %v1925, 0.044715
        %v2056 = vmul.f32 %v1927, 0.044715
        %v2057 = vmul.f32 %v1993, %v1738
        %v2058 = vmul.f32 %v1994, %v1740
        %v2059 = vmul.f32 %v1995, %v1851
        %v2060 = vmul.f32 %v1996, %v1853
        %v2061 = vmul.f32 %v1997, %v1742
        %v2062 = vmul.f32 %v1998, %v1744
        %v2063 = vmul.f32 %v1999, %v1855
        %v2064 = vmul.f32 %v2000, %v1857
        %v2065 = vmul.f32 %v2001, %v1748
        %v2066 = vmul.f32 %v2002, %v1750
        %v2067 = vmul.f32 %v2003, %v1861
        %v2068 = vmul.f32 %v2004, %v1863
        %v2069 = vmul.f32 %v2005, %v1752
        %v2070 = vmul.f32 %v2006, %v1754
        %v2071 = vmul.f32 %v2007, %v1865
        %v2072 = vmul.f32 %v2008, %v1867
        %v2073 = vmul.f32 %v2009, %v1758
        %v2074 = vmul.f32 %v2010, %v1760
        %v2075 = vmul.f32 %v2011, %v1871
        %v2076 = vmul.f32 %v2012, %v1873
        %v2077 = vmul.f32 %v2013, %v1762
        %v2078 = vmul.f32 %v2014, %v1764
        %v2079 = vmul.f32 %v2015, %v1875
        %v2080 = vmul.f32 %v2016, %v1877
        %v2081 = vmul.f32 %v2017, %v1768
        %v2082 = vmul.f32 %v2018, %v1770
        %v2083 = vmul.f32 %v2019, %v1881
        %v2084 = vmul.f32 %v2020, %v1883
        %v2085 = vmul.f32 %v2021, %v1772
        %v2086 = vmul.f32 %v2022, %v1774
        %v2087 = vmul.f32 %v2023, %v1885
        %v2088 = vmul.f32 %v2024, %v1887
        %v2089 = vmul.f32 %v2025, %v1778
        %v2090 = vmul.f32 %v2026, %v1780
        %v2091 = vmul.f32 %v2027, %v1891
        %v2092 = vmul.f32 %v2028, %v1893
        %v2093 = vmul.f32 %v2029, %v1782
        %v2094 = vmul.f32 %v2030, %v1784
        %v2095 = vmul.f32 %v2031, %v1895
        %v2096 = vmul.f32 %v2032, %v1897
        %v2097 = vmul.f32 %v2033, %v1788
        %v2098 = vmul.f32 %v2034, %v1790
        %v2099 = vmul.f32 %v2035, %v1901
        %v2100 = vmul.f32 %v2036, %v1903
        %v2101 = vmul.f32 %v2037, %v1792
        %v2102 = vmul.f32 %v2038, %v1794
        %v2103 = vmul.f32 %v2039, %v1905
        %v2104 = vmul.f32 %v2040, %v1907
        %v2105 = vmul.f32 %v2041, %v1798
        %v2106 = vmul.f32 %v2042, %v1800
        %v2107 = vmul.f32 %v2043, %v1911
        %v2108 = vmul.f32 %v2044, %v1913
        %v2109 = vmul.f32 %v2045, %v1802
        %v2110 = vmul.f32 %v2046, %v1804
        %v2111 = vmul.f32 %v2047, %v1915
        %v2112 = vmul.f32 %v2048, %v1917
        %v2113 = vmul.f32 %v2049, %v1808
        %v2114 = vmul.f32 %v2050, %v1810
        %v2115 = vmul.f32 %v2051, %v1921
        %v2116 = vmul.f32 %v2052, %v1923
        %v2117 = vmul.f32 %v2053, %v1812
        %v2118 = vmul.f32 %v2054, %v1814
        %v2119 = vmul.f32 %v2055, %v1925
        %v2120 = vmul.f32 %v2056, %v1927
        %v2121 = vmul.f32 %v2057, %v1738
        %v2122 = vmul.f32 %v2058, %v1740
        %v2123 = vmul.f32 %v2059, %v1851
        %v2124 = vmul.f32 %v2060, %v1853
        %v2125 = vmul.f32 %v2061, %v1742
        %v2126 = vmul.f32 %v2062, %v1744
        %v2127 = vmul.f32 %v2063, %v1855
        %v2128 = vmul.f32 %v2064, %v1857
        %v2129 = vmul.f32 %v2065, %v1748
        %v2130 = vmul.f32 %v2066, %v1750
        %v2131 = vmul.f32 %v2067, %v1861
        %v2132 = vmul.f32 %v2068, %v1863
        %v2133 = vmul.f32 %v2069, %v1752
        %v2134 = vmul.f32 %v2070, %v1754
        %v2135 = vmul.f32 %v2071, %v1865
        %v2136 = vmul.f32 %v2072, %v1867
        %v2137 = vmul.f32 %v2073, %v1758
        %v2138 = vmul.f32 %v2074, %v1760
        %v2139 = vmul.f32 %v2075, %v1871
        %v2140 = vmul.f32 %v2076, %v1873
        %v2141 = vmul.f32 %v2077, %v1762
        %v2142 = vmul.f32 %v2078, %v1764
        %v2143 = vmul.f32 %v2079, %v1875
        %v2144 = vmul.f32 %v2080, %v1877
        %v2145 = vmul.f32 %v2081, %v1768
        %v2146 = vmul.f32 %v2082, %v1770
        %v2147 = vmul.f32 %v2083, %v1881
        %v2148 = vmul.f32 %v2084, %v1883
        %v2149 = vmul.f32 %v2085, %v1772
        %v2150 = vmul.f32 %v2086, %v1774
        %v2151 = vmul.f32 %v2087, %v1885
        %v2152 = vmul.f32 %v2088, %v1887
        %v2153 = vmul.f32 %v2089, %v1778
        %v2154 = vmul.f32 %v2090, %v1780
        %v2155 = vmul.f32 %v2091, %v1891
        %v2156 = vmul.f32 %v2092, %v1893
        %v2157 = vmul.f32 %v2093, %v1782
        %v2158 = vmul.f32 %v2094, %v1784
        %v2159 = vmul.f32 %v2095, %v1895
        %v2160 = vmul.f32 %v2096, %v1897
        %v2161 = vmul.f32 %v2097, %v1788
        %v2162 = vmul.f32 %v2098, %v1790
        %v2163 = vmul.f32 %v2099, %v1901
        %v2164 = vmul.f32 %v2100, %v1903
        %v2165 = vmul.f32 %v2101, %v1792
        %v2166 = vmul.f32 %v2102, %v1794
        %v2167 = vmul.f32 %v2103, %v1905
        %v2168 = vmul.f32 %v2104, %v1907
        %v2169 = vmul.f32 %v2105, %v1798
        %v2170 = vmul.f32 %v2106, %v1800
        %v2171 = vmul.f32 %v2107, %v1911
        %v2172 = vmul.f32 %v2108, %v1913
        %v2173 = vmul.f32 %v2109, %v1802
        %v2174 = vmul.f32 %v2110, %v1804
        %v2175 = vmul.f32 %v2111, %v1915
        %v2176 = vmul.f32 %v2112, %v1917
        %v2177 = vmul.f32 %v2113, %v1808
        %v2178 = vmul.f32 %v2114, %v1810
        %v2179 = vmul.f32 %v2115, %v1921
        %v2180 = vmul.f32 %v2116, %v1923
        %v2181 = vmul.f32 %v2117, %v1812
        %v2182 = vmul.f32 %v2118, %v1814
        %v2183 = vmul.f32 %v2119, %v1925
        %v2184 = vmul.f32 %v2120, %v1927
        %v2185 = vadd.f32 %v1738, %v2121
        %v2186 = vadd.f32 %v1740, %v2122
        %v2187 = vadd.f32 %v1851, %v2123
        %v2188 = vadd.f32 %v1853, %v2124
        %v2189 = vadd.f32 %v1742, %v2125
        %v2190 = vadd.f32 %v1744, %v2126
        %v2191 = vadd.f32 %v1855, %v2127
        %v2192 = vadd.f32 %v1857, %v2128
        %v2193 = vadd.f32 %v1748, %v2129
        %v2194 = vadd.f32 %v1750, %v2130
        %v2195 = vadd.f32 %v1861, %v2131
        %v2196 = vadd.f32 %v1863, %v2132
        %v2197 = vadd.f32 %v1752, %v2133
        %v2198 = vadd.f32 %v1754, %v2134
        %v2199 = vadd.f32 %v1865, %v2135
        %v2200 = vadd.f32 %v1867, %v2136
        %v2201 = vadd.f32 %v1758, %v2137
        %v2202 = vadd.f32 %v1760, %v2138
        %v2203 = vadd.f32 %v1871, %v2139
        %v2204 = vadd.f32 %v1873, %v2140
        %v2205 = vadd.f32 %v1762, %v2141
        %v2206 = vadd.f32 %v1764, %v2142
        %v2207 = vadd.f32 %v1875, %v2143
        %v2208 = vadd.f32 %v1877, %v2144
        %v2209 = vadd.f32 %v1768, %v2145
        %v2210 = vadd.f32 %v1770, %v2146
        %v2211 = vadd.f32 %v1881, %v2147
        %v2212 = vadd.f32 %v1883, %v2148
        %v2213 = vadd.f32 %v1772, %v2149
        %v2214 = vadd.f32 %v1774, %v2150
        %v2215 = vadd.f32 %v1885, %v2151
        %v2216 = vadd.f32 %v1887, %v2152
        %v2217 = vadd.f32 %v1778, %v2153
        %v2218 = vadd.f32 %v1780, %v2154
        %v2219 = vadd.f32 %v1891, %v2155
        %v2220 = vadd.f32 %v1893, %v2156
        %v2221 = vadd.f32 %v1782, %v2157
        %v2222 = vadd.f32 %v1784, %v2158
        %v2223 = vadd.f32 %v1895, %v2159
        %v2224 = vadd.f32 %v1897, %v2160
        %v2225 = vadd.f32 %v1788, %v2161
        %v2226 = vadd.f32 %v1790, %v2162
        %v2227 = vadd.f32 %v1901, %v2163
        %v2228 = vadd.f32 %v1903, %v2164
        %v2229 = vadd.f32 %v1792, %v2165
        %v2230 = vadd.f32 %v1794, %v2166
        %v2231 = vadd.f32 %v1905, %v2167
        %v2232 = vadd.f32 %v1907, %v2168
        %v2233 = vadd.f32 %v1798, %v2169
        %v2234 = vadd.f32 %v1800, %v2170
        %v2235 = vadd.f32 %v1911, %v2171
        %v2236 = vadd.f32 %v1913, %v2172
        %v2237 = vadd.f32 %v1802, %v2173
        %v2238 = vadd.f32 %v1804, %v2174
        %v2239 = vadd.f32 %v1915, %v2175
        %v2240 = vadd.f32 %v1917, %v2176
        %v2241 = vadd.f32 %v1808, %v2177
        %v2242 = vadd.f32 %v1810, %v2178
        %v2243 = vadd.f32 %v1921, %v2179
        %v2244 = vadd.f32 %v1923, %v2180
        %v2245 = vadd.f32 %v1812, %v2181
        %v2246 = vadd.f32 %v1814, %v2182
        %v2247 = vadd.f32 %v1925, %v2183
        %v2248 = vadd.f32 %v1927, %v2184
        %v2249 = vmul.f32 %v2185, 0.7978846
        %v2250 = vmul.f32 %v2186, 0.7978846
        %v2251 = vmul.f32 %v2187, 0.7978846
        %v2252 = vmul.f32 %v2188, 0.7978846
        %v2253 = vmul.f32 %v2189, 0.7978846
        %v2254 = vmul.f32 %v2190, 0.7978846
        %v2255 = vmul.f32 %v2191, 0.7978846
        %v2256 = vmul.f32 %v2192, 0.7978846
        %v2257 = vmul.f32 %v2193, 0.7978846
        %v2258 = vmul.f32 %v2194, 0.7978846
        %v2259 = vmul.f32 %v2195, 0.7978846
        %v2260 = vmul.f32 %v2196, 0.7978846
        %v2261 = vmul.f32 %v2197, 0.7978846
        %v2262 = vmul.f32 %v2198, 0.7978846
        %v2263 = vmul.f32 %v2199, 0.7978846
        %v2264 = vmul.f32 %v2200, 0.7978846
        %v2265 = vmul.f32 %v2201, 0.7978846
        %v2266 = vmul.f32 %v2202, 0.7978846
        %v2267 = vmul.f32 %v2203, 0.7978846
        %v2268 = vmul.f32 %v2204, 0.7978846
        %v2269 = vmul.f32 %v2205, 0.7978846
        %v2270 = vmul.f32 %v2206, 0.7978846
        %v2271 = vmul.f32 %v2207, 0.7978846
        %v2272 = vmul.f32 %v2208, 0.7978846
        %v2273 = vmul.f32 %v2209, 0.7978846
        %v2274 = vmul.f32 %v2210, 0.7978846
        %v2275 = vmul.f32 %v2211, 0.7978846
        %v2276 = vmul.f32 %v2212, 0.7978846
        %v2277 = vmul.f32 %v2213, 0.7978846
        %v2278 = vmul.f32 %v2214, 0.7978846
        %v2279 = vmul.f32 %v2215, 0.7978846
        %v2280 = vmul.f32 %v2216, 0.7978846
        %v2281 = vmul.f32 %v2217, 0.7978846
        %v2282 = vmul.f32 %v2218, 0.7978846
        %v2283 = vmul.f32 %v2219, 0.7978846
        %v2284 = vmul.f32 %v2220, 0.7978846
        %v2285 = vmul.f32 %v2221, 0.7978846
        %v2286 = vmul.f32 %v2222, 0.7978846
        %v2287 = vmul.f32 %v2223, 0.7978846
        %v2288 = vmul.f32 %v2224, 0.7978846
        %v2289 = vmul.f32 %v2225, 0.7978846
        %v2290 = vmul.f32 %v2226, 0.7978846
        %v2291 = vmul.f32 %v2227, 0.7978846
        %v2292 = vmul.f32 %v2228, 0.7978846
        %v2293 = vmul.f32 %v2229, 0.7978846
        %v2294 = vmul.f32 %v2230, 0.7978846
        %v2295 = vmul.f32 %v2231, 0.7978846
        %v2296 = vmul.f32 %v2232, 0.7978846
        %v2297 = vmul.f32 %v2233, 0.7978846
        %v2298 = vmul.f32 %v2234, 0.7978846
        %v2299 = vmul.f32 %v2235, 0.7978846
        %v2300 = vmul.f32 %v2236, 0.7978846
        %v2301 = vmul.f32 %v2237, 0.7978846
        %v2302 = vmul.f32 %v2238, 0.7978846
        %v2303 = vmul.f32 %v2239, 0.7978846
        %v2304 = vmul.f32 %v2240, 0.7978846
        %v2305 = vmul.f32 %v2241, 0.7978846
        %v2306 = vmul.f32 %v2242, 0.7978846
        %v2307 = vmul.f32 %v2243, 0.7978846
        %v2308 = vmul.f32 %v2244, 0.7978846
        %v2309 = vmul.f32 %v2245, 0.7978846
        %v2310 = vmul.f32 %v2246, 0.7978846
        %v2311 = vmul.f32 %v2247, 0.7978846
        %v2312 = vmul.f32 %v2248, 0.7978846
        %v2313 = vtanh.pop %v2249
        %v2314 = vtanh.pop %v2250
        %v2315 = vtanh.pop %v2251
        %v2316 = vtanh.pop %v2252
        %v2317 = vtanh.pop %v2253
        %v2318 = vtanh.pop %v2254
        %v2319 = vtanh.pop %v2255
        %v2320 = vtanh.pop %v2256
        %v2321 = vtanh.pop %v2257
        %v2322 = vtanh.pop %v2258
        %v2323 = vtanh.pop %v2259
        %v2324 = vtanh.pop %v2260
        %v2325 = vtanh.pop %v2261
        %v2326 = vtanh.pop %v2262
        %v2327 = vtanh.pop %v2263
        %v2328 = vtanh.pop %v2264
        %v2329 = vtanh.pop %v2265
        %v2330 = vtanh.pop %v2266
        %v2331 = vtanh.pop %v2267
        %v2332 = vtanh.pop %v2268
        %v2333 = vtanh.pop %v2269
        %v2334 = vtanh.pop %v2270
        %v2335 = vtanh.pop %v2271
        %v2336 = vtanh.pop %v2272
        %v2337 = vtanh.pop %v2273
        %v2338 = vtanh.pop %v2274
        %v2339 = vtanh.pop %v2275
        %v2340 = vtanh.pop %v2276
        %v2341 = vtanh.pop %v2277
        %v2342 = vtanh.pop %v2278
        %v2343 = vtanh.pop %v2279
        %v2344 = vtanh.pop %v2280
        %v2345 = vtanh.pop %v2281
        %v2346 = vtanh.pop %v2282
        %v2347 = vtanh.pop %v2283
        %v2348 = vtanh.pop %v2284
        %v2349 = vtanh.pop %v2285
        %v2350 = vtanh.pop %v2286
        %v2351 = vtanh.pop %v2287
        %v2352 = vtanh.pop %v2288
        %v2353 = vtanh.pop %v2289
        %v2354 = vtanh.pop %v2290
        %v2355 = vtanh.pop %v2291
        %v2356 = vtanh.pop %v2292
        %v2357 = vtanh.pop %v2293
        %v2358 = vtanh.pop %v2294
        %v2359 = vtanh.pop %v2295
        %v2360 = vtanh.pop %v2296
        %v2361 = vtanh.pop %v2297
        %v2362 = vtanh.pop %v2298
        %v2363 = vtanh.pop %v2299
        %v2364 = vtanh.pop %v2300
        %v2365 = vtanh.pop %v2301
        %v2366 = vtanh.pop %v2302
        %v2367 = vtanh.pop %v2303
        %v2368 = vtanh.pop %v2304
        %v2369 = vtanh.pop %v2305
        %v2370 = vtanh.pop %v2306
        %v2371 = vtanh.pop %v2307
        %v2372 = vtanh.pop %v2308
        %v2373 = vtanh.pop %v2309
        %v2374 = vtanh.pop %v2310
        %v2375 = vtanh.pop %v2311
        %v2376 = vtanh.pop %v2312
        %v2377 = vadd.f32 %v2313, 1.0
        %v2378 = vadd.f32 %v2314, 1.0
        %v2379 = vadd.f32 %v2315, 1.0
        %v2380 = vadd.f32 %v2316, 1.0
        %v2381 = vadd.f32 %v2317, 1.0
        %v2382 = vadd.f32 %v2318, 1.0
        %v2383 = vadd.f32 %v2319, 1.0
        %v2384 = vadd.f32 %v2320, 1.0
        %v2385 = vadd.f32 %v2321, 1.0
        %v2386 = vadd.f32 %v2322, 1.0
        %v2387 = vadd.f32 %v2323, 1.0
        %v2388 = vadd.f32 %v2324, 1.0
        %v2389 = vadd.f32 %v2325, 1.0
        %v2390 = vadd.f32 %v2326, 1.0
        %v2391 = vadd.f32 %v2327, 1.0
        %v2392 = vadd.f32 %v2328, 1.0
        %v2393 = vadd.f32 %v2329, 1.0
        %v2394 = vadd.f32 %v2330, 1.0
        %v2395 = vadd.f32 %v2331, 1.0
        %v2396 = vadd.f32 %v2332, 1.0
        %v2397 = vadd.f32 %v2333, 1.0
        %v2398 = vadd.f32 %v2334, 1.0
        %v2399 = vadd.f32 %v2335, 1.0
        %v2400 = vadd.f32 %v2336, 1.0
        %v2401 = vadd.f32 %v2337, 1.0
        %v2402 = vadd.f32 %v2338, 1.0
        %v2403 = vadd.f32 %v2339, 1.0
        %v2404 = vadd.f32 %v2340, 1.0
        %v2405 = vadd.f32 %v2341, 1.0
        %v2406 = vadd.f32 %v2342, 1.0
        %v2407 = vadd.f32 %v2343, 1.0
        %v2408 = vadd.f32 %v2344, 1.0
        %v2409 = vadd.f32 %v2345, 1.0
        %v2410 = vadd.f32 %v2346, 1.0
        %v2411 = vadd.f32 %v2347, 1.0
        %v2412 = vadd.f32 %v2348, 1.0
        %v2413 = vadd.f32 %v2349, 1.0
        %v2414 = vadd.f32 %v2350, 1.0
        %v2415 = vadd.f32 %v2351, 1.0
        %v2416 = vadd.f32 %v2352, 1.0
        %v2417 = vadd.f32 %v2353, 1.0
        %v2418 = vadd.f32 %v2354, 1.0
        %v2419 = vadd.f32 %v2355, 1.0
        %v2420 = vadd.f32 %v2356, 1.0
        %v2421 = vadd.f32 %v2357, 1.0
        %v2422 = vadd.f32 %v2358, 1.0
        %v2423 = vadd.f32 %v2359, 1.0
        %v2424 = vadd.f32 %v2360, 1.0
        %v2425 = vadd.f32 %v2361, 1.0
        %v2426 = vadd.f32 %v2362, 1.0
        %v2427 = vadd.f32 %v2363, 1.0
        %v2428 = vadd.f32 %v2364, 1.0
        %v2429 = vadd.f32 %v2365, 1.0
        %v2430 = vadd.f32 %v2366, 1.0
        %v2431 = vadd.f32 %v2367, 1.0
        %v2432 = vadd.f32 %v2368, 1.0
        %v2433 = vadd.f32 %v2369, 1.0
        %v2434 = vadd.f32 %v2370, 1.0
        %v2435 = vadd.f32 %v2371, 1.0
        %v2436 = vadd.f32 %v2372, 1.0
        %v2437 = vadd.f32 %v2373, 1.0
        %v2438 = vadd.f32 %v2374, 1.0
        %v2439 = vadd.f32 %v2375, 1.0
        %v2440 = vadd.f32 %v2376, 1.0
        %v2441 = vmul.f32 %v1929, %v2377
        %v2442 = vmul.f32 %v1930, %v2378
        %v2443 = vmul.f32 %v1931, %v2379
        %v2444 = vmul.f32 %v1932, %v2380
        %v2445 = vmul.f32 %v1933, %v2381
        %v2446 = vmul.f32 %v1934, %v2382
        %v2447 = vmul.f32 %v1935, %v2383
        %v2448 = vmul.f32 %v1936, %v2384
        %v2449 = vmul.f32 %v1937, %v2385
        %v2450 = vmul.f32 %v1938, %v2386
        %v2451 = vmul.f32 %v1939, %v2387
        %v2452 = vmul.f32 %v1940, %v2388
        %v2453 = vmul.f32 %v1941, %v2389
        %v2454 = vmul.f32 %v1942, %v2390
        %v2455 = vmul.f32 %v1943, %v2391
        %v2456 = vmul.f32 %v1944, %v2392
        %v2457 = vmul.f32 %v1945, %v2393
        %v2458 = vmul.f32 %v1946, %v2394
        %v2459 = vmul.f32 %v1947, %v2395
        %v2460 = vmul.f32 %v1948, %v2396
        %v2461 = vmul.f32 %v1949, %v2397
        %v2462 = vmul.f32 %v1950, %v2398
        %v2463 = vmul.f32 %v1951, %v2399
        %v2464 = vmul.f32 %v1952, %v2400
        %v2465 = vmul.f32 %v1953, %v2401
        %v2466 = vmul.f32 %v1954, %v2402
        %v2467 = vmul.f32 %v1955, %v2403
        %v2468 = vmul.f32 %v1956, %v2404
        %v2469 = vmul.f32 %v1957, %v2405
        %v2470 = vmul.f32 %v1958, %v2406
        %v2471 = vmul.f32 %v1959, %v2407
        %v2472 = vmul.f32 %v1960, %v2408
        %v2473 = vmul.f32 %v1961, %v2409
        %v2474 = vmul.f32 %v1962, %v2410
        %v2475 = vmul.f32 %v1963, %v2411
        %v2476 = vmul.f32 %v1964, %v2412
        %v2477 = vmul.f32 %v1965, %v2413
        %v2478 = vmul.f32 %v1966, %v2414
        %v2479 = vmul.f32 %v1967, %v2415
        %v2480 = vmul.f32 %v1968, %v2416
        %v2481 = vmul.f32 %v1969, %v2417
        %v2482 = vmul.f32 %v1970, %v2418
        %v2483 = vmul.f32 %v1971, %v2419
        %v2484 = vmul.f32 %v1972, %v2420
        %v2485 = vmul.f32 %v1973, %v2421
        %v2486 = vmul.f32 %v1974, %v2422
        %v2487 = vmul.f32 %v1975, %v2423
        %v2488 = vmul.f32 %v1976, %v2424
        %v2489 = vmul.f32 %v1977, %v2425
        %v2490 = vmul.f32 %v1978, %v2426
        %v2491 = vmul.f32 %v1979, %v2427
        %v2492 = vmul.f32 %v1980, %v2428
        %v2493 = vmul.f32 %v1981, %v2429
        %v2494 = vmul.f32 %v1982, %v2430
        %v2495 = vmul.f32 %v1983, %v2431
        %v2496 = vmul.f32 %v1984, %v2432
        %v2497 = vmul.f32 %v1985, %v2433
        %v2498 = vmul.f32 %v1986, %v2434
        %v2499 = vmul.f32 %v1987, %v2435
        %v2500 = vmul.f32 %v1988, %v2436
        %v2501 = vmul.f32 %v1989, %v2437
        %v2502 = vmul.f32 %v1990, %v2438
        %v2503 = vmul.f32 %v1991, %v2439
        %v2504 = vmul.f32 %v1992, %v2440
        %v2505 = vpack.c.bf16 %v2445, %v2441
        %v2506 = vpack.c.bf16 %v2446, %v2442
        %v2507 = vpack.c.bf16 %v2447, %v2443
        %v2508 = vpack.c.bf16 %v2448, %v2444
        %v2509 = vpack.c.bf16 %v2453, %v2449
        %v2510 = vpack.c.bf16 %v2454, %v2450
        %v2511 = vpack.c.bf16 %v2455, %v2451
        %v2512 = vpack.c.bf16 %v2456, %v2452
        %v2513 = vpack.c.bf16 %v2461, %v2457
        %v2514 = vpack.c.bf16 %v2462, %v2458
        %v2515 = vpack.c.bf16 %v2463, %v2459
        %v2516 = vpack.c.bf16 %v2464, %v2460
        %v2517 = vpack.c.bf16 %v2469, %v2465
        %v2518 = vpack.c.bf16 %v2470, %v2466
        %v2519 = vpack.c.bf16 %v2471, %v2467
        %v2520 = vpack.c.bf16 %v2472, %v2468
        %v2521 = vpack.c.bf16 %v2477, %v2473
        %v2522 = vpack.c.bf16 %v2478, %v2474
        %v2523 = vpack.c.bf16 %v2479, %v2475
        %v2524 = vpack.c.bf16 %v2480, %v2476
        %v2525 = vpack.c.bf16 %v2485, %v2481
        %v2526 = vpack.c.bf16 %v2486, %v2482
        %v2527 = vpack.c.bf16 %v2487, %v2483
        %v2528 = vpack.c.bf16 %v2488, %v2484
        %v2529 = vpack.c.bf16 %v2493, %v2489
        %v2530 = vpack.c.bf16 %v2494, %v2490
        %v2531 = vpack.c.bf16 %v2495, %v2491
        %v2532 = vpack.c.bf16 %v2496, %v2492
        %v2533 = vpack.c.bf16 %v2501, %v2497
        %v2534 = vpack.c.bf16 %v2502, %v2498
        %v2535 = vpack.c.bf16 %v2503, %v2499
        %v2536 = vpack.c.bf16 %v2504, %v2500
        %v2537 = vld [vmem:[%s7] sm:$0xf]
        %v2538 = vld [vmem:[%s7 + $0x4] sm:$0xf]
        %v2539 = vld [vmem:[%s7 + $0x8] sm:$0xf]
        %v2540 = vld [vmem:[%s7 + $0xc] sm:$0xf]
        %v2541 = vld [vmem:[%s7 + $0x10] sm:$0xf]
        %v2542 = vld [vmem:[%s7 + $0x14] sm:$0xf]
        %v2543 = vld [vmem:[%s7 + $0x18] sm:$0xf]
        %v2544 = vld [vmem:[%s7 + $0x1c] sm:$0xf]
        %v2545 = vld [vmem:[%s8] sm:$0xff]
        %v2546 = vld [vmem:[%s8 + $0x8] sm:$0xff]
        %v2547 = vld [vmem:[%s8 + $0x10] sm:$0xff]
        %v2548 = vld [vmem:[%s8 + $0x18] sm:$0xff]
        %v2549 = vld [vmem:[%s8 + $0x20] sm:$0xff]
        %v2550 = vld [vmem:[%s8 + $0x28] sm:$0xff]
        %v2551 = vld [vmem:[%s8 + $0x30] sm:$0xff]
        %v2552 = vld [vmem:[%s8 + $0x38] sm:$0xff]
        %2554 = vset.pattern.permute.xlu0 0
        %2555 = vperm.xlu0 %2554, %v2545
        %v2556 = vpop.permute.xlu0 %2555
        %2559 = vset.pattern.permute.xlu0 0
        %2560 = vperm.xlu0 %2559, %v2546
        %v2561 = vpop.permute.xlu0 %2560
        %2564 = vset.pattern.permute.xlu0 0
        %2565 = vperm.xlu0 %2564, %v2547
        %v2566 = vpop.permute.xlu0 %2565
        %2569 = vset.pattern.permute.xlu0 0
        %2570 = vperm.xlu0 %2569, %v2548
        %v2571 = vpop.permute.xlu0 %2570
        %2574 = vset.pattern.permute.xlu0 0
        %2575 = vperm.xlu0 %2574, %v2549
        %v2576 = vpop.permute.xlu0 %2575
        %2579 = vset.pattern.permute.xlu0 0
        %2580 = vperm.xlu0 %2579, %v2550
        %v2581 = vpop.permute.xlu0 %2580
        %2584 = vset.pattern.permute.xlu0 0
        %2585 = vperm.xlu0 %2584, %v2551
        %v2586 = vpop.permute.xlu0 %2585
        %2589 = vset.pattern.permute.xlu0 0
        %2590 = vperm.xlu0 %2589, %v2552
        %v2591 = vpop.permute.xlu0 %2590
        %v2601 = vunpack.c.l.b16 %v2537
        %v2602 = vunpack.c.l.b16 %v2538
        %v2603 = vunpack.c.l.b16 %v2539
        %v2604 = vunpack.c.l.b16 %v2540
        %v2605 = vunpack.c.l.b16 %v2541
        %v2606 = vunpack.c.l.b16 %v2542
        %v2607 = vunpack.c.l.b16 %v2543
        %v2608 = vunpack.c.l.b16 %v2544
        %v2609 = vpack.c.b16 %v2602, %v2601
        %v2610 = vpack.c.b16 %v2604, %v2603
        %v2611 = vpack.c.b16 %v2606, %v2605
        %v2612 = vpack.c.b16 %v2608, %v2607
        %2617 = vmatprep.subr.bf16.mxu0 %v2506
        %2618 = vmatpush1.bf16.msra.mxu0 %v2505
        %2619 = vmatprep.subr.bf16.mxu0 %v2510
        %2620 = vmatpush1.bf16.msra.mxu0 %v2509
        %2621 = vmatprep.subr.bf16.mxu0 %v2514
        %2622 = vmatpush1.bf16.msra.mxu0 %v2513
        %2623 = vmatprep.subr.bf16.mxu0 %v2518
        %2624 = vmatpush1.bf16.msra.mxu0 %v2517
        %2625 = vmatprep.subr.bf16.mxu0 %v2522
        %2626 = vmatpush1.bf16.msra.mxu0 %v2521
        %2627 = vmatprep.subr.bf16.mxu0 %v2526
        %2628 = vmatpush1.bf16.msra.mxu0 %v2525
        %2629 = vmatprep.subr.bf16.mxu0 %v2530
        %2630 = vmatpush1.bf16.msra.mxu0 %v2529
        %2631 = vmatprep.subr.bf16.mxu0 %v2534
        %2632 = vmatpush1.bf16.msra.mxu0 %v2533
        %2633 = vmatprep.subr.bf16.mxu0 0
        %2634 = vmatpush1.bf16.msra.mxu0 0
        %2635 = vmatprep.subr.bf16.mxu0 0
        %2636 = vmatpush1.bf16.msra.mxu0 0
        %2637 = vmatprep.subr.bf16.mxu0 0
        %2638 = vmatpush1.bf16.msra.mxu0 0
        %2639 = vmatprep.subr.bf16.mxu0 0
        %2640 = vmatpush1.bf16.msra.mxu0 0
        %2641 = vmatprep.subr.bf16.mxu0 0
        %2642 = vmatpush1.bf16.msra.mxu0 0
        %2643 = vmatprep.subr.bf16.mxu0 0
        %2644 = vmatpush1.bf16.msra.mxu0 0
        %2645 = vmatprep.subr.bf16.mxu0 0
        %2646 = vmatpush1.bf16.msra.mxu0 0
        %2647 = vmatprep.subr.bf16.mxu0 0
        %2648 = vmatpush1.bf16.msra.mxu0 0
        %2649 = vmatprep.mubr.bf16.mxu0 0
        %2650 = vmatmul.mubr.bf16.gmra.mrb[0].mxu0 %v2609
        %v2651 = vpop.f32.mrb[0].mxu0
        %v2652 = vadd.f32 %v2556, %v2651
        %v2653 = vpop.f32.mrb[0].mxu0
        %v2654 = vadd.f32 %v2556, %v2653
        %v2655 = vpop.f32.mrb[0].mxu0
        %v2656 = vadd.f32 %v2561, %v2655
        %v2657 = vpop.f32.mrb[0].mxu0
        %v2658 = vadd.f32 %v2561, %v2657
        %2659 = vmatprep.mubr.bf16.mxu0 0
        %2660 = vmatmul.mubr.bf16.gmra.mrb[0].mxu0 %v2610
        %v2661 = vpop.f32.mrb[0].mxu0
        %v2662 = vadd.f32 %v2566, %v2661
        %v2663 = vpop.f32.mrb[0].mxu0
        %v2664 = vadd.f32 %v2566, %v2663
        %v2665 = vpop.f32.mrb[0].mxu0
        %v2666 = vadd.f32 %v2571, %v2665
        %v2667 = vpop.f32.mrb[0].mxu0
        %v2668 = vadd.f32 %v2571, %v2667
        %2669 = vmatprep.mubr.bf16.mxu0 0
        %2670 = vmatmul.mubr.bf16.gmra.mrb[0].mxu0 %v2611
        %v2671 = vpop.f32.mrb[0].mxu0
        %v2672 = vadd.f32 %v2576, %v2671
        %v2673 = vpop.f32.mrb[0].mxu0
        %v2674 = vadd.f32 %v2576, %v2673
        %v2675 = vpop.f32.mrb[0].mxu0
        %v2676 = vadd.f32 %v2581, %v2675
        %v2677 = vpop.f32.mrb[0].mxu0
        %v2678 = vadd.f32 %v2581, %v2677
        %2679 = vmatprep.mubr.bf16.mxu0 0
        %2680 = vmatmul.mubr.bf16.gmra.mrb[0].mxu0 %v2612
        %v2681 = vpop.f32.mrb[0].mxu0
        %v2682 = vadd.f32 %v2586, %v2681
        %v2683 = vpop.f32.mrb[0].mxu0
        %v2684 = vadd.f32 %v2586, %v2683
        %v2685 = vpop.f32.mrb[0].mxu0
        %v2686 = vadd.f32 %v2591, %v2685
        %v2687 = vpop.f32.mrb[0].mxu0
        %v2688 = vadd.f32 %v2591, %v2687
        %2689 = vdwg.mxu0
        %2690 = vmatprep.subr.bf16.mxu0 %v2508
        %2691 = vmatpush1.bf16.msra.mxu0 %v2507
        %2692 = vmatprep.subr.bf16.mxu0 %v2512
        %2693 = vmatpush1.bf16.msra.mxu0 %v2511
        %2694 = vmatprep.subr.bf16.mxu0 %v2516
        %2695 = vmatpush1.bf16.msra.mxu0 %v2515
        %2696 = vmatprep.subr.bf16.mxu0 %v2520
        %2697 = vmatpush1.bf16.msra.mxu0 %v2519
        %2698 = vmatprep.subr.bf16.mxu0 %v2524
        %2699 = vmatpush1.bf16.msra.mxu0 %v2523
        %2700 = vmatprep.subr.bf16.mxu0 %v2528
        %2701 = vmatpush1.bf16.msra.mxu0 %v2527
        %2702 = vmatprep.subr.bf16.mxu0 %v2532
        %2703 = vmatpush1.bf16.msra.mxu0 %v2531
        %2704 = vmatprep.subr.bf16.mxu0 %v2536
        %2705 = vmatpush1.bf16.msra.mxu0 %v2535
        %2706 = vmatprep.subr.bf16.mxu0 0
        %2707 = vmatpush1.bf16.msra.mxu0 0
        %2708 = vmatprep.subr.bf16.mxu0 0
        %2709 = vmatpush1.bf16.msra.mxu0 0
        %2710 = vmatprep.subr.bf16.mxu0 0
        %2711 = vmatpush1.bf16.msra.mxu0 0
        %2712 = vmatprep.subr.bf16.mxu0 0
        %2713 = vmatpush1.bf16.msra.mxu0 0
        %2714 = vmatprep.subr.bf16.mxu0 0
        %2715 = vmatpush1.bf16.msra.mxu0 0
        %2716 = vmatprep.subr.bf16.mxu0 0
        %2717 = vmatpush1.bf16.msra.mxu0 0
        %2718 = vmatprep.subr.bf16.mxu0 0
        %2719 = vmatpush1.bf16.msra.mxu0 0
        %2720 = vmatprep.subr.bf16.mxu0 0
        %2721 = vmatpush1.bf16.msra.mxu0 0
        %2722 = vmatprep.mubr.bf16.mxu0 0
        %2723 = vmatmul.mubr.bf16.gmra.mrb[0].mxu0 %v2609
        %v2724 = vpop.f32.mrb[0].mxu0
        %v2725 = vadd.f32 %v2556, %v2724
        %v2726 = vpop.f32.mrb[0].mxu0
        %v2727 = vadd.f32 %v2556, %v2726
        %v2728 = vpop.f32.mrb[0].mxu0
        %v2729 = vadd.f32 %v2561, %v2728
        %v2730 = vpop.f32.mrb[0].mxu0
        %v2731 = vadd.f32 %v2561, %v2730
        %2732 = vmatprep.mubr.bf16.mxu0 0
        %2733 = vmatmul.mubr.bf16.gmra.mrb[0].mxu0 %v2610
        %v2734 = vpop.f32.mrb[0].mxu0
        %v2735 = vadd.f32 %v2566, %v2734
        %v2736 = vpop.f32.mrb[0].mxu0
        %v2737 = vadd.f32 %v2566, %v2736
        %v2738 = vpop.f32.mrb[0].mxu0
        %v2739 = vadd.f32 %v2571, %v2738
        %v2740 = vpop.f32.mrb[0].mxu0
        %v2741 = vadd.f32 %v2571, %v2740
        %2742 = vmatprep.mubr.bf16.mxu0 0
        %2743 = vmatmul.mubr.bf16.gmra.mrb[0].mxu0 %v2611
        %v2744 = vpop.f32.mrb[0].mxu0
        %v2745 = vadd.f32 %v2576, %v2744
        %v2746 = vpop.f32.mrb[0].mxu0
        %v2747 = vadd.f32 %v2576, %v2746
        %v2748 = vpop.f32.mrb[0].mxu0
        %v2749 = vadd.f32 %v2581, %v2748
        %v2750 = vpop.f32.mrb[0].mxu0
        %v2751 = vadd.f32 %v2581, %v2750
        %2752 = vmatprep.mubr.bf16.mxu0 0
        %2753 = vmatmul.mubr.bf16.gmra.mrb[0].mxu0 %v2612
        %v2754 = vpop.f32.mrb[0].mxu0
        %v2755 = vadd.f32 %v2586, %v2754
        %v2756 = vpop.f32.mrb[0].mxu0
        %v2757 = vadd.f32 %v2586, %v2756
        %v2758 = vpop.f32.mrb[0].mxu0
        %v2759 = vadd.f32 %v2591, %v2758
        %v2760 = vpop.f32.mrb[0].mxu0
        %v2761 = vadd.f32 %v2591, %v2760
        %2762 = vdwg.mxu0
        %v2763 = vadd.f32 %v953, %v2652
        %v2764 = vadd.f32 %v954, %v2656
        %v2765 = vadd.f32 %v955, %v2662
        %v2766 = vadd.f32 %v956, %v2666
        %v2767 = vadd.f32 %v957, %v2672
        %v2768 = vadd.f32 %v958, %v2676
        %v2769 = vadd.f32 %v959, %v2682
        %v2770 = vadd.f32 %v960, %v2686
        %2771 = vst [vmem:[#allocation2] sm:$0xff] %v2763
        %2772 = vst [vmem:[#allocation2 + $0x8] sm:$0xff] %v2764
        %2773 = vst [vmem:[#allocation2 + $0x10] sm:$0xff] %v2765
        %2774 = vst [vmem:[#allocation2 + $0x18] sm:$0xff] %v2766
        %2775 = vst [vmem:[#allocation2 + $0x20] sm:$0xff] %v2767
        %2776 = vst [vmem:[#allocation2 + $0x28] sm:$0xff] %v2768
        %2777 = vst [vmem:[#allocation2 + $0x30] sm:$0xff] %v2769
        %2778 = vst [vmem:[#allocation2 + $0x38] sm:$0xff] %v2770
        %v2779 = vld [vmem:[#allocation2 + $0x40] sm:$0xff]
        %v2780 = vld [vmem:[#allocation2 + $0x48] sm:$0xff]
        %v2781 = vld [vmem:[#allocation2 + $0x50] sm:$0xff]
        %v2782 = vld [vmem:[#allocation2 + $0x58] sm:$0xff]
        %v2783 = vld [vmem:[#allocation2 + $0x60] sm:$0xff]
        %v2784 = vld [vmem:[#allocation2 + $0x68] sm:$0xff]
        %v2785 = vld [vmem:[#allocation2 + $0x70] sm:$0xff]
        %v2786 = vld [vmem:[#allocation2 + $0x78] sm:$0xff]
        %v2787 = vadd.f32 %v2779, %v2654
        %v2788 = vadd.f32 %v2780, %v2658
        %v2789 = vadd.f32 %v2781, %v2664
        %v2790 = vadd.f32 %v2782, %v2668
        %v2791 = vadd.f32 %v2783, %v2674
        %v2792 = vadd.f32 %v2784, %v2678
        %v2793 = vadd.f32 %v2785, %v2684
        %v2794 = vadd.f32 %v2786, %v2688
        %2795 = vst [vmem:[#allocation2 + $0x40] sm:$0xff] %v2787
        %2796 = vst [vmem:[#allocation2 + $0x48] sm:$0xff] %v2788
        %2797 = vst [vmem:[#allocation2 + $0x50] sm:$0xff] %v2789
        %2798 = vst [vmem:[#allocation2 + $0x58] sm:$0xff] %v2790
        %2799 = vst [vmem:[#allocation2 + $0x60] sm:$0xff] %v2791
        %2800 = vst [vmem:[#allocation2 + $0x68] sm:$0xff] %v2792
        %2801 = vst [vmem:[#allocation2 + $0x70] sm:$0xff] %v2793
        %2802 = vst [vmem:[#allocation2 + $0x78] sm:$0xff] %v2794
        %v2803 = vld [vmem:[#allocation2 + $0x80] sm:$0xff]
        %v2804 = vld [vmem:[#allocation2 + $0x88] sm:$0xff]
        %v2805 = vld [vmem:[#allocation2 + $0x90] sm:$0xff]
        %v2806 = vld [vmem:[#allocation2 + $0x98] sm:$0xff]
        %v2807 = vld [vmem:[#allocation2 + $0xa0] sm:$0xff]
        %v2808 = vld [vmem:[#allocation2 + $0xa8] sm:$0xff]
        %v2809 = vld [vmem:[#allocation2 + $0xb0] sm:$0xff]
        %v2810 = vld [vmem:[#allocation2 + $0xb8] sm:$0xff]
        %v2811 = vadd.f32 %v2803, %v2725
        %v2812 = vadd.f32 %v2804, %v2729
        %v2813 = vadd.f32 %v2805, %v2735
        %v2814 = vadd.f32 %v2806, %v2739
        %v2815 = vadd.f32 %v2807, %v2745
        %v2816 = vadd.f32 %v2808, %v2749
        %v2817 = vadd.f32 %v2809, %v2755
        %v2818 = vadd.f32 %v2810, %v2759
        %2819 = vst [vmem:[#allocation2 + $0x80] sm:$0xff] %v2811
        %2820 = vst [vmem:[#allocation2 + $0x88] sm:$0xff] %v2812
        %2821 = vst [vmem:[#allocation2 + $0x90] sm:$0xff] %v2813
        %2822 = vst [vmem:[#allocation2 + $0x98] sm:$0xff] %v2814
        %2823 = vst [vmem:[#allocation2 + $0xa0] sm:$0xff] %v2815
        %2824 = vst [vmem:[#allocation2 + $0xa8] sm:$0xff] %v2816
        %2825 = vst [vmem:[#allocation2 + $0xb0] sm:$0xff] %v2817
        %2826 = vst [vmem:[#allocation2 + $0xb8] sm:$0xff] %v2818
        %v2827 = vld [vmem:[#allocation2 + $0xc0] sm:$0xff]
        %v2828 = vld [vmem:[#allocation2 + $0xc8] sm:$0xff]
        %v2829 = vld [vmem:[#allocation2 + $0xd0] sm:$0xff]
        %v2830 = vld [vmem:[#allocation2 + $0xd8] sm:$0xff]
        %v2831 = vld [vmem:[#allocation2 + $0xe0] sm:$0xff]
        %v2832 = vld [vmem:[#allocation2 + $0xe8] sm:$0xff]
        %v2833 = vld [vmem:[#allocation2 + $0xf0] sm:$0xff]
        %v2834 = vld [vmem:[#allocation2 + $0xf8] sm:$0xff]
        %v2835 = vadd.f32 %v2827, %v2727
        %v2836 = vadd.f32 %v2828, %v2731
        %v2837 = vadd.f32 %v2829, %v2737
        %v2838 = vadd.f32 %v2830, %v2741
        %v2839 = vadd.f32 %v2831, %v2747
        %v2840 = vadd.f32 %v2832, %v2751
        %v2841 = vadd.f32 %v2833, %v2757
        %v2842 = vadd.f32 %v2834, %v2761
        %2843 = vst [vmem:[#allocation2 + $0xc0] sm:$0xff] %v2835
        %2844 = vst [vmem:[#allocation2 + $0xc8] sm:$0xff] %v2836
        %2845 = vst [vmem:[#allocation2 + $0xd0] sm:$0xff] %v2837
        %2846 = vst [vmem:[#allocation2 + $0xd8] sm:$0xff] %v2838
        %2847 = vst [vmem:[#allocation2 + $0xe0] sm:$0xff] %v2839
        %2848 = vst [vmem:[#allocation2 + $0xe8] sm:$0xff] %v2840
        %2849 = vst [vmem:[#allocation2 + $0xf0] sm:$0xff] %v2841
        %2850 = vst [vmem:[#allocation2 + $0xf8] sm:$0xff] %v2842
        %v2851 = vld [vmem:[%s9] sm:$0x1]
        %v2852 = vld [vmem:[%s10] sm:$0x1]
        %v2853 = vld [vmem:[#allocation2] sm:$0xff]
        %v2854 = vld [vmem:[#allocation2 + $0x8] sm:$0xff]
        %v2855 = vld [vmem:[#allocation2 + $0x10] sm:$0xff]
        %v2856 = vld [vmem:[#allocation2 + $0x18] sm:$0xff]
        %v2857 = vld [vmem:[#allocation2 + $0x20] sm:$0xff]
        %v2858 = vld [vmem:[#allocation2 + $0x28] sm:$0xff]
        %v2859 = vld [vmem:[#allocation2 + $0x30] sm:$0xff]
        %v2860 = vld [vmem:[#allocation2 + $0x38] sm:$0xff]
        %v2861 = vld [vmem:[#allocation2 + $0x40] sm:$0xff]
        %v2862 = vld [vmem:[#allocation2 + $0x48] sm:$0xff]
        %v2863 = vld [vmem:[#allocation2 + $0x50] sm:$0xff]
        %v2864 = vld [vmem:[#allocation2 + $0x58] sm:$0xff]
        %v2865 = vld [vmem:[#allocation2 + $0x60] sm:$0xff]
        %v2866 = vld [vmem:[#allocation2 + $0x68] sm:$0xff]
        %v2867 = vld [vmem:[#allocation2 + $0x70] sm:$0xff]
        %v2868 = vld [vmem:[#allocation2 + $0x78] sm:$0xff]
        %2869 = vadd.xlane.f32.xlu0 %v2853
        %v2870 = vpop.xlane.xlu0 %2869
        %2871 = vadd.xlane.f32.xlu0 %v2854
        %v2872 = vpop.xlane.xlu0 %2871
        %2873 = vadd.xlane.f32.xlu0 %v2855
        %v2874 = vpop.xlane.xlu0 %2873
        %2875 = vadd.xlane.f32.xlu0 %v2856
        %v2876 = vpop.xlane.xlu0 %2875
        %2877 = vadd.xlane.f32.xlu0 %v2857
        %v2878 = vpop.xlane.xlu0 %2877
        %2879 = vadd.xlane.f32.xlu0 %v2858
        %v2880 = vpop.xlane.xlu0 %2879
        %2881 = vadd.xlane.f32.xlu0 %v2859
        %v2882 = vpop.xlane.xlu0 %2881
        %2883 = vadd.xlane.f32.xlu0 %v2860
        %v2884 = vpop.xlane.xlu0 %2883
        %2885 = vadd.xlane.f32.xlu0 %v2861
        %v2886 = vpop.xlane.xlu0 %2885
        %2887 = vadd.xlane.f32.xlu0 %v2862
        %v2888 = vpop.xlane.xlu0 %2887
        %2889 = vadd.xlane.f32.xlu0 %v2863
        %v2890 = vpop.xlane.xlu0 %2889
        %2891 = vadd.xlane.f32.xlu0 %v2864
        %v2892 = vpop.xlane.xlu0 %2891
        %2893 = vadd.xlane.f32.xlu0 %v2865
        %v2894 = vpop.xlane.xlu0 %2893
        %2895 = vadd.xlane.f32.xlu0 %v2866
        %v2896 = vpop.xlane.xlu0 %2895
        %2897 = vadd.xlane.f32.xlu0 %v2867
        %v2898 = vpop.xlane.xlu0 %2897
        %2899 = vadd.xlane.f32.xlu0 %v2868
        %v2900 = vpop.xlane.xlu0 %2899
        %v2901 = vmul.f32 %v2870, %v977
        %v2902 = vmul.f32 %v2872, %v977
        %v2903 = vmul.f32 %v2874, %v977
        %v2904 = vmul.f32 %v2876, %v977
        %v2905 = vmul.f32 %v2878, %v977
        %v2906 = vmul.f32 %v2880, %v977
        %v2907 = vmul.f32 %v2882, %v977
        %v2908 = vmul.f32 %v2884, %v977
        %v2909 = vmul.f32 %v2886, %v977
        %v2910 = vmul.f32 %v2888, %v977
        %v2911 = vmul.f32 %v2890, %v977
        %v2912 = vmul.f32 %v2892, %v977
        %v2913 = vmul.f32 %v2894, %v977
        %v2914 = vmul.f32 %v2896, %v977
        %v2915 = vmul.f32 %v2898, %v977
        %v2916 = vmul.f32 %v2900, %v977
        %v2917 = vmul.f32 %v2853, %v2853
        %v2918 = vmul.f32 %v2854, %v2854
        %v2919 = vmul.f32 %v2855, %v2855
        %v2920 = vmul.f32 %v2856, %v2856
        %v2921 = vmul.f32 %v2857, %v2857
        %v2922 = vmul.f32 %v2858, %v2858
        %v2923 = vmul.f32 %v2859, %v2859
        %v2924 = vmul.f32 %v2860, %v2860
        %v2925 = vmul.f32 %v2861, %v2861
        %v2926 = vmul.f32 %v2862, %v2862
        %v2927 = vmul.f32 %v2863, %v2863
        %v2928 = vmul.f32 %v2864, %v2864
        %v2929 = vmul.f32 %v2865, %v2865
        %v2930 = vmul.f32 %v2866, %v2866
        %v2931 = vmul.f32 %v2867, %v2867
        %v2932 = vmul.f32 %v2868, %v2868
        %2933 = vadd.xlane.f32.xlu0 %v2917
        %v2934 = vpop.xlane.xlu0 %2933
        %2935 = vadd.xlane.f32.xlu0 %v2918
        %v2936 = vpop.xlane.xlu0 %2935
        %2937 = vadd.xlane.f32.xlu0 %v2919
        %v2938 = vpop.xlane.xlu0 %2937
        %2939 = vadd.xlane.f32.xlu0 %v2920
        %v2940 = vpop.xlane.xlu0 %2939
        %2941 = vadd.xlane.f32.xlu0 %v2921
        %v2942 = vpop.xlane.xlu0 %2941
        %2943 = vadd.xlane.f32.xlu0 %v2922
        %v2944 = vpop.xlane.xlu0 %2943
        %2945 = vadd.xlane.f32.xlu0 %v2923
        %v2946 = vpop.xlane.xlu0 %2945
        %2947 = vadd.xlane.f32.xlu0 %v2924
        %v2948 = vpop.xlane.xlu0 %2947
        %2949 = vadd.xlane.f32.xlu0 %v2925
        %v2950 = vpop.xlane.xlu0 %2949
        %2951 = vadd.xlane.f32.xlu0 %v2926
        %v2952 = vpop.xlane.xlu0 %2951
        %2953 = vadd.xlane.f32.xlu0 %v2927
        %v2954 = vpop.xlane.xlu0 %2953
        %2955 = vadd.xlane.f32.xlu0 %v2928
        %v2956 = vpop.xlane.xlu0 %2955
        %2957 = vadd.xlane.f32.xlu0 %v2929
        %v2958 = vpop.xlane.xlu0 %2957
        %2959 = vadd.xlane.f32.xlu0 %v2930
        %v2960 = vpop.xlane.xlu0 %2959
        %2961 = vadd.xlane.f32.xlu0 %v2931
        %v2962 = vpop.xlane.xlu0 %2961
        %2963 = vadd.xlane.f32.xlu0 %v2932
        %v2964 = vpop.xlane.xlu0 %2963
        %v2965 = vmul.f32 %v2934, %v977
        %v2966 = vmul.f32 %v2936, %v977
        %v2967 = vmul.f32 %v2938, %v977
        %v2968 = vmul.f32 %v2940, %v977
        %v2969 = vmul.f32 %v2942, %v977
        %v2970 = vmul.f32 %v2944, %v977
        %v2971 = vmul.f32 %v2946, %v977
        %v2972 = vmul.f32 %v2948, %v977
        %v2973 = vmul.f32 %v2950, %v977
        %v2974 = vmul.f32 %v2952, %v977
        %v2975 = vmul.f32 %v2954, %v977
        %v2976 = vmul.f32 %v2956, %v977
        %v2977 = vmul.f32 %v2958, %v977
        %v2978 = vmul.f32 %v2960, %v977
        %v2979 = vmul.f32 %v2962, %v977
        %v2980 = vmul.f32 %v2964, %v977
        %v2981 = vmul.f32 %v2901, %v2901
        %v2982 = vmul.f32 %v2902, %v2902
        %v2983 = vmul.f32 %v2903, %v2903
        %v2984 = vmul.f32 %v2904, %v2904
        %v2985 = vmul.f32 %v2905, %v2905
        %v2986 = vmul.f32 %v2906, %v2906
        %v2987 = vmul.f32 %v2907, %v2907
        %v2988 = vmul.f32 %v2908, %v2908
        %v2989 = vmul.f32 %v2909, %v2909
        %v2990 = vmul.f32 %v2910, %v2910
        %v2991 = vmul.f32 %v2911, %v2911
        %v2992 = vmul.f32 %v2912, %v2912
        %v2993 = vmul.f32 %v2913, %v2913
        %v2994 = vmul.f32 %v2914, %v2914
        %v2995 = vmul.f32 %v2915, %v2915
        %v2996 = vmul.f32 %v2916, %v2916
        %v2997 = vsub.f32 %v2965, %v2981
        %v2998 = vsub.f32 %v2966, %v2982
        %v2999 = vsub.f32 %v2967, %v2983
        %v3000 = vsub.f32 %v2968, %v2984
        %v3001 = vsub.f32 %v2969, %v2985
        %v3002 = vsub.f32 %v2970, %v2986
        %v3003 = vsub.f32 %v2971, %v2987
        %v3004 = vsub.f32 %v2972, %v2988
        %v3005 = vsub.f32 %v2973, %v2989
        %v3006 = vsub.f32 %v2974, %v2990
        %v3007 = vsub.f32 %v2975, %v2991
        %v3008 = vsub.f32 %v2976, %v2992
        %v3009 = vsub.f32 %v2977, %v2993
        %v3010 = vsub.f32 %v2978, %v2994
        %v3011 = vsub.f32 %v2979, %v2995
        %v3012 = vsub.f32 %v2980, %v2996
        %v3013 = vmax.f32 %v2997, 0.0
        %v3014 = vmax.f32 %v2998, 0.0
        %v3015 = vmax.f32 %v2999, 0.0
        %v3016 = vmax.f32 %v3000, 0.0
        %v3017 = vmax.f32 %v3001, 0.0
        %v3018 = vmax.f32 %v3002, 0.0
        %v3019 = vmax.f32 %v3003, 0.0
        %v3020 = vmax.f32 %v3004, 0.0
        %v3021 = vmax.f32 %v3005, 0.0
        %v3022 = vmax.f32 %v3006, 0.0
        %v3023 = vmax.f32 %v3007, 0.0
        %v3024 = vmax.f32 %v3008, 0.0
        %v3025 = vmax.f32 %v3009, 0.0
        %v3026 = vmax.f32 %v3010, 0.0
        %v3027 = vmax.f32 %v3011, 0.0
        %v3028 = vmax.f32 %v3012, 0.0
        %v3029 = vsub.f32 %v2853, %v2901
        %v3030 = vsub.f32 %v2854, %v2902
        %v3031 = vsub.f32 %v2855, %v2903
        %v3032 = vsub.f32 %v2856, %v2904
        %v3033 = vsub.f32 %v2857, %v2905
        %v3034 = vsub.f32 %v2858, %v2906
        %v3035 = vsub.f32 %v2859, %v2907
        %v3036 = vsub.f32 %v2860, %v2908
        %v3037 = vsub.f32 %v2861, %v2909
        %v3038 = vsub.f32 %v2862, %v2910
        %v3039 = vsub.f32 %v2863, %v2911
        %v3040 = vsub.f32 %v2864, %v2912
        %v3041 = vsub.f32 %v2865, %v2913
        %v3042 = vsub.f32 %v2866, %v2914
        %v3043 = vsub.f32 %v2867, %v2915
        %v3044 = vsub.f32 %v2868, %v2916
        %v3045 = vadd.f32 %v3013, 1e-05
        %v3046 = vadd.f32 %v3014, 1e-05
        %v3047 = vadd.f32 %v3015, 1e-05
        %v3048 = vadd.f32 %v3016, 1e-05
        %v3049 = vadd.f32 %v3017, 1e-05
        %v3050 = vadd.f32 %v3018, 1e-05
        %v3051 = vadd.f32 %v3019, 1e-05
        %v3052 = vadd.f32 %v3020, 1e-05
        %v3053 = vadd.f32 %v3021, 1e-05
        %v3054 = vadd.f32 %v3022, 1e-05
        %v3055 = vadd.f32 %v3023, 1e-05
        %v3056 = vadd.f32 %v3024, 1e-05
        %v3057 = vadd.f32 %v3025, 1e-05
        %v3058 = vadd.f32 %v3026, 1e-05
        %v3059 = vadd.f32 %v3027, 1e-05
        %v3060 = vadd.f32 %v3028, 1e-05
        %v3061 = vrsqrt.pop %v3045
        %v3062 = vrsqrt.pop %v3046
        %v3063 = vrsqrt.pop %v3047
        %v3064 = vrsqrt.pop %v3048
        %v3065 = vrsqrt.pop %v3049
        %v3066 = vrsqrt.pop %v3050
        %v3067 = vrsqrt.pop %v3051
        %v3068 = vrsqrt.pop %v3052
        %v3069 = vrsqrt.pop %v3053
        %v3070 = vrsqrt.pop %v3054
        %v3071 = vrsqrt.pop %v3055
        %v3072 = vrsqrt.pop %v3056
        %v3073 = vrsqrt.pop %v3057
        %v3074 = vrsqrt.pop %v3058
        %v3075 = vrsqrt.pop %v3059
        %v3076 = vrsqrt.pop %v3060
        %v3077 = vmul.f32 %v3029, %v3061
        %v3078 = vmul.f32 %v3030, %v3062
        %v3079 = vmul.f32 %v3031, %v3063
        %v3080 = vmul.f32 %v3032, %v3064
        %v3081 = vmul.f32 %v3033, %v3065
        %v3082 = vmul.f32 %v3034, %v3066
        %v3083 = vmul.f32 %v3035, %v3067
        %v3084 = vmul.f32 %v3036, %v3068
        %v3085 = vmul.f32 %v3037, %v3069
        %v3086 = vmul.f32 %v3038, %v3070
        %v3087 = vmul.f32 %v3039, %v3071
        %v3088 = vmul.f32 %v3040, %v3072
        %v3089 = vmul.f32 %v3041, %v3073
        %v3090 = vmul.f32 %v3042, %v3074
        %v3091 = vmul.f32 %v3043, %v3075
        %v3092 = vmul.f32 %v3044, %v3076
        %v3094 = vlaneseq
        %v3095 = vshrl.u32 %v3094, 7
        %v3096 = vsub.s32 0, %v3095
        %v3097 = vrot.slane %v2851, %v3096
        %v3099 = vmul.f32 %v3077, %v3097
        %v3100 = vmul.f32 %v3078, %v3097
        %v3101 = vmul.f32 %v3079, %v3097
        %v3102 = vmul.f32 %v3080, %v3097
        %v3103 = vmul.f32 %v3081, %v3097
        %v3104 = vmul.f32 %v3082, %v3097
        %v3105 = vmul.f32 %v3083, %v3097
        %v3106 = vmul.f32 %v3084, %v3097
        %v3107 = vmul.f32 %v3085, %v3097
        %v3108 = vmul.f32 %v3086, %v3097
        %v3109 = vmul.f32 %v3087, %v3097
        %v3110 = vmul.f32 %v3088, %v3097
        %v3111 = vmul.f32 %v3089, %v3097
        %v3112 = vmul.f32 %v3090, %v3097
        %v3113 = vmul.f32 %v3091, %v3097
        %v3114 = vmul.f32 %v3092, %v3097
        %v3116 = vlaneseq
        %v3117 = vshrl.u32 %v3116, 7
        %v3118 = vsub.s32 0, %v3117
        %v3119 = vrot.slane %v2852, %v3118
        %v3121 = vadd.f32 %v3099, %v3119
        %v3122 = vadd.f32 %v3100, %v3119
        %v3123 = vadd.f32 %v3101, %v3119
        %v3124 = vadd.f32 %v3102, %v3119
        %v3125 = vadd.f32 %v3103, %v3119
        %v3126 = vadd.f32 %v3104, %v3119
        %v3127 = vadd.f32 %v3105, %v3119
        %v3128 = vadd.f32 %v3106, %v3119
        %v3129 = vadd.f32 %v3107, %v3119
        %v3130 = vadd.f32 %v3108, %v3119
        %v3131 = vadd.f32 %v3109, %v3119
        %v3132 = vadd.f32 %v3110, %v3119
        %v3133 = vadd.f32 %v3111, %v3119
        %v3134 = vadd.f32 %v3112, %v3119
        %v3135 = vadd.f32 %v3113, %v3119
        %v3136 = vadd.f32 %v3114, %v3119
        %v3137 = vpack.c.bf16 %v3122, %v3121
        %v3138 = vpack.c.bf16 %v3124, %v3123
        %v3139 = vpack.c.bf16 %v3126, %v3125
        %v3140 = vpack.c.bf16 %v3128, %v3127
        %v3141 = vpack.c.bf16 %v3130, %v3129
        %v3142 = vpack.c.bf16 %v3132, %v3131
        %v3143 = vpack.c.bf16 %v3134, %v3133
        %v3144 = vpack.c.bf16 %v3136, %v3135
        %v3145 = vld [vmem:[%s11] sm:$0xff]
        %v3146 = vld [vmem:[%s11 + $0x8] sm:$0xff]
        %v3147 = vld [vmem:[%s11 + $0x10] sm:$0xff]
        %v3148 = vld [vmem:[%s11 + $0x18] sm:$0xff]
        %v3149 = vld [vmem:[%s11 + $0x20] sm:$0xff]
        %v3150 = vld [vmem:[%s11 + $0x28] sm:$0xff]
        %v3151 = vld [vmem:[%s11 + $0x30] sm:$0xff]
        %v3152 = vld [vmem:[%s11 + $0x38] sm:$0xff]
        %v3153 = vld [vmem:[%s11 + $0x40] sm:$0xff]
        %v3154 = vld [vmem:[%s11 + $0x48] sm:$0xff]
        %v3155 = vld [vmem:[%s11 + $0x50] sm:$0xff]
        %v3156 = vld [vmem:[%s11 + $0x58] sm:$0xff]
        %v3157 = vld [vmem:[%s11 + $0x60] sm:$0xff]
        %v3158 = vld [vmem:[%s11 + $0x68] sm:$0xff]
        %v3159 = vld [vmem:[%s11 + $0x70] sm:$0xff]
        %v3160 = vld [vmem:[%s11 + $0x78] sm:$0xff]
        %v3161 = vld [vmem:[%s12] sm:$0x3]
        %v3163 = vlaneseq
        %v3164 = vshrl.u32 %v3163, 7
        %v3165 = vsub.s32 0, %v3164
        %v3166 = vrot.slane %v3161, %v3165
        %v3167 = vlaneseq
        %v3168 = vshrl.u32 %v3167, 7
        %v3169 = vsub.s32 1, %v3168
        %v3170 = vrot.slane %v3161, %v3169
        %v3189 = vunpack.c.l.b16 %v3145
        %v3190 = vunpack.c.h.b16 %v3145
        %v3191 = vunpack.c.l.b16 %v3146
        %v3192 = vunpack.c.h.b16 %v3146
        %v3193 = vunpack.c.l.b16 %v3147
        %v3194 = vunpack.c.h.b16 %v3147
        %v3195 = vunpack.c.l.b16 %v3148
        %v3196 = vunpack.c.h.b16 %v3148
        %v3197 = vunpack.c.l.b16 %v3149
        %v3198 = vunpack.c.h.b16 %v3149
        %v3199 = vunpack.c.l.b16 %v3150
        %v3200 = vunpack.c.h.b16 %v3150
        %v3201 = vunpack.c.l.b16 %v3151
        %v3202 = vunpack.c.h.b16 %v3151
        %v3203 = vunpack.c.l.b16 %v3152
        %v3204 = vunpack.c.h.b16 %v3152
        %v3205 = vunpack.c.l.b16 %v3153
        %v3206 = vunpack.c.h.b16 %v3153
        %v3207 = vunpack.c.l.b16 %v3154
        %v3208 = vunpack.c.h.b16 %v3154
        %v3209 = vunpack.c.l.b16 %v3155
        %v3210 = vunpack.c.h.b16 %v3155
        %v3211 = vunpack.c.l.b16 %v3156
        %v3212 = vunpack.c.h.b16 %v3156
        %v3213 = vunpack.c.l.b16 %v3157
        %v3214 = vunpack.c.h.b16 %v3157
        %v3215 = vunpack.c.l.b16 %v3158
        %v3216 = vunpack.c.h.b16 %v3158
        %v3217 = vunpack.c.l.b16 %v3159
        %v3218 = vunpack.c.h.b16 %v3159
        %v3219 = vunpack.c.l.b16 %v3160
        %v3220 = vunpack.c.h.b16 %v3160
        %v3221 = vpack.c.b16 %v3191, %v3189
        %v3222 = vpack.c.b16 %v3192, %v3190
        %v3223 = vpack.c.b16 %v3195, %v3193
        %v3224 = vpack.c.b16 %v3196, %v3194
        %v3225 = vpack.c.b16 %v3199, %v3197
        %v3226 = vpack.c.b16 %v3200, %v3198
        %v3227 = vpack.c.b16 %v3203, %v3201
        %v3228 = vpack.c.b16 %v3204, %v3202
        %v3229 = vpack.c.b16 %v3207, %v3205
        %v3230 = vpack.c.b16 %v3208, %v3206
        %v3231 = vpack.c.b16 %v3211, %v3209
        %v3232 = vpack.c.b16 %v3212, %v3210
        %v3233 = vpack.c.b16 %v3215, %v3213
        %v3234 = vpack.c.b16 %v3216, %v3214
        %v3235 = vpack.c.b16 %v3219, %v3217
        %v3236 = vpack.c.b16 %v3220, %v3218
        %3253 = vmatprep.subr.bf16.mxu0 %v3222
        %3254 = vmatpush1.bf16.msra.mxu0 %v3221
        %3255 = vmatprep.subr.bf16.mxu0 %v3224
        %3256 = vmatpush1.bf16.msra.mxu0 %v3223
        %3257 = vmatprep.subr.bf16.mxu0 %v3226
        %3258 = vmatpush1.bf16.msra.mxu0 %v3225
        %3259 = vmatprep.subr.bf16.mxu0 %v3228
        %3260 = vmatpush1.bf16.msra.mxu0 %v3227
        %3261 = vmatprep.subr.bf16.mxu0 %v3230
        %3262 = vmatpush1.bf16.msra.mxu0 %v3229
        %3263 = vmatprep.subr.bf16.mxu0 %v3232
        %3264 = vmatpush1.bf16.msra.mxu0 %v3231
        %3265 = vmatprep.subr.bf16.mxu0 %v3234
        %3266 = vmatpush1.bf16.msra.mxu0 %v3233
        %3267 = vmatprep.subr.bf16.mxu0 %v3236
        %3268 = vmatpush1.bf16.msra.mxu0 %v3235
        %3269 = vmatprep.subr.bf16.mxu0 0
        %3270 = vmatpush1.bf16.msra.mxu0 0
        %3271 = vmatprep.subr.bf16.mxu0 0
        %3272 = vmatpush1.bf16.msra.mxu0 0
        %3273 = vmatprep.subr.bf16.mxu0 0
        %3274 = vmatpush1.bf16.msra.mxu0 0
        %3275 = vmatprep.subr.bf16.mxu0 0
        %3276 = vmatpush1.bf16.msra.mxu0 0
        %3277 = vmatprep.subr.bf16.mxu0 0
        %3278 = vmatpush1.bf16.msra.mxu0 0
        %3279 = vmatprep.subr.bf16.mxu0 0
        %3280 = vmatpush1.bf16.msra.mxu0 0
        %3281 = vmatprep.subr.bf16.mxu0 0
        %3282 = vmatpush1.bf16.msra.mxu0 0
        %3283 = vmatprep.subr.bf16.mxu0 0
        %3284 = vmatpush1.bf16.msra.mxu0 0
        %3285 = vmatprep.mubr.bf16.mxu0 0
        %3286 = vmatmul.mubr.bf16.gmra.mrb[0].mxu0 %v3137
        %v3287 = vpop.f32.mrb[0].mxu0
        %v3288 = vadd.f32 %v3166, %v3287
        %v3289 = vpop.f32.mrb[0].mxu0
        %v3290 = vadd.f32 %v3170, %v3289
        %v3291 = vpop.f32.mrb[0].mxu0
        %v3292 = vadd.f32 %v3166, %v3291
        %v3293 = vpop.f32.mrb[0].mxu0
        %v3294 = vadd.f32 %v3170, %v3293
        %3295 = vmatprep.mubr.bf16.mxu0 0
        %3296 = vmatmul.mubr.bf16.gmra.mrb[0].mxu0 %v3138
        %v3297 = vpop.f32.mrb[0].mxu0
        %v3298 = vadd.f32 %v3166, %v3297
        %v3299 = vpop.f32.mrb[0].mxu0
        %v3300 = vadd.f32 %v3170, %v3299
        %v3301 = vpop.f32.mrb[0].mxu0
        %v3302 = vadd.f32 %v3166, %v3301
        %v3303 = vpop.f32.mrb[0].mxu0
        %v3304 = vadd.f32 %v3170, %v3303
        %3305 = vmatprep.mubr.bf16.mxu0 0
        %3306 = vmatmul.mubr.bf16.gmra.mrb[0].mxu0 %v3139
        %v3307 = vpop.f32.mrb[0].mxu0
        %v3308 = vadd.f32 %v3166, %v3307
        %v3309 = vpop.f32.mrb[0].mxu0
        %v3310 = vadd.f32 %v3170, %v3309
        %v3311 = vpop.f32.mrb[0].mxu0
        %v3312 = vadd.f32 %v3166, %v3311
        %v3313 = vpop.f32.mrb[0].mxu0
        %v3314 = vadd.f32 %v3170, %v3313
        %3315 = vmatprep.mubr.bf16.mxu0 0
        %3316 = vmatmul.mubr.bf16.gmra.mrb[0].mxu0 %v3140
        %v3317 = vpop.f32.mrb[0].mxu0
        %v3318 = vadd.f32 %v3166, %v3317
        %v3319 = vpop.f32.mrb[0].mxu0
        %v3320 = vadd.f32 %v3170, %v3319
        %v3321 = vpop.f32.mrb[0].mxu0
        %v3322 = vadd.f32 %v3166, %v3321
        %v3323 = vpop.f32.mrb[0].mxu0
        %v3324 = vadd.f32 %v3170, %v3323
        %3325 = vmatprep.mubr.bf16.mxu0 0
        %3326 = vmatmul.mubr.bf16.gmra.mrb[0].mxu0 %v3141
        %v3327 = vpop.f32.mrb[0].mxu0
        %v3328 = vadd.f32 %v3166, %v3327
        %v3329 = vpop.f32.mrb[0].mxu0
        %v3330 = vadd.f32 %v3170, %v3329
        %v3331 = vpop.f32.mrb[0].mxu0
        %v3332 = vadd.f32 %v3166, %v3331
        %v3333 = vpop.f32.mrb[0].mxu0
        %v3334 = vadd.f32 %v3170, %v3333
        %3335 = vmatprep.mubr.bf16.mxu0 0
        %3336 = vmatmul.mubr.bf16.gmra.mrb[0].mxu0 %v3142
        %v3337 = vpop.f32.mrb[0].mxu0
        %v3338 = vadd.f32 %v3166, %v3337
        %v3339 = vpop.f32.mrb[0].mxu0
        %v3340 = vadd.f32 %v3170, %v3339
        %v3341 = vpop.f32.mrb[0].mxu0
        %v3342 = vadd.f32 %v3166, %v3341
        %v3343 = vpop.f32.mrb[0].mxu0
        %v3344 = vadd.f32 %v3170, %v3343
        %3345 = vmatprep.mubr.bf16.mxu0 0
        %3346 = vmatmul.mubr.bf16.gmra.mrb[0].mxu0 %v3143
        %v3347 = vpop.f32.mrb[0].mxu0
        %v3348 = vadd.f32 %v3166, %v3347
        %v3349 = vpop.f32.mrb[0].mxu0
        %v3350 = vadd.f32 %v3170, %v3349
        %v3351 = vpop.f32.mrb[0].mxu0
        %v3352 = vadd.f32 %v3166, %v3351
        %v3353 = vpop.f32.mrb[0].mxu0
        %v3354 = vadd.f32 %v3170, %v3353
        %3355 = vmatprep.mubr.bf16.mxu0 0
        %3356 = vmatmul.mubr.bf16.gmra.mrb[0].mxu0 %v3144
        %v3357 = vpop.f32.mrb[0].mxu0
        %v3358 = vadd.f32 %v3166, %v3357
        %v3359 = vpop.f32.mrb[0].mxu0
        %v3360 = vadd.f32 %v3170, %v3359
        %v3361 = vpop.f32.mrb[0].mxu0
        %v3362 = vadd.f32 %v3166, %v3361
        %v3363 = vpop.f32.mrb[0].mxu0
        %v3364 = vadd.f32 %v3170, %v3363
        %3365 = vdwg.mxu0
        %v3366 = vmul.f32 %v3288, 0.5
        %v3367 = vmul.f32 %v3290, 0.5
        %v3368 = vmul.f32 %v3292, 0.5
        %v3369 = vmul.f32 %v3294, 0.5
        %v3370 = vmul.f32 %v3298, 0.5
        %v3371 = vmul.f32 %v3300, 0.5
        %v3372 = vmul.f32 %v3302, 0.5
        %v3373 = vmul.f32 %v3304, 0.5
        %v3374 = vmul.f32 %v3308, 0.5
        %v3375 = vmul.f32 %v3310, 0.5
        %v3376 = vmul.f32 %v3312, 0.5
        %v3377 = vmul.f32 %v3314, 0.5
        %v3378 = vmul.f32 %v3318, 0.5
        %v3379 = vmul.f32 %v3320, 0.5
        %v3380 = vmul.f32 %v3322, 0.5
        %v3381 = vmul.f32 %v3324, 0.5
        %v3382 = vmul.f32 %v3328, 0.5
        %v3383 = vmul.f32 %v3330, 0.5
        %v3384 = vmul.f32 %v3332, 0.5
        %v3385 = vmul.f32 %v3334, 0.5
        %v3386 = vmul.f32 %v3338, 0.5
        %v3387 = vmul.f32 %v3340, 0.5
        %v3388 = vmul.f32 %v3342, 0.5
        %v3389 = vmul.f32 %v3344, 0.5
        %v3390 = vmul.f32 %v3348, 0.5
        %v3391 = vmul.f32 %v3350, 0.5
        %v3392 = vmul.f32 %v3352, 0.5
        %v3393 = vmul.f32 %v3354, 0.5
        %v3394 = vmul.f32 %v3358, 0.5
        %v3395 = vmul.f32 %v3360, 0.5
        %v3396 = vmul.f32 %v3362, 0.5
        %v3397 = vmul.f32 %v3364, 0.5
        %v3398 = vmul.f32 %v3288, 0.044715
        %v3399 = vmul.f32 %v3290, 0.044715
        %v3400 = vmul.f32 %v3292, 0.044715
        %v3401 = vmul.f32 %v3294, 0.044715
        %v3402 = vmul.f32 %v3298, 0.044715
        %v3403 = vmul.f32 %v3300, 0.044715
        %v3404 = vmul.f32 %v3302, 0.044715
        %v3405 = vmul.f32 %v3304, 0.044715
        %v3406 = vmul.f32 %v3308, 0.044715
        %v3407 = vmul.f32 %v3310, 0.044715
        %v3408 = vmul.f32 %v3312, 0.044715
        %v3409 = vmul.f32 %v3314, 0.044715
        %v3410 = vmul.f32 %v3318, 0.044715
        %v3411 = vmul.f32 %v3320, 0.044715
        %v3412 = vmul.f32 %v3322, 0.044715
        %v3413 = vmul.f32 %v3324, 0.044715
        %v3414 = vmul.f32 %v3328, 0.044715
        %v3415 = vmul.f32 %v3330, 0.044715
        %v3416 = vmul.f32 %v3332, 0.044715
        %v3417 = vmul.f32 %v3334, 0.044715
        %v3418 = vmul.f32 %v3338, 0.044715
        %v3419 = vmul.f32 %v3340, 0.044715
        %v3420 = vmul.f32 %v3342, 0.044715
        %v3421 = vmul.f32 %v3344, 0.044715
        %v3422 = vmul.f32 %v3348, 0.044715
        %v3423 = vmul.f32 %v3350, 0.044715
        %v3424 = vmul.f32 %v3352, 0.044715
        %v3425 = vmul.f32 %v3354, 0.044715
        %v3426 = vmul.f32 %v3358, 0.044715
        %v3427 = vmul.f32 %v3360, 0.044715
        %v3428 = vmul.f32 %v3362, 0.044715
        %v3429 = vmul.f32 %v3364, 0.044715
        %v3430 = vmul.f32 %v3398, %v3288
        %v3431 = vmul.f32 %v3399, %v3290
        %v3432 = vmul.f32 %v3400, %v3292
        %v3433 = vmul.f32 %v3401, %v3294
        %v3434 = vmul.f32 %v3402, %v3298
        %v3435 = vmul.f32 %v3403, %v3300
        %v3436 = vmul.f32 %v3404, %v3302
        %v3437 = vmul.f32 %v3405, %v3304
        %v3438 = vmul.f32 %v3406, %v3308
        %v3439 = vmul.f32 %v3407, %v3310
        %v3440 = vmul.f32 %v3408, %v3312
        %v3441 = vmul.f32 %v3409, %v3314
        %v3442 = vmul.f32 %v3410, %v3318
        %v3443 = vmul.f32 %v3411, %v3320
        %v3444 = vmul.f32 %v3412, %v3322
        %v3445 = vmul.f32 %v3413, %v3324
        %v3446 = vmul.f32 %v3414, %v3328
        %v3447 = vmul.f32 %v3415, %v3330
        %v3448 = vmul.f32 %v3416, %v3332
        %v3449 = vmul.f32 %v3417, %v3334
        %v3450 = vmul.f32 %v3418, %v3338
        %v3451 = vmul.f32 %v3419, %v3340
        %v3452 = vmul.f32 %v3420, %v3342
        %v3453 = vmul.f32 %v3421, %v3344
        %v3454 = vmul.f32 %v3422, %v3348
        %v3455 = vmul.f32 %v3423, %v3350
        %v3456 = vmul.f32 %v3424, %v3352
        %v3457 = vmul.f32 %v3425, %v3354
        %v3458 = vmul.f32 %v3426, %v3358
        %v3459 = vmul.f32 %v3427, %v3360
        %v3460 = vmul.f32 %v3428, %v3362
        %v3461 = vmul.f32 %v3429, %v3364
        %v3462 = vmul.f32 %v3430, %v3288
        %v3463 = vmul.f32 %v3431, %v3290
        %v3464 = vmul.f32 %v3432, %v3292
        %v3465 = vmul.f32 %v3433, %v3294
        %v3466 = vmul.f32 %v3434, %v3298
        %v3467 = vmul.f32 %v3435, %v3300
        %v3468 = vmul.f32 %v3436, %v3302
        %v3469 = vmul.f32 %v3437, %v3304
        %v3470 = vmul.f32 %v3438, %v3308
        %v3471 = vmul.f32 %v3439, %v3310
        %v3472 = vmul.f32 %v3440, %v3312
        %v3473 = vmul.f32 %v3441, %v3314
        %v3474 = vmul.f32 %v3442, %v3318
        %v3475 = vmul.f32 %v3443, %v3320
        %v3476 = vmul.f32 %v3444, %v3322
        %v3477 = vmul.f32 %v3445, %v3324
        %v3478 = vmul.f32 %v3446, %v3328
        %v3479 = vmul.f32 %v3447, %v3330
        %v3480 = vmul.f32 %v3448, %v3332
        %v3481 = vmul.f32 %v3449, %v3334
        %v3482 = vmul.f32 %v3450, %v3338
        %v3483 = vmul.f32 %v3451, %v3340
        %v3484 = vmul.f32 %v3452, %v3342
        %v3485 = vmul.f32 %v3453, %v3344
        %v3486 = vmul.f32 %v3454, %v3348
        %v3487 = vmul.f32 %v3455, %v3350
        %v3488 = vmul.f32 %v3456, %v3352
        %v3489 = vmul.f32 %v3457, %v3354
        %v3490 = vmul.f32 %v3458, %v3358
        %v3491 = vmul.f32 %v3459, %v3360
        %v3492 = vmul.f32 %v3460, %v3362
        %v3493 = vmul.f32 %v3461, %v3364
        %v3494 = vadd.f32 %v3288, %v3462
        %v3495 = vadd.f32 %v3290, %v3463
        %v3496 = vadd.f32 %v3292, %v3464
        %v3497 = vadd.f32 %v3294, %v3465
        %v3498 = vadd.f32 %v3298, %v3466
        %v3499 = vadd.f32 %v3300, %v3467
        %v3500 = vadd.f32 %v3302, %v3468
        %v3501 = vadd.f32 %v3304, %v3469
        %v3502 = vadd.f32 %v3308, %v3470
        %v3503 = vadd.f32 %v3310, %v3471
        %v3504 = vadd.f32 %v3312, %v3472
        %v3505 = vadd.f32 %v3314, %v3473
        %v3506 = vadd.f32 %v3318, %v3474
        %v3507 = vadd.f32 %v3320, %v3475
        %v3508 = vadd.f32 %v3322, %v3476
        %v3509 = vadd.f32 %v3324, %v3477
        %v3510 = vadd.f32 %v3328, %v3478
        %v3511 = vadd.f32 %v3330, %v3479
        %v3512 = vadd.f32 %v3332, %v3480
        %v3513 = vadd.f32 %v3334, %v3481
        %v3514 = vadd.f32 %v3338, %v3482
        %v3515 = vadd.f32 %v3340, %v3483
        %v3516 = vadd.f32 %v3342, %v3484
        %v3517 = vadd.f32 %v3344, %v3485
        %v3518 = vadd.f32 %v3348, %v3486
        %v3519 = vadd.f32 %v3350, %v3487
        %v3520 = vadd.f32 %v3352, %v3488
        %v3521 = vadd.f32 %v3354, %v3489
        %v3522 = vadd.f32 %v3358, %v3490
        %v3523 = vadd.f32 %v3360, %v3491
        %v3524 = vadd.f32 %v3362, %v3492
        %v3525 = vadd.f32 %v3364, %v3493
        %v3526 = vmul.f32 %v3494, 0.7978846
        %v3527 = vmul.f32 %v3495, 0.7978846
        %v3528 = vmul.f32 %v3496, 0.7978846
        %v3529 = vmul.f32 %v3497, 0.7978846
        %v3530 = vmul.f32 %v3498, 0.7978846
        %v3531 = vmul.f32 %v3499, 0.7978846
        %v3532 = vmul.f32 %v3500, 0.7978846
        %v3533 = vmul.f32 %v3501, 0.7978846
        %v3534 = vmul.f32 %v3502, 0.7978846
        %v3535 = vmul.f32 %v3503, 0.7978846
        %v3536 = vmul.f32 %v3504, 0.7978846
        %v3537 = vmul.f32 %v3505, 0.7978846
        %v3538 = vmul.f32 %v3506, 0.7978846
        %v3539 = vmul.f32 %v3507, 0.7978846
        %v3540 = vmul.f32 %v3508, 0.7978846
        %v3541 = vmul.f32 %v3509, 0.7978846
        %v3542 = vmul.f32 %v3510, 0.7978846
        %v3543 = vmul.f32 %v3511, 0.7978846
        %v3544 = vmul.f32 %v3512, 0.7978846
        %v3545 = vmul.f32 %v3513, 0.7978846
        %v3546 = vmul.f32 %v3514, 0.7978846
        %v3547 = vmul.f32 %v3515, 0.7978846
        %v3548 = vmul.f32 %v3516, 0.7978846
        %v3549 = vmul.f32 %v3517, 0.7978846
        %v3550 = vmul.f32 %v3518, 0.7978846
        %v3551 = vmul.f32 %v3519, 0.7978846
        %v3552 = vmul.f32 %v3520, 0.7978846
        %v3553 = vmul.f32 %v3521, 0.7978846
        %v3554 = vmul.f32 %v3522, 0.7978846
        %v3555 = vmul.f32 %v3523, 0.7978846
        %v3556 = vmul.f32 %v3524, 0.7978846
        %v3557 = vmul.f32 %v3525, 0.7978846
        %v3558 = vtanh.pop %v3526
        %v3559 = vtanh.pop %v3527
        %v3560 = vtanh.pop %v3528
        %v3561 = vtanh.pop %v3529
        %v3562 = vtanh.pop %v3530
        %v3563 = vtanh.pop %v3531
        %v3564 = vtanh.pop %v3532
        %v3565 = vtanh.pop %v3533
        %v3566 = vtanh.pop %v3534
        %v3567 = vtanh.pop %v3535
        %v3568 = vtanh.pop %v3536
        %v3569 = vtanh.pop %v3537
        %v3570 = vtanh.pop %v3538
        %v3571 = vtanh.pop %v3539
        %v3572 = vtanh.pop %v3540
        %v3573 = vtanh.pop %v3541
        %v3574 = vtanh.pop %v3542
        %v3575 = vtanh.pop %v3543
        %v3576 = vtanh.pop %v3544
        %v3577 = vtanh.pop %v3545
        %v3578 = vtanh.pop %v3546
        %v3579 = vtanh.pop %v3547
        %v3580 = vtanh.pop %v3548
        %v3581 = vtanh.pop %v3549
        %v3582 = vtanh.pop %v3550
        %v3583 = vtanh.pop %v3551
        %v3584 = vtanh.pop %v3552
        %v3585 = vtanh.pop %v3553
        %v3586 = vtanh.pop %v3554
        %v3587 = vtanh.pop %v3555
        %v3588 = vtanh.pop %v3556
        %v3589 = vtanh.pop %v3557
        %v3590 = vadd.f32 %v3558, 1.0
        %v3591 = vadd.f32 %v3559, 1.0
        %v3592 = vadd.f32 %v3560, 1.0
        %v3593 = vadd.f32 %v3561, 1.0
        %v3594 = vadd.f32 %v3562, 1.0
        %v3595 = vadd.f32 %v3563, 1.0
        %v3596 = vadd.f32 %v3564, 1.0
        %v3597 = vadd.f32 %v3565, 1.0
        %v3598 = vadd.f32 %v3566, 1.0
        %v3599 = vadd.f32 %v3567, 1.0
        %v3600 = vadd.f32 %v3568, 1.0
        %v3601 = vadd.f32 %v3569, 1.0
        %v3602 = vadd.f32 %v3570, 1.0
        %v3603 = vadd.f32 %v3571, 1.0
        %v3604 = vadd.f32 %v3572, 1.0
        %v3605 = vadd.f32 %v3573, 1.0
        %v3606 = vadd.f32 %v3574, 1.0
        %v3607 = vadd.f32 %v3575, 1.0
        %v3608 = vadd.f32 %v3576, 1.0
        %v3609 = vadd.f32 %v3577, 1.0
        %v3610 = vadd.f32 %v3578, 1.0
        %v3611 = vadd.f32 %v3579, 1.0
        %v3612 = vadd.f32 %v3580, 1.0
        %v3613 = vadd.f32 %v3581, 1.0
        %v3614 = vadd.f32 %v3582, 1.0
        %v3615 = vadd.f32 %v3583, 1.0
        %v3616 = vadd.f32 %v3584, 1.0
        %v3617 = vadd.f32 %v3585, 1.0
        %v3618 = vadd.f32 %v3586, 1.0
        %v3619 = vadd.f32 %v3587, 1.0
        %v3620 = vadd.f32 %v3588, 1.0
        %v3621 = vadd.f32 %v3589, 1.0
        %v3622 = vmul.f32 %v3366, %v3590
        %v3623 = vmul.f32 %v3367, %v3591
        %v3624 = vmul.f32 %v3368, %v3592
        %v3625 = vmul.f32 %v3369, %v3593
        %v3626 = vmul.f32 %v3370, %v3594
        %v3627 = vmul.f32 %v3371, %v3595
        %v3628 = vmul.f32 %v3372, %v3596
        %v3629 = vmul.f32 %v3373, %v3597
        %v3630 = vmul.f32 %v3374, %v3598
        %v3631 = vmul.f32 %v3375, %v3599
        %v3632 = vmul.f32 %v3376, %v3600
        %v3633 = vmul.f32 %v3377, %v3601
        %v3634 = vmul.f32 %v3378, %v3602
        %v3635 = vmul.f32 %v3379, %v3603
        %v3636 = vmul.f32 %v3380, %v3604
        %v3637 = vmul.f32 %v3381, %v3605
        %v3638 = vmul.f32 %v3382, %v3606
        %v3639 = vmul.f32 %v3383, %v3607
        %v3640 = vmul.f32 %v3384, %v3608
        %v3641 = vmul.f32 %v3385, %v3609
        %v3642 = vmul.f32 %v3386, %v3610
        %v3643 = vmul.f32 %v3387, %v3611
        %v3644 = vmul.f32 %v3388, %v3612
        %v3645 = vmul.f32 %v3389, %v3613
        %v3646 = vmul.f32 %v3390, %v3614
        %v3647 = vmul.f32 %v3391, %v3615
        %v3648 = vmul.f32 %v3392, %v3616
        %v3649 = vmul.f32 %v3393, %v3617
        %v3650 = vmul.f32 %v3394, %v3618
        %v3651 = vmul.f32 %v3395, %v3619
        %v3652 = vmul.f32 %v3396, %v3620
        %v3653 = vmul.f32 %v3397, %v3621
        %v3654 = vpack.c.bf16 %v3624, %v3622
        %v3655 = vpack.c.bf16 %v3625, %v3623
        %v3656 = vpack.c.bf16 %v3628, %v3626
        %v3657 = vpack.c.bf16 %v3629, %v3627
        %v3658 = vpack.c.bf16 %v3632, %v3630
        %v3659 = vpack.c.bf16 %v3633, %v3631
        %v3660 = vpack.c.bf16 %v3636, %v3634
        %v3661 = vpack.c.bf16 %v3637, %v3635
        %v3662 = vpack.c.bf16 %v3640, %v3638
        %v3663 = vpack.c.bf16 %v3641, %v3639
        %v3664 = vpack.c.bf16 %v3644, %v3642
        %v3665 = vpack.c.bf16 %v3645, %v3643
        %v3666 = vpack.c.bf16 %v3648, %v3646
        %v3667 = vpack.c.bf16 %v3649, %v3647
        %v3668 = vpack.c.bf16 %v3652, %v3650
        %v3669 = vpack.c.bf16 %v3653, %v3651
        %v3670 = vld [vmem:[%s13] sm:$0xf]
        %v3671 = vld [vmem:[%s13 + $0x4] sm:$0xf]
        %v3672 = vld [vmem:[%s13 + $0x8] sm:$0xf]
        %v3673 = vld [vmem:[%s13 + $0xc] sm:$0xf]
        %v3674 = vld [vmem:[%s13 + $0x10] sm:$0xf]
        %v3675 = vld [vmem:[%s13 + $0x14] sm:$0xf]
        %v3676 = vld [vmem:[%s13 + $0x18] sm:$0xf]
        %v3677 = vld [vmem:[%s13 + $0x1c] sm:$0xf]
        %v3678 = vld [vmem:[%s13 + $0x20] sm:$0xf]
        %v3679 = vld [vmem:[%s13 + $0x24] sm:$0xf]
        %v3680 = vld [vmem:[%s13 + $0x28] sm:$0xf]
        %v3681 = vld [vmem:[%s13 + $0x2c] sm:$0xf]
        %v3682 = vld [vmem:[%s13 + $0x30] sm:$0xf]
        %v3683 = vld [vmem:[%s13 + $0x34] sm:$0xf]
        %v3684 = vld [vmem:[%s13 + $0x38] sm:$0xf]
        %v3685 = vld [vmem:[%s13 + $0x3c] sm:$0xf]
        %v3686 = vld [vmem:[%s13 + $0x40] sm:$0xf]
        %v3687 = vld [vmem:[%s13 + $0x44] sm:$0xf]
        %v3688 = vld [vmem:[%s13 + $0x48] sm:$0xf]
        %v3689 = vld [vmem:[%s13 + $0x4c] sm:$0xf]
        %v3690 = vld [vmem:[%s13 + $0x50] sm:$0xf]
        %v3691 = vld [vmem:[%s13 + $0x54] sm:$0xf]
        %v3692 = vld [vmem:[%s13 + $0x58] sm:$0xf]
        %v3693 = vld [vmem:[%s13 + $0x5c] sm:$0xf]
        %v3694 = vld [vmem:[%s13 + $0x60] sm:$0xf]
        %v3695 = vld [vmem:[%s13 + $0x64] sm:$0xf]
        %v3696 = vld [vmem:[%s13 + $0x68] sm:$0xf]
        %v3697 = vld [vmem:[%s13 + $0x6c] sm:$0xf]
        %v3698 = vld [vmem:[%s13 + $0x70] sm:$0xf]
        %v3699 = vld [vmem:[%s13 + $0x74] sm:$0xf]
        %v3700 = vld [vmem:[%s13 + $0x78] sm:$0xf]
        %v3701 = vld [vmem:[%s13 + $0x7c] sm:$0xf]
        %v3702 = vld [vmem:[%s14] sm:$0x1]
        %v3704 = vlaneseq
        %v3705 = vshrl.u32 %v3704, 7
        %v3706 = vsub.s32 0, %v3705
        %v3707 = vrot.slane %v3702, %v3706
        %v3741 = vunpack.c.l.b16 %v3670
        %v3742 = vunpack.c.l.b16 %v3671
        %v3743 = vunpack.c.l.b16 %v3672
        %v3744 = vunpack.c.l.b16 %v3673
        %v3745 = vunpack.c.l.b16 %v3674
        %v3746 = vunpack.c.l.b16 %v3675
        %v3747 = vunpack.c.l.b16 %v3676
        %v3748 = vunpack.c.l.b16 %v3677
        %v3749 = vunpack.c.l.b16 %v3678
        %v3750 = vunpack.c.l.b16 %v3679
        %v3751 = vunpack.c.l.b16 %v3680
        %v3752 = vunpack.c.l.b16 %v3681
        %v3753 = vunpack.c.l.b16 %v3682
        %v3754 = vunpack.c.l.b16 %v3683
        %v3755 = vunpack.c.l.b16 %v3684
        %v3756 = vunpack.c.l.b16 %v3685
        %v3757 = vunpack.c.l.b16 %v3686
        %v3758 = vunpack.c.l.b16 %v3687
        %v3759 = vunpack.c.l.b16 %v3688
        %v3760 = vunpack.c.l.b16 %v3689
        %v3761 = vunpack.c.l.b16 %v3690
        %v3762 = vunpack.c.l.b16 %v3691
        %v3763 = vunpack.c.l.b16 %v3692
        %v3764 = vunpack.c.l.b16 %v3693
        %v3765 = vunpack.c.l.b16 %v3694
        %v3766 = vunpack.c.l.b16 %v3695
        %v3767 = vunpack.c.l.b16 %v3696
        %v3768 = vunpack.c.l.b16 %v3697
        %v3769 = vunpack.c.l.b16 %v3698
        %v3770 = vunpack.c.l.b16 %v3699
        %v3771 = vunpack.c.l.b16 %v3700
        %v3772 = vunpack.c.l.b16 %v3701
        %v3773 = vpack.c.b16 %v3742, %v3741
        %v3774 = vpack.c.b16 %v3744, %v3743
        %v3775 = vpack.c.b16 %v3746, %v3745
        %v3776 = vpack.c.b16 %v3748, %v3747
        %v3777 = vpack.c.b16 %v3750, %v3749
        %v3778 = vpack.c.b16 %v3752, %v3751
        %v3779 = vpack.c.b16 %v3754, %v3753
        %v3780 = vpack.c.b16 %v3756, %v3755
        %v3781 = vpack.c.b16 %v3758, %v3757
        %v3782 = vpack.c.b16 %v3760, %v3759
        %v3783 = vpack.c.b16 %v3762, %v3761
        %v3784 = vpack.c.b16 %v3764, %v3763
        %v3785 = vpack.c.b16 %v3766, %v3765
        %v3786 = vpack.c.b16 %v3768, %v3767
        %v3787 = vpack.c.b16 %v3770, %v3769
        %v3788 = vpack.c.b16 %v3772, %v3771
        %3805 = vmatprep.subr.bf16.mxu0 0
        %3806 = vmatpush1.bf16.msra.mxu0 %v3773
        %3807 = vmatprep.subr.bf16.mxu0 0
        %3808 = vmatpush1.bf16.msra.mxu0 %v3774
        %3809 = vmatprep.subr.bf16.mxu0 0
        %3810 = vmatpush1.bf16.msra.mxu0 %v3775
        %3811 = vmatprep.subr.bf16.mxu0 0
        %3812 = vmatpush1.bf16.msra.mxu0 %v3776
        %3813 = vmatprep.subr.bf16.mxu0 0
        %3814 = vmatpush1.bf16.msra.mxu0 %v3777
        %3815 = vmatprep.subr.bf16.mxu0 0
        %3816 = vmatpush1.bf16.msra.mxu0 %v3778
        %3817 = vmatprep.subr.bf16.mxu0 0
        %3818 = vmatpush1.bf16.msra.mxu0 %v3779
        %3819 = vmatprep.subr.bf16.mxu0 0
        %3820 = vmatpush1.bf16.msra.mxu0 %v3780
        %3821 = vmatprep.subr.bf16.mxu0 0
        %3822 = vmatpush1.bf16.msra.mxu0 %v3781
        %3823 = vmatprep.subr.bf16.mxu0 0
        %3824 = vmatpush1.bf16.msra.mxu0 %v3782
        %3825 = vmatprep.subr.bf16.mxu0 0
        %3826 = vmatpush1.bf16.msra.mxu0 %v3783
        %3827 = vmatprep.subr.bf16.mxu0 0
        %3828 = vmatpush1.bf16.msra.mxu0 %v3784
        %3829 = vmatprep.subr.bf16.mxu0 0
        %3830 = vmatpush1.bf16.msra.mxu0 %v3785
        %3831 = vmatprep.subr.bf16.mxu0 0
        %3832 = vmatpush1.bf16.msra.mxu0 %v3786
        %3833 = vmatprep.subr.bf16.mxu0 0
        %3834 = vmatpush1.bf16.msra.mxu0 %v3787
        %3835 = vmatprep.subr.bf16.mxu0 0
        %3836 = vmatpush1.bf16.msra.mxu0 %v3788
        %3837 = vmatprep.mubr.bf16.mxu0 %v3655
        %3838 = vmatmul.mubr.bf16.gmra.mrb[0].mxu0 %v3654
        %v3839 = vpop.f32.mrb[0].mxu0
        %v3840 = vadd.f32 %v3707, %v3839
        %v3841 = vpop.f32.mrb[0].mxu0
        %v3842 = vpop.f32.mrb[0].mxu0
        %v3843 = vadd.f32 %v3707, %v3842
        %v3844 = vpop.f32.mrb[0].mxu0
        %3845 = vmatprep.mubr.bf16.mxu0 %v3657
        %3846 = vmatmul.mubr.bf16.gmra.mrb[0].mxu0 %v3656
        %v3847 = vpop.f32.mrb[0].mxu0
        %v3848 = vadd.f32 %v3707, %v3847
        %v3849 = vpop.f32.mrb[0].mxu0
        %v3850 = vpop.f32.mrb[0].mxu0
        %v3851 = vadd.f32 %v3707, %v3850
        %v3852 = vpop.f32.mrb[0].mxu0
        %3853 = vmatprep.mubr.bf16.mxu0 %v3659
        %3854 = vmatmul.mubr.bf16.gmra.mrb[0].mxu0 %v3658
        %v3855 = vpop.f32.mrb[0].mxu0
        %v3856 = vadd.f32 %v3707, %v3855
        %v3857 = vpop.f32.mrb[0].mxu0
        %v3858 = vpop.f32.mrb[0].mxu0
        %v3859 = vadd.f32 %v3707, %v3858
        %v3860 = vpop.f32.mrb[0].mxu0
        %3861 = vmatprep.mubr.bf16.mxu0 %v3661
        %3862 = vmatmul.mubr.bf16.gmra.mrb[0].mxu0 %v3660
        %v3863 = vpop.f32.mrb[0].mxu0
        %v3864 = vadd.f32 %v3707, %v3863
        %v3865 = vpop.f32.mrb[0].mxu0
        %v3866 = vpop.f32.mrb[0].mxu0
        %v3867 = vadd.f32 %v3707, %v3866
        %v3868 = vpop.f32.mrb[0].mxu0
        %3869 = vmatprep.mubr.bf16.mxu0 %v3663
        %3870 = vmatmul.mubr.bf16.gmra.mrb[0].mxu0 %v3662
        %v3871 = vpop.f32.mrb[0].mxu0
        %v3872 = vadd.f32 %v3707, %v3871
        %v3873 = vpop.f32.mrb[0].mxu0
        %v3874 = vpop.f32.mrb[0].mxu0
        %v3875 = vadd.f32 %v3707, %v3874
        %v3876 = vpop.f32.mrb[0].mxu0
        %3877 = vmatprep.mubr.bf16.mxu0 %v3665
        %3878 = vmatmul.mubr.bf16.gmra.mrb[0].mxu0 %v3664
        %v3879 = vpop.f32.mrb[0].mxu0
        %v3880 = vadd.f32 %v3707, %v3879
        %v3881 = vpop.f32.mrb[0].mxu0
        %v3882 = vpop.f32.mrb[0].mxu0
        %v3883 = vadd.f32 %v3707, %v3882
        %v3884 = vpop.f32.mrb[0].mxu0
        %3885 = vmatprep.mubr.bf16.mxu0 %v3667
        %3886 = vmatmul.mubr.bf16.gmra.mrb[0].mxu0 %v3666
        %v3887 = vpop.f32.mrb[0].mxu0
        %v3888 = vadd.f32 %v3707, %v3887
        %v3889 = vpop.f32.mrb[0].mxu0
        %v3890 = vpop.f32.mrb[0].mxu0
        %v3891 = vadd.f32 %v3707, %v3890
        %v3892 = vpop.f32.mrb[0].mxu0
        %3893 = vmatprep.mubr.bf16.mxu0 %v3669
        %3894 = vmatmul.mubr.bf16.gmra.mrb[0].mxu0 %v3668
        %v3895 = vpop.f32.mrb[0].mxu0
        %v3896 = vadd.f32 %v3707, %v3895
        %v3897 = vpop.f32.mrb[0].mxu0
        %v3898 = vpop.f32.mrb[0].mxu0
        %v3899 = vadd.f32 %v3707, %v3898
        %v3900 = vpop.f32.mrb[0].mxu0
        %3901 = vdwg.mxu0
        %v3902 = vadd.f32 %v3840, %v2853
        %v3903 = vadd.f32 %v3843, %v2854
        %v3904 = vadd.f32 %v3848, %v2855
        %v3905 = vadd.f32 %v3851, %v2856
        %v3906 = vadd.f32 %v3856, %v2857
        %v3907 = vadd.f32 %v3859, %v2858
        %v3908 = vadd.f32 %v3864, %v2859
        %v3909 = vadd.f32 %v3867, %v2860
        %v3910 = vadd.f32 %v3872, %v2861
        %v3911 = vadd.f32 %v3875, %v2862
        %v3912 = vadd.f32 %v3880, %v2863
        %v3913 = vadd.f32 %v3883, %v2864
        %v3914 = vadd.f32 %v3888, %v2865
        %v3915 = vadd.f32 %v3891, %v2866
        %v3916 = vadd.f32 %v3896, %v2867
        %v3917 = vadd.f32 %v3899, %v2868
        %3918 = vst [vmem:[#allocation2] sm:$0xff] %v3902
        %3919 = vst [vmem:[#allocation2 + $0x8] sm:$0xff] %v3903
        %3920 = vst [vmem:[#allocation2 + $0x10] sm:$0xff] %v3904
        %3921 = vst [vmem:[#allocation2 + $0x18] sm:$0xff] %v3905
        %3922 = vst [vmem:[#allocation2 + $0x20] sm:$0xff] %v3906
        %3923 = vst [vmem:[#allocation2 + $0x28] sm:$0xff] %v3907
        %3924 = vst [vmem:[#allocation2 + $0x30] sm:$0xff] %v3908
        %3925 = vst [vmem:[#allocation2 + $0x38] sm:$0xff] %v3909
        %3926 = vst [vmem:[#allocation2 + $0x40] sm:$0xff] %v3910
        %3927 = vst [vmem:[#allocation2 + $0x48] sm:$0xff] %v3911
        %3928 = vst [vmem:[#allocation2 + $0x50] sm:$0xff] %v3912
        %3929 = vst [vmem:[#allocation2 + $0x58] sm:$0xff] %v3913
        %3930 = vst [vmem:[#allocation2 + $0x60] sm:$0xff] %v3914
        %3931 = vst [vmem:[#allocation2 + $0x68] sm:$0xff] %v3915
        %3932 = vst [vmem:[#allocation2 + $0x70] sm:$0xff] %v3916
        %3933 = vst [vmem:[#allocation2 + $0x78] sm:$0xff] %v3917
        %v3934 = vld [vmem:[%s934] sm:$0xff]
        %v3935 = vld [vmem:[%s934 + $0x8] sm:$0xff]
        %v3936 = vld [vmem:[%s934 + $0x10] sm:$0xff]
        %v3937 = vld [vmem:[%s934 + $0x18] sm:$0xff]
        %v3938 = vld [vmem:[%s934 + $0x20] sm:$0xff]
        %v3939 = vld [vmem:[%s934 + $0x28] sm:$0xff]
        %v3940 = vld [vmem:[%s934 + $0x30] sm:$0xff]
        %v3941 = vld [vmem:[%s934 + $0x38] sm:$0xff]
        %v3942 = vld [vmem:[%s934 + $0x40] sm:$0xff]
        %v3943 = vld [vmem:[%s934 + $0x48] sm:$0xff]
        %v3944 = vld [vmem:[%s934 + $0x50] sm:$0xff]
        %v3945 = vld [vmem:[%s934 + $0x58] sm:$0xff]
        %v3946 = vld [vmem:[%s934 + $0x60] sm:$0xff]
        %v3947 = vld [vmem:[%s934 + $0x68] sm:$0xff]
        %v3948 = vld [vmem:[%s934 + $0x70] sm:$0xff]
        %v3949 = vld [vmem:[%s934 + $0x78] sm:$0xff]
        %3950 = vadd.xlane.f32.xlu0 %v3934
        %v3951 = vpop.xlane.xlu0 %3950
        %3952 = vadd.xlane.f32.xlu0 %v3935
        %v3953 = vpop.xlane.xlu0 %3952
        %3954 = vadd.xlane.f32.xlu0 %v3936
        %v3955 = vpop.xlane.xlu0 %3954
        %3956 = vadd.xlane.f32.xlu0 %v3937
        %v3957 = vpop.xlane.xlu0 %3956
        %3958 = vadd.xlane.f32.xlu0 %v3938
        %v3959 = vpop.xlane.xlu0 %3958
        %3960 = vadd.xlane.f32.xlu0 %v3939
        %v3961 = vpop.xlane.xlu0 %3960
        %3962 = vadd.xlane.f32.xlu0 %v3940
        %v3963 = vpop.xlane.xlu0 %3962
        %3964 = vadd.xlane.f32.xlu0 %v3941
        %v3965 = vpop.xlane.xlu0 %3964
        %3966 = vadd.xlane.f32.xlu0 %v3942
        %v3967 = vpop.xlane.xlu0 %3966
        %3968 = vadd.xlane.f32.xlu0 %v3943
        %v3969 = vpop.xlane.xlu0 %3968
        %3970 = vadd.xlane.f32.xlu0 %v3944
        %v3971 = vpop.xlane.xlu0 %3970
        %3972 = vadd.xlane.f32.xlu0 %v3945
        %v3973 = vpop.xlane.xlu0 %3972
        %3974 = vadd.xlane.f32.xlu0 %v3946
        %v3975 = vpop.xlane.xlu0 %3974
        %3976 = vadd.xlane.f32.xlu0 %v3947
        %v3977 = vpop.xlane.xlu0 %3976
        %3978 = vadd.xlane.f32.xlu0 %v3948
        %v3979 = vpop.xlane.xlu0 %3978
        %3980 = vadd.xlane.f32.xlu0 %v3949
        %v3981 = vpop.xlane.xlu0 %3980
        %v3982 = vmul.f32 %v3951, %v977
        %v3983 = vmul.f32 %v3953, %v977
        %v3984 = vmul.f32 %v3955, %v977
        %v3985 = vmul.f32 %v3957, %v977
        %v3986 = vmul.f32 %v3959, %v977
        %v3987 = vmul.f32 %v3961, %v977
        %v3988 = vmul.f32 %v3963, %v977
        %v3989 = vmul.f32 %v3965, %v977
        %v3990 = vmul.f32 %v3967, %v977
        %v3991 = vmul.f32 %v3969, %v977
        %v3992 = vmul.f32 %v3971, %v977
        %v3993 = vmul.f32 %v3973, %v977
        %v3994 = vmul.f32 %v3975, %v977
        %v3995 = vmul.f32 %v3977, %v977
        %v3996 = vmul.f32 %v3979, %v977
        %v3997 = vmul.f32 %v3981, %v977
        %v3998 = vmul.f32 %v3934, %v3934
        %v3999 = vmul.f32 %v3935, %v3935
        %v4000 = vmul.f32 %v3936, %v3936
        %v4001 = vmul.f32 %v3937, %v3937
        %v4002 = vmul.f32 %v3938, %v3938
        %v4003 = vmul.f32 %v3939, %v3939
        %v4004 = vmul.f32 %v3940, %v3940
        %v4005 = vmul.f32 %v3941, %v3941
        %v4006 = vmul.f32 %v3942, %v3942
        %v4007 = vmul.f32 %v3943, %v3943
        %v4008 = vmul.f32 %v3944, %v3944
        %v4009 = vmul.f32 %v3945, %v3945
        %v4010 = vmul.f32 %v3946, %v3946
        %v4011 = vmul.f32 %v3947, %v3947
        %v4012 = vmul.f32 %v3948, %v3948
        %v4013 = vmul.f32 %v3949, %v3949
        %4014 = vadd.xlane.f32.xlu0 %v3998
        %v4015 = vpop.xlane.xlu0 %4014
        %4016 = vadd.xlane.f32.xlu0 %v3999
        %v4017 = vpop.xlane.xlu0 %4016
        %4018 = vadd.xlane.f32.xlu0 %v4000
        %v4019 = vpop.xlane.xlu0 %4018
        %4020 = vadd.xlane.f32.xlu0 %v4001
        %v4021 = vpop.xlane.xlu0 %4020
        %4022 = vadd.xlane.f32.xlu0 %v4002
        %v4023 = vpop.xlane.xlu0 %4022
        %4024 = vadd.xlane.f32.xlu0 %v4003
        %v4025 = vpop.xlane.xlu0 %4024
        %4026 = vadd.xlane.f32.xlu0 %v4004
        %v4027 = vpop.xlane.xlu0 %4026
        %4028 = vadd.xlane.f32.xlu0 %v4005
        %v4029 = vpop.xlane.xlu0 %4028
        %4030 = vadd.xlane.f32.xlu0 %v4006
        %v4031 = vpop.xlane.xlu0 %4030
        %4032 = vadd.xlane.f32.xlu0 %v4007
        %v4033 = vpop.xlane.xlu0 %4032
        %4034 = vadd.xlane.f32.xlu0 %v4008
        %v4035 = vpop.xlane.xlu0 %4034
        %4036 = vadd.xlane.f32.xlu0 %v4009
        %v4037 = vpop.xlane.xlu0 %4036
        %4038 = vadd.xlane.f32.xlu0 %v4010
        %v4039 = vpop.xlane.xlu0 %4038
        %4040 = vadd.xlane.f32.xlu0 %v4011
        %v4041 = vpop.xlane.xlu0 %4040
        %4042 = vadd.xlane.f32.xlu0 %v4012
        %v4043 = vpop.xlane.xlu0 %4042
        %4044 = vadd.xlane.f32.xlu0 %v4013
        %v4045 = vpop.xlane.xlu0 %4044
        %v4046 = vmul.f32 %v4015, %v977
        %v4047 = vmul.f32 %v4017, %v977
        %v4048 = vmul.f32 %v4019, %v977
        %v4049 = vmul.f32 %v4021, %v977
        %v4050 = vmul.f32 %v4023, %v977
        %v4051 = vmul.f32 %v4025, %v977
        %v4052 = vmul.f32 %v4027, %v977
        %v4053 = vmul.f32 %v4029, %v977
        %v4054 = vmul.f32 %v4031, %v977
        %v4055 = vmul.f32 %v4033, %v977
        %v4056 = vmul.f32 %v4035, %v977
        %v4057 = vmul.f32 %v4037, %v977
        %v4058 = vmul.f32 %v4039, %v977
        %v4059 = vmul.f32 %v4041, %v977
        %v4060 = vmul.f32 %v4043, %v977
        %v4061 = vmul.f32 %v4045, %v977
        %v4062 = vmul.f32 %v3982, %v3982
        %v4063 = vmul.f32 %v3983, %v3983
        %v4064 = vmul.f32 %v3984, %v3984
        %v4065 = vmul.f32 %v3985, %v3985
        %v4066 = vmul.f32 %v3986, %v3986
        %v4067 = vmul.f32 %v3987, %v3987
        %v4068 = vmul.f32 %v3988, %v3988
        %v4069 = vmul.f32 %v3989, %v3989
        %v4070 = vmul.f32 %v3990, %v3990
        %v4071 = vmul.f32 %v3991, %v3991
        %v4072 = vmul.f32 %v3992, %v3992
        %v4073 = vmul.f32 %v3993, %v3993
        %v4074 = vmul.f32 %v3994, %v3994
        %v4075 = vmul.f32 %v3995, %v3995
        %v4076 = vmul.f32 %v3996, %v3996
        %v4077 = vmul.f32 %v3997, %v3997
        %v4078 = vsub.f32 %v4046, %v4062
        %v4079 = vsub.f32 %v4047, %v4063
        %v4080 = vsub.f32 %v4048, %v4064
        %v4081 = vsub.f32 %v4049, %v4065
        %v4082 = vsub.f32 %v4050, %v4066
        %v4083 = vsub.f32 %v4051, %v4067
        %v4084 = vsub.f32 %v4052, %v4068
        %v4085 = vsub.f32 %v4053, %v4069
        %v4086 = vsub.f32 %v4054, %v4070
        %v4087 = vsub.f32 %v4055, %v4071
        %v4088 = vsub.f32 %v4056, %v4072
        %v4089 = vsub.f32 %v4057, %v4073
        %v4090 = vsub.f32 %v4058, %v4074
        %v4091 = vsub.f32 %v4059, %v4075
        %v4092 = vsub.f32 %v4060, %v4076
        %v4093 = vsub.f32 %v4061, %v4077
        %v4094 = vmax.f32 %v4078, 0.0
        %v4095 = vmax.f32 %v4079, 0.0
        %v4096 = vmax.f32 %v4080, 0.0
        %v4097 = vmax.f32 %v4081, 0.0
        %v4098 = vmax.f32 %v4082, 0.0
        %v4099 = vmax.f32 %v4083, 0.0
        %v4100 = vmax.f32 %v4084, 0.0
        %v4101 = vmax.f32 %v4085, 0.0
        %v4102 = vmax.f32 %v4086, 0.0
        %v4103 = vmax.f32 %v4087, 0.0
        %v4104 = vmax.f32 %v4088, 0.0
        %v4105 = vmax.f32 %v4089, 0.0
        %v4106 = vmax.f32 %v4090, 0.0
        %v4107 = vmax.f32 %v4091, 0.0
        %v4108 = vmax.f32 %v4092, 0.0
        %v4109 = vmax.f32 %v4093, 0.0
        %v4110 = vsub.f32 %v3934, %v3982
        %v4111 = vsub.f32 %v3935, %v3983
        %v4112 = vsub.f32 %v3936, %v3984
        %v4113 = vsub.f32 %v3937, %v3985
        %v4114 = vsub.f32 %v3938, %v3986
        %v4115 = vsub.f32 %v3939, %v3987
        %v4116 = vsub.f32 %v3940, %v3988
        %v4117 = vsub.f32 %v3941, %v3989
        %v4118 = vsub.f32 %v3942, %v3990
        %v4119 = vsub.f32 %v3943, %v3991
        %v4120 = vsub.f32 %v3944, %v3992
        %v4121 = vsub.f32 %v3945, %v3993
        %v4122 = vsub.f32 %v3946, %v3994
        %v4123 = vsub.f32 %v3947, %v3995
        %v4124 = vsub.f32 %v3948, %v3996
        %v4125 = vsub.f32 %v3949, %v3997
        %v4126 = vadd.f32 %v4094, 1e-05
        %v4127 = vadd.f32 %v4095, 1e-05
        %v4128 = vadd.f32 %v4096, 1e-05
        %v4129 = vadd.f32 %v4097, 1e-05
        %v4130 = vadd.f32 %v4098, 1e-05
        %v4131 = vadd.f32 %v4099, 1e-05
        %v4132 = vadd.f32 %v4100, 1e-05
        %v4133 = vadd.f32 %v4101, 1e-05
        %v4134 = vadd.f32 %v4102, 1e-05
        %v4135 = vadd.f32 %v4103, 1e-05
        %v4136 = vadd.f32 %v4104, 1e-05
        %v4137 = vadd.f32 %v4105, 1e-05
        %v4138 = vadd.f32 %v4106, 1e-05
        %v4139 = vadd.f32 %v4107, 1e-05
        %v4140 = vadd.f32 %v4108, 1e-05
        %v4141 = vadd.f32 %v4109, 1e-05
        %v4142 = vrsqrt.pop %v4126
        %v4143 = vrsqrt.pop %v4127
        %v4144 = vrsqrt.pop %v4128
        %v4145 = vrsqrt.pop %v4129
        %v4146 = vrsqrt.pop %v4130
        %v4147 = vrsqrt.pop %v4131
        %v4148 = vrsqrt.pop %v4132
        %v4149 = vrsqrt.pop %v4133
        %v4150 = vrsqrt.pop %v4134
        %v4151 = vrsqrt.pop %v4135
        %v4152 = vrsqrt.pop %v4136
        %v4153 = vrsqrt.pop %v4137
        %v4154 = vrsqrt.pop %v4138
        %v4155 = vrsqrt.pop %v4139
        %v4156 = vrsqrt.pop %v4140
        %v4157 = vrsqrt.pop %v4141
        %v4158 = vmul.f32 %v4110, %v4142
        %v4159 = vmul.f32 %v4111, %v4143
        %v4160 = vmul.f32 %v4112, %v4144
        %v4161 = vmul.f32 %v4113, %v4145
        %v4162 = vmul.f32 %v4114, %v4146
        %v4163 = vmul.f32 %v4115, %v4147
        %v4164 = vmul.f32 %v4116, %v4148
        %v4165 = vmul.f32 %v4117, %v4149
        %v4166 = vmul.f32 %v4118, %v4150
        %v4167 = vmul.f32 %v4119, %v4151
        %v4168 = vmul.f32 %v4120, %v4152
        %v4169 = vmul.f32 %v4121, %v4153
        %v4170 = vmul.f32 %v4122, %v4154
        %v4171 = vmul.f32 %v4123, %v4155
        %v4172 = vmul.f32 %v4124, %v4156
        %v4173 = vmul.f32 %v4125, %v4157
        %v4174 = vmul.f32 %v4158, %v3097
        %v4175 = vmul.f32 %v4159, %v3097
        %v4176 = vmul.f32 %v4160, %v3097
        %v4177 = vmul.f32 %v4161, %v3097
        %v4178 = vmul.f32 %v4162, %v3097
        %v4179 = vmul.f32 %v4163, %v3097
        %v4180 = vmul.f32 %v4164, %v3097
        %v4181 = vmul.f32 %v4165, %v3097
        %v4182 = vmul.f32 %v4166, %v3097
        %v4183 = vmul.f32 %v4167, %v3097
        %v4184 = vmul.f32 %v4168, %v3097
        %v4185 = vmul.f32 %v4169, %v3097
        %v4186 = vmul.f32 %v4170, %v3097
        %v4187 = vmul.f32 %v4171, %v3097
        %v4188 = vmul.f32 %v4172, %v3097
        %v4189 = vmul.f32 %v4173, %v3097
        %v4190 = vadd.f32 %v4174, %v3119
        %v4191 = vadd.f32 %v4175, %v3119
        %v4192 = vadd.f32 %v4176, %v3119
        %v4193 = vadd.f32 %v4177, %v3119
        %v4194 = vadd.f32 %v4178, %v3119
        %v4195 = vadd.f32 %v4179, %v3119
        %v4196 = vadd.f32 %v4180, %v3119
        %v4197 = vadd.f32 %v4181, %v3119
        %v4198 = vadd.f32 %v4182, %v3119
        %v4199 = vadd.f32 %v4183, %v3119
        %v4200 = vadd.f32 %v4184, %v3119
        %v4201 = vadd.f32 %v4185, %v3119
        %v4202 = vadd.f32 %v4186, %v3119
        %v4203 = vadd.f32 %v4187, %v3119
        %v4204 = vadd.f32 %v4188, %v3119
        %v4205 = vadd.f32 %v4189, %v3119
        %v4206 = vpack.c.bf16 %v4191, %v4190
        %v4207 = vpack.c.bf16 %v4193, %v4192
        %v4208 = vpack.c.bf16 %v4195, %v4194
        %v4209 = vpack.c.bf16 %v4197, %v4196
        %v4210 = vpack.c.bf16 %v4199, %v4198
        %v4211 = vpack.c.bf16 %v4201, %v4200
        %v4212 = vpack.c.bf16 %v4203, %v4202
        %v4213 = vpack.c.bf16 %v4205, %v4204
        %v4214 = vld [vmem:[%s11] sm:$0xff]
        %v4215 = vld [vmem:[%s11 + $0x8] sm:$0xff]
        %v4216 = vld [vmem:[%s11 + $0x10] sm:$0xff]
        %v4217 = vld [vmem:[%s11 + $0x18] sm:$0xff]
        %v4218 = vld [vmem:[%s11 + $0x20] sm:$0xff]
        %v4219 = vld [vmem:[%s11 + $0x28] sm:$0xff]
        %v4220 = vld [vmem:[%s11 + $0x30] sm:$0xff]
        %v4221 = vld [vmem:[%s11 + $0x38] sm:$0xff]
        %v4222 = vld [vmem:[%s11 + $0x40] sm:$0xff]
        %v4223 = vld [vmem:[%s11 + $0x48] sm:$0xff]
        %v4224 = vld [vmem:[%s11 + $0x50] sm:$0xff]
        %v4225 = vld [vmem:[%s11 + $0x58] sm:$0xff]
        %v4226 = vld [vmem:[%s11 + $0x60] sm:$0xff]
        %v4227 = vld [vmem:[%s11 + $0x68] sm:$0xff]
        %v4228 = vld [vmem:[%s11 + $0x70] sm:$0xff]
        %v4229 = vld [vmem:[%s11 + $0x78] sm:$0xff]
        %v4230 = vld [vmem:[%s12] sm:$0x3]
        %v4232 = vlaneseq
        %v4233 = vshrl.u32 %v4232, 7
        %v4234 = vsub.s32 0, %v4233
        %v4235 = vrot.slane %v4230, %v4234
        %v4236 = vlaneseq
        %v4237 = vshrl.u32 %v4236, 7
        %v4238 = vsub.s32 1, %v4237
        %v4239 = vrot.slane %v4230, %v4238
        %v4258 = vunpack.c.l.b16 %v4214
        %v4259 = vunpack.c.h.b16 %v4214
        %v4260 = vunpack.c.l.b16 %v4215
        %v4261 = vunpack.c.h.b16 %v4215
        %v4262 = vunpack.c.l.b16 %v4216
        %v4263 = vunpack.c.h.b16 %v4216
        %v4264 = vunpack.c.l.b16 %v4217
        %v4265 = vunpack.c.h.b16 %v4217
        %v4266 = vunpack.c.l.b16 %v4218
        %v4267 = vunpack.c.h.b16 %v4218
        %v4268 = vunpack.c.l.b16 %v4219
        %v4269 = vunpack.c.h.b16 %v4219
        %v4270 = vunpack.c.l.b16 %v4220
        %v4271 = vunpack.c.h.b16 %v4220
        %v4272 = vunpack.c.l.b16 %v4221
        %v4273 = vunpack.c.h.b16 %v4221
        %v4274 = vunpack.c.l.b16 %v4222
        %v4275 = vunpack.c.h.b16 %v4222
        %v4276 = vunpack.c.l.b16 %v4223
        %v4277 = vunpack.c.h.b16 %v4223
        %v4278 = vunpack.c.l.b16 %v4224
        %v4279 = vunpack.c.h.b16 %v4224
        %v4280 = vunpack.c.l.b16 %v4225
        %v4281 = vunpack.c.h.b16 %v4225
        %v4282 = vunpack.c.l.b16 %v4226
        %v4283 = vunpack.c.h.b16 %v4226
        %v4284 = vunpack.c.l.b16 %v4227
        %v4285 = vunpack.c.h.b16 %v4227
        %v4286 = vunpack.c.l.b16 %v4228
        %v4287 = vunpack.c.h.b16 %v4228
        %v4288 = vunpack.c.l.b16 %v4229
        %v4289 = vunpack.c.h.b16 %v4229
        %v4290 = vpack.c.b16 %v4260, %v4258
        %v4291 = vpack.c.b16 %v4261, %v4259
        %v4292 = vpack.c.b16 %v4264, %v4262
        %v4293 = vpack.c.b16 %v4265, %v4263
        %v4294 = vpack.c.b16 %v4268, %v4266
        %v4295 = vpack.c.b16 %v4269, %v4267
        %v4296 = vpack.c.b16 %v4272, %v4270
        %v4297 = vpack.c.b16 %v4273, %v4271
        %v4298 = vpack.c.b16 %v4276, %v4274
        %v4299 = vpack.c.b16 %v4277, %v4275
        %v4300 = vpack.c.b16 %v4280, %v4278
        %v4301 = vpack.c.b16 %v4281, %v4279
        %v4302 = vpack.c.b16 %v4284, %v4282
        %v4303 = vpack.c.b16 %v4285, %v4283
        %v4304 = vpack.c.b16 %v4288, %v4286
        %v4305 = vpack.c.b16 %v4289, %v4287
        %4322 = vmatprep.subr.bf16.mxu0 %v4291
        %4323 = vmatpush1.bf16.msra.mxu0 %v4290
        %4324 = vmatprep.subr.bf16.mxu0 %v4293
        %4325 = vmatpush1.bf16.msra.mxu0 %v4292
        %4326 = vmatprep.subr.bf16.mxu0 %v4295
        %4327 = vmatpush1.bf16.msra.mxu0 %v4294
        %4328 = vmatprep.subr.bf16.mxu0 %v4297
        %4329 = vmatpush1.bf16.msra.mxu0 %v4296
        %4330 = vmatprep.subr.bf16.mxu0 %v4299
        %4331 = vmatpush1.bf16.msra.mxu0 %v4298
        %4332 = vmatprep.subr.bf16.mxu0 %v4301
        %4333 = vmatpush1.bf16.msra.mxu0 %v4300
        %4334 = vmatprep.subr.bf16.mxu0 %v4303
        %4335 = vmatpush1.bf16.msra.mxu0 %v4302
        %4336 = vmatprep.subr.bf16.mxu0 %v4305
        %4337 = vmatpush1.bf16.msra.mxu0 %v4304
        %4338 = vmatprep.subr.bf16.mxu0 0
        %4339 = vmatpush1.bf16.msra.mxu0 0
        %4340 = vmatprep.subr.bf16.mxu0 0
        %4341 = vmatpush1.bf16.msra.mxu0 0
        %4342 = vmatprep.subr.bf16.mxu0 0
        %4343 = vmatpush1.bf16.msra.mxu0 0
        %4344 = vmatprep.subr.bf16.mxu0 0
        %4345 = vmatpush1.bf16.msra.mxu0 0
        %4346 = vmatprep.subr.bf16.mxu0 0
        %4347 = vmatpush1.bf16.msra.mxu0 0
        %4348 = vmatprep.subr.bf16.mxu0 0
        %4349 = vmatpush1.bf16.msra.mxu0 0
        %4350 = vmatprep.subr.bf16.mxu0 0
        %4351 = vmatpush1.bf16.msra.mxu0 0
        %4352 = vmatprep.subr.bf16.mxu0 0
        %4353 = vmatpush1.bf16.msra.mxu0 0
        %4354 = vmatprep.mubr.bf16.mxu0 0
        %4355 = vmatmul.mubr.bf16.gmra.mrb[0].mxu0 %v4206
        %v4356 = vpop.f32.mrb[0].mxu0
        %v4357 = vadd.f32 %v4235, %v4356
        %v4358 = vpop.f32.mrb[0].mxu0
        %v4359 = vadd.f32 %v4239, %v4358
        %v4360 = vpop.f32.mrb[0].mxu0
        %v4361 = vadd.f32 %v4235, %v4360
        %v4362 = vpop.f32.mrb[0].mxu0
        %v4363 = vadd.f32 %v4239, %v4362
        %4364 = vmatprep.mubr.bf16.mxu0 0
        %4365 = vmatmul.mubr.bf16.gmra.mrb[0].mxu0 %v4207
        %v4366 = vpop.f32.mrb[0].mxu0
        %v4367 = vadd.f32 %v4235, %v4366
        %v4368 = vpop.f32.mrb[0].mxu0
        %v4369 = vadd.f32 %v4239, %v4368
        %v4370 = vpop.f32.mrb[0].mxu0
        %v4371 = vadd.f32 %v4235, %v4370
        %v4372 = vpop.f32.mrb[0].mxu0
        %v4373 = vadd.f32 %v4239, %v4372
        %4374 = vmatprep.mubr.bf16.mxu0 0
        %4375 = vmatmul.mubr.bf16.gmra.mrb[0].mxu0 %v4208
        %v4376 = vpop.f32.mrb[0].mxu0
        %v4377 = vadd.f32 %v4235, %v4376
        %v4378 = vpop.f32.mrb[0].mxu0
        %v4379 = vadd.f32 %v4239, %v4378
        %v4380 = vpop.f32.mrb[0].mxu0
        %v4381 = vadd.f32 %v4235, %v4380
        %v4382 = vpop.f32.mrb[0].mxu0
        %v4383 = vadd.f32 %v4239, %v4382
        %4384 = vmatprep.mubr.bf16.mxu0 0
        %4385 = vmatmul.mubr.bf16.gmra.mrb[0].mxu0 %v4209
        %v4386 = vpop.f32.mrb[0].mxu0
        %v4387 = vadd.f32 %v4235, %v4386
        %v4388 = vpop.f32.mrb[0].mxu0
        %v4389 = vadd.f32 %v4239, %v4388
        %v4390 = vpop.f32.mrb[0].mxu0
        %v4391 = vadd.f32 %v4235, %v4390
        %v4392 = vpop.f32.mrb[0].mxu0
        %v4393 = vadd.f32 %v4239, %v4392
        %4394 = vmatprep.mubr.bf16.mxu0 0
        %4395 = vmatmul.mubr.bf16.gmra.mrb[0].mxu0 %v4210
        %v4396 = vpop.f32.mrb[0].mxu0
        %v4397 = vadd.f32 %v4235, %v4396
        %v4398 = vpop.f32.mrb[0].mxu0
        %v4399 = vadd.f32 %v4239, %v4398
        %v4400 = vpop.f32.mrb[0].mxu0
        %v4401 = vadd.f32 %v4235, %v4400
        %v4402 = vpop.f32.mrb[0].mxu0
        %v4403 = vadd.f32 %v4239, %v4402
        %4404 = vmatprep.mubr.bf16.mxu0 0
        %4405 = vmatmul.mubr.bf16.gmra.mrb[0].mxu0 %v4211
        %v4406 = vpop.f32.mrb[0].mxu0
        %v4407 = vadd.f32 %v4235, %v4406
        %v4408 = vpop.f32.mrb[0].mxu0
        %v4409 = vadd.f32 %v4239, %v4408
        %v4410 = vpop.f32.mrb[0].mxu0
        %v4411 = vadd.f32 %v4235, %v4410
        %v4412 = vpop.f32.mrb[0].mxu0
        %v4413 = vadd.f32 %v4239, %v4412
        %4414 = vmatprep.mubr.bf16.mxu0 0
        %4415 = vmatmul.mubr.bf16.gmra.mrb[0].mxu0 %v4212
        %v4416 = vpop.f32.mrb[0].mxu0
        %v4417 = vadd.f32 %v4235, %v4416
        %v4418 = vpop.f32.mrb[0].mxu0
        %v4419 = vadd.f32 %v4239, %v4418
        %v4420 = vpop.f32.mrb[0].mxu0
        %v4421 = vadd.f32 %v4235, %v4420
        %v4422 = vpop.f32.mrb[0].mxu0
        %v4423 = vadd.f32 %v4239, %v4422
        %4424 = vmatprep.mubr.bf16.mxu0 0
        %4425 = vmatmul.mubr.bf16.gmra.mrb[0].mxu0 %v4213
        %v4426 = vpop.f32.mrb[0].mxu0
        %v4427 = vadd.f32 %v4235, %v4426
        %v4428 = vpop.f32.mrb[0].mxu0
        %v4429 = vadd.f32 %v4239, %v4428
        %v4430 = vpop.f32.mrb[0].mxu0
        %v4431 = vadd.f32 %v4235, %v4430
        %v4432 = vpop.f32.mrb[0].mxu0
        %v4433 = vadd.f32 %v4239, %v4432
        %4434 = vdwg.mxu0
        %v4435 = vmul.f32 %v4357, 0.5
        %v4436 = vmul.f32 %v4359, 0.5
        %v4437 = vmul.f32 %v4361, 0.5
        %v4438 = vmul.f32 %v4363, 0.5
        %v4439 = vmul.f32 %v4367, 0.5
        %v4440 = vmul.f32 %v4369, 0.5
        %v4441 = vmul.f32 %v4371, 0.5
        %v4442 = vmul.f32 %v4373, 0.5
        %v4443 = vmul.f32 %v4377, 0.5
        %v4444 = vmul.f32 %v4379, 0.5
        %v4445 = vmul.f32 %v4381, 0.5
        %v4446 = vmul.f32 %v4383, 0.5
        %v4447 = vmul.f32 %v4387, 0.5
        %v4448 = vmul.f32 %v4389, 0.5
        %v4449 = vmul.f32 %v4391, 0.5
        %v4450 = vmul.f32 %v4393, 0.5
        %v4451 = vmul.f32 %v4397, 0.5
        %v4452 = vmul.f32 %v4399, 0.5
        %v4453 = vmul.f32 %v4401, 0.5
        %v4454 = vmul.f32 %v4403, 0.5
        %v4455 = vmul.f32 %v4407, 0.5
        %v4456 = vmul.f32 %v4409, 0.5
        %v4457 = vmul.f32 %v4411, 0.5
        %v4458 = vmul.f32 %v4413, 0.5
        %v4459 = vmul.f32 %v4417, 0.5
        %v4460 = vmul.f32 %v4419, 0.5
        %v4461 = vmul.f32 %v4421, 0.5
        %v4462 = vmul.f32 %v4423, 0.5
        %v4463 = vmul.f32 %v4427, 0.5
        %v4464 = vmul.f32 %v4429, 0.5
        %v4465 = vmul.f32 %v4431, 0.5
        %v4466 = vmul.f32 %v4433, 0.5
        %v4467 = vmul.f32 %v4357, 0.044715
        %v4468 = vmul.f32 %v4359, 0.044715
        %v4469 = vmul.f32 %v4361, 0.044715
        %v4470 = vmul.f32 %v4363, 0.044715
        %v4471 = vmul.f32 %v4367, 0.044715
        %v4472 = vmul.f32 %v4369, 0.044715
        %v4473 = vmul.f32 %v4371, 0.044715
        %v4474 = vmul.f32 %v4373, 0.044715
        %v4475 = vmul.f32 %v4377, 0.044715
        %v4476 = vmul.f32 %v4379, 0.044715
        %v4477 = vmul.f32 %v4381, 0.044715
        %v4478 = vmul.f32 %v4383, 0.044715
        %v4479 = vmul.f32 %v4387, 0.044715
        %v4480 = vmul.f32 %v4389, 0.044715
        %v4481 = vmul.f32 %v4391, 0.044715
        %v4482 = vmul.f32 %v4393, 0.044715
        %v4483 = vmul.f32 %v4397, 0.044715
        %v4484 = vmul.f32 %v4399, 0.044715
        %v4485 = vmul.f32 %v4401, 0.044715
        %v4486 = vmul.f32 %v4403, 0.044715
        %v4487 = vmul.f32 %v4407, 0.044715
        %v4488 = vmul.f32 %v4409, 0.044715
        %v4489 = vmul.f32 %v4411, 0.044715
        %v4490 = vmul.f32 %v4413, 0.044715
        %v4491 = vmul.f32 %v4417, 0.044715
        %v4492 = vmul.f32 %v4419, 0.044715
        %v4493 = vmul.f32 %v4421, 0.044715
        %v4494 = vmul.f32 %v4423, 0.044715
        %v4495 = vmul.f32 %v4427, 0.044715
        %v4496 = vmul.f32 %v4429, 0.044715
        %v4497 = vmul.f32 %v4431, 0.044715
        %v4498 = vmul.f32 %v4433, 0.044715
        %v4499 = vmul.f32 %v4467, %v4357
        %v4500 = vmul.f32 %v4468, %v4359
        %v4501 = vmul.f32 %v4469, %v4361
        %v4502 = vmul.f32 %v4470, %v4363
        %v4503 = vmul.f32 %v4471, %v4367
        %v4504 = vmul.f32 %v4472, %v4369
        %v4505 = vmul.f32 %v4473, %v4371
        %v4506 = vmul.f32 %v4474, %v4373
        %v4507 = vmul.f32 %v4475, %v4377
        %v4508 = vmul.f32 %v4476, %v4379
        %v4509 = vmul.f32 %v4477, %v4381
        %v4510 = vmul.f32 %v4478, %v4383
        %v4511 = vmul.f32 %v4479, %v4387
        %v4512 = vmul.f32 %v4480, %v4389
        %v4513 = vmul.f32 %v4481, %v4391
        %v4514 = vmul.f32 %v4482, %v4393
        %v4515 = vmul.f32 %v4483, %v4397
        %v4516 = vmul.f32 %v4484, %v4399
        %v4517 = vmul.f32 %v4485, %v4401
        %v4518 = vmul.f32 %v4486, %v4403
        %v4519 = vmul.f32 %v4487, %v4407
        %v4520 = vmul.f32 %v4488, %v4409
        %v4521 = vmul.f32 %v4489, %v4411
        %v4522 = vmul.f32 %v4490, %v4413
        %v4523 = vmul.f32 %v4491, %v4417
        %v4524 = vmul.f32 %v4492, %v4419
        %v4525 = vmul.f32 %v4493, %v4421
        %v4526 = vmul.f32 %v4494, %v4423
        %v4527 = vmul.f32 %v4495, %v4427
        %v4528 = vmul.f32 %v4496, %v4429
        %v4529 = vmul.f32 %v4497, %v4431
        %v4530 = vmul.f32 %v4498, %v4433
        %v4531 = vmul.f32 %v4499, %v4357
        %v4532 = vmul.f32 %v4500, %v4359
        %v4533 = vmul.f32 %v4501, %v4361
        %v4534 = vmul.f32 %v4502, %v4363
        %v4535 = vmul.f32 %v4503, %v4367
        %v4536 = vmul.f32 %v4504, %v4369
        %v4537 = vmul.f32 %v4505, %v4371
        %v4538 = vmul.f32 %v4506, %v4373
        %v4539 = vmul.f32 %v4507, %v4377
        %v4540 = vmul.f32 %v4508, %v4379
        %v4541 = vmul.f32 %v4509, %v4381
        %v4542 = vmul.f32 %v4510, %v4383
        %v4543 = vmul.f32 %v4511, %v4387
        %v4544 = vmul.f32 %v4512, %v4389
        %v4545 = vmul.f32 %v4513, %v4391
        %v4546 = vmul.f32 %v4514, %v4393
        %v4547 = vmul.f32 %v4515, %v4397
        %v4548 = vmul.f32 %v4516, %v4399
        %v4549 = vmul.f32 %v4517, %v4401
        %v4550 = vmul.f32 %v4518, %v4403
        %v4551 = vmul.f32 %v4519, %v4407
        %v4552 = vmul.f32 %v4520, %v4409
        %v4553 = vmul.f32 %v4521, %v4411
        %v4554 = vmul.f32 %v4522, %v4413
        %v4555 = vmul.f32 %v4523, %v4417
        %v4556 = vmul.f32 %v4524, %v4419
        %v4557 = vmul.f32 %v4525, %v4421
        %v4558 = vmul.f32 %v4526, %v4423
        %v4559 = vmul.f32 %v4527, %v4427
        %v4560 = vmul.f32 %v4528, %v4429
        %v4561 = vmul.f32 %v4529, %v4431
        %v4562 = vmul.f32 %v4530, %v4433
        %v4563 = vadd.f32 %v4357, %v4531
        %v4564 = vadd.f32 %v4359, %v4532
        %v4565 = vadd.f32 %v4361, %v4533
        %v4566 = vadd.f32 %v4363, %v4534
        %v4567 = vadd.f32 %v4367, %v4535
        %v4568 = vadd.f32 %v4369, %v4536
        %v4569 = vadd.f32 %v4371, %v4537
        %v4570 = vadd.f32 %v4373, %v4538
        %v4571 = vadd.f32 %v4377, %v4539
        %v4572 = vadd.f32 %v4379, %v4540
        %v4573 = vadd.f32 %v4381, %v4541
        %v4574 = vadd.f32 %v4383, %v4542
        %v4575 = vadd.f32 %v4387, %v4543
        %v4576 = vadd.f32 %v4389, %v4544
        %v4577 = vadd.f32 %v4391, %v4545
        %v4578 = vadd.f32 %v4393, %v4546
        %v4579 = vadd.f32 %v4397, %v4547
        %v4580 = vadd.f32 %v4399, %v4548
        %v4581 = vadd.f32 %v4401, %v4549
        %v4582 = vadd.f32 %v4403, %v4550
        %v4583 = vadd.f32 %v4407, %v4551
        %v4584 = vadd.f32 %v4409, %v4552
        %v4585 = vadd.f32 %v4411, %v4553
        %v4586 = vadd.f32 %v4413, %v4554
        %v4587 = vadd.f32 %v4417, %v4555
        %v4588 = vadd.f32 %v4419, %v4556
        %v4589 = vadd.f32 %v4421, %v4557
        %v4590 = vadd.f32 %v4423, %v4558
        %v4591 = vadd.f32 %v4427, %v4559
        %v4592 = vadd.f32 %v4429, %v4560
        %v4593 = vadd.f32 %v4431, %v4561
        %v4594 = vadd.f32 %v4433, %v4562
        %v4595 = vmul.f32 %v4563, 0.7978846
        %v4596 = vmul.f32 %v4564, 0.7978846
        %v4597 = vmul.f32 %v4565, 0.7978846
        %v4598 = vmul.f32 %v4566, 0.7978846
        %v4599 = vmul.f32 %v4567, 0.7978846
        %v4600 = vmul.f32 %v4568, 0.7978846
        %v4601 = vmul.f32 %v4569, 0.7978846
        %v4602 = vmul.f32 %v4570, 0.7978846
        %v4603 = vmul.f32 %v4571, 0.7978846
        %v4604 = vmul.f32 %v4572, 0.7978846
        %v4605 = vmul.f32 %v4573, 0.7978846
        %v4606 = vmul.f32 %v4574, 0.7978846
        %v4607 = vmul.f32 %v4575, 0.7978846
        %v4608 = vmul.f32 %v4576, 0.7978846
        %v4609 = vmul.f32 %v4577, 0.7978846
        %v4610 = vmul.f32 %v4578, 0.7978846
        %v4611 = vmul.f32 %v4579, 0.7978846
        %v4612 = vmul.f32 %v4580, 0.7978846
        %v4613 = vmul.f32 %v4581, 0.7978846
        %v4614 = vmul.f32 %v4582, 0.7978846
        %v4615 = vmul.f32 %v4583, 0.7978846
        %v4616 = vmul.f32 %v4584, 0.7978846
        %v4617 = vmul.f32 %v4585, 0.7978846
        %v4618 = vmul.f32 %v4586, 0.7978846
        %v4619 = vmul.f32 %v4587, 0.7978846
        %v4620 = vmul.f32 %v4588, 0.7978846
        %v4621 = vmul.f32 %v4589, 0.7978846
        %v4622 = vmul.f32 %v4590, 0.7978846
        %v4623 = vmul.f32 %v4591, 0.7978846
        %v4624 = vmul.f32 %v4592, 0.7978846
        %v4625 = vmul.f32 %v4593, 0.7978846
        %v4626 = vmul.f32 %v4594, 0.7978846
        %v4627 = vtanh.pop %v4595
        %v4628 = vtanh.pop %v4596
        %v4629 = vtanh.pop %v4597
        %v4630 = vtanh.pop %v4598
        %v4631 = vtanh.pop %v4599
        %v4632 = vtanh.pop %v4600
        %v4633 = vtanh.pop %v4601
        %v4634 = vtanh.pop %v4602
        %v4635 = vtanh.pop %v4603
        %v4636 = vtanh.pop %v4604
        %v4637 = vtanh.pop %v4605
        %v4638 = vtanh.pop %v4606
        %v4639 = vtanh.pop %v4607
        %v4640 = vtanh.pop %v4608
        %v4641 = vtanh.pop %v4609
        %v4642 = vtanh.pop %v4610
        %v4643 = vtanh.pop %v4611
        %v4644 = vtanh.pop %v4612
        %v4645 = vtanh.pop %v4613
        %v4646 = vtanh.pop %v4614
        %v4647 = vtanh.pop %v4615
        %v4648 = vtanh.pop %v4616
        %v4649 = vtanh.pop %v4617
        %v4650 = vtanh.pop %v4618
        %v4651 = vtanh.pop %v4619
        %v4652 = vtanh.pop %v4620
        %v4653 = vtanh.pop %v4621
        %v4654 = vtanh.pop %v4622
        %v4655 = vtanh.pop %v4623
        %v4656 = vtanh.pop %v4624
        %v4657 = vtanh.pop %v4625
        %v4658 = vtanh.pop %v4626
        %v4659 = vadd.f32 %v4627, 1.0
        %v4660 = vadd.f32 %v4628, 1.0
        %v4661 = vadd.f32 %v4629, 1.0
        %v4662 = vadd.f32 %v4630, 1.0
        %v4663 = vadd.f32 %v4631, 1.0
        %v4664 = vadd.f32 %v4632, 1.0
        %v4665 = vadd.f32 %v4633, 1.0
        %v4666 = vadd.f32 %v4634, 1.0
        %v4667 = vadd.f32 %v4635, 1.0
        %v4668 = vadd.f32 %v4636, 1.0
        %v4669 = vadd.f32 %v4637, 1.0
        %v4670 = vadd.f32 %v4638, 1.0
        %v4671 = vadd.f32 %v4639, 1.0
        %v4672 = vadd.f32 %v4640, 1.0
        %v4673 = vadd.f32 %v4641, 1.0
        %v4674 = vadd.f32 %v4642, 1.0
        %v4675 = vadd.f32 %v4643, 1.0
        %v4676 = vadd.f32 %v4644, 1.0
        %v4677 = vadd.f32 %v4645, 1.0
        %v4678 = vadd.f32 %v4646, 1.0
        %v4679 = vadd.f32 %v4647, 1.0
        %v4680 = vadd.f32 %v4648, 1.0
        %v4681 = vadd.f32 %v4649, 1.0
        %v4682 = vadd.f32 %v4650, 1.0
        %v4683 = vadd.f32 %v4651, 1.0
        %v4684 = vadd.f32 %v4652, 1.0
        %v4685 = vadd.f32 %v4653, 1.0
        %v4686 = vadd.f32 %v4654, 1.0
        %v4687 = vadd.f32 %v4655, 1.0
        %v4688 = vadd.f32 %v4656, 1.0
        %v4689 = vadd.f32 %v4657, 1.0
        %v4690 = vadd.f32 %v4658, 1.0
        %v4691 = vmul.f32 %v4435, %v4659
        %v4692 = vmul.f32 %v4436, %v4660
        %v4693 = vmul.f32 %v4437, %v4661
        %v4694 = vmul.f32 %v4438, %v4662
        %v4695 = vmul.f32 %v4439, %v4663
        %v4696 = vmul.f32 %v4440, %v4664
        %v4697 = vmul.f32 %v4441, %v4665
        %v4698 = vmul.f32 %v4442, %v4666
        %v4699 = vmul.f32 %v4443, %v4667
        %v4700 = vmul.f32 %v4444, %v4668
        %v4701 = vmul.f32 %v4445, %v4669
        %v4702 = vmul.f32 %v4446, %v4670
        %v4703 = vmul.f32 %v4447, %v4671
        %v4704 = vmul.f32 %v4448, %v4672
        %v4705 = vmul.f32 %v4449, %v4673
        %v4706 = vmul.f32 %v4450, %v4674
        %v4707 = vmul.f32 %v4451, %v4675
        %v4708 = vmul.f32 %v4452, %v4676
        %v4709 = vmul.f32 %v4453, %v4677
        %v4710 = vmul.f32 %v4454, %v4678
        %v4711 = vmul.f32 %v4455, %v4679
        %v4712 = vmul.f32 %v4456, %v4680
        %v4713 = vmul.f32 %v4457, %v4681
        %v4714 = vmul.f32 %v4458, %v4682
        %v4715 = vmul.f32 %v4459, %v4683
        %v4716 = vmul.f32 %v4460, %v4684
        %v4717 = vmul.f32 %v4461, %v4685
        %v4718 = vmul.f32 %v4462, %v4686
        %v4719 = vmul.f32 %v4463, %v4687
        %v4720 = vmul.f32 %v4464, %v4688
        %v4721 = vmul.f32 %v4465, %v4689
        %v4722 = vmul.f32 %v4466, %v4690
        %v4723 = vpack.c.bf16 %v4693, %v4691
        %v4724 = vpack.c.bf16 %v4694, %v4692
        %v4725 = vpack.c.bf16 %v4697, %v4695
        %v4726 = vpack.c.bf16 %v4698, %v4696
        %v4727 = vpack.c.bf16 %v4701, %v4699
        %v4728 = vpack.c.bf16 %v4702, %v4700
        %v4729 = vpack.c.bf16 %v4705, %v4703
        %v4730 = vpack.c.bf16 %v4706, %v4704
        %v4731 = vpack.c.bf16 %v4709, %v4707
        %v4732 = vpack.c.bf16 %v4710, %v4708
        %v4733 = vpack.c.bf16 %v4713, %v4711
        %v4734 = vpack.c.bf16 %v4714, %v4712
        %v4735 = vpack.c.bf16 %v4717, %v4715
        %v4736 = vpack.c.bf16 %v4718, %v4716
        %v4737 = vpack.c.bf16 %v4721, %v4719
        %v4738 = vpack.c.bf16 %v4722, %v4720
        %v4739 = vld [vmem:[%s13] sm:$0xf]
        %v4740 = vld [vmem:[%s13 + $0x4] sm:$0xf]
        %v4741 = vld [vmem:[%s13 + $0x8] sm:$0xf]
        %v4742 = vld [vmem:[%s13 + $0xc] sm:$0xf]
        %v4743 = vld [vmem:[%s13 + $0x10] sm:$0xf]
        %v4744 = vld [vmem:[%s13 + $0x14] sm:$0xf]
        %v4745 = vld [vmem:[%s13 + $0x18] sm:$0xf]
        %v4746 = vld [vmem:[%s13 + $0x1c] sm:$0xf]
        %v4747 = vld [vmem:[%s13 + $0x20] sm:$0xf]
        %v4748 = vld [vmem:[%s13 + $0x24] sm:$0xf]
        %v4749 = vld [vmem:[%s13 + $0x28] sm:$0xf]
        %v4750 = vld [vmem:[%s13 + $0x2c] sm:$0xf]
        %v4751 = vld [vmem:[%s13 + $0x30] sm:$0xf]
        %v4752 = vld [vmem:[%s13 + $0x34] sm:$0xf]
        %v4753 = vld [vmem:[%s13 + $0x38] sm:$0xf]
        %v4754 = vld [vmem:[%s13 + $0x3c] sm:$0xf]
        %v4755 = vld [vmem:[%s13 + $0x40] sm:$0xf]
        %v4756 = vld [vmem:[%s13 + $0x44] sm:$0xf]
        %v4757 = vld [vmem:[%s13 + $0x48] sm:$0xf]
        %v4758 = vld [vmem:[%s13 + $0x4c] sm:$0xf]
        %v4759 = vld [vmem:[%s13 + $0x50] sm:$0xf]
        %v4760 = vld [vmem:[%s13 + $0x54] sm:$0xf]
        %v4761 = vld [vmem:[%s13 + $0x58] sm:$0xf]
        %v4762 = vld [vmem:[%s13 + $0x5c] sm:$0xf]
        %v4763 = vld [vmem:[%s13 + $0x60] sm:$0xf]
        %v4764 = vld [vmem:[%s13 + $0x64] sm:$0xf]
        %v4765 = vld [vmem:[%s13 + $0x68] sm:$0xf]
        %v4766 = vld [vmem:[%s13 + $0x6c] sm:$0xf]
        %v4767 = vld [vmem:[%s13 + $0x70] sm:$0xf]
        %v4768 = vld [vmem:[%s13 + $0x74] sm:$0xf]
        %v4769 = vld [vmem:[%s13 + $0x78] sm:$0xf]
        %v4770 = vld [vmem:[%s13 + $0x7c] sm:$0xf]
        %v4771 = vld [vmem:[%s14] sm:$0x1]
        %v4773 = vlaneseq
        %v4774 = vshrl.u32 %v4773, 7
        %v4775 = vsub.s32 0, %v4774
        %v4776 = vrot.slane %v4771, %v4775
        %v4810 = vunpack.c.l.b16 %v4739
        %v4811 = vunpack.c.l.b16 %v4740
        %v4812 = vunpack.c.l.b16 %v4741
        %v4813 = vunpack.c.l.b16 %v4742
        %v4814 = vunpack.c.l.b16 %v4743
        %v4815 = vunpack.c.l.b16 %v4744
        %v4816 = vunpack.c.l.b16 %v4745
        %v4817 = vunpack.c.l.b16 %v4746
        %v4818 = vunpack.c.l.b16 %v4747
        %v4819 = vunpack.c.l.b16 %v4748
        %v4820 = vunpack.c.l.b16 %v4749
        %v4821 = vunpack.c.l.b16 %v4750
        %v4822 = vunpack.c.l.b16 %v4751
        %v4823 = vunpack.c.l.b16 %v4752
        %v4824 = vunpack.c.l.b16 %v4753
        %v4825 = vunpack.c.l.b16 %v4754
        %v4826 = vunpack.c.l.b16 %v4755
        %v4827 = vunpack.c.l.b16 %v4756
        %v4828 = vunpack.c.l.b16 %v4757
        %v4829 = vunpack.c.l.b16 %v4758
        %v4830 = vunpack.c.l.b16 %v4759
        %v4831 = vunpack.c.l.b16 %v4760
        %v4832 = vunpack.c.l.b16 %v4761
        %v4833 = vunpack.c.l.b16 %v4762
        %v4834 = vunpack.c.l.b16 %v4763
        %v4835 = vunpack.c.l.b16 %v4764
        %v4836 = vunpack.c.l.b16 %v4765
        %v4837 = vunpack.c.l.b16 %v4766
        %v4838 = vunpack.c.l.b16 %v4767
        %v4839 = vunpack.c.l.b16 %v4768
        %v4840 = vunpack.c.l.b16 %v4769
        %v4841 = vunpack.c.l.b16 %v4770
        %v4842 = vpack.c.b16 %v4811, %v4810
        %v4843 = vpack.c.b16 %v4813, %v4812
        %v4844 = vpack.c.b16 %v4815, %v4814
        %v4845 = vpack.c.b16 %v4817, %v4816
        %v4846 = vpack.c.b16 %v4819, %v4818
        %v4847 = vpack.c.b16 %v4821, %v4820
        %v4848 = vpack.c.b16 %v4823, %v4822
        %v4849 = vpack.c.b16 %v4825, %v4824
        %v4850 = vpack.c.b16 %v4827, %v4826
        %v4851 = vpack.c.b16 %v4829, %v4828
        %v4852 = vpack.c.b16 %v4831, %v4830
        %v4853 = vpack.c.b16 %v4833, %v4832
        %v4854 = vpack.c.b16 %v4835, %v4834
        %v4855 = vpack.c.b16 %v4837, %v4836
        %v4856 = vpack.c.b16 %v4839, %v4838
        %v4857 = vpack.c.b16 %v4841, %v4840
        %4874 = vmatprep.subr.bf16.mxu0 0
        %4875 = vmatpush1.bf16.msra.mxu0 %v4842
        %4876 = vmatprep.subr.bf16.mxu0 0
        %4877 = vmatpush1.bf16.msra.mxu0 %v4843
        %4878 = vmatprep.subr.bf16.mxu0 0
        %4879 = vmatpush1.bf16.msra.mxu0 %v4844
        %4880 = vmatprep.subr.bf16.mxu0 0
        %4881 = vmatpush1.bf16.msra.mxu0 %v4845
        %4882 = vmatprep.subr.bf16.mxu0 0
        %4883 = vmatpush1.bf16.msra.mxu0 %v4846
        %4884 = vmatprep.subr.bf16.mxu0 0
        %4885 = vmatpush1.bf16.msra.mxu0 %v4847
        %4886 = vmatprep.subr.bf16.mxu0 0
        %4887 = vmatpush1.bf16.msra.mxu0 %v4848
        %4888 = vmatprep.subr.bf16.mxu0 0
        %4889 = vmatpush1.bf16.msra.mxu0 %v4849
        %4890 = vmatprep.subr.bf16.mxu0 0
        %4891 = vmatpush1.bf16.msra.mxu0 %v4850
        %4892 = vmatprep.subr.bf16.mxu0 0
        %4893 = vmatpush1.bf16.msra.mxu0 %v4851
        %4894 = vmatprep.subr.bf16.mxu0 0
        %4895 = vmatpush1.bf16.msra.mxu0 %v4852
        %4896 = vmatprep.subr.bf16.mxu0 0
        %4897 = vmatpush1.bf16.msra.mxu0 %v4853
        %4898 = vmatprep.subr.bf16.mxu0 0
        %4899 = vmatpush1.bf16.msra.mxu0 %v4854
        %4900 = vmatprep.subr.bf16.mxu0 0
        %4901 = vmatpush1.bf16.msra.mxu0 %v4855
        %4902 = vmatprep.subr.bf16.mxu0 0
        %4903 = vmatpush1.bf16.msra.mxu0 %v4856
        %4904 = vmatprep.subr.bf16.mxu0 0
        %4905 = vmatpush1.bf16.msra.mxu0 %v4857
        %4906 = vmatprep.mubr.bf16.mxu0 %v4724
        %4907 = vmatmul.mubr.bf16.gmra.mrb[0].mxu0 %v4723
        %v4908 = vpop.f32.mrb[0].mxu0
        %v4909 = vadd.f32 %v4776, %v4908
        %v4910 = vpop.f32.mrb[0].mxu0
        %v4911 = vpop.f32.mrb[0].mxu0
        %v4912 = vadd.f32 %v4776, %v4911
        %v4913 = vpop.f32.mrb[0].mxu0
        %4914 = vmatprep.mubr.bf16.mxu0 %v4726
        %4915 = vmatmul.mubr.bf16.gmra.mrb[0].mxu0 %v4725
        %v4916 = vpop.f32.mrb[0].mxu0
        %v4917 = vadd.f32 %v4776, %v4916
        %v4918 = vpop.f32.mrb[0].mxu0
        %v4919 = vpop.f32.mrb[0].mxu0
        %v4920 = vadd.f32 %v4776, %v4919
        %v4921 = vpop.f32.mrb[0].mxu0
        %4922 = vmatprep.mubr.bf16.mxu0 %v4728
        %4923 = vmatmul.mubr.bf16.gmra.mrb[0].mxu0 %v4727
        %v4924 = vpop.f32.mrb[0].mxu0
        %v4925 = vadd.f32 %v4776, %v4924
        %v4926 = vpop.f32.mrb[0].mxu0
        %v4927 = vpop.f32.mrb[0].mxu0
        %v4928 = vadd.f32 %v4776, %v4927
        %v4929 = vpop.f32.mrb[0].mxu0
        %4930 = vmatprep.mubr.bf16.mxu0 %v4730
        %4931 = vmatmul.mubr.bf16.gmra.mrb[0].mxu0 %v4729
        %v4932 = vpop.f32.mrb[0].mxu0
        %v4933 = vadd.f32 %v4776, %v4932
        %v4934 = vpop.f32.mrb[0].mxu0
        %v4935 = vpop.f32.mrb[0].mxu0
        %v4936 = vadd.f32 %v4776, %v4935
        %v4937 = vpop.f32.mrb[0].mxu0
        %4938 = vmatprep.mubr.bf16.mxu0 %v4732
        %4939 = vmatmul.mubr.bf16.gmra.mrb[0].mxu0 %v4731
        %v4940 = vpop.f32.mrb[0].mxu0
        %v4941 = vadd.f32 %v4776, %v4940
        %v4942 = vpop.f32.mrb[0].mxu0
        %v4943 = vpop.f32.mrb[0].mxu0
        %v4944 = vadd.f32 %v4776, %v4943
        %v4945 = vpop.f32.mrb[0].mxu0
        %4946 = vmatprep.mubr.bf16.mxu0 %v4734
        %4947 = vmatmul.mubr.bf16.gmra.mrb[0].mxu0 %v4733
        %v4948 = vpop.f32.mrb[0].mxu0
        %v4949 = vadd.f32 %v4776, %v4948
        %v4950 = vpop.f32.mrb[0].mxu0
        %v4951 = vpop.f32.mrb[0].mxu0
        %v4952 = vadd.f32 %v4776, %v4951
        %v4953 = vpop.f32.mrb[0].mxu0
        %4954 = vmatprep.mubr.bf16.mxu0 %v4736
        %4955 = vmatmul.mubr.bf16.gmra.mrb[0].mxu0 %v4735
        %v4956 = vpop.f32.mrb[0].mxu0
        %v4957 = vadd.f32 %v4776, %v4956
        %v4958 = vpop.f32.mrb[0].mxu0
        %v4959 = vpop.f32.mrb[0].mxu0
        %v4960 = vadd.f32 %v4776, %v4959
        %v4961 = vpop.f32.mrb[0].mxu0
        %4962 = vmatprep.mubr.bf16.mxu0 %v4738
        %4963 = vmatmul.mubr.bf16.gmra.mrb[0].mxu0 %v4737
        %v4964 = vpop.f32.mrb[0].mxu0
        %v4965 = vadd.f32 %v4776, %v4964
        %v4966 = vpop.f32.mrb[0].mxu0
        %v4967 = vpop.f32.mrb[0].mxu0
        %v4968 = vadd.f32 %v4776, %v4967
        %v4969 = vpop.f32.mrb[0].mxu0
        %4970 = vdwg.mxu0
        %v4971 = vadd.f32 %v4909, %v3934
        %v4972 = vadd.f32 %v4912, %v3935
        %v4973 = vadd.f32 %v4917, %v3936
        %v4974 = vadd.f32 %v4920, %v3937
        %v4975 = vadd.f32 %v4925, %v3938
        %v4976 = vadd.f32 %v4928, %v3939
        %v4977 = vadd.f32 %v4933, %v3940
        %v4978 = vadd.f32 %v4936, %v3941
        %v4979 = vadd.f32 %v4941, %v3942
        %v4980 = vadd.f32 %v4944, %v3943
        %v4981 = vadd.f32 %v4949, %v3944
        %v4982 = vadd.f32 %v4952, %v3945
        %v4983 = vadd.f32 %v4957, %v3946
        %v4984 = vadd.f32 %v4960, %v3947
        %v4985 = vadd.f32 %v4965, %v3948
        %v4986 = vadd.f32 %v4968, %v3949
        %4987 = vst [vmem:[%s934] sm:$0xff] %v4971
        %4988 = vst [vmem:[%s934 + $0x8] sm:$0xff] %v4972
        %4989 = vst [vmem:[%s934 + $0x10] sm:$0xff] %v4973
        %4990 = vst [vmem:[%s934 + $0x18] sm:$0xff] %v4974
        %4991 = vst [vmem:[%s934 + $0x20] sm:$0xff] %v4975
        %4992 = vst [vmem:[%s934 + $0x28] sm:$0xff] %v4976
        %4993 = vst [vmem:[%s934 + $0x30] sm:$0xff] %v4977
        %4994 = vst [vmem:[%s934 + $0x38] sm:$0xff] %v4978
        %4995 = vst [vmem:[%s934 + $0x40] sm:$0xff] %v4979
        %4996 = vst [vmem:[%s934 + $0x48] sm:$0xff] %v4980
        %4997 = vst [vmem:[%s934 + $0x50] sm:$0xff] %v4981
        %4998 = vst [vmem:[%s934 + $0x58] sm:$0xff] %v4982
        %4999 = vst [vmem:[%s934 + $0x60] sm:$0xff] %v4983
        %5000 = vst [vmem:[%s934 + $0x68] sm:$0xff] %v4984
        %5001 = vst [vmem:[%s934 + $0x70] sm:$0xff] %v4985
        %5002 = vst [vmem:[%s934 + $0x78] sm:$0xff] %v4986
        %s5003 = scalar_lea.vmem %s3, 1
        %v5004 = vld [vmem:[%s5003] sm:$0x1]
        %s5005 = scalar_lea.vmem %s4, 1
        %v5006 = vld [vmem:[%s5005] sm:$0x1]
        %v5007 = vld [vmem:[#allocation2] sm:$0xff]
        %v5008 = vld [vmem:[#allocation2 + $0x8] sm:$0xff]
        %v5009 = vld [vmem:[#allocation2 + $0x10] sm:$0xff]
        %v5010 = vld [vmem:[#allocation2 + $0x18] sm:$0xff]
        %v5011 = vld [vmem:[#allocation2 + $0x20] sm:$0xff]
        %v5012 = vld [vmem:[#allocation2 + $0x28] sm:$0xff]
        %v5013 = vld [vmem:[#allocation2 + $0x30] sm:$0xff]
        %v5014 = vld [vmem:[#allocation2 + $0x38] sm:$0xff]
        %5015 = vadd.xlane.f32.xlu0 %v5007
        %v5016 = vpop.xlane.xlu0 %5015
        %5017 = vadd.xlane.f32.xlu0 %v5008
        %v5018 = vpop.xlane.xlu0 %5017
        %5019 = vadd.xlane.f32.xlu0 %v5009
        %v5020 = vpop.xlane.xlu0 %5019
        %5021 = vadd.xlane.f32.xlu0 %v5010
        %v5022 = vpop.xlane.xlu0 %5021
        %5023 = vadd.xlane.f32.xlu0 %v5011
        %v5024 = vpop.xlane.xlu0 %5023
        %5025 = vadd.xlane.f32.xlu0 %v5012
        %v5026 = vpop.xlane.xlu0 %5025
        %5027 = vadd.xlane.f32.xlu0 %v5013
        %v5028 = vpop.xlane.xlu0 %5027
        %5029 = vadd.xlane.f32.xlu0 %v5014
        %v5030 = vpop.xlane.xlu0 %5029
        %v5031 = vmul.f32 %v5016, %v977
        %v5032 = vmul.f32 %v5018, %v977
        %v5033 = vmul.f32 %v5020, %v977
        %v5034 = vmul.f32 %v5022, %v977
        %v5035 = vmul.f32 %v5024, %v977
        %v5036 = vmul.f32 %v5026, %v977
        %v5037 = vmul.f32 %v5028, %v977
        %v5038 = vmul.f32 %v5030, %v977
        %v5039 = vmul.f32 %v5007, %v5007
        %v5040 = vmul.f32 %v5008, %v5008
        %v5041 = vmul.f32 %v5009, %v5009
        %v5042 = vmul.f32 %v5010, %v5010
        %v5043 = vmul.f32 %v5011, %v5011
        %v5044 = vmul.f32 %v5012, %v5012
        %v5045 = vmul.f32 %v5013, %v5013
        %v5046 = vmul.f32 %v5014, %v5014
        %5047 = vadd.xlane.f32.xlu0 %v5039
        %v5048 = vpop.xlane.xlu0 %5047
        %5049 = vadd.xlane.f32.xlu0 %v5040
        %v5050 = vpop.xlane.xlu0 %5049
        %5051 = vadd.xlane.f32.xlu0 %v5041
        %v5052 = vpop.xlane.xlu0 %5051
        %5053 = vadd.xlane.f32.xlu0 %v5042
        %v5054 = vpop.xlane.xlu0 %5053
        %5055 = vadd.xlane.f32.xlu0 %v5043
        %v5056 = vpop.xlane.xlu0 %5055
        %5057 = vadd.xlane.f32.xlu0 %v5044
        %v5058 = vpop.xlane.xlu0 %5057
        %5059 = vadd.xlane.f32.xlu0 %v5045
        %v5060 = vpop.xlane.xlu0 %5059
        %5061 = vadd.xlane.f32.xlu0 %v5046
        %v5062 = vpop.xlane.xlu0 %5061
        %v5063 = vmul.f32 %v5048, %v977
        %v5064 = vmul.f32 %v5050, %v977
        %v5065 = vmul.f32 %v5052, %v977
        %v5066 = vmul.f32 %v5054, %v977
        %v5067 = vmul.f32 %v5056, %v977
        %v5068 = vmul.f32 %v5058, %v977
        %v5069 = vmul.f32 %v5060, %v977
        %v5070 = vmul.f32 %v5062, %v977
        %v5071 = vmul.f32 %v5031, %v5031
        %v5072 = vmul.f32 %v5032, %v5032
        %v5073 = vmul.f32 %v5033, %v5033
        %v5074 = vmul.f32 %v5034, %v5034
        %v5075 = vmul.f32 %v5035, %v5035
        %v5076 = vmul.f32 %v5036, %v5036
        %v5077 = vmul.f32 %v5037, %v5037
        %v5078 = vmul.f32 %v5038, %v5038
        %v5079 = vsub.f32 %v5063, %v5071
        %v5080 = vsub.f32 %v5064, %v5072
        %v5081 = vsub.f32 %v5065, %v5073
        %v5082 = vsub.f32 %v5066, %v5074
        %v5083 = vsub.f32 %v5067, %v5075
        %v5084 = vsub.f32 %v5068, %v5076
        %v5085 = vsub.f32 %v5069, %v5077
        %v5086 = vsub.f32 %v5070, %v5078
        %v5087 = vmax.f32 %v5079, 0.0
        %v5088 = vmax.f32 %v5080, 0.0
        %v5089 = vmax.f32 %v5081, 0.0
        %v5090 = vmax.f32 %v5082, 0.0
        %v5091 = vmax.f32 %v5083, 0.0
        %v5092 = vmax.f32 %v5084, 0.0
        %v5093 = vmax.f32 %v5085, 0.0
        %v5094 = vmax.f32 %v5086, 0.0
        %v5095 = vsub.f32 %v5007, %v5031
        %v5096 = vsub.f32 %v5008, %v5032
        %v5097 = vsub.f32 %v5009, %v5033
        %v5098 = vsub.f32 %v5010, %v5034
        %v5099 = vsub.f32 %v5011, %v5035
        %v5100 = vsub.f32 %v5012, %v5036
        %v5101 = vsub.f32 %v5013, %v5037
        %v5102 = vsub.f32 %v5014, %v5038
        %v5103 = vadd.f32 %v5087, 1e-05
        %v5104 = vadd.f32 %v5088, 1e-05
        %v5105 = vadd.f32 %v5089, 1e-05
        %v5106 = vadd.f32 %v5090, 1e-05
        %v5107 = vadd.f32 %v5091, 1e-05
        %v5108 = vadd.f32 %v5092, 1e-05
        %v5109 = vadd.f32 %v5093, 1e-05
        %v5110 = vadd.f32 %v5094, 1e-05
        %v5111 = vrsqrt.pop %v5103
        %v5112 = vrsqrt.pop %v5104
        %v5113 = vrsqrt.pop %v5105
        %v5114 = vrsqrt.pop %v5106
        %v5115 = vrsqrt.pop %v5107
        %v5116 = vrsqrt.pop %v5108
        %v5117 = vrsqrt.pop %v5109
        %v5118 = vrsqrt.pop %v5110
        %v5119 = vmul.f32 %v5095, %v5111
        %v5120 = vmul.f32 %v5096, %v5112
        %v5121 = vmul.f32 %v5097, %v5113
        %v5122 = vmul.f32 %v5098, %v5114
        %v5123 = vmul.f32 %v5099, %v5115
        %v5124 = vmul.f32 %v5100, %v5116
        %v5125 = vmul.f32 %v5101, %v5117
        %v5126 = vmul.f32 %v5102, %v5118
        %v5128 = vlaneseq
        %v5129 = vshrl.u32 %v5128, 7
        %v5130 = vsub.s32 0, %v5129
        %v5131 = vrot.slane %v5004, %v5130
        %v5133 = vmul.f32 %v5119, %v5131
        %v5134 = vmul.f32 %v5120, %v5131
        %v5135 = vmul.f32 %v5121, %v5131
        %v5136 = vmul.f32 %v5122, %v5131
        %v5137 = vmul.f32 %v5123, %v5131
        %v5138 = vmul.f32 %v5124, %v5131
        %v5139 = vmul.f32 %v5125, %v5131
        %v5140 = vmul.f32 %v5126, %v5131
        %v5142 = vlaneseq
        %v5143 = vshrl.u32 %v5142, 7
        %v5144 = vsub.s32 0, %v5143
        %v5145 = vrot.slane %v5006, %v5144
        %v5147 = vadd.f32 %v5133, %v5145
        %v5148 = vadd.f32 %v5134, %v5145
        %v5149 = vadd.f32 %v5135, %v5145
        %v5150 = vadd.f32 %v5136, %v5145
        %v5151 = vadd.f32 %v5137, %v5145
        %v5152 = vadd.f32 %v5138, %v5145
        %v5153 = vadd.f32 %v5139, %v5145
        %v5154 = vadd.f32 %v5140, %v5145
        %v5155 = vpack.c.bf16 %v5148, %v5147
        %v5156 = vpack.c.bf16 %v5150, %v5149
        %v5157 = vpack.c.bf16 %v5152, %v5151
        %v5158 = vpack.c.bf16 %v5154, %v5153
        %v5159 = vld [vmem:[#allocation2 + $0x40] sm:$0xff]
        %v5160 = vld [vmem:[#allocation2 + $0x48] sm:$0xff]
        %v5161 = vld [vmem:[#allocation2 + $0x50] sm:$0xff]
        %v5162 = vld [vmem:[#allocation2 + $0x58] sm:$0xff]
        %v5163 = vld [vmem:[#allocation2 + $0x60] sm:$0xff]
        %v5164 = vld [vmem:[#allocation2 + $0x68] sm:$0xff]
        %v5165 = vld [vmem:[#allocation2 + $0x70] sm:$0xff]
        %v5166 = vld [vmem:[#allocation2 + $0x78] sm:$0xff]
        %5167 = vadd.xlane.f32.xlu0 %v5159
        %v5168 = vpop.xlane.xlu0 %5167
        %5169 = vadd.xlane.f32.xlu0 %v5160
        %v5170 = vpop.xlane.xlu0 %5169
        %5171 = vadd.xlane.f32.xlu0 %v5161
        %v5172 = vpop.xlane.xlu0 %5171
        %5173 = vadd.xlane.f32.xlu0 %v5162
        %v5174 = vpop.xlane.xlu0 %5173
        %5175 = vadd.xlane.f32.xlu0 %v5163
        %v5176 = vpop.xlane.xlu0 %5175
        %5177 = vadd.xlane.f32.xlu0 %v5164
        %v5178 = vpop.xlane.xlu0 %5177
        %5179 = vadd.xlane.f32.xlu0 %v5165
        %v5180 = vpop.xlane.xlu0 %5179
        %5181 = vadd.xlane.f32.xlu0 %v5166
        %v5182 = vpop.xlane.xlu0 %5181
        %v5183 = vmul.f32 %v5168, %v977
        %v5184 = vmul.f32 %v5170, %v977
        %v5185 = vmul.f32 %v5172, %v977
        %v5186 = vmul.f32 %v5174, %v977
        %v5187 = vmul.f32 %v5176, %v977
        %v5188 = vmul.f32 %v5178, %v977
        %v5189 = vmul.f32 %v5180, %v977
        %v5190 = vmul.f32 %v5182, %v977
        %v5191 = vmul.f32 %v5159, %v5159
        %v5192 = vmul.f32 %v5160, %v5160
        %v5193 = vmul.f32 %v5161, %v5161
        %v5194 = vmul.f32 %v5162, %v5162
        %v5195 = vmul.f32 %v5163, %v5163
        %v5196 = vmul.f32 %v5164, %v5164
        %v5197 = vmul.f32 %v5165, %v5165
        %v5198 = vmul.f32 %v5166, %v5166
        %5199 = vadd.xlane.f32.xlu0 %v5191
        %v5200 = vpop.xlane.xlu0 %5199
        %5201 = vadd.xlane.f32.xlu0 %v5192
        %v5202 = vpop.xlane.xlu0 %5201
        %5203 = vadd.xlane.f32.xlu0 %v5193
        %v5204 = vpop.xlane.xlu0 %5203
        %5205 = vadd.xlane.f32.xlu0 %v5194
        %v5206 = vpop.xlane.xlu0 %5205
        %5207 = vadd.xlane.f32.xlu0 %v5195
        %v5208 = vpop.xlane.xlu0 %5207
        %5209 = vadd.xlane.f32.xlu0 %v5196
        %v5210 = vpop.xlane.xlu0 %5209
        %5211 = vadd.xlane.f32.xlu0 %v5197
        %v5212 = vpop.xlane.xlu0 %5211
        %5213 = vadd.xlane.f32.xlu0 %v5198
        %v5214 = vpop.xlane.xlu0 %5213
        %v5215 = vmul.f32 %v5200, %v977
        %v5216 = vmul.f32 %v5202, %v977
        %v5217 = vmul.f32 %v5204, %v977
        %v5218 = vmul.f32 %v5206, %v977
        %v5219 = vmul.f32 %v5208, %v977
        %v5220 = vmul.f32 %v5210, %v977
        %v5221 = vmul.f32 %v5212, %v977
        %v5222 = vmul.f32 %v5214, %v977
        %v5223 = vmul.f32 %v5183, %v5183
        %v5224 = vmul.f32 %v5184, %v5184
        %v5225 = vmul.f32 %v5185, %v5185
        %v5226 = vmul.f32 %v5186, %v5186
        %v5227 = vmul.f32 %v5187, %v5187
        %v5228 = vmul.f32 %v5188, %v5188
        %v5229 = vmul.f32 %v5189, %v5189
        %v5230 = vmul.f32 %v5190, %v5190
        %v5231 = vsub.f32 %v5215, %v5223
        %v5232 = vsub.f32 %v5216, %v5224
        %v5233 = vsub.f32 %v5217, %v5225
        %v5234 = vsub.f32 %v5218, %v5226
        %v5235 = vsub.f32 %v5219, %v5227
        %v5236 = vsub.f32 %v5220, %v5228
        %v5237 = vsub.f32 %v5221, %v5229
        %v5238 = vsub.f32 %v5222, %v5230
        %v5239 = vmax.f32 %v5231, 0.0
        %v5240 = vmax.f32 %v5232, 0.0
        %v5241 = vmax.f32 %v5233, 0.0
        %v5242 = vmax.f32 %v5234, 0.0
        %v5243 = vmax.f32 %v5235, 0.0
        %v5244 = vmax.f32 %v5236, 0.0
        %v5245 = vmax.f32 %v5237, 0.0
        %v5246 = vmax.f32 %v5238, 0.0
        %v5247 = vsub.f32 %v5159, %v5183
        %v5248 = vsub.f32 %v5160, %v5184
        %v5249 = vsub.f32 %v5161, %v5185
        %v5250 = vsub.f32 %v5162, %v5186
        %v5251 = vsub.f32 %v5163, %v5187
        %v5252 = vsub.f32 %v5164, %v5188
        %v5253 = vsub.f32 %v5165, %v5189
        %v5254 = vsub.f32 %v5166, %v5190
        %v5255 = vadd.f32 %v5239, 1e-05
        %v5256 = vadd.f32 %v5240, 1e-05
        %v5257 = vadd.f32 %v5241, 1e-05
        %v5258 = vadd.f32 %v5242, 1e-05
        %v5259 = vadd.f32 %v5243, 1e-05
        %v5260 = vadd.f32 %v5244, 1e-05
        %v5261 = vadd.f32 %v5245, 1e-05
        %v5262 = vadd.f32 %v5246, 1e-05
        %v5263 = vrsqrt.pop %v5255
        %v5264 = vrsqrt.pop %v5256
        %v5265 = vrsqrt.pop %v5257
        %v5266 = vrsqrt.pop %v5258
        %v5267 = vrsqrt.pop %v5259
        %v5268 = vrsqrt.pop %v5260
        %v5269 = vrsqrt.pop %v5261
        %v5270 = vrsqrt.pop %v5262
        %v5271 = vmul.f32 %v5247, %v5263
        %v5272 = vmul.f32 %v5248, %v5264
        %v5273 = vmul.f32 %v5249, %v5265
        %v5274 = vmul.f32 %v5250, %v5266
        %v5275 = vmul.f32 %v5251, %v5267
        %v5276 = vmul.f32 %v5252, %v5268
        %v5277 = vmul.f32 %v5253, %v5269
        %v5278 = vmul.f32 %v5254, %v5270
        %v5279 = vmul.f32 %v5271, %v5131
        %v5280 = vmul.f32 %v5272, %v5131
        %v5281 = vmul.f32 %v5273, %v5131
        %v5282 = vmul.f32 %v5274, %v5131
        %v5283 = vmul.f32 %v5275, %v5131
        %v5284 = vmul.f32 %v5276, %v5131
        %v5285 = vmul.f32 %v5277, %v5131
        %v5286 = vmul.f32 %v5278, %v5131
        %v5287 = vadd.f32 %v5279, %v5145
        %v5288 = vadd.f32 %v5280, %v5145
        %v5289 = vadd.f32 %v5281, %v5145
        %v5290 = vadd.f32 %v5282, %v5145
        %v5291 = vadd.f32 %v5283, %v5145
        %v5292 = vadd.f32 %v5284, %v5145
        %v5293 = vadd.f32 %v5285, %v5145
        %v5294 = vadd.f32 %v5286, %v5145
        %v5295 = vpack.c.bf16 %v5288, %v5287
        %v5296 = vpack.c.bf16 %v5290, %v5289
        %v5297 = vpack.c.bf16 %v5292, %v5291
        %v5298 = vpack.c.bf16 %v5294, %v5293
        %v5299 = vld [vmem:[#allocation2 + $0x80] sm:$0xff]
        %v5300 = vld [vmem:[#allocation2 + $0x88] sm:$0xff]
        %v5301 = vld [vmem:[#allocation2 + $0x90] sm:$0xff]
        %v5302 = vld [vmem:[#allocation2 + $0x98] sm:$0xff]
        %v5303 = vld [vmem:[#allocation2 + $0xa0] sm:$0xff]
        %v5304 = vld [vmem:[#allocation2 + $0xa8] sm:$0xff]
        %v5305 = vld [vmem:[#allocation2 + $0xb0] sm:$0xff]
        %v5306 = vld [vmem:[#allocation2 + $0xb8] sm:$0xff]
        %5307 = vadd.xlane.f32.xlu0 %v5299
        %v5308 = vpop.xlane.xlu0 %5307
        %5309 = vadd.xlane.f32.xlu0 %v5300
        %v5310 = vpop.xlane.xlu0 %5309
        %5311 = vadd.xlane.f32.xlu0 %v5301
        %v5312 = vpop.xlane.xlu0 %5311
        %5313 = vadd.xlane.f32.xlu0 %v5302
        %v5314 = vpop.xlane.xlu0 %5313
        %5315 = vadd.xlane.f32.xlu0 %v5303
        %v5316 = vpop.xlane.xlu0 %5315
        %5317 = vadd.xlane.f32.xlu0 %v5304
        %v5318 = vpop.xlane.xlu0 %5317
        %5319 = vadd.xlane.f32.xlu0 %v5305
        %v5320 = vpop.xlane.xlu0 %5319
        %5321 = vadd.xlane.f32.xlu0 %v5306
        %v5322 = vpop.xlane.xlu0 %5321
        %v5323 = vmul.f32 %v5308, %v977
        %v5324 = vmul.f32 %v5310, %v977
        %v5325 = vmul.f32 %v5312, %v977
        %v5326 = vmul.f32 %v5314, %v977
        %v5327 = vmul.f32 %v5316, %v977
        %v5328 = vmul.f32 %v5318, %v977
        %v5329 = vmul.f32 %v5320, %v977
        %v5330 = vmul.f32 %v5322, %v977
        %v5331 = vmul.f32 %v5299, %v5299
        %v5332 = vmul.f32 %v5300, %v5300
        %v5333 = vmul.f32 %v5301, %v5301
        %v5334 = vmul.f32 %v5302, %v5302
        %v5335 = vmul.f32 %v5303, %v5303
        %v5336 = vmul.f32 %v5304, %v5304
        %v5337 = vmul.f32 %v5305, %v5305
        %v5338 = vmul.f32 %v5306, %v5306
        %5339 = vadd.xlane.f32.xlu0 %v5331
        %v5340 = vpop.xlane.xlu0 %5339
        %5341 = vadd.xlane.f32.xlu0 %v5332
        %v5342 = vpop.xlane.xlu0 %5341
        %5343 = vadd.xlane.f32.xlu0 %v5333
        %v5344 = vpop.xlane.xlu0 %5343
        %5345 = vadd.xlane.f32.xlu0 %v5334
        %v5346 = vpop.xlane.xlu0 %5345
        %5347 = vadd.xlane.f32.xlu0 %v5335
        %v5348 = vpop.xlane.xlu0 %5347
        %5349 = vadd.xlane.f32.xlu0 %v5336
        %v5350 = vpop.xlane.xlu0 %5349
        %5351 = vadd.xlane.f32.xlu0 %v5337
        %v5352 = vpop.xlane.xlu0 %5351
        %5353 = vadd.xlane.f32.xlu0 %v5338
        %v5354 = vpop.xlane.xlu0 %5353
        %v5355 = vmul.f32 %v5340, %v977
        %v5356 = vmul.f32 %v5342, %v977
        %v5357 = vmul.f32 %v5344, %v977
        %v5358 = vmul.f32 %v5346, %v977
        %v5359 = vmul.f32 %v5348, %v977
        %v5360 = vmul.f32 %v5350, %v977
        %v5361 = vmul.f32 %v5352, %v977
        %v5362 = vmul.f32 %v5354, %v977
        %v5363 = vmul.f32 %v5323, %v5323
        %v5364 = vmul.f32 %v5324, %v5324
        %v5365 = vmul.f32 %v5325, %v5325
        %v5366 = vmul.f32 %v5326, %v5326
        %v5367 = vmul.f32 %v5327, %v5327
        %v5368 = vmul.f32 %v5328, %v5328
        %v5369 = vmul.f32 %v5329, %v5329
        %v5370 = vmul.f32 %v5330, %v5330
        %v5371 = vsub.f32 %v5355, %v5363
        %v5372 = vsub.f32 %v5356, %v5364
        %v5373 = vsub.f32 %v5357, %v5365
        %v5374 = vsub.f32 %v5358, %v5366
        %v5375 = vsub.f32 %v5359, %v5367
        %v5376 = vsub.f32 %v5360, %v5368
        %v5377 = vsub.f32 %v5361, %v5369
        %v5378 = vsub.f32 %v5362, %v5370
        %v5379 = vmax.f32 %v5371, 0.0
        %v5380 = vmax.f32 %v5372, 0.0
        %v5381 = vmax.f32 %v5373, 0.0
        %v5382 = vmax.f32 %v5374, 0.0
        %v5383 = vmax.f32 %v5375, 0.0
        %v5384 = vmax.f32 %v5376, 0.0
        %v5385 = vmax.f32 %v5377, 0.0
        %v5386 = vmax.f32 %v5378, 0.0
        %v5387 = vsub.f32 %v5299, %v5323
        %v5388 = vsub.f32 %v5300, %v5324
        %v5389 = vsub.f32 %v5301, %v5325
        %v5390 = vsub.f32 %v5302, %v5326
        %v5391 = vsub.f32 %v5303, %v5327
        %v5392 = vsub.f32 %v5304, %v5328
        %v5393 = vsub.f32 %v5305, %v5329
        %v5394 = vsub.f32 %v5306, %v5330
        %v5395 = vadd.f32 %v5379, 1e-05
        %v5396 = vadd.f32 %v5380, 1e-05
        %v5397 = vadd.f32 %v5381, 1e-05
        %v5398 = vadd.f32 %v5382, 1e-05
        %v5399 = vadd.f32 %v5383, 1e-05
        %v5400 = vadd.f32 %v5384, 1e-05
        %v5401 = vadd.f32 %v5385, 1e-05
        %v5402 = vadd.f32 %v5386, 1e-05
        %v5403 = vrsqrt.pop %v5395
        %v5404 = vrsqrt.pop %v5396
        %v5405 = vrsqrt.pop %v5397
        %v5406 = vrsqrt.pop %v5398
        %v5407 = vrsqrt.pop %v5399
        %v5408 = vrsqrt.pop %v5400
        %v5409 = vrsqrt.pop %v5401
        %v5410 = vrsqrt.pop %v5402
        %v5411 = vmul.f32 %v5387, %v5403
        %v5412 = vmul.f32 %v5388, %v5404
        %v5413 = vmul.f32 %v5389, %v5405
        %v5414 = vmul.f32 %v5390, %v5406
        %v5415 = vmul.f32 %v5391, %v5407
        %v5416 = vmul.f32 %v5392, %v5408
        %v5417 = vmul.f32 %v5393, %v5409
        %v5418 = vmul.f32 %v5394, %v5410
        %v5419 = vmul.f32 %v5411, %v5131
        %v5420 = vmul.f32 %v5412, %v5131
        %v5421 = vmul.f32 %v5413, %v5131
        %v5422 = vmul.f32 %v5414, %v5131
        %v5423 = vmul.f32 %v5415, %v5131
        %v5424 = vmul.f32 %v5416, %v5131
        %v5425 = vmul.f32 %v5417, %v5131
        %v5426 = vmul.f32 %v5418, %v5131
        %v5427 = vadd.f32 %v5419, %v5145
        %v5428 = vadd.f32 %v5420, %v5145
        %v5429 = vadd.f32 %v5421, %v5145
        %v5430 = vadd.f32 %v5422, %v5145
        %v5431 = vadd.f32 %v5423, %v5145
        %v5432 = vadd.f32 %v5424, %v5145
        %v5433 = vadd.f32 %v5425, %v5145
        %v5434 = vadd.f32 %v5426, %v5145
        %v5435 = vpack.c.bf16 %v5428, %v5427
        %v5436 = vpack.c.bf16 %v5430, %v5429
        %v5437 = vpack.c.bf16 %v5432, %v5431
        %v5438 = vpack.c.bf16 %v5434, %v5433
        %v5439 = vld [vmem:[#allocation2 + $0xc0] sm:$0xff]
        %v5440 = vld [vmem:[#allocation2 + $0xc8] sm:$0xff]
        %v5441 = vld [vmem:[#allocation2 + $0xd0] sm:$0xff]
        %v5442 = vld [vmem:[#allocation2 + $0xd8] sm:$0xff]
        %v5443 = vld [vmem:[#allocation2 + $0xe0] sm:$0xff]
        %v5444 = vld [vmem:[#allocation2 + $0xe8] sm:$0xff]
        %v5445 = vld [vmem:[#allocation2 + $0xf0] sm:$0xff]
        %v5446 = vld [vmem:[#allocation2 + $0xf8] sm:$0xff]
        %5447 = vadd.xlane.f32.xlu0 %v5439
        %v5448 = vpop.xlane.xlu0 %5447
        %5449 = vadd.xlane.f32.xlu0 %v5440
        %v5450 = vpop.xlane.xlu0 %5449
        %5451 = vadd.xlane.f32.xlu0 %v5441
        %v5452 = vpop.xlane.xlu0 %5451
        %5453 = vadd.xlane.f32.xlu0 %v5442
        %v5454 = vpop.xlane.xlu0 %5453
        %5455 = vadd.xlane.f32.xlu0 %v5443
        %v5456 = vpop.xlane.xlu0 %5455
        %5457 = vadd.xlane.f32.xlu0 %v5444
        %v5458 = vpop.xlane.xlu0 %5457
        %5459 = vadd.xlane.f32.xlu0 %v5445
        %v5460 = vpop.xlane.xlu0 %5459
        %5461 = vadd.xlane.f32.xlu0 %v5446
        %v5462 = vpop.xlane.xlu0 %5461
        %v5463 = vmul.f32 %v5448, %v977
        %v5464 = vmul.f32 %v5450, %v977
        %v5465 = vmul.f32 %v5452, %v977
        %v5466 = vmul.f32 %v5454, %v977
        %v5467 = vmul.f32 %v5456, %v977
        %v5468 = vmul.f32 %v5458, %v977
        %v5469 = vmul.f32 %v5460, %v977
        %v5470 = vmul.f32 %v5462, %v977
        %v5471 = vmul.f32 %v5439, %v5439
        %v5472 = vmul.f32 %v5440, %v5440
        %v5473 = vmul.f32 %v5441, %v5441
        %v5474 = vmul.f32 %v5442, %v5442
        %v5475 = vmul.f32 %v5443, %v5443
        %v5476 = vmul.f32 %v5444, %v5444
        %v5477 = vmul.f32 %v5445, %v5445
        %v5478 = vmul.f32 %v5446, %v5446
        %5479 = vadd.xlane.f32.xlu0 %v5471
        %v5480 = vpop.xlane.xlu0 %5479
        %5481 = vadd.xlane.f32.xlu0 %v5472
        %v5482 = vpop.xlane.xlu0 %5481
        %5483 = vadd.xlane.f32.xlu0 %v5473
        %v5484 = vpop.xlane.xlu0 %5483
        %5485 = vadd.xlane.f32.xlu0 %v5474
        %v5486 = vpop.xlane.xlu0 %5485
        %5487 = vadd.xlane.f32.xlu0 %v5475
        %v5488 = vpop.xlane.xlu0 %5487
        %5489 = vadd.xlane.f32.xlu0 %v5476
        %v5490 = vpop.xlane.xlu0 %5489
        %5491 = vadd.xlane.f32.xlu0 %v5477
        %v5492 = vpop.xlane.xlu0 %5491
        %5493 = vadd.xlane.f32.xlu0 %v5478
        %v5494 = vpop.xlane.xlu0 %5493
        %v5495 = vmul.f32 %v5480, %v977
        %v5496 = vmul.f32 %v5482, %v977
        %v5497 = vmul.f32 %v5484, %v977
        %v5498 = vmul.f32 %v5486, %v977
        %v5499 = vmul.f32 %v5488, %v977
        %v5500 = vmul.f32 %v5490, %v977
        %v5501 = vmul.f32 %v5492, %v977
        %v5502 = vmul.f32 %v5494, %v977
        %v5503 = vmul.f32 %v5463, %v5463
        %v5504 = vmul.f32 %v5464, %v5464
        %v5505 = vmul.f32 %v5465, %v5465
        %v5506 = vmul.f32 %v5466, %v5466
        %v5507 = vmul.f32 %v5467, %v5467
        %v5508 = vmul.f32 %v5468, %v5468
        %v5509 = vmul.f32 %v5469, %v5469
        %v5510 = vmul.f32 %v5470, %v5470
        %v5511 = vsub.f32 %v5495, %v5503
        %v5512 = vsub.f32 %v5496, %v5504
        %v5513 = vsub.f32 %v5497, %v5505
        %v5514 = vsub.f32 %v5498, %v5506
        %v5515 = vsub.f32 %v5499, %v5507
        %v5516 = vsub.f32 %v5500, %v5508
        %v5517 = vsub.f32 %v5501, %v5509
        %v5518 = vsub.f32 %v5502, %v5510
        %v5519 = vmax.f32 %v5511, 0.0
        %v5520 = vmax.f32 %v5512, 0.0
        %v5521 = vmax.f32 %v5513, 0.0
        %v5522 = vmax.f32 %v5514, 0.0
        %v5523 = vmax.f32 %v5515, 0.0
        %v5524 = vmax.f32 %v5516, 0.0
        %v5525 = vmax.f32 %v5517, 0.0
        %v5526 = vmax.f32 %v5518, 0.0
        %v5527 = vsub.f32 %v5439, %v5463
        %v5528 = vsub.f32 %v5440, %v5464
        %v5529 = vsub.f32 %v5441, %v5465
        %v5530 = vsub.f32 %v5442, %v5466
        %v5531 = vsub.f32 %v5443, %v5467
        %v5532 = vsub.f32 %v5444, %v5468
        %v5533 = vsub.f32 %v5445, %v5469
        %v5534 = vsub.f32 %v5446, %v5470
        %v5535 = vadd.f32 %v5519, 1e-05
        %v5536 = vadd.f32 %v5520, 1e-05
        %v5537 = vadd.f32 %v5521, 1e-05
        %v5538 = vadd.f32 %v5522, 1e-05
        %v5539 = vadd.f32 %v5523, 1e-05
        %v5540 = vadd.f32 %v5524, 1e-05
        %v5541 = vadd.f32 %v5525, 1e-05
        %v5542 = vadd.f32 %v5526, 1e-05
        %v5543 = vrsqrt.pop %v5535
        %v5544 = vrsqrt.pop %v5536
        %v5545 = vrsqrt.pop %v5537
        %v5546 = vrsqrt.pop %v5538
        %v5547 = vrsqrt.pop %v5539
        %v5548 = vrsqrt.pop %v5540
        %v5549 = vrsqrt.pop %v5541
        %v5550 = vrsqrt.pop %v5542
        %v5551 = vmul.f32 %v5527, %v5543
        %v5552 = vmul.f32 %v5528, %v5544
        %v5553 = vmul.f32 %v5529, %v5545
        %v5554 = vmul.f32 %v5530, %v5546
        %v5555 = vmul.f32 %v5531, %v5547
        %v5556 = vmul.f32 %v5532, %v5548
        %v5557 = vmul.f32 %v5533, %v5549
        %v5558 = vmul.f32 %v5534, %v5550
        %v5559 = vmul.f32 %v5551, %v5131
        %v5560 = vmul.f32 %v5552, %v5131
        %v5561 = vmul.f32 %v5553, %v5131
        %v5562 = vmul.f32 %v5554, %v5131
        %v5563 = vmul.f32 %v5555, %v5131
        %v5564 = vmul.f32 %v5556, %v5131
        %v5565 = vmul.f32 %v5557, %v5131
        %v5566 = vmul.f32 %v5558, %v5131
        %v5567 = vadd.f32 %v5559, %v5145
        %v5568 = vadd.f32 %v5560, %v5145
        %v5569 = vadd.f32 %v5561, %v5145
        %v5570 = vadd.f32 %v5562, %v5145
        %v5571 = vadd.f32 %v5563, %v5145
        %v5572 = vadd.f32 %v5564, %v5145
        %v5573 = vadd.f32 %v5565, %v5145
        %v5574 = vadd.f32 %v5566, %v5145
        %v5575 = vpack.c.bf16 %v5568, %v5567
        %v5576 = vpack.c.bf16 %v5570, %v5569
        %v5577 = vpack.c.bf16 %v5572, %v5571
        %v5578 = vpack.c.bf16 %v5574, %v5573
        %s5579 = scalar_lea.vmem %s5, 64
        %v5580 = vld [vmem:[%s5579] sm:$0xf]
        %v5581 = vld [vmem:[%s5579 + $0x4] sm:$0xf]
        %v5582 = vld [vmem:[%s5579 + $0x8] sm:$0xf]
        %v5583 = vld [vmem:[%s5579 + $0xc] sm:$0xf]
        %v5584 = vld [vmem:[%s5579 + $0x10] sm:$0xf]
        %v5585 = vld [vmem:[%s5579 + $0x14] sm:$0xf]
        %v5586 = vld [vmem:[%s5579 + $0x18] sm:$0xf]
        %v5587 = vld [vmem:[%s5579 + $0x1c] sm:$0xf]
        %v5588 = vld [vmem:[%s5579 + $0x20] sm:$0xf]
        %v5589 = vld [vmem:[%s5579 + $0x24] sm:$0xf]
        %v5590 = vld [vmem:[%s5579 + $0x28] sm:$0xf]
        %v5591 = vld [vmem:[%s5579 + $0x2c] sm:$0xf]
        %v5592 = vld [vmem:[%s5579 + $0x30] sm:$0xf]
        %v5593 = vld [vmem:[%s5579 + $0x34] sm:$0xf]
        %v5594 = vld [vmem:[%s5579 + $0x38] sm:$0xf]
        %v5595 = vld [vmem:[%s5579 + $0x3c] sm:$0xf]
        %s5596 = scalar_lea.vmem %s6, 128
        %v5597 = vld [vmem:[%s5596] sm:$0xff]
        %v5598 = vld [vmem:[%s5596 + $0x8] sm:$0xff]
        %v5599 = vld [vmem:[%s5596 + $0x10] sm:$0xff]
        %v5600 = vld [vmem:[%s5596 + $0x18] sm:$0xff]
        %v5601 = vld [vmem:[%s5596 + $0x20] sm:$0xff]
        %v5602 = vld [vmem:[%s5596 + $0x28] sm:$0xff]
        %v5603 = vld [vmem:[%s5596 + $0x30] sm:$0xff]
        %v5604 = vld [vmem:[%s5596 + $0x38] sm:$0xff]
        %v5605 = vld [vmem:[%s5596 + $0x40] sm:$0xff]
        %v5606 = vld [vmem:[%s5596 + $0x48] sm:$0xff]
        %v5607 = vld [vmem:[%s5596 + $0x50] sm:$0xff]
        %v5608 = vld [vmem:[%s5596 + $0x58] sm:$0xff]
        %v5609 = vld [vmem:[%s5596 + $0x60] sm:$0xff]
        %v5610 = vld [vmem:[%s5596 + $0x68] sm:$0xff]
        %v5611 = vld [vmem:[%s5596 + $0x70] sm:$0xff]
        %v5612 = vld [vmem:[%s5596 + $0x78] sm:$0xff]
        %5614 = vset.pattern.permute.xlu0 0
        %5615 = vperm.xlu0 %5614, %v5597
        %v5616 = vpop.permute.xlu0 %5615
        %5619 = vset.pattern.permute.xlu0 0
        %5620 = vperm.xlu0 %5619, %v5598
        %v5621 = vpop.permute.xlu0 %5620
        %5624 = vset.pattern.permute.xlu0 0
        %5625 = vperm.xlu0 %5624, %v5599
        %v5626 = vpop.permute.xlu0 %5625
        %5629 = vset.pattern.permute.xlu0 0
        %5630 = vperm.xlu0 %5629, %v5600
        %v5631 = vpop.permute.xlu0 %5630
        %5634 = vset.pattern.permute.xlu0 0
        %5635 = vperm.xlu0 %5634, %v5601
        %v5636 = vpop.permute.xlu0 %5635
        %5639 = vset.pattern.permute.xlu0 0
        %5640 = vperm.xlu0 %5639, %v5602
        %v5641 = vpop.permute.xlu0 %5640
        %5644 = vset.pattern.permute.xlu0 0
        %5645 = vperm.xlu0 %5644, %v5603
        %v5646 = vpop.permute.xlu0 %5645
        %5649 = vset.pattern.permute.xlu0 0
        %5650 = vperm.xlu0 %5649, %v5604
        %v5651 = vpop.permute.xlu0 %5650
        %5654 = vset.pattern.permute.xlu0 0
        %5655 = vperm.xlu0 %5654, %v5605
        %v5656 = vpop.permute.xlu0 %5655
        %5659 = vset.pattern.permute.xlu0 0
        %5660 = vperm.xlu0 %5659, %v5606
        %v5661 = vpop.permute.xlu0 %5660
        %5664 = vset.pattern.permute.xlu0 0
        %5665 = vperm.xlu0 %5664, %v5607
        %v5666 = vpop.permute.xlu0 %5665
        %5669 = vset.pattern.permute.xlu0 0
        %5670 = vperm.xlu0 %5669, %v5608
        %v5671 = vpop.permute.xlu0 %5670
        %5674 = vset.pattern.permute.xlu0 0
        %5675 = vperm.xlu0 %5674, %v5609
        %v5676 = vpop.permute.xlu0 %5675
        %5679 = vset.pattern.permute.xlu0 0
        %5680 = vperm.xlu0 %5679, %v5610
        %v5681 = vpop.permute.xlu0 %5680
        %5684 = vset.pattern.permute.xlu0 0
        %5685 = vperm.xlu0 %5684, %v5611
        %v5686 = vpop.permute.xlu0 %5685
        %5689 = vset.pattern.permute.xlu0 0
        %5690 = vperm.xlu0 %5689, %v5612
        %v5691 = vpop.permute.xlu0 %5690
        %v5709 = vunpack.c.l.b16 %v5580
        %v5710 = vunpack.c.l.b16 %v5581
        %v5711 = vunpack.c.l.b16 %v5582
        %v5712 = vunpack.c.l.b16 %v5583
        %v5713 = vunpack.c.l.b16 %v5584
        %v5714 = vunpack.c.l.b16 %v5585
        %v5715 = vunpack.c.l.b16 %v5586
        %v5716 = vunpack.c.l.b16 %v5587
        %v5717 = vunpack.c.l.b16 %v5588
        %v5718 = vunpack.c.l.b16 %v5589
        %v5719 = vunpack.c.l.b16 %v5590
        %v5720 = vunpack.c.l.b16 %v5591
        %v5721 = vunpack.c.l.b16 %v5592
        %v5722 = vunpack.c.l.b16 %v5593
        %v5723 = vunpack.c.l.b16 %v5594
        %v5724 = vunpack.c.l.b16 %v5595
        %v5725 = vpack.c.b16 %v5710, %v5709
        %v5726 = vpack.c.b16 %v5712, %v5711
        %v5727 = vpack.c.b16 %v5714, %v5713
        %v5728 = vpack.c.b16 %v5716, %v5715
        %v5729 = vpack.c.b16 %v5718, %v5717
        %v5730 = vpack.c.b16 %v5720, %v5719
        %v5731 = vpack.c.b16 %v5722, %v5721
        %v5732 = vpack.c.b16 %v5724, %v5723
        %v5734 = vsel %vm1678, %v5725, 0
        %v5737 = vsel %vm1678, %v5726, 0
        %v5740 = vsel %vm1678, %v5727, 0
        %v5743 = vsel %vm1678, %v5728, 0
        %v5746 = vsel %vm1678, %v5729, 0
        %v5749 = vsel %vm1678, %v5730, 0
        %v5752 = vsel %vm1678, %v5731, 0
        %v5755 = vsel %vm1678, %v5732, 0
        %5757 = vmatprep.subr.bf16.mxu0 %v5295
        %5758 = vmatpush1.bf16.msra.mxu0 %v5155
        %5759 = vmatprep.subr.bf16.mxu0 %v5296
        %5760 = vmatpush1.bf16.msra.mxu0 %v5156
        %5761 = vmatprep.subr.bf16.mxu0 %v5297
        %5762 = vmatpush1.bf16.msra.mxu0 %v5157
        %5763 = vmatprep.subr.bf16.mxu0 %v5298
        %5764 = vmatpush1.bf16.msra.mxu0 %v5158
        %5765 = vmatprep.subr.bf16.mxu0 0
        %5766 = vmatpush1.bf16.msra.mxu0 0
        %5767 = vmatprep.subr.bf16.mxu0 0
        %5768 = vmatpush1.bf16.msra.mxu0 0
        %5769 = vmatprep.subr.bf16.mxu0 0
        %5770 = vmatpush1.bf16.msra.mxu0 0
        %5771 = vmatprep.subr.bf16.mxu0 0
        %5772 = vmatpush1.bf16.msra.mxu0 0
        %5773 = vmatprep.subr.bf16.mxu0 0
        %5774 = vmatpush1.bf16.msra.mxu0 0
        %5775 = vmatprep.subr.bf16.mxu0 0
        %5776 = vmatpush1.bf16.msra.mxu0 0
        %5777 = vmatprep.subr.bf16.mxu0 0
        %5778 = vmatpush1.bf16.msra.mxu0 0
        %5779 = vmatprep.subr.bf16.mxu0 0
        %5780 = vmatpush1.bf16.msra.mxu0 0
        %5781 = vmatprep.subr.bf16.mxu0 0
        %5782 = vmatpush1.bf16.msra.mxu0 0
        %5783 = vmatprep.subr.bf16.mxu0 0
        %5784 = vmatpush1.bf16.msra.mxu0 0
        %5785 = vmatprep.subr.bf16.mxu0 0
        %5786 = vmatpush1.bf16.msra.mxu0 0
        %5787 = vmatprep.subr.bf16.mxu0 0
        %5788 = vmatpush1.bf16.msra.mxu0 0
        %5789 = vmatprep.mubr.bf16.mxu0 0
        %5790 = vmatmul.mubr.bf16.gmra.mrb[0].mxu0 %v5734
        %v5791 = vpop.f32.mrb[0].mxu0
        %v5792 = vadd.f32 %v5616, %v5791
        %v5793 = vpop.f32.mrb[0].mxu0
        %v5794 = vadd.f32 %v5616, %v5793
        %v5795 = vpop.f32.mrb[0].mxu0
        %v5796 = vadd.f32 %v5621, %v5795
        %v5797 = vpop.f32.mrb[0].mxu0
        %v5798 = vadd.f32 %v5621, %v5797
        %5799 = vmatprep.mubr.bf16.mxu0 0
        %5800 = vmatmul.mubr.bf16.gmra.mrb[0].mxu0 %v5737
        %v5801 = vpop.f32.mrb[0].mxu0
        %v5802 = vadd.f32 %v5626, %v5801
        %v5803 = vpop.f32.mrb[0].mxu0
        %v5804 = vadd.f32 %v5626, %v5803
        %v5805 = vpop.f32.mrb[0].mxu0
        %v5806 = vadd.f32 %v5631, %v5805
        %v5807 = vpop.f32.mrb[0].mxu0
        %v5808 = vadd.f32 %v5631, %v5807
        %5809 = vmatprep.mubr.bf16.mxu0 0
        %5810 = vmatmul.mubr.bf16.gmra.mrb[0].mxu0 %v5740
        %v5811 = vpop.f32.mrb[0].mxu0
        %v5812 = vadd.f32 %v5636, %v5811
        %v5813 = vpop.f32.mrb[0].mxu0
        %v5814 = vadd.f32 %v5636, %v5813
        %v5815 = vpop.f32.mrb[0].mxu0
        %v5816 = vadd.f32 %v5641, %v5815
        %v5817 = vpop.f32.mrb[0].mxu0
        %v5818 = vadd.f32 %v5641, %v5817
        %5819 = vmatprep.mubr.bf16.mxu0 0
        %5820 = vmatmul.mubr.bf16.gmra.mrb[0].mxu0 %v5743
        %v5821 = vpop.f32.mrb[0].mxu0
        %v5822 = vadd.f32 %v5646, %v5821
        %v5823 = vpop.f32.mrb[0].mxu0
        %v5824 = vadd.f32 %v5646, %v5823
        %v5825 = vpop.f32.mrb[0].mxu0
        %v5826 = vadd.f32 %v5651, %v5825
        %v5827 = vpop.f32.mrb[0].mxu0
        %v5828 = vadd.f32 %v5651, %v5827
        %5829 = vmatprep.mubr.bf16.mxu0 0
        %5830 = vmatmul.mubr.bf16.gmra.mrb[0].mxu0 %v5746
        %v5831 = vpop.f32.mrb[0].mxu0
        %v5832 = vadd.f32 %v5656, %v5831
        %v5833 = vpop.f32.mrb[0].mxu0
        %v5834 = vadd.f32 %v5656, %v5833
        %v5835 = vpop.f32.mrb[0].mxu0
        %v5836 = vadd.f32 %v5661, %v5835
        %v5837 = vpop.f32.mrb[0].mxu0
        %v5838 = vadd.f32 %v5661, %v5837
        %5839 = vmatprep.mubr.bf16.mxu0 0
        %5840 = vmatmul.mubr.bf16.gmra.mrb[0].mxu0 %v5749
        %v5841 = vpop.f32.mrb[0].mxu0
        %v5842 = vadd.f32 %v5666, %v5841
        %v5843 = vpop.f32.mrb[0].mxu0
        %v5844 = vadd.f32 %v5666, %v5843
        %v5845 = vpop.f32.mrb[0].mxu0
        %v5846 = vadd.f32 %v5671, %v5845
        %v5847 = vpop.f32.mrb[0].mxu0
        %v5848 = vadd.f32 %v5671, %v5847
        %5849 = vmatprep.mubr.bf16.mxu0 0
        %5850 = vmatmul.mubr.bf16.gmra.mrb[0].mxu0 %v5752
        %v5851 = vpop.f32.mrb[0].mxu0
        %v5852 = vadd.f32 %v5676, %v5851
        %v5853 = vpop.f32.mrb[0].mxu0
        %v5854 = vadd.f32 %v5676, %v5853
        %v5855 = vpop.f32.mrb[0].mxu0
        %v5856 = vadd.f32 %v5681, %v5855
        %v5857 = vpop.f32.mrb[0].mxu0
        %v5858 = vadd.f32 %v5681, %v5857
        %5859 = vmatprep.mubr.bf16.mxu0 0
        %5860 = vmatmul.mubr.bf16.gmra.mrb[0].mxu0 %v5755
        %v5861 = vpop.f32.mrb[0].mxu0
        %v5862 = vadd.f32 %v5686, %v5861
        %v5863 = vpop.f32.mrb[0].mxu0
        %v5864 = vadd.f32 %v5686, %v5863
        %v5865 = vpop.f32.mrb[0].mxu0
        %v5866 = vadd.f32 %v5691, %v5865
        %v5867 = vpop.f32.mrb[0].mxu0
        %v5868 = vadd.f32 %v5691, %v5867
        %5869 = vdwg.mxu0
        %5870 = vmatprep.subr.bf16.mxu0 %v5575
        %5871 = vmatpush1.bf16.msra.mxu0 %v5435
        %5872 = vmatprep.subr.bf16.mxu0 %v5576
        %5873 = vmatpush1.bf16.msra.mxu0 %v5436
        %5874 = vmatprep.subr.bf16.mxu0 %v5577
        %5875 = vmatpush1.bf16.msra.mxu0 %v5437
        %5876 = vmatprep.subr.bf16.mxu0 %v5578
        %5877 = vmatpush1.bf16.msra.mxu0 %v5438
        %5878 = vmatprep.subr.bf16.mxu0 0
        %5879 = vmatpush1.bf16.msra.mxu0 0
        %5880 = vmatprep.subr.bf16.mxu0 0
        %5881 = vmatpush1.bf16.msra.mxu0 0
        %5882 = vmatprep.subr.bf16.mxu0 0
        %5883 = vmatpush1.bf16.msra.mxu0 0
        %5884 = vmatprep.subr.bf16.mxu0 0
        %5885 = vmatpush1.bf16.msra.mxu0 0
        %5886 = vmatprep.subr.bf16.mxu0 0
        %5887 = vmatpush1.bf16.msra.mxu0 0
        %5888 = vmatprep.subr.bf16.mxu0 0
        %5889 = vmatpush1.bf16.msra.mxu0 0
        %5890 = vmatprep.subr.bf16.mxu0 0
        %5891 = vmatpush1.bf16.msra.mxu0 0
        %5892 = vmatprep.subr.bf16.mxu0 0
        %5893 = vmatpush1.bf16.msra.mxu0 0
        %5894 = vmatprep.subr.bf16.mxu0 0
        %5895 = vmatpush1.bf16.msra.mxu0 0
        %5896 = vmatprep.subr.bf16.mxu0 0
        %5897 = vmatpush1.bf16.msra.mxu0 0
        %5898 = vmatprep.subr.bf16.mxu0 0
        %5899 = vmatpush1.bf16.msra.mxu0 0
        %5900 = vmatprep.subr.bf16.mxu0 0
        %5901 = vmatpush1.bf16.msra.mxu0 0
        %5902 = vmatprep.mubr.bf16.mxu0 0
        %5903 = vmatmul.mubr.bf16.gmra.mrb[0].mxu0 %v5734
        %v5904 = vpop.f32.mrb[0].mxu0
        %v5905 = vadd.f32 %v5616, %v5904
        %v5906 = vpop.f32.mrb[0].mxu0
        %v5907 = vadd.f32 %v5616, %v5906
        %v5908 = vpop.f32.mrb[0].mxu0
        %v5909 = vadd.f32 %v5621, %v5908
        %v5910 = vpop.f32.mrb[0].mxu0
        %v5911 = vadd.f32 %v5621, %v5910
        %5912 = vmatprep.mubr.bf16.mxu0 0
        %5913 = vmatmul.mubr.bf16.gmra.mrb[0].mxu0 %v5737
        %v5914 = vpop.f32.mrb[0].mxu0
        %v5915 = vadd.f32 %v5626, %v5914
        %v5916 = vpop.f32.mrb[0].mxu0
        %v5917 = vadd.f32 %v5626, %v5916
        %v5918 = vpop.f32.mrb[0].mxu0
        %v5919 = vadd.f32 %v5631, %v5918
        %v5920 = vpop.f32.mrb[0].mxu0
        %v5921 = vadd.f32 %v5631, %v5920
        %5922 = vmatprep.mubr.bf16.mxu0 0
        %5923 = vmatmul.mubr.bf16.gmra.mrb[0].mxu0 %v5740
        %v5924 = vpop.f32.mrb[0].mxu0
        %v5925 = vadd.f32 %v5636, %v5924
        %v5926 = vpop.f32.mrb[0].mxu0
        %v5927 = vadd.f32 %v5636, %v5926
        %v5928 = vpop.f32.mrb[0].mxu0
        %v5929 = vadd.f32 %v5641, %v5928
        %v5930 = vpop.f32.mrb[0].mxu0
        %v5931 = vadd.f32 %v5641, %v5930
        %5932 = vmatprep.mubr.bf16.mxu0 0
        %5933 = vmatmul.mubr.bf16.gmra.mrb[0].mxu0 %v5743
        %v5934 = vpop.f32.mrb[0].mxu0
        %v5935 = vadd.f32 %v5646, %v5934
        %v5936 = vpop.f32.mrb[0].mxu0
        %v5937 = vadd.f32 %v5646, %v5936
        %v5938 = vpop.f32.mrb[0].mxu0
        %v5939 = vadd.f32 %v5651, %v5938
        %v5940 = vpop.f32.mrb[0].mxu0
        %v5941 = vadd.f32 %v5651, %v5940
        %5942 = vmatprep.mubr.bf16.mxu0 0
        %5943 = vmatmul.mubr.bf16.gmra.mrb[0].mxu0 %v5746
        %v5944 = vpop.f32.mrb[0].mxu0
        %v5945 = vadd.f32 %v5656, %v5944
        %v5946 = vpop.f32.mrb[0].mxu0
        %v5947 = vadd.f32 %v5656, %v5946
        %v5948 = vpop.f32.mrb[0].mxu0
        %v5949 = vadd.f32 %v5661, %v5948
        %v5950 = vpop.f32.mrb[0].mxu0
        %v5951 = vadd.f32 %v5661, %v5950
        %5952 = vmatprep.mubr.bf16.mxu0 0
        %5953 = vmatmul.mubr.bf16.gmra.mrb[0].mxu0 %v5749
        %v5954 = vpop.f32.mrb[0].mxu0
        %v5955 = vadd.f32 %v5666, %v5954
        %v5956 = vpop.f32.mrb[0].mxu0
        %v5957 = vadd.f32 %v5666, %v5956
        %v5958 = vpop.f32.mrb[0].mxu0
        %v5959 = vadd.f32 %v5671, %v5958
        %v5960 = vpop.f32.mrb[0].mxu0
        %v5961 = vadd.f32 %v5671, %v5960
        %5962 = vmatprep.mubr.bf16.mxu0 0
        %5963 = vmatmul.mubr.bf16.gmra.mrb[0].mxu0 %v5752
        %v5964 = vpop.f32.mrb[0].mxu0
        %v5965 = vadd.f32 %v5676, %v5964
        %v5966 = vpop.f32.mrb[0].mxu0
        %v5967 = vadd.f32 %v5676, %v5966
        %v5968 = vpop.f32.mrb[0].mxu0
        %v5969 = vadd.f32 %v5681, %v5968
        %v5970 = vpop.f32.mrb[0].mxu0
        %v5971 = vadd.f32 %v5681, %v5970
        %5972 = vmatprep.mubr.bf16.mxu0 0
        %5973 = vmatmul.mubr.bf16.gmra.mrb[0].mxu0 %v5755
        %v5974 = vpop.f32.mrb[0].mxu0
        %v5975 = vadd.f32 %v5686, %v5974
        %v5976 = vpop.f32.mrb[0].mxu0
        %v5977 = vadd.f32 %v5686, %v5976
        %v5978 = vpop.f32.mrb[0].mxu0
        %v5979 = vadd.f32 %v5691, %v5978
        %v5980 = vpop.f32.mrb[0].mxu0
        %v5981 = vadd.f32 %v5691, %v5980
        %5982 = vdwg.mxu0
        %v5983 = vmul.f32 %v5792, 0.5
        %v5984 = vmul.f32 %v5794, 0.5
        %v5985 = vmul.f32 %v5905, 0.5
        %v5986 = vmul.f32 %v5907, 0.5
        %v5987 = vmul.f32 %v5796, 0.5
        %v5988 = vmul.f32 %v5798, 0.5
        %v5989 = vmul.f32 %v5909, 0.5
        %v5990 = vmul.f32 %v5911, 0.5
        %v5991 = vmul.f32 %v5802, 0.5
        %v5992 = vmul.f32 %v5804, 0.5
        %v5993 = vmul.f32 %v5915, 0.5
        %v5994 = vmul.f32 %v5917, 0.5
        %v5995 = vmul.f32 %v5806, 0.5
        %v5996 = vmul.f32 %v5808, 0.5
        %v5997 = vmul.f32 %v5919, 0.5
        %v5998 = vmul.f32 %v5921, 0.5
        %v5999 = vmul.f32 %v5812, 0.5
        %v6000 = vmul.f32 %v5814, 0.5
        %v6001 = vmul.f32 %v5925, 0.5
        %v6002 = vmul.f32 %v5927, 0.5
        %v6003 = vmul.f32 %v5816, 0.5
        %v6004 = vmul.f32 %v5818, 0.5
        %v6005 = vmul.f32 %v5929, 0.5
        %v6006 = vmul.f32 %v5931, 0.5
        %v6007 = vmul.f32 %v5822, 0.5
        %v6008 = vmul.f32 %v5824, 0.5
        %v6009 = vmul.f32 %v5935, 0.5
        %v6010 = vmul.f32 %v5937, 0.5
        %v6011 = vmul.f32 %v5826, 0.5
        %v6012 = vmul.f32 %v5828, 0.5
        %v6013 = vmul.f32 %v5939, 0.5
        %v6014 = vmul.f32 %v5941, 0.5
        %v6015 = vmul.f32 %v5832, 0.5
        %v6016 = vmul.f32 %v5834, 0.5
        %v6017 = vmul.f32 %v5945, 0.5
        %v6018 = vmul.f32 %v5947, 0.5
        %v6019 = vmul.f32 %v5836, 0.5
        %v6020 = vmul.f32 %v5838, 0.5
        %v6021 = vmul.f32 %v5949, 0.5
        %v6022 = vmul.f32 %v5951, 0.5
        %v6023 = vmul.f32 %v5842, 0.5
        %v6024 = vmul.f32 %v5844, 0.5
        %v6025 = vmul.f32 %v5955, 0.5
        %v6026 = vmul.f32 %v5957, 0.5
        %v6027 = vmul.f32 %v5846, 0.5
        %v6028 = vmul.f32 %v5848, 0.5
        %v6029 = vmul.f32 %v5959, 0.5
        %v6030 = vmul.f32 %v5961, 0.5
        %v6031 = vmul.f32 %v5852, 0.5
        %v6032 = vmul.f32 %v5854, 0.5
        %v6033 = vmul.f32 %v5965, 0.5
        %v6034 = vmul.f32 %v5967, 0.5
        %v6035 = vmul.f32 %v5856, 0.5
        %v6036 = vmul.f32 %v5858, 0.5
        %v6037 = vmul.f32 %v5969, 0.5
        %v6038 = vmul.f32 %v5971, 0.5
        %v6039 = vmul.f32 %v5862, 0.5
        %v6040 = vmul.f32 %v5864, 0.5
        %v6041 = vmul.f32 %v5975, 0.5
        %v6042 = vmul.f32 %v5977, 0.5
        %v6043 = vmul.f32 %v5866, 0.5
        %v6044 = vmul.f32 %v5868, 0.5
        %v6045 = vmul.f32 %v5979, 0.5
        %v6046 = vmul.f32 %v5981, 0.5
        %v6047 = vmul.f32 %v5792, 0.044715
        %v6048 = vmul.f32 %v5794, 0.044715
        %v6049 = vmul.f32 %v5905, 0.044715
        %v6050 = vmul.f32 %v5907, 0.044715
        %v6051 = vmul.f32 %v5796, 0.044715
        %v6052 = vmul.f32 %v5798, 0.044715
        %v6053 = vmul.f32 %v5909, 0.044715
        %v6054 = vmul.f32 %v5911, 0.044715
        %v6055 = vmul.f32 %v5802, 0.044715
        %v6056 = vmul.f32 %v5804, 0.044715
        %v6057 = vmul.f32 %v5915, 0.044715
        %v6058 = vmul.f32 %v5917, 0.044715
        %v6059 = vmul.f32 %v5806, 0.044715
        %v6060 = vmul.f32 %v5808, 0.044715
        %v6061 = vmul.f32 %v5919, 0.044715
        %v6062 = vmul.f32 %v5921, 0.044715
        %v6063 = vmul.f32 %v5812, 0.044715
        %v6064 = vmul.f32 %v5814, 0.044715
        %v6065 = vmul.f32 %v5925, 0.044715
        %v6066 = vmul.f32 %v5927, 0.044715
        %v6067 = vmul.f32 %v5816, 0.044715
        %v6068 = vmul.f32 %v5818, 0.044715
        %v6069 = vmul.f32 %v5929, 0.044715
        %v6070 = vmul.f32 %v5931, 0.044715
        %v6071 = vmul.f32 %v5822, 0.044715
        %v6072 = vmul.f32 %v5824, 0.044715
        %v6073 = vmul.f32 %v5935, 0.044715
        %v6074 = vmul.f32 %v5937, 0.044715
        %v6075 = vmul.f32 %v5826, 0.044715
        %v6076 = vmul.f32 %v5828, 0.044715
        %v6077 = vmul.f32 %v5939, 0.044715
        %v6078 = vmul.f32 %v5941, 0.044715
        %v6079 = vmul.f32 %v5832, 0.044715
        %v6080 = vmul.f32 %v5834, 0.044715
        %v6081 = vmul.f32 %v5945, 0.044715
        %v6082 = vmul.f32 %v5947, 0.044715
        %v6083 = vmul.f32 %v5836, 0.044715
        %v6084 = vmul.f32 %v5838, 0.044715
        %v6085 = vmul.f32 %v5949, 0.044715
        %v6086 = vmul.f32 %v5951, 0.044715
        %v6087 = vmul.f32 %v5842, 0.044715
        %v6088 = vmul.f32 %v5844, 0.044715
        %v6089 = vmul.f32 %v5955, 0.044715
        %v6090 = vmul.f32 %v5957, 0.044715
        %v6091 = vmul.f32 %v5846, 0.044715
        %v6092 = vmul.f32 %v5848, 0.044715
        %v6093 = vmul.f32 %v5959, 0.044715
        %v6094 = vmul.f32 %v5961, 0.044715
        %v6095 = vmul.f32 %v5852, 0.044715
        %v6096 = vmul.f32 %v5854, 0.044715
        %v6097 = vmul.f32 %v5965, 0.044715
        %v6098 = vmul.f32 %v5967, 0.044715
        %v6099 = vmul.f32 %v5856, 0.044715
        %v6100 = vmul.f32 %v5858, 0.044715
        %v6101 = vmul.f32 %v5969, 0.044715
        %v6102 = vmul.f32 %v5971, 0.044715
        %v6103 = vmul.f32 %v5862, 0.044715
        %v6104 = vmul.f32 %v5864, 0.044715
        %v6105 = vmul.f32 %v5975, 0.044715
        %v6106 = vmul.f32 %v5977, 0.044715
        %v6107 = vmul.f32 %v5866, 0.044715
        %v6108 = vmul.f32 %v5868, 0.044715
        %v6109 = vmul.f32 %v5979, 0.044715
        %v6110 = vmul.f32 %v5981, 0.044715
        %v6111 = vmul.f32 %v6047, %v5792
        %v6112 = vmul.f32 %v6048, %v5794
        %v6113 = vmul.f32 %v6049, %v5905
        %v6114 = vmul.f32 %v6050, %v5907
        %v6115 = vmul.f32 %v6051, %v5796
        %v6116 = vmul.f32 %v6052, %v5798
        %v6117 = vmul.f32 %v6053, %v5909
        %v6118 = vmul.f32 %v6054, %v5911
        %v6119 = vmul.f32 %v6055, %v5802
        %v6120 = vmul.f32 %v6056, %v5804
        %v6121 = vmul.f32 %v6057, %v5915
        %v6122 = vmul.f32 %v6058, %v5917
        %v6123 = vmul.f32 %v6059, %v5806
        %v6124 = vmul.f32 %v6060, %v5808
        %v6125 = vmul.f32 %v6061, %v5919
        %v6126 = vmul.f32 %v6062, %v5921
        %v6127 = vmul.f32 %v6063, %v5812
        %v6128 = vmul.f32 %v6064, %v5814
        %v6129 = vmul.f32 %v6065, %v5925
        %v6130 = vmul.f32 %v6066, %v5927
        %v6131 = vmul.f32 %v6067, %v5816
        %v6132 = vmul.f32 %v6068, %v5818
        %v6133 = vmul.f32 %v6069, %v5929
        %v6134 = vmul.f32 %v6070, %v5931
        %v6135 = vmul.f32 %v6071, %v5822
        %v6136 = vmul.f32 %v6072, %v5824
        %v6137 = vmul.f32 %v6073, %v5935
        %v6138 = vmul.f32 %v6074, %v5937
        %v6139 = vmul.f32 %v6075, %v5826
        %v6140 = vmul.f32 %v6076, %v5828
        %v6141 = vmul.f32 %v6077, %v5939
        %v6142 = vmul.f32 %v6078, %v5941
        %v6143 = vmul.f32 %v6079, %v5832
        %v6144 = vmul.f32 %v6080, %v5834
        %v6145 = vmul.f32 %v6081, %v5945
        %v6146 = vmul.f32 %v6082, %v5947
        %v6147 = vmul.f32 %v6083, %v5836
        %v6148 = vmul.f32 %v6084, %v5838
        %v6149 = vmul.f32 %v6085, %v5949
        %v6150 = vmul.f32 %v6086, %v5951
        %v6151 = vmul.f32 %v6087, %v5842
        %v6152 = vmul.f32 %v6088, %v5844
        %v6153 = vmul.f32 %v6089, %v5955
        %v6154 = vmul.f32 %v6090, %v5957
        %v6155 = vmul.f32 %v6091, %v5846
        %v6156 = vmul.f32 %v6092, %v5848
        %v6157 = vmul.f32 %v6093, %v5959
        %v6158 = vmul.f32 %v6094, %v5961
        %v6159 = vmul.f32 %v6095, %v5852
        %v6160 = vmul.f32 %v6096, %v5854
        %v6161 = vmul.f32 %v6097, %v5965
        %v6162 = vmul.f32 %v6098, %v5967
        %v6163 = vmul.f32 %v6099, %v5856
        %v6164 = vmul.f32 %v6100, %v5858
        %v6165 = vmul.f32 %v6101, %v5969
        %v6166 = vmul.f32 %v6102, %v5971
        %v6167 = vmul.f32 %v6103, %v5862
        %v6168 = vmul.f32 %v6104, %v5864
        %v6169 = vmul.f32 %v6105, %v5975
        %v6170 = vmul.f32 %v6106, %v5977
        %v6171 = vmul.f32 %v6107, %v5866
        %v6172 = vmul.f32 %v6108, %v5868
        %v6173 = vmul.f32 %v6109, %v5979
        %v6174 = vmul.f32 %v6110, %v5981
        %v6175 = vmul.f32 %v6111, %v5792
        %v6176 = vmul.f32 %v6112, %v5794
        %v6177 = vmul.f32 %v6113, %v5905
        %v6178 = vmul.f32 %v6114, %v5907
        %v6179 = vmul.f32 %v6115, %v5796
        %v6180 = vmul.f32 %v6116, %v5798
        %v6181 = vmul.f32 %v6117, %v5909
        %v6182 = vmul.f32 %v6118, %v5911
        %v6183 = vmul.f32 %v6119, %v5802
        %v6184 = vmul.f32 %v6120, %v5804
        %v6185 = vmul.f32 %v6121, %v5915
        %v6186 = vmul.f32 %v6122, %v5917
        %v6187 = vmul.f32 %v6123, %v5806
        %v6188 = vmul.f32 %v6124, %v5808
        %v6189 = vmul.f32 %v6125, %v5919
        %v6190 = vmul.f32 %v6126, %v5921
        %v6191 = vmul.f32 %v6127, %v5812
        %v6192 = vmul.f32 %v6128, %v5814
        %v6193 = vmul.f32 %v6129, %v5925
        %v6194 = vmul.f32 %v6130, %v5927
        %v6195 = vmul.f32 %v6131, %v5816
        %v6196 = vmul.f32 %v6132, %v5818
        %v6197 = vmul.f32 %v6133, %v5929
        %v6198 = vmul.f32 %v6134, %v5931
        %v6199 = vmul.f32 %v6135, %v5822
        %v6200 = vmul.f32 %v6136, %v5824
        %v6201 = vmul.f32 %v6137, %v5935
        %v6202 = vmul.f32 %v6138, %v5937
        %v6203 = vmul.f32 %v6139, %v5826
        %v6204 = vmul.f32 %v6140, %v5828
        %v6205 = vmul.f32 %v6141, %v5939
        %v6206 = vmul.f32 %v6142, %v5941
        %v6207 = vmul.f32 %v6143, %v5832
        %v6208 = vmul.f32 %v6144, %v5834
        %v6209 = vmul.f32 %v6145, %v5945
        %v6210 = vmul.f32 %v6146, %v5947
        %v6211 = vmul.f32 %v6147, %v5836
        %v6212 = vmul.f32 %v6148, %v5838
        %v6213 = vmul.f32 %v6149, %v5949
        %v6214 = vmul.f32 %v6150, %v5951
        %v6215 = vmul.f32 %v6151, %v5842
        %v6216 = vmul.f32 %v6152, %v5844
        %v6217 = vmul.f32 %v6153, %v5955
        %v6218 = vmul.f32 %v6154, %v5957
        %v6219 = vmul.f32 %v6155, %v5846
        %v6220 = vmul.f32 %v6156, %v5848
        %v6221 = vmul.f32 %v6157, %v5959
        %v6222 = vmul.f32 %v6158, %v5961
        %v6223 = vmul.f32 %v6159, %v5852
        %v6224 = vmul.f32 %v6160, %v5854
        %v6225 = vmul.f32 %v6161, %v5965
        %v6226 = vmul.f32 %v6162, %v5967
        %v6227 = vmul.f32 %v6163, %v5856
        %v6228 = vmul.f32 %v6164, %v5858
        %v6229 = vmul.f32 %v6165, %v5969
        %v6230 = vmul.f32 %v6166, %v5971
        %v6231 = vmul.f32 %v6167, %v5862
        %v6232 = vmul.f32 %v6168, %v5864
        %v6233 = vmul.f32 %v6169, %v5975
        %v6234 = vmul.f32 %v6170, %v5977
        %v6235 = vmul.f32 %v6171, %v5866
        %v6236 = vmul.f32 %v6172, %v5868
        %v6237 = vmul.f32 %v6173, %v5979
        %v6238 = vmul.f32 %v6174, %v5981
        %v6239 = vadd.f32 %v5792, %v6175
        %v6240 = vadd.f32 %v5794, %v6176
        %v6241 = vadd.f32 %v5905, %v6177
        %v6242 = vadd.f32 %v5907, %v6178
        %v6243 = vadd.f32 %v5796, %v6179
        %v6244 = vadd.f32 %v5798, %v6180
        %v6245 = vadd.f32 %v5909, %v6181
        %v6246 = vadd.f32 %v5911, %v6182
        %v6247 = vadd.f32 %v5802, %v6183
        %v6248 = vadd.f32 %v5804, %v6184
        %v6249 = vadd.f32 %v5915, %v6185
        %v6250 = vadd.f32 %v5917, %v6186
        %v6251 = vadd.f32 %v5806, %v6187
        %v6252 = vadd.f32 %v5808, %v6188
        %v6253 = vadd.f32 %v5919, %v6189
        %v6254 = vadd.f32 %v5921, %v6190
        %v6255 = vadd.f32 %v5812, %v6191
        %v6256 = vadd.f32 %v5814, %v6192
        %v6257 = vadd.f32 %v5925, %v6193
        %v6258 = vadd.f32 %v5927, %v6194
        %v6259 = vadd.f32 %v5816, %v6195
        %v6260 = vadd.f32 %v5818, %v6196
        %v6261 = vadd.f32 %v5929, %v6197
        %v6262 = vadd.f32 %v5931, %v6198
        %v6263 = vadd.f32 %v5822, %v6199
        %v6264 = vadd.f32 %v5824, %v6200
        %v6265 = vadd.f32 %v5935, %v6201
        %v6266 = vadd.f32 %v5937, %v6202
        %v6267 = vadd.f32 %v5826, %v6203
        %v6268 = vadd.f32 %v5828, %v6204
        %v6269 = vadd.f32 %v5939, %v6205
        %v6270 = vadd.f32 %v5941, %v6206
        %v6271 = vadd.f32 %v5832, %v6207
        %v6272 = vadd.f32 %v5834, %v6208
        %v6273 = vadd.f32 %v5945, %v6209
        %v6274 = vadd.f32 %v5947, %v6210
        %v6275 = vadd.f32 %v5836, %v6211
        %v6276 = vadd.f32 %v5838, %v6212
        %v6277 = vadd.f32 %v5949, %v6213
        %v6278 = vadd.f32 %v5951, %v6214
        %v6279 = vadd.f32 %v5842, %v6215
        %v6280 = vadd.f32 %v5844, %v6216
        %v6281 = vadd.f32 %v5955, %v6217
        %v6282 = vadd.f32 %v5957, %v6218
        %v6283 = vadd.f32 %v5846, %v6219
        %v6284 = vadd.f32 %v5848, %v6220
        %v6285 = vadd.f32 %v5959, %v6221
        %v6286 = vadd.f32 %v5961, %v6222
        %v6287 = vadd.f32 %v5852, %v6223
        %v6288 = vadd.f32 %v5854, %v6224
        %v6289 = vadd.f32 %v5965, %v6225
        %v6290 = vadd.f32 %v5967, %v6226
        %v6291 = vadd.f32 %v5856, %v6227
        %v6292 = vadd.f32 %v5858, %v6228
        %v6293 = vadd.f32 %v5969, %v6229
        %v6294 = vadd.f32 %v5971, %v6230
        %v6295 = vadd.f32 %v5862, %v6231
        %v6296 = vadd.f32 %v5864, %v6232
        %v6297 = vadd.f32 %v5975, %v6233
        %v6298 = vadd.f32 %v5977, %v6234
        %v6299 = vadd.f32 %v5866, %v6235
        %v6300 = vadd.f32 %v5868, %v6236
        %v6301 = vadd.f32 %v5979, %v6237
        %v6302 = vadd.f32 %v5981, %v6238
        %v6303 = vmul.f32 %v6239, 0.7978846
        %v6304 = vmul.f32 %v6240, 0.7978846
        %v6305 = vmul.f32 %v6241, 0.7978846
        %v6306 = vmul.f32 %v6242, 0.7978846
        %v6307 = vmul.f32 %v6243, 0.7978846
        %v6308 = vmul.f32 %v6244, 0.7978846
        %v6309 = vmul.f32 %v6245, 0.7978846
        %v6310 = vmul.f32 %v6246, 0.7978846
        %v6311 = vmul.f32 %v6247, 0.7978846
        %v6312 = vmul.f32 %v6248, 0.7978846
        %v6313 = vmul.f32 %v6249, 0.7978846
        %v6314 = vmul.f32 %v6250, 0.7978846
        %v6315 = vmul.f32 %v6251, 0.7978846
        %v6316 = vmul.f32 %v6252, 0.7978846
        %v6317 = vmul.f32 %v6253, 0.7978846
        %v6318 = vmul.f32 %v6254, 0.7978846
        %v6319 = vmul.f32 %v6255, 0.7978846
        %v6320 = vmul.f32 %v6256, 0.7978846
        %v6321 = vmul.f32 %v6257, 0.7978846
        %v6322 = vmul.f32 %v6258, 0.7978846
        %v6323 = vmul.f32 %v6259, 0.7978846
        %v6324 = vmul.f32 %v6260, 0.7978846
        %v6325 = vmul.f32 %v6261, 0.7978846
        %v6326 = vmul.f32 %v6262, 0.7978846
        %v6327 = vmul.f32 %v6263, 0.7978846
        %v6328 = vmul.f32 %v6264, 0.7978846
        %v6329 = vmul.f32 %v6265, 0.7978846
        %v6330 = vmul.f32 %v6266, 0.7978846
        %v6331 = vmul.f32 %v6267, 0.7978846
        %v6332 = vmul.f32 %v6268, 0.7978846
        %v6333 = vmul.f32 %v6269, 0.7978846
        %v6334 = vmul.f32 %v6270, 0.7978846
        %v6335 = vmul.f32 %v6271, 0.7978846
        %v6336 = vmul.f32 %v6272, 0.7978846
        %v6337 = vmul.f32 %v6273, 0.7978846
        %v6338 = vmul.f32 %v6274, 0.7978846
        %v6339 = vmul.f32 %v6275, 0.7978846
        %v6340 = vmul.f32 %v6276, 0.7978846
        %v6341 = vmul.f32 %v6277, 0.7978846
        %v6342 = vmul.f32 %v6278, 0.7978846
        %v6343 = vmul.f32 %v6279, 0.7978846
        %v6344 = vmul.f32 %v6280, 0.7978846
        %v6345 = vmul.f32 %v6281, 0.7978846
        %v6346 = vmul.f32 %v6282, 0.7978846
        %v6347 = vmul.f32 %v6283, 0.7978846
        %v6348 = vmul.f32 %v6284, 0.7978846
        %v6349 = vmul.f32 %v6285, 0.7978846
        %v6350 = vmul.f32 %v6286, 0.7978846
        %v6351 = vmul.f32 %v6287, 0.7978846
        %v6352 = vmul.f32 %v6288, 0.7978846
        %v6353 = vmul.f32 %v6289, 0.7978846
        %v6354 = vmul.f32 %v6290, 0.7978846
        %v6355 = vmul.f32 %v6291, 0.7978846
        %v6356 = vmul.f32 %v6292, 0.7978846
        %v6357 = vmul.f32 %v6293, 0.7978846
        %v6358 = vmul.f32 %v6294, 0.7978846
        %v6359 = vmul.f32 %v6295, 0.7978846
        %v6360 = vmul.f32 %v6296, 0.7978846
        %v6361 = vmul.f32 %v6297, 0.7978846
        %v6362 = vmul.f32 %v6298, 0.7978846
        %v6363 = vmul.f32 %v6299, 0.7978846
        %v6364 = vmul.f32 %v6300, 0.7978846
        %v6365 = vmul.f32 %v6301, 0.7978846
        %v6366 = vmul.f32 %v6302, 0.7978846
        %v6367 = vtanh.pop %v6303
        %v6368 = vtanh.pop %v6304
        %v6369 = vtanh.pop %v6305
        %v6370 = vtanh.pop %v6306
        %v6371 = vtanh.pop %v6307
        %v6372 = vtanh.pop %v6308
        %v6373 = vtanh.pop %v6309
        %v6374 = vtanh.pop %v6310
        %v6375 = vtanh.pop %v6311
        %v6376 = vtanh.pop %v6312
        %v6377 = vtanh.pop %v6313
        %v6378 = vtanh.pop %v6314
        %v6379 = vtanh.pop %v6315
        %v6380 = vtanh.pop %v6316
        %v6381 = vtanh.pop %v6317
        %v6382 = vtanh.pop %v6318
        %v6383 = vtanh.pop %v6319
        %v6384 = vtanh.pop %v6320
        %v6385 = vtanh.pop %v6321
        %v6386 = vtanh.pop %v6322
        %v6387 = vtanh.pop %v6323
        %v6388 = vtanh.pop %v6324
        %v6389 = vtanh.pop %v6325
        %v6390 = vtanh.pop %v6326
        %v6391 = vtanh.pop %v6327
        %v6392 = vtanh.pop %v6328
        %v6393 = vtanh.pop %v6329
        %v6394 = vtanh.pop %v6330
        %v6395 = vtanh.pop %v6331
        %v6396 = vtanh.pop %v6332
        %v6397 = vtanh.pop %v6333
        %v6398 = vtanh.pop %v6334
        %v6399 = vtanh.pop %v6335
        %v6400 = vtanh.pop %v6336
        %v6401 = vtanh.pop %v6337
        %v6402 = vtanh.pop %v6338
        %v6403 = vtanh.pop %v6339
        %v6404 = vtanh.pop %v6340
        %v6405 = vtanh.pop %v6341
        %v6406 = vtanh.pop %v6342
        %v6407 = vtanh.pop %v6343
        %v6408 = vtanh.pop %v6344
        %v6409 = vtanh.pop %v6345
        %v6410 = vtanh.pop %v6346
        %v6411 = vtanh.pop %v6347
        %v6412 = vtanh.pop %v6348
        %v6413 = vtanh.pop %v6349
        %v6414 = vtanh.pop %v6350
        %v6415 = vtanh.pop %v6351
        %v6416 = vtanh.pop %v6352
        %v6417 = vtanh.pop %v6353
        %v6418 = vtanh.pop %v6354
        %v6419 = vtanh.pop %v6355
        %v6420 = vtanh.pop %v6356
        %v6421 = vtanh.pop %v6357
        %v6422 = vtanh.pop %v6358
        %v6423 = vtanh.pop %v6359
        %v6424 = vtanh.pop %v6360
        %v6425 = vtanh.pop %v6361
        %v6426 = vtanh.pop %v6362
        %v6427 = vtanh.pop %v6363
        %v6428 = vtanh.pop %v6364
        %v6429 = vtanh.pop %v6365
        %v6430 = vtanh.pop %v6366
        %v6431 = vadd.f32 %v6367, 1.0
        %v6432 = vadd.f32 %v6368, 1.0
        %v6433 = vadd.f32 %v6369, 1.0
        %v6434 = vadd.f32 %v6370, 1.0
        %v6435 = vadd.f32 %v6371, 1.0
        %v6436 = vadd.f32 %v6372, 1.0
        %v6437 = vadd.f32 %v6373, 1.0
        %v6438 = vadd.f32 %v6374, 1.0
        %v6439 = vadd.f32 %v6375, 1.0
        %v6440 = vadd.f32 %v6376, 1.0
        %v6441 = vadd.f32 %v6377, 1.0
        %v6442 = vadd.f32 %v6378, 1.0
        %v6443 = vadd.f32 %v6379, 1.0
        %v6444 = vadd.f32 %v6380, 1.0
        %v6445 = vadd.f32 %v6381, 1.0
        %v6446 = vadd.f32 %v6382, 1.0
        %v6447 = vadd.f32 %v6383, 1.0
        %v6448 = vadd.f32 %v6384, 1.0
        %v6449 = vadd.f32 %v6385, 1.0
        %v6450 = vadd.f32 %v6386, 1.0
        %v6451 = vadd.f32 %v6387, 1.0
        %v6452 = vadd.f32 %v6388, 1.0
        %v6453 = vadd.f32 %v6389, 1.0
        %v6454 = vadd.f32 %v6390, 1.0
        %v6455 = vadd.f32 %v6391, 1.0
        %v6456 = vadd.f32 %v6392, 1.0
        %v6457 = vadd.f32 %v6393, 1.0
        %v6458 = vadd.f32 %v6394, 1.0
        %v6459 = vadd.f32 %v6395, 1.0
        %v6460 = vadd.f32 %v6396, 1.0
        %v6461 = vadd.f32 %v6397, 1.0
        %v6462 = vadd.f32 %v6398, 1.0
        %v6463 = vadd.f32 %v6399, 1.0
        %v6464 = vadd.f32 %v6400, 1.0
        %v6465 = vadd.f32 %v6401, 1.0
        %v6466 = vadd.f32 %v6402, 1.0
        %v6467 = vadd.f32 %v6403, 1.0
        %v6468 = vadd.f32 %v6404, 1.0
        %v6469 = vadd.f32 %v6405, 1.0
        %v6470 = vadd.f32 %v6406, 1.0
        %v6471 = vadd.f32 %v6407, 1.0
        %v6472 = vadd.f32 %v6408, 1.0
        %v6473 = vadd.f32 %v6409, 1.0
        %v6474 = vadd.f32 %v6410, 1.0
        %v6475 = vadd.f32 %v6411, 1.0
        %v6476 = vadd.f32 %v6412, 1.0
        %v6477 = vadd.f32 %v6413, 1.0
        %v6478 = vadd.f32 %v6414, 1.0
        %v6479 = vadd.f32 %v6415, 1.0
        %v6480 = vadd.f32 %v6416, 1.0
        %v6481 = vadd.f32 %v6417, 1.0
        %v6482 = vadd.f32 %v6418, 1.0
        %v6483 = vadd.f32 %v6419, 1.0
        %v6484 = vadd.f32 %v6420, 1.0
        %v6485 = vadd.f32 %v6421, 1.0
        %v6486 = vadd.f32 %v6422, 1.0
        %v6487 = vadd.f32 %v6423, 1.0
        %v6488 = vadd.f32 %v6424, 1.0
        %v6489 = vadd.f32 %v6425, 1.0
        %v6490 = vadd.f32 %v6426, 1.0
        %v6491 = vadd.f32 %v6427, 1.0
        %v6492 = vadd.f32 %v6428, 1.0
        %v6493 = vadd.f32 %v6429, 1.0
        %v6494 = vadd.f32 %v6430, 1.0
        %v6495 = vmul.f32 %v5983, %v6431
        %v6496 = vmul.f32 %v5984, %v6432
        %v6497 = vmul.f32 %v5985, %v6433
        %v6498 = vmul.f32 %v5986, %v6434
        %v6499 = vmul.f32 %v5987, %v6435
        %v6500 = vmul.f32 %v5988, %v6436
        %v6501 = vmul.f32 %v5989, %v6437
        %v6502 = vmul.f32 %v5990, %v6438
        %v6503 = vmul.f32 %v5991, %v6439
        %v6504 = vmul.f32 %v5992, %v6440
        %v6505 = vmul.f32 %v5993, %v6441
        %v6506 = vmul.f32 %v5994, %v6442
        %v6507 = vmul.f32 %v5995, %v6443
        %v6508 = vmul.f32 %v5996, %v6444
        %v6509 = vmul.f32 %v5997, %v6445
        %v6510 = vmul.f32 %v5998, %v6446
        %v6511 = vmul.f32 %v5999, %v6447
        %v6512 = vmul.f32 %v6000, %v6448
        %v6513 = vmul.f32 %v6001, %v6449
        %v6514 = vmul.f32 %v6002, %v6450
        %v6515 = vmul.f32 %v6003, %v6451
        %v6516 = vmul.f32 %v6004, %v6452
        %v6517 = vmul.f32 %v6005, %v6453
        %v6518 = vmul.f32 %v6006, %v6454
        %v6519 = vmul.f32 %v6007, %v6455
        %v6520 = vmul.f32 %v6008, %v6456
        %v6521 = vmul.f32 %v6009, %v6457
        %v6522 = vmul.f32 %v6010, %v6458
        %v6523 = vmul.f32 %v6011, %v6459
        %v6524 = vmul.f32 %v6012, %v6460
        %v6525 = vmul.f32 %v6013, %v6461
        %v6526 = vmul.f32 %v6014, %v6462
        %v6527 = vmul.f32 %v6015, %v6463
        %v6528 = vmul.f32 %v6016, %v6464
        %v6529 = vmul.f32 %v6017, %v6465
        %v6530 = vmul.f32 %v6018, %v6466
        %v6531 = vmul.f32 %v6019, %v6467
        %v6532 = vmul.f32 %v6020, %v6468
        %v6533 = vmul.f32 %v6021, %v6469
        %v6534 = vmul.f32 %v6022, %v6470
        %v6535 = vmul.f32 %v6023, %v6471
        %v6536 = vmul.f32 %v6024, %v6472
        %v6537 = vmul.f32 %v6025, %v6473
        %v6538 = vmul.f32 %v6026, %v6474
        %v6539 = vmul.f32 %v6027, %v6475
        %v6540 = vmul.f32 %v6028, %v6476
        %v6541 = vmul.f32 %v6029, %v6477
        %v6542 = vmul.f32 %v6030, %v6478
        %v6543 = vmul.f32 %v6031, %v6479
        %v6544 = vmul.f32 %v6032, %v6480
        %v6545 = vmul.f32 %v6033, %v6481
        %v6546 = vmul.f32 %v6034, %v6482
        %v6547 = vmul.f32 %v6035, %v6483
        %v6548 = vmul.f32 %v6036, %v6484
        %v6549 = vmul.f32 %v6037, %v6485
        %v6550 = vmul.f32 %v6038, %v6486
        %v6551 = vmul.f32 %v6039, %v6487
        %v6552 = vmul.f32 %v6040, %v6488
        %v6553 = vmul.f32 %v6041, %v6489
        %v6554 = vmul.f32 %v6042, %v6490
        %v6555 = vmul.f32 %v6043, %v6491
        %v6556 = vmul.f32 %v6044, %v6492
        %v6557 = vmul.f32 %v6045, %v6493
        %v6558 = vmul.f32 %v6046, %v6494
        %v6559 = vpack.c.bf16 %v6499, %v6495
        %v6560 = vpack.c.bf16 %v6500, %v6496
        %v6561 = vpack.c.bf16 %v6501, %v6497
        %v6562 = vpack.c.bf16 %v6502, %v6498
        %v6563 = vpack.c.bf16 %v6507, %v6503
        %v6564 = vpack.c.bf16 %v6508, %v6504
        %v6565 = vpack.c.bf16 %v6509, %v6505
        %v6566 = vpack.c.bf16 %v6510, %v6506
        %v6567 = vpack.c.bf16 %v6515, %v6511
        %v6568 = vpack.c.bf16 %v6516, %v6512
        %v6569 = vpack.c.bf16 %v6517, %v6513
        %v6570 = vpack.c.bf16 %v6518, %v6514
        %v6571 = vpack.c.bf16 %v6523, %v6519
        %v6572 = vpack.c.bf16 %v6524, %v6520
        %v6573 = vpack.c.bf16 %v6525, %v6521
        %v6574 = vpack.c.bf16 %v6526, %v6522
        %v6575 = vpack.c.bf16 %v6531, %v6527
        %v6576 = vpack.c.bf16 %v6532, %v6528
        %v6577 = vpack.c.bf16 %v6533, %v6529
        %v6578 = vpack.c.bf16 %v6534, %v6530
        %v6579 = vpack.c.bf16 %v6539, %v6535
        %v6580 = vpack.c.bf16 %v6540, %v6536
        %v6581 = vpack.c.bf16 %v6541, %v6537
        %v6582 = vpack.c.bf16 %v6542, %v6538
        %v6583 = vpack.c.bf16 %v6547, %v6543
        %v6584 = vpack.c.bf16 %v6548, %v6544
        %v6585 = vpack.c.bf16 %v6549, %v6545
        %v6586 = vpack.c.bf16 %v6550, %v6546
        %v6587 = vpack.c.bf16 %v6555, %v6551
        %v6588 = vpack.c.bf16 %v6556, %v6552
        %v6589 = vpack.c.bf16 %v6557, %v6553
        %v6590 = vpack.c.bf16 %v6558, %v6554
        %s6591 = scalar_lea.vmem %s7, 32
        %v6592 = vld [vmem:[%s6591] sm:$0xf]
        %v6593 = vld [vmem:[%s6591 + $0x4] sm:$0xf]
        %v6594 = vld [vmem:[%s6591 + $0x8] sm:$0xf]
        %v6595 = vld [vmem:[%s6591 + $0xc] sm:$0xf]
        %v6596 = vld [vmem:[%s6591 + $0x10] sm:$0xf]
        %v6597 = vld [vmem:[%s6591 + $0x14] sm:$0xf]
        %v6598 = vld [vmem:[%s6591 + $0x18] sm:$0xf]
        %v6599 = vld [vmem:[%s6591 + $0x1c] sm:$0xf]
        %s6600 = scalar_lea.vmem %s8, 64
        %v6601 = vld [vmem:[%s6600] sm:$0xff]
        %v6602 = vld [vmem:[%s6600 + $0x8] sm:$0xff]
        %v6603 = vld [vmem:[%s6600 + $0x10] sm:$0xff]
        %v6604 = vld [vmem:[%s6600 + $0x18] sm:$0xff]
        %v6605 = vld [vmem:[%s6600 + $0x20] sm:$0xff]
        %v6606 = vld [vmem:[%s6600 + $0x28] sm:$0xff]
        %v6607 = vld [vmem:[%s6600 + $0x30] sm:$0xff]
        %v6608 = vld [vmem:[%s6600 + $0x38] sm:$0xff]
        %6610 = vset.pattern.permute.xlu0 0
        %6611 = vperm.xlu0 %6610, %v6601
        %v6612 = vpop.permute.xlu0 %6611
        %6615 = vset.pattern.permute.xlu0 0
        %6616 = vperm.xlu0 %6615, %v6602
        %v6617 = vpop.permute.xlu0 %6616
        %6620 = vset.pattern.permute.xlu0 0
        %6621 = vperm.xlu0 %6620, %v6603
        %v6622 = vpop.permute.xlu0 %6621
        %6625 = vset.pattern.permute.xlu0 0
        %6626 = vperm.xlu0 %6625, %v6604
        %v6627 = vpop.permute.xlu0 %6626
        %6630 = vset.pattern.permute.xlu0 0
        %6631 = vperm.xlu0 %6630, %v6605
        %v6632 = vpop.permute.xlu0 %6631
        %6635 = vset.pattern.permute.xlu0 0
        %6636 = vperm.xlu0 %6635, %v6606
        %v6637 = vpop.permute.xlu0 %6636
        %6640 = vset.pattern.permute.xlu0 0
        %6641 = vperm.xlu0 %6640, %v6607
        %v6642 = vpop.permute.xlu0 %6641
        %6645 = vset.pattern.permute.xlu0 0
        %6646 = vperm.xlu0 %6645, %v6608
        %v6647 = vpop.permute.xlu0 %6646
        %v6657 = vunpack.c.l.b16 %v6592
        %v6658 = vunpack.c.l.b16 %v6593
        %v6659 = vunpack.c.l.b16 %v6594
        %v6660 = vunpack.c.l.b16 %v6595
        %v6661 = vunpack.c.l.b16 %v6596
        %v6662 = vunpack.c.l.b16 %v6597
        %v6663 = vunpack.c.l.b16 %v6598
        %v6664 = vunpack.c.l.b16 %v6599
        %v6665 = vpack.c.b16 %v6658, %v6657
        %v6666 = vpack.c.b16 %v6660, %v6659
        %v6667 = vpack.c.b16 %v6662, %v6661
        %v6668 = vpack.c.b16 %v6664, %v6663
        %6673 = vmatprep.subr.bf16.mxu0 %v6560
        %6674 = vmatpush1.bf16.msra.mxu0 %v6559
        %6675 = vmatprep.subr.bf16.mxu0 %v6564
        %6676 = vmatpush1.bf16.msra.mxu0 %v6563
        %6677 = vmatprep.subr.bf16.mxu0 %v6568
        %6678 = vmatpush1.bf16.msra.mxu0 %v6567
        %6679 = vmatprep.subr.bf16.mxu0 %v6572
        %6680 = vmatpush1.bf16.msra.mxu0 %v6571
        %6681 = vmatprep.subr.bf16.mxu0 %v6576
        %6682 = vmatpush1.bf16.msra.mxu0 %v6575
        %6683 = vmatprep.subr.bf16.mxu0 %v6580
        %6684 = vmatpush1.bf16.msra.mxu0 %v6579
        %6685 = vmatprep.subr.bf16.mxu0 %v6584
        %6686 = vmatpush1.bf16.msra.mxu0 %v6583
        %6687 = vmatprep.subr.bf16.mxu0 %v6588
        %6688 = vmatpush1.bf16.msra.mxu0 %v6587
        %6689 = vmatprep.subr.bf16.mxu0 0
        %6690 = vmatpush1.bf16.msra.mxu0 0
        %6691 = vmatprep.subr.bf16.mxu0 0
        %6692 = vmatpush1.bf16.msra.mxu0 0
        %6693 = vmatprep.subr.bf16.mxu0 0
        %6694 = vmatpush1.bf16.msra.mxu0 0
        %6695 = vmatprep.subr.bf16.mxu0 0
        %6696 = vmatpush1.bf16.msra.mxu0 0
        %6697 = vmatprep.subr.bf16.mxu0 0
        %6698 = vmatpush1.bf16.msra.mxu0 0
        %6699 = vmatprep.subr.bf16.mxu0 0
        %6700 = vmatpush1.bf16.msra.mxu0 0
        %6701 = vmatprep.subr.bf16.mxu0 0
        %6702 = vmatpush1.bf16.msra.mxu0 0
        %6703 = vmatprep.subr.bf16.mxu0 0
        %6704 = vmatpush1.bf16.msra.mxu0 0
        %6705 = vmatprep.mubr.bf16.mxu0 0
        %6706 = vmatmul.mubr.bf16.gmra.mrb[0].mxu0 %v6665
        %v6707 = vpop.f32.mrb[0].mxu0
        %v6708 = vadd.f32 %v6612, %v6707
        %v6709 = vpop.f32.mrb[0].mxu0
        %v6710 = vadd.f32 %v6612, %v6709
        %v6711 = vpop.f32.mrb[0].mxu0
        %v6712 = vadd.f32 %v6617, %v6711
        %v6713 = vpop.f32.mrb[0].mxu0
        %v6714 = vadd.f32 %v6617, %v6713
        %6715 = vmatprep.mubr.bf16.mxu0 0
        %6716 = vmatmul.mubr.bf16.gmra.mrb[0].mxu0 %v6666
        %v6717 = vpop.f32.mrb[0].mxu0
        %v6718 = vadd.f32 %v6622, %v6717
        %v6719 = vpop.f32.mrb[0].mxu0
        %v6720 = vadd.f32 %v6622, %v6719
        %v6721 = vpop.f32.mrb[0].mxu0
        %v6722 = vadd.f32 %v6627, %v6721
        %v6723 = vpop.f32.mrb[0].mxu0
        %v6724 = vadd.f32 %v6627, %v6723
        %6725 = vmatprep.mubr.bf16.mxu0 0
        %6726 = vmatmul.mubr.bf16.gmra.mrb[0].mxu0 %v6667
        %v6727 = vpop.f32.mrb[0].mxu0
        %v6728 = vadd.f32 %v6632, %v6727
        %v6729 = vpop.f32.mrb[0].mxu0
        %v6730 = vadd.f32 %v6632, %v6729
        %v6731 = vpop.f32.mrb[0].mxu0
        %v6732 = vadd.f32 %v6637, %v6731
        %v6733 = vpop.f32.mrb[0].mxu0
        %v6734 = vadd.f32 %v6637, %v6733
        %6735 = vmatprep.mubr.bf16.mxu0 0
        %6736 = vmatmul.mubr.bf16.gmra.mrb[0].mxu0 %v6668
        %v6737 = vpop.f32.mrb[0].mxu0
        %v6738 = vadd.f32 %v6642, %v6737
        %v6739 = vpop.f32.mrb[0].mxu0
        %v6740 = vadd.f32 %v6642, %v6739
        %v6741 = vpop.f32.mrb[0].mxu0
        %v6742 = vadd.f32 %v6647, %v6741
        %v6743 = vpop.f32.mrb[0].mxu0
        %v6744 = vadd.f32 %v6647, %v6743
        %6745 = vdwg.mxu0
        %6746 = vmatprep.subr.bf16.mxu0 %v6562
        %6747 = vmatpush1.bf16.msra.mxu0 %v6561
        %6748 = vmatprep.subr.bf16.mxu0 %v6566
        %6749 = vmatpush1.bf16.msra.mxu0 %v6565
        %6750 = vmatprep.subr.bf16.mxu0 %v6570
        %6751 = vmatpush1.bf16.msra.mxu0 %v6569
        %6752 = vmatprep.subr.bf16.mxu0 %v6574
        %6753 = vmatpush1.bf16.msra.mxu0 %v6573
        %6754 = vmatprep.subr.bf16.mxu0 %v6578
        %6755 = vmatpush1.bf16.msra.mxu0 %v6577
        %6756 = vmatprep.subr.bf16.mxu0 %v6582
        %6757 = vmatpush1.bf16.msra.mxu0 %v6581
        %6758 = vmatprep.subr.bf16.mxu0 %v6586
        %6759 = vmatpush1.bf16.msra.mxu0 %v6585
        %6760 = vmatprep.subr.bf16.mxu0 %v6590
        %6761 = vmatpush1.bf16.msra.mxu0 %v6589
        %6762 = vmatprep.subr.bf16.mxu0 0
        %6763 = vmatpush1.bf16.msra.mxu0 0
        %6764 = vmatprep.subr.bf16.mxu0 0
        %6765 = vmatpush1.bf16.msra.mxu0 0
        %6766 = vmatprep.subr.bf16.mxu0 0
        %6767 = vmatpush1.bf16.msra.mxu0 0
        %6768 = vmatprep.subr.bf16.mxu0 0
        %6769 = vmatpush1.bf16.msra.mxu0 0
        %6770 = vmatprep.subr.bf16.mxu0 0
        %6771 = vmatpush1.bf16.msra.mxu0 0
        %6772 = vmatprep.subr.bf16.mxu0 0
        %6773 = vmatpush1.bf16.msra.mxu0 0
        %6774 = vmatprep.subr.bf16.mxu0 0
        %6775 = vmatpush1.bf16.msra.mxu0 0
        %6776 = vmatprep.subr.bf16.mxu0 0
        %6777 = vmatpush1.bf16.msra.mxu0 0
        %6778 = vmatprep.mubr.bf16.mxu0 0
        %6779 = vmatmul.mubr.bf16.gmra.mrb[0].mxu0 %v6665
        %v6780 = vpop.f32.mrb[0].mxu0
        %v6781 = vadd.f32 %v6612, %v6780
        %v6782 = vpop.f32.mrb[0].mxu0
        %v6783 = vadd.f32 %v6612, %v6782
        %v6784 = vpop.f32.mrb[0].mxu0
        %v6785 = vadd.f32 %v6617, %v6784
        %v6786 = vpop.f32.mrb[0].mxu0
        %v6787 = vadd.f32 %v6617, %v6786
        %6788 = vmatprep.mubr.bf16.mxu0 0
        %6789 = vmatmul.mubr.bf16.gmra.mrb[0].mxu0 %v6666
        %v6790 = vpop.f32.mrb[0].mxu0
        %v6791 = vadd.f32 %v6622, %v6790
        %v6792 = vpop.f32.mrb[0].mxu0
        %v6793 = vadd.f32 %v6622, %v6792
        %v6794 = vpop.f32.mrb[0].mxu0
        %v6795 = vadd.f32 %v6627, %v6794
        %v6796 = vpop.f32.mrb[0].mxu0
        %v6797 = vadd.f32 %v6627, %v6796
        %6798 = vmatprep.mubr.bf16.mxu0 0
        %6799 = vmatmul.mubr.bf16.gmra.mrb[0].mxu0 %v6667
        %v6800 = vpop.f32.mrb[0].mxu0
        %v6801 = vadd.f32 %v6632, %v6800
        %v6802 = vpop.f32.mrb[0].mxu0
        %v6803 = vadd.f32 %v6632, %v6802
        %v6804 = vpop.f32.mrb[0].mxu0
        %v6805 = vadd.f32 %v6637, %v6804
        %v6806 = vpop.f32.mrb[0].mxu0
        %v6807 = vadd.f32 %v6637, %v6806
        %6808 = vmatprep.mubr.bf16.mxu0 0
        %6809 = vmatmul.mubr.bf16.gmra.mrb[0].mxu0 %v6668
        %v6810 = vpop.f32.mrb[0].mxu0
        %v6811 = vadd.f32 %v6642, %v6810
        %v6812 = vpop.f32.mrb[0].mxu0
        %v6813 = vadd.f32 %v6642, %v6812
        %v6814 = vpop.f32.mrb[0].mxu0
        %v6815 = vadd.f32 %v6647, %v6814
        %v6816 = vpop.f32.mrb[0].mxu0
        %v6817 = vadd.f32 %v6647, %v6816
        %6818 = vdwg.mxu0
        %v6819 = vadd.f32 %v5007, %v6708
        %v6820 = vadd.f32 %v5008, %v6712
        %v6821 = vadd.f32 %v5009, %v6718
        %v6822 = vadd.f32 %v5010, %v6722
        %v6823 = vadd.f32 %v5011, %v6728
        %v6824 = vadd.f32 %v5012, %v6732
        %v6825 = vadd.f32 %v5013, %v6738
        %v6826 = vadd.f32 %v5014, %v6742
        %6827 = vst [vmem:[#allocation2] sm:$0xff] %v6819
        %6828 = vst [vmem:[#allocation2 + $0x8] sm:$0xff] %v6820
        %6829 = vst [vmem:[#allocation2 + $0x10] sm:$0xff] %v6821
        %6830 = vst [vmem:[#allocation2 + $0x18] sm:$0xff] %v6822
        %6831 = vst [vmem:[#allocation2 + $0x20] sm:$0xff] %v6823
        %6832 = vst [vmem:[#allocation2 + $0x28] sm:$0xff] %v6824
        %6833 = vst [vmem:[#allocation2 + $0x30] sm:$0xff] %v6825
        %6834 = vst [vmem:[#allocation2 + $0x38] sm:$0xff] %v6826
        %v6835 = vld [vmem:[#allocation2 + $0x40] sm:$0xff]
        %v6836 = vld [vmem:[#allocation2 + $0x48] sm:$0xff]
        %v6837 = vld [vmem:[#allocation2 + $0x50] sm:$0xff]
        %v6838 = vld [vmem:[#allocation2 + $0x58] sm:$0xff]
        %v6839 = vld [vmem:[#allocation2 + $0x60] sm:$0xff]
        %v6840 = vld [vmem:[#allocation2 + $0x68] sm:$0xff]
        %v6841 = vld [vmem:[#allocation2 + $0x70] sm:$0xff]
        %v6842 = vld [vmem:[#allocation2 + $0x78] sm:$0xff]
        %v6843 = vadd.f32 %v6835, %v6710
        %v6844 = vadd.f32 %v6836, %v6714
        %v6845 = vadd.f32 %v6837, %v6720
        %v6846 = vadd.f32 %v6838, %v6724
        %v6847 = vadd.f32 %v6839, %v6730
        %v6848 = vadd.f32 %v6840, %v6734
        %v6849 = vadd.f32 %v6841, %v6740
        %v6850 = vadd.f32 %v6842, %v6744
        %6851 = vst [vmem:[#allocation2 + $0x40] sm:$0xff] %v6843
        %6852 = vst [vmem:[#allocation2 + $0x48] sm:$0xff] %v6844
        %6853 = vst [vmem:[#allocation2 + $0x50] sm:$0xff] %v6845
        %6854 = vst [vmem:[#allocation2 + $0x58] sm:$0xff] %v6846
        %6855 = vst [vmem:[#allocation2 + $0x60] sm:$0xff] %v6847
        %6856 = vst [vmem:[#allocation2 + $0x68] sm:$0xff] %v6848
        %6857 = vst [vmem:[#allocation2 + $0x70] sm:$0xff] %v6849
        %6858 = vst [vmem:[#allocation2 + $0x78] sm:$0xff] %v6850
        %v6859 = vld [vmem:[#allocation2 + $0x80] sm:$0xff]
        %v6860 = vld [vmem:[#allocation2 + $0x88] sm:$0xff]
        %v6861 = vld [vmem:[#allocation2 + $0x90] sm:$0xff]
        %v6862 = vld [vmem:[#allocation2 + $0x98] sm:$0xff]
        %v6863 = vld [vmem:[#allocation2 + $0xa0] sm:$0xff]
        %v6864 = vld [vmem:[#allocation2 + $0xa8] sm:$0xff]
        %v6865 = vld [vmem:[#allocation2 + $0xb0] sm:$0xff]
        %v6866 = vld [vmem:[#allocation2 + $0xb8] sm:$0xff]
        %v6867 = vadd.f32 %v6859, %v6781
        %v6868 = vadd.f32 %v6860, %v6785
        %v6869 = vadd.f32 %v6861, %v6791
        %v6870 = vadd.f32 %v6862, %v6795
        %v6871 = vadd.f32 %v6863, %v6801
        %v6872 = vadd.f32 %v6864, %v6805
        %v6873 = vadd.f32 %v6865, %v6811
        %v6874 = vadd.f32 %v6866, %v6815
        %6875 = vst [vmem:[#allocation2 + $0x80] sm:$0xff] %v6867
        %6876 = vst [vmem:[#allocation2 + $0x88] sm:$0xff] %v6868
        %6877 = vst [vmem:[#allocation2 + $0x90] sm:$0xff] %v6869
        %6878 = vst [vmem:[#allocation2 + $0x98] sm:$0xff] %v6870
        %6879 = vst [vmem:[#allocation2 + $0xa0] sm:$0xff] %v6871
        %6880 = vst [vmem:[#allocation2 + $0xa8] sm:$0xff] %v6872
        %6881 = vst [vmem:[#allocation2 + $0xb0] sm:$0xff] %v6873
        %6882 = vst [vmem:[#allocation2 + $0xb8] sm:$0xff] %v6874
        %v6883 = vld [vmem:[#allocation2 + $0xc0] sm:$0xff]
        %v6884 = vld [vmem:[#allocation2 + $0xc8] sm:$0xff]
        %v6885 = vld [vmem:[#allocation2 + $0xd0] sm:$0xff]
        %v6886 = vld [vmem:[#allocation2 + $0xd8] sm:$0xff]
        %v6887 = vld [vmem:[#allocation2 + $0xe0] sm:$0xff]
        %v6888 = vld [vmem:[#allocation2 + $0xe8] sm:$0xff]
        %v6889 = vld [vmem:[#allocation2 + $0xf0] sm:$0xff]
        %v6890 = vld [vmem:[#allocation2 + $0xf8] sm:$0xff]
        %v6891 = vadd.f32 %v6883, %v6783
        %v6892 = vadd.f32 %v6884, %v6787
        %v6893 = vadd.f32 %v6885, %v6793
        %v6894 = vadd.f32 %v6886, %v6797
        %v6895 = vadd.f32 %v6887, %v6803
        %v6896 = vadd.f32 %v6888, %v6807
        %v6897 = vadd.f32 %v6889, %v6813
        %v6898 = vadd.f32 %v6890, %v6817
        %6899 = vst [vmem:[#allocation2 + $0xc0] sm:$0xff] %v6891
        %6900 = vst [vmem:[#allocation2 + $0xc8] sm:$0xff] %v6892
        %6901 = vst [vmem:[#allocation2 + $0xd0] sm:$0xff] %v6893
        %6902 = vst [vmem:[#allocation2 + $0xd8] sm:$0xff] %v6894
        %6903 = vst [vmem:[#allocation2 + $0xe0] sm:$0xff] %v6895
        %6904 = vst [vmem:[#allocation2 + $0xe8] sm:$0xff] %v6896
        %6905 = vst [vmem:[#allocation2 + $0xf0] sm:$0xff] %v6897
        %6906 = vst [vmem:[#allocation2 + $0xf8] sm:$0xff] %v6898
        %s6907 = scalar_lea.vmem %s9, 1
        %v6908 = vld [vmem:[%s6907] sm:$0x1]
        %s6909 = scalar_lea.vmem %s10, 1
        %v6910 = vld [vmem:[%s6909] sm:$0x1]
        %v6911 = vld [vmem:[#allocation2] sm:$0xff]
        %v6912 = vld [vmem:[#allocation2 + $0x8] sm:$0xff]
        %v6913 = vld [vmem:[#allocation2 + $0x10] sm:$0xff]
        %v6914 = vld [vmem:[#allocation2 + $0x18] sm:$0xff]
        %v6915 = vld [vmem:[#allocation2 + $0x20] sm:$0xff]
        %v6916 = vld [vmem:[#allocation2 + $0x28] sm:$0xff]
        %v6917 = vld [vmem:[#allocation2 + $0x30] sm:$0xff]
        %v6918 = vld [vmem:[#allocation2 + $0x38] sm:$0xff]
        %v6919 = vld [vmem:[#allocation2 + $0x40] sm:$0xff]
        %v6920 = vld [vmem:[#allocation2 + $0x48] sm:$0xff]
        %v6921 = vld [vmem:[#allocation2 + $0x50] sm:$0xff]
        %v6922 = vld [vmem:[#allocation2 + $0x58] sm:$0xff]
        %v6923 = vld [vmem:[#allocation2 + $0x60] sm:$0xff]
        %v6924 = vld [vmem:[#allocation2 + $0x68] sm:$0xff]
        %v6925 = vld [vmem:[#allocation2 + $0x70] sm:$0xff]
        %v6926 = vld [vmem:[#allocation2 + $0x78] sm:$0xff]
        %6927 = vadd.xlane.f32.xlu0 %v6911
        %v6928 = vpop.xlane.xlu0 %6927
        %6929 = vadd.xlane.f32.xlu0 %v6912
        %v6930 = vpop.xlane.xlu0 %6929
        %6931 = vadd.xlane.f32.xlu0 %v6913
        %v6932 = vpop.xlane.xlu0 %6931
        %6933 = vadd.xlane.f32.xlu0 %v6914
        %v6934 = vpop.xlane.xlu0 %6933
        %6935 = vadd.xlane.f32.xlu0 %v6915
        %v6936 = vpop.xlane.xlu0 %6935
        %6937 = vadd.xlane.f32.xlu0 %v6916
        %v6938 = vpop.xlane.xlu0 %6937
        %6939 = vadd.xlane.f32.xlu0 %v6917
        %v6940 = vpop.xlane.xlu0 %6939
        %6941 = vadd.xlane.f32.xlu0 %v6918
        %v6942 = vpop.xlane.xlu0 %6941
        %6943 = vadd.xlane.f32.xlu0 %v6919
        %v6944 = vpop.xlane.xlu0 %6943
        %6945 = vadd.xlane.f32.xlu0 %v6920
        %v6946 = vpop.xlane.xlu0 %6945
        %6947 = vadd.xlane.f32.xlu0 %v6921
        %v6948 = vpop.xlane.xlu0 %6947
        %6949 = vadd.xlane.f32.xlu0 %v6922
        %v6950 = vpop.xlane.xlu0 %6949
        %6951 = vadd.xlane.f32.xlu0 %v6923
        %v6952 = vpop.xlane.xlu0 %6951
        %6953 = vadd.xlane.f32.xlu0 %v6924
        %v6954 = vpop.xlane.xlu0 %6953
        %6955 = vadd.xlane.f32.xlu0 %v6925
        %v6956 = vpop.xlane.xlu0 %6955
        %6957 = vadd.xlane.f32.xlu0 %v6926
        %v6958 = vpop.xlane.xlu0 %6957
        %v6959 = vmul.f32 %v6928, %v977
        %v6960 = vmul.f32 %v6930, %v977
        %v6961 = vmul.f32 %v6932, %v977
        %v6962 = vmul.f32 %v6934, %v977
        %v6963 = vmul.f32 %v6936, %v977
        %v6964 = vmul.f32 %v6938, %v977
        %v6965 = vmul.f32 %v6940, %v977
        %v6966 = vmul.f32 %v6942, %v977
        %v6967 = vmul.f32 %v6944, %v977
        %v6968 = vmul.f32 %v6946, %v977
        %v6969 = vmul.f32 %v6948, %v977
        %v6970 = vmul.f32 %v6950, %v977
        %v6971 = vmul.f32 %v6952, %v977
        %v6972 = vmul.f32 %v6954, %v977
        %v6973 = vmul.f32 %v6956, %v977
        %v6974 = vmul.f32 %v6958, %v977
        %v6975 = vmul.f32 %v6911, %v6911
        %v6976 = vmul.f32 %v6912, %v6912
        %v6977 = vmul.f32 %v6913, %v6913
        %v6978 = vmul.f32 %v6914, %v6914
        %v6979 = vmul.f32 %v6915, %v6915
        %v6980 = vmul.f32 %v6916, %v6916
        %v6981 = vmul.f32 %v6917, %v6917
        %v6982 = vmul.f32 %v6918, %v6918
        %v6983 = vmul.f32 %v6919, %v6919
        %v6984 = vmul.f32 %v6920, %v6920
        %v6985 = vmul.f32 %v6921, %v6921
        %v6986 = vmul.f32 %v6922, %v6922
        %v6987 = vmul.f32 %v6923, %v6923
        %v6988 = vmul.f32 %v6924, %v6924
        %v6989 = vmul.f32 %v6925, %v6925
        %v6990 = vmul.f32 %v6926, %v6926
        %6991 = vadd.xlane.f32.xlu0 %v6975
        %v6992 = vpop.xlane.xlu0 %6991
        %6993 = vadd.xlane.f32.xlu0 %v6976
        %v6994 = vpop.xlane.xlu0 %6993
        %6995 = vadd.xlane.f32.xlu0 %v6977
        %v6996 = vpop.xlane.xlu0 %6995
        %6997 = vadd.xlane.f32.xlu0 %v6978
        %v6998 = vpop.xlane.xlu0 %6997
        %6999 = vadd.xlane.f32.xlu0 %v6979
        %v7000 = vpop.xlane.xlu0 %6999
        %7001 = vadd.xlane.f32.xlu0 %v6980
        %v7002 = vpop.xlane.xlu0 %7001
        %7003 = vadd.xlane.f32.xlu0 %v6981
        %v7004 = vpop.xlane.xlu0 %7003
        %7005 = vadd.xlane.f32.xlu0 %v6982
        %v7006 = vpop.xlane.xlu0 %7005
        %7007 = vadd.xlane.f32.xlu0 %v6983
        %v7008 = vpop.xlane.xlu0 %7007
        %7009 = vadd.xlane.f32.xlu0 %v6984
        %v7010 = vpop.xlane.xlu0 %7009
        %7011 = vadd.xlane.f32.xlu0 %v6985
        %v7012 = vpop.xlane.xlu0 %7011
        %7013 = vadd.xlane.f32.xlu0 %v6986
        %v7014 = vpop.xlane.xlu0 %7013
        %7015 = vadd.xlane.f32.xlu0 %v6987
        %v7016 = vpop.xlane.xlu0 %7015
        %7017 = vadd.xlane.f32.xlu0 %v6988
        %v7018 = vpop.xlane.xlu0 %7017
        %7019 = vadd.xlane.f32.xlu0 %v6989
        %v7020 = vpop.xlane.xlu0 %7019
        %7021 = vadd.xlane.f32.xlu0 %v6990
        %v7022 = vpop.xlane.xlu0 %7021
        %v7023 = vmul.f32 %v6992, %v977
        %v7024 = vmul.f32 %v6994, %v977
        %v7025 = vmul.f32 %v6996, %v977
        %v7026 = vmul.f32 %v6998, %v977
        %v7027 = vmul.f32 %v7000, %v977
        %v7028 = vmul.f32 %v7002, %v977
        %v7029 = vmul.f32 %v7004, %v977
        %v7030 = vmul.f32 %v7006, %v977
        %v7031 = vmul.f32 %v7008, %v977
        %v7032 = vmul.f32 %v7010, %v977
        %v7033 = vmul.f32 %v7012, %v977
        %v7034 = vmul.f32 %v7014, %v977
        %v7035 = vmul.f32 %v7016, %v977
        %v7036 = vmul.f32 %v7018, %v977
        %v7037 = vmul.f32 %v7020, %v977
        %v7038 = vmul.f32 %v7022, %v977
        %v7039 = vmul.f32 %v6959, %v6959
        %v7040 = vmul.f32 %v6960, %v6960
        %v7041 = vmul.f32 %v6961, %v6961
        %v7042 = vmul.f32 %v6962, %v6962
        %v7043 = vmul.f32 %v6963, %v6963
        %v7044 = vmul.f32 %v6964, %v6964
        %v7045 = vmul.f32 %v6965, %v6965
        %v7046 = vmul.f32 %v6966, %v6966
        %v7047 = vmul.f32 %v6967, %v6967
        %v7048 = vmul.f32 %v6968, %v6968
        %v7049 = vmul.f32 %v6969, %v6969
        %v7050 = vmul.f32 %v6970, %v6970
        %v7051 = vmul.f32 %v6971, %v6971
        %v7052 = vmul.f32 %v6972, %v6972
        %v7053 = vmul.f32 %v6973, %v6973
        %v7054 = vmul.f32 %v6974, %v6974
        %v7055 = vsub.f32 %v7023, %v7039
        %v7056 = vsub.f32 %v7024, %v7040
        %v7057 = vsub.f32 %v7025, %v7041
        %v7058 = vsub.f32 %v7026, %v7042
        %v7059 = vsub.f32 %v7027, %v7043
        %v7060 = vsub.f32 %v7028, %v7044
        %v7061 = vsub.f32 %v7029, %v7045
        %v7062 = vsub.f32 %v7030, %v7046
        %v7063 = vsub.f32 %v7031, %v7047
        %v7064 = vsub.f32 %v7032, %v7048
        %v7065 = vsub.f32 %v7033, %v7049
        %v7066 = vsub.f32 %v7034, %v7050
        %v7067 = vsub.f32 %v7035, %v7051
        %v7068 = vsub.f32 %v7036, %v7052
        %v7069 = vsub.f32 %v7037, %v7053
        %v7070 = vsub.f32 %v7038, %v7054
        %v7071 = vmax.f32 %v7055, 0.0
        %v7072 = vmax.f32 %v7056, 0.0
        %v7073 = vmax.f32 %v7057, 0.0
        %v7074 = vmax.f32 %v7058, 0.0
        %v7075 = vmax.f32 %v7059, 0.0
        %v7076 = vmax.f32 %v7060, 0.0
        %v7077 = vmax.f32 %v7061, 0.0
        %v7078 = vmax.f32 %v7062, 0.0
        %v7079 = vmax.f32 %v7063, 0.0
        %v7080 = vmax.f32 %v7064, 0.0
        %v7081 = vmax.f32 %v7065, 0.0
        %v7082 = vmax.f32 %v7066, 0.0
        %v7083 = vmax.f32 %v7067, 0.0
        %v7084 = vmax.f32 %v7068, 0.0
        %v7085 = vmax.f32 %v7069, 0.0
        %v7086 = vmax.f32 %v7070, 0.0
        %v7087 = vsub.f32 %v6911, %v6959
        %v7088 = vsub.f32 %v6912, %v6960
        %v7089 = vsub.f32 %v6913, %v6961
        %v7090 = vsub.f32 %v6914, %v6962
        %v7091 = vsub.f32 %v6915, %v6963
        %v7092 = vsub.f32 %v6916, %v6964
        %v7093 = vsub.f32 %v6917, %v6965
        %v7094 = vsub.f32 %v6918, %v6966
        %v7095 = vsub.f32 %v6919, %v6967
        %v7096 = vsub.f32 %v6920, %v6968
        %v7097 = vsub.f32 %v6921, %v6969
        %v7098 = vsub.f32 %v6922, %v6970
        %v7099 = vsub.f32 %v6923, %v6971
        %v7100 = vsub.f32 %v6924, %v6972
        %v7101 = vsub.f32 %v6925, %v6973
        %v7102 = vsub.f32 %v6926, %v6974
        %v7103 = vadd.f32 %v7071, 1e-05
        %v7104 = vadd.f32 %v7072, 1e-05
        %v7105 = vadd.f32 %v7073, 1e-05
        %v7106 = vadd.f32 %v7074, 1e-05
        %v7107 = vadd.f32 %v7075, 1e-05
        %v7108 = vadd.f32 %v7076, 1e-05
        %v7109 = vadd.f32 %v7077, 1e-05
        %v7110 = vadd.f32 %v7078, 1e-05
        %v7111 = vadd.f32 %v7079, 1e-05
        %v7112 = vadd.f32 %v7080, 1e-05
        %v7113 = vadd.f32 %v7081, 1e-05
        %v7114 = vadd.f32 %v7082, 1e-05
        %v7115 = vadd.f32 %v7083, 1e-05
        %v7116 = vadd.f32 %v7084, 1e-05
        %v7117 = vadd.f32 %v7085, 1e-05
        %v7118 = vadd.f32 %v7086, 1e-05
        %v7119 = vrsqrt.pop %v7103
        %v7120 = vrsqrt.pop %v7104
        %v7121 = vrsqrt.pop %v7105
        %v7122 = vrsqrt.pop %v7106
        %v7123 = vrsqrt.pop %v7107
        %v7124 = vrsqrt.pop %v7108
        %v7125 = vrsqrt.pop %v7109
        %v7126 = vrsqrt.pop %v7110
        %v7127 = vrsqrt.pop %v7111
        %v7128 = vrsqrt.pop %v7112
        %v7129 = vrsqrt.pop %v7113
        %v7130 = vrsqrt.pop %v7114
        %v7131 = vrsqrt.pop %v7115
        %v7132 = vrsqrt.pop %v7116
        %v7133 = vrsqrt.pop %v7117
        %v7134 = vrsqrt.pop %v7118
        %v7135 = vmul.f32 %v7087, %v7119
        %v7136 = vmul.f32 %v7088, %v7120
        %v7137 = vmul.f32 %v7089, %v7121
        %v7138 = vmul.f32 %v7090, %v7122
        %v7139 = vmul.f32 %v7091, %v7123
        %v7140 = vmul.f32 %v7092, %v7124
        %v7141 = vmul.f32 %v7093, %v7125
        %v7142 = vmul.f32 %v7094, %v7126
        %v7143 = vmul.f32 %v7095, %v7127
        %v7144 = vmul.f32 %v7096, %v7128
        %v7145 = vmul.f32 %v7097, %v7129
        %v7146 = vmul.f32 %v7098, %v7130
        %v7147 = vmul.f32 %v7099, %v7131
        %v7148 = vmul.f32 %v7100, %v7132
        %v7149 = vmul.f32 %v7101, %v7133
        %v7150 = vmul.f32 %v7102, %v7134
        %v7152 = vlaneseq
        %v7153 = vshrl.u32 %v7152, 7
        %v7154 = vsub.s32 0, %v7153
        %v7155 = vrot.slane %v6908, %v7154
        %v7157 = vmul.f32 %v7135, %v7155
        %v7158 = vmul.f32 %v7136, %v7155
        %v7159 = vmul.f32 %v7137, %v7155
        %v7160 = vmul.f32 %v7138, %v7155
        %v7161 = vmul.f32 %v7139, %v7155
        %v7162 = vmul.f32 %v7140, %v7155
        %v7163 = vmul.f32 %v7141, %v7155
        %v7164 = vmul.f32 %v7142, %v7155
        %v7165 = vmul.f32 %v7143, %v7155
        %v7166 = vmul.f32 %v7144, %v7155
        %v7167 = vmul.f32 %v7145, %v7155
        %v7168 = vmul.f32 %v7146, %v7155
        %v7169 = vmul.f32 %v7147, %v7155
        %v7170 = vmul.f32 %v7148, %v7155
        %v7171 = vmul.f32 %v7149, %v7155
        %v7172 = vmul.f32 %v7150, %v7155
        %v7174 = vlaneseq
        %v7175 = vshrl.u32 %v7174, 7
        %v7176 = vsub.s32 0, %v7175
        %v7177 = vrot.slane %v6910, %v7176
        %v7179 = vadd.f32 %v7157, %v7177
        %v7180 = vadd.f32 %v7158, %v7177
        %v7181 = vadd.f32 %v7159, %v7177
        %v7182 = vadd.f32 %v7160, %v7177
        %v7183 = vadd.f32 %v7161, %v7177
        %v7184 = vadd.f32 %v7162, %v7177
        %v7185 = vadd.f32 %v7163, %v7177
        %v7186 = vadd.f32 %v7164, %v7177
        %v7187 = vadd.f32 %v7165, %v7177
        %v7188 = vadd.f32 %v7166, %v7177
        %v7189 = vadd.f32 %v7167, %v7177
        %v7190 = vadd.f32 %v7168, %v7177
        %v7191 = vadd.f32 %v7169, %v7177
        %v7192 = vadd.f32 %v7170, %v7177
        %v7193 = vadd.f32 %v7171, %v7177
        %v7194 = vadd.f32 %v7172, %v7177
        %v7195 = vpack.c.bf16 %v7180, %v7179
        %v7196 = vpack.c.bf16 %v7182, %v7181
        %v7197 = vpack.c.bf16 %v7184, %v7183
        %v7198 = vpack.c.bf16 %v7186, %v7185
        %v7199 = vpack.c.bf16 %v7188, %v7187
        %v7200 = vpack.c.bf16 %v7190, %v7189
        %v7201 = vpack.c.bf16 %v7192, %v7191
        %v7202 = vpack.c.bf16 %v7194, %v7193
        %s7203 = scalar_lea.vmem %s11, 128
        %v7204 = vld [vmem:[%s7203] sm:$0xff]
        %v7205 = vld [vmem:[%s7203 + $0x8] sm:$0xff]
        %v7206 = vld [vmem:[%s7203 + $0x10] sm:$0xff]
        %v7207 = vld [vmem:[%s7203 + $0x18] sm:$0xff]
        %v7208 = vld [vmem:[%s7203 + $0x20] sm:$0xff]
        %v7209 = vld [vmem:[%s7203 + $0x28] sm:$0xff]
        %v7210 = vld [vmem:[%s7203 + $0x30] sm:$0xff]
        %v7211 = vld [vmem:[%s7203 + $0x38] sm:$0xff]
        %v7212 = vld [vmem:[%s7203 + $0x40] sm:$0xff]
        %v7213 = vld [vmem:[%s7203 + $0x48] sm:$0xff]
        %v7214 = vld [vmem:[%s7203 + $0x50] sm:$0xff]
        %v7215 = vld [vmem:[%s7203 + $0x58] sm:$0xff]
        %v7216 = vld [vmem:[%s7203 + $0x60] sm:$0xff]
        %v7217 = vld [vmem:[%s7203 + $0x68] sm:$0xff]
        %v7218 = vld [vmem:[%s7203 + $0x70] sm:$0xff]
        %v7219 = vld [vmem:[%s7203 + $0x78] sm:$0xff]
        %s7220 = scalar_lea.vmem %s12, 2
        %v7221 = vld [vmem:[%s7220] sm:$0x3]
        %v7223 = vlaneseq
        %v7224 = vshrl.u32 %v7223, 7
        %v7225 = vsub.s32 0, %v7224
        %v7226 = vrot.slane %v7221, %v7225
        %v7227 = vlaneseq
        %v7228 = vshrl.u32 %v7227, 7
        %v7229 = vsub.s32 1, %v7228
        %v7230 = vrot.slane %v7221, %v7229
        %v7249 = vunpack.c.l.b16 %v7204
        %v7250 = vunpack.c.h.b16 %v7204
        %v7251 = vunpack.c.l.b16 %v7205
        %v7252 = vunpack.c.h.b16 %v7205
        %v7253 = vunpack.c.l.b16 %v7206
        %v7254 = vunpack.c.h.b16 %v7206
        %v7255 = vunpack.c.l.b16 %v7207
        %v7256 = vunpack.c.h.b16 %v7207
        %v7257 = vunpack.c.l.b16 %v7208
        %v7258 = vunpack.c.h.b16 %v7208
        %v7259 = vunpack.c.l.b16 %v7209
        %v7260 = vunpack.c.h.b16 %v7209
        %v7261 = vunpack.c.l.b16 %v7210
        %v7262 = vunpack.c.h.b16 %v7210
        %v7263 = vunpack.c.l.b16 %v7211
        %v7264 = vunpack.c.h.b16 %v7211
        %v7265 = vunpack.c.l.b16 %v7212
        %v7266 = vunpack.c.h.b16 %v7212
        %v7267 = vunpack.c.l.b16 %v7213
        %v7268 = vunpack.c.h.b16 %v7213
        %v7269 = vunpack.c.l.b16 %v7214
        %v7270 = vunpack.c.h.b16 %v7214
        %v7271 = vunpack.c.l.b16 %v7215
        %v7272 = vunpack.c.h.b16 %v7215
        %v7273 = vunpack.c.l.b16 %v7216
        %v7274 = vunpack.c.h.b16 %v7216
        %v7275 = vunpack.c.l.b16 %v7217
        %v7276 = vunpack.c.h.b16 %v7217
        %v7277 = vunpack.c.l.b16 %v7218
        %v7278 = vunpack.c.h.b16 %v7218
        %v7279 = vunpack.c.l.b16 %v7219
        %v7280 = vunpack.c.h.b16 %v7219
        %v7281 = vpack.c.b16 %v7251, %v7249
        %v7282 = vpack.c.b16 %v7252, %v7250
        %v7283 = vpack.c.b16 %v7255, %v7253
        %v7284 = vpack.c.b16 %v7256, %v7254
        %v7285 = vpack.c.b16 %v7259, %v7257
        %v7286 = vpack.c.b16 %v7260, %v7258
        %v7287 = vpack.c.b16 %v7263, %v7261
        %v7288 = vpack.c.b16 %v7264, %v7262
        %v7289 = vpack.c.b16 %v7267, %v7265
        %v7290 = vpack.c.b16 %v7268, %v7266
        %v7291 = vpack.c.b16 %v7271, %v7269
        %v7292 = vpack.c.b16 %v7272, %v7270
        %v7293 = vpack.c.b16 %v7275, %v7273
        %v7294 = vpack.c.b16 %v7276, %v7274
        %v7295 = vpack.c.b16 %v7279, %v7277
        %v7296 = vpack.c.b16 %v7280, %v7278
        %7313 = vmatprep.subr.bf16.mxu0 %v7282
        %7314 = vmatpush1.bf16.msra.mxu0 %v7281
        %7315 = vmatprep.subr.bf16.mxu0 %v7284
        %7316 = vmatpush1.bf16.msra.mxu0 %v7283
        %7317 = vmatprep.subr.bf16.mxu0 %v7286
        %7318 = vmatpush1.bf16.msra.mxu0 %v7285
        %7319 = vmatprep.subr.bf16.mxu0 %v7288
        %7320 = vmatpush1.bf16.msra.mxu0 %v7287
        %7321 = vmatprep.subr.bf16.mxu0 %v7290
        %7322 = vmatpush1.bf16.msra.mxu0 %v7289
        %7323 = vmatprep.subr.bf16.mxu0 %v7292
        %7324 = vmatpush1.bf16.msra.mxu0 %v7291
        %7325 = vmatprep.subr.bf16.mxu0 %v7294
        %7326 = vmatpush1.bf16.msra.mxu0 %v7293
        %7327 = vmatprep.subr.bf16.mxu0 %v7296
        %7328 = vmatpush1.bf16.msra.mxu0 %v7295
        %7329 = vmatprep.subr.bf16.mxu0 0
        %7330 = vmatpush1.bf16.msra.mxu0 0
        %7331 = vmatprep.subr.bf16.mxu0 0
        %7332 = vmatpush1.bf16.msra.mxu0 0
        %7333 = vmatprep.subr.bf16.mxu0 0
        %7334 = vmatpush1.bf16.msra.mxu0 0
        %7335 = vmatprep.subr.bf16.mxu0 0
        %7336 = vmatpush1.bf16.msra.mxu0 0
        %7337 = vmatprep.subr.bf16.mxu0 0
        %7338 = vmatpush1.bf16.msra.mxu0 0
        %7339 = vmatprep.subr.bf16.mxu0 0
        %7340 = vmatpush1.bf16.msra.mxu0 0
        %7341 = vmatprep.subr.bf16.mxu0 0
        %7342 = vmatpush1.bf16.msra.mxu0 0
        %7343 = vmatprep.subr.bf16.mxu0 0
        %7344 = vmatpush1.bf16.msra.mxu0 0
        %7345 = vmatprep.mubr.bf16.mxu0 0
        %7346 = vmatmul.mubr.bf16.gmra.mrb[0].mxu0 %v7195
        %v7347 = vpop.f32.mrb[0].mxu0
        %v7348 = vadd.f32 %v7226, %v7347
        %v7349 = vpop.f32.mrb[0].mxu0
        %v7350 = vadd.f32 %v7230, %v7349
        %v7351 = vpop.f32.mrb[0].mxu0
        %v7352 = vadd.f32 %v7226, %v7351
        %v7353 = vpop.f32.mrb[0].mxu0
        %v7354 = vadd.f32 %v7230, %v7353
        %7355 = vmatprep.mubr.bf16.mxu0 0
        %7356 = vmatmul.mubr.bf16.gmra.mrb[0].mxu0 %v7196
        %v7357 = vpop.f32.mrb[0].mxu0
        %v7358 = vadd.f32 %v7226, %v7357
        %v7359 = vpop.f32.mrb[0].mxu0
        %v7360 = vadd.f32 %v7230, %v7359
        %v7361 = vpop.f32.mrb[0].mxu0
        %v7362 = vadd.f32 %v7226, %v7361
        %v7363 = vpop.f32.mrb[0].mxu0
        %v7364 = vadd.f32 %v7230, %v7363
        %7365 = vmatprep.mubr.bf16.mxu0 0
        %7366 = vmatmul.mubr.bf16.gmra.mrb[0].mxu0 %v7197
        %v7367 = vpop.f32.mrb[0].mxu0
        %v7368 = vadd.f32 %v7226, %v7367
        %v7369 = vpop.f32.mrb[0].mxu0
        %v7370 = vadd.f32 %v7230, %v7369
        %v7371 = vpop.f32.mrb[0].mxu0
        %v7372 = vadd.f32 %v7226, %v7371
        %v7373 = vpop.f32.mrb[0].mxu0
        %v7374 = vadd.f32 %v7230, %v7373
        %7375 = vmatprep.mubr.bf16.mxu0 0
        %7376 = vmatmul.mubr.bf16.gmra.mrb[0].mxu0 %v7198
        %v7377 = vpop.f32.mrb[0].mxu0
        %v7378 = vadd.f32 %v7226, %v7377
        %v7379 = vpop.f32.mrb[0].mxu0
        %v7380 = vadd.f32 %v7230, %v7379
        %v7381 = vpop.f32.mrb[0].mxu0
        %v7382 = vadd.f32 %v7226, %v7381
        %v7383 = vpop.f32.mrb[0].mxu0
        %v7384 = vadd.f32 %v7230, %v7383
        %7385 = vmatprep.mubr.bf16.mxu0 0
        %7386 = vmatmul.mubr.bf16.gmra.mrb[0].mxu0 %v7199
        %v7387 = vpop.f32.mrb[0].mxu0
        %v7388 = vadd.f32 %v7226, %v7387
        %v7389 = vpop.f32.mrb[0].mxu0
        %v7390 = vadd.f32 %v7230, %v7389
        %v7391 = vpop.f32.mrb[0].mxu0
        %v7392 = vadd.f32 %v7226, %v7391
        %v7393 = vpop.f32.mrb[0].mxu0
        %v7394 = vadd.f32 %v7230, %v7393
        %7395 = vmatprep.mubr.bf16.mxu0 0
        %7396 = vmatmul.mubr.bf16.gmra.mrb[0].mxu0 %v7200
        %v7397 = vpop.f32.mrb[0].mxu0
        %v7398 = vadd.f32 %v7226, %v7397
        %v7399 = vpop.f32.mrb[0].mxu0
        %v7400 = vadd.f32 %v7230, %v7399
        %v7401 = vpop.f32.mrb[0].mxu0
        %v7402 = vadd.f32 %v7226, %v7401
        %v7403 = vpop.f32.mrb[0].mxu0
        %v7404 = vadd.f32 %v7230, %v7403
        %7405 = vmatprep.mubr.bf16.mxu0 0
        %7406 = vmatmul.mubr.bf16.gmra.mrb[0].mxu0 %v7201
        %v7407 = vpop.f32.mrb[0].mxu0
        %v7408 = vadd.f32 %v7226, %v7407
        %v7409 = vpop.f32.mrb[0].mxu0
        %v7410 = vadd.f32 %v7230, %v7409
        %v7411 = vpop.f32.mrb[0].mxu0
        %v7412 = vadd.f32 %v7226, %v7411
        %v7413 = vpop.f32.mrb[0].mxu0
        %v7414 = vadd.f32 %v7230, %v7413
        %7415 = vmatprep.mubr.bf16.mxu0 0
        %7416 = vmatmul.mubr.bf16.gmra.mrb[0].mxu0 %v7202
        %v7417 = vpop.f32.mrb[0].mxu0
        %v7418 = vadd.f32 %v7226, %v7417
        %v7419 = vpop.f32.mrb[0].mxu0
        %v7420 = vadd.f32 %v7230, %v7419
        %v7421 = vpop.f32.mrb[0].mxu0
        %v7422 = vadd.f32 %v7226, %v7421
        %v7423 = vpop.f32.mrb[0].mxu0
        %v7424 = vadd.f32 %v7230, %v7423
        %7425 = vdwg.mxu0
        %v7426 = vmul.f32 %v7348, 0.5
        %v7427 = vmul.f32 %v7350, 0.5
        %v7428 = vmul.f32 %v7352, 0.5
        %v7429 = vmul.f32 %v7354, 0.5
        %v7430 = vmul.f32 %v7358, 0.5
        %v7431 = vmul.f32 %v7360, 0.5
        %v7432 = vmul.f32 %v7362, 0.5
        %v7433 = vmul.f32 %v7364, 0.5
        %v7434 = vmul.f32 %v7368, 0.5
        %v7435 = vmul.f32 %v7370, 0.5
        %v7436 = vmul.f32 %v7372, 0.5
        %v7437 = vmul.f32 %v7374, 0.5
        %v7438 = vmul.f32 %v7378, 0.5
        %v7439 = vmul.f32 %v7380, 0.5
        %v7440 = vmul.f32 %v7382, 0.5
        %v7441 = vmul.f32 %v7384, 0.5
        %v7442 = vmul.f32 %v7388, 0.5
        %v7443 = vmul.f32 %v7390, 0.5
        %v7444 = vmul.f32 %v7392, 0.5
        %v7445 = vmul.f32 %v7394, 0.5
        %v7446 = vmul.f32 %v7398, 0.5
        %v7447 = vmul.f32 %v7400, 0.5
        %v7448 = vmul.f32 %v7402, 0.5
        %v7449 = vmul.f32 %v7404, 0.5
        %v7450 = vmul.f32 %v7408, 0.5
        %v7451 = vmul.f32 %v7410, 0.5
        %v7452 = vmul.f32 %v7412, 0.5
        %v7453 = vmul.f32 %v7414, 0.5
        %v7454 = vmul.f32 %v7418, 0.5
        %v7455 = vmul.f32 %v7420, 0.5
        %v7456 = vmul.f32 %v7422, 0.5
        %v7457 = vmul.f32 %v7424, 0.5
        %v7458 = vmul.f32 %v7348, 0.044715
        %v7459 = vmul.f32 %v7350, 0.044715
        %v7460 = vmul.f32 %v7352, 0.044715
        %v7461 = vmul.f32 %v7354, 0.044715
        %v7462 = vmul.f32 %v7358, 0.044715
        %v7463 = vmul.f32 %v7360, 0.044715
        %v7464 = vmul.f32 %v7362, 0.044715
        %v7465 = vmul.f32 %v7364, 0.044715
        %v7466 = vmul.f32 %v7368, 0.044715
        %v7467 = vmul.f32 %v7370, 0.044715
        %v7468 = vmul.f32 %v7372, 0.044715
        %v7469 = vmul.f32 %v7374, 0.044715
        %v7470 = vmul.f32 %v7378, 0.044715
        %v7471 = vmul.f32 %v7380, 0.044715
        %v7472 = vmul.f32 %v7382, 0.044715
        %v7473 = vmul.f32 %v7384, 0.044715
        %v7474 = vmul.f32 %v7388, 0.044715
        %v7475 = vmul.f32 %v7390, 0.044715
        %v7476 = vmul.f32 %v7392, 0.044715
        %v7477 = vmul.f32 %v7394, 0.044715
        %v7478 = vmul.f32 %v7398, 0.044715
        %v7479 = vmul.f32 %v7400, 0.044715
        %v7480 = vmul.f32 %v7402, 0.044715
        %v7481 = vmul.f32 %v7404, 0.044715
        %v7482 = vmul.f32 %v7408, 0.044715
        %v7483 = vmul.f32 %v7410, 0.044715
        %v7484 = vmul.f32 %v7412, 0.044715
        %v7485 = vmul.f32 %v7414, 0.044715
        %v7486 = vmul.f32 %v7418, 0.044715
        %v7487 = vmul.f32 %v7420, 0.044715
        %v7488 = vmul.f32 %v7422, 0.044715
        %v7489 = vmul.f32 %v7424, 0.044715
        %v7490 = vmul.f32 %v7458, %v7348
        %v7491 = vmul.f32 %v7459, %v7350
        %v7492 = vmul.f32 %v7460, %v7352
        %v7493 = vmul.f32 %v7461, %v7354
        %v7494 = vmul.f32 %v7462, %v7358
        %v7495 = vmul.f32 %v7463, %v7360
        %v7496 = vmul.f32 %v7464, %v7362
        %v7497 = vmul.f32 %v7465, %v7364
        %v7498 = vmul.f32 %v7466, %v7368
        %v7499 = vmul.f32 %v7467, %v7370
        %v7500 = vmul.f32 %v7468, %v7372
        %v7501 = vmul.f32 %v7469, %v7374
        %v7502 = vmul.f32 %v7470, %v7378
        %v7503 = vmul.f32 %v7471, %v7380
        %v7504 = vmul.f32 %v7472, %v7382
        %v7505 = vmul.f32 %v7473, %v7384
        %v7506 = vmul.f32 %v7474, %v7388
        %v7507 = vmul.f32 %v7475, %v7390
        %v7508 = vmul.f32 %v7476, %v7392
        %v7509 = vmul.f32 %v7477, %v7394
        %v7510 = vmul.f32 %v7478, %v7398
        %v7511 = vmul.f32 %v7479, %v7400
        %v7512 = vmul.f32 %v7480, %v7402
        %v7513 = vmul.f32 %v7481, %v7404
        %v7514 = vmul.f32 %v7482, %v7408
        %v7515 = vmul.f32 %v7483, %v7410
        %v7516 = vmul.f32 %v7484, %v7412
        %v7517 = vmul.f32 %v7485, %v7414
        %v7518 = vmul.f32 %v7486, %v7418
        %v7519 = vmul.f32 %v7487, %v7420
        %v7520 = vmul.f32 %v7488, %v7422
        %v7521 = vmul.f32 %v7489, %v7424
        %v7522 = vmul.f32 %v7490, %v7348
        %v7523 = vmul.f32 %v7491, %v7350
        %v7524 = vmul.f32 %v7492, %v7352
        %v7525 = vmul.f32 %v7493, %v7354
        %v7526 = vmul.f32 %v7494, %v7358
        %v7527 = vmul.f32 %v7495, %v7360
        %v7528 = vmul.f32 %v7496, %v7362
        %v7529 = vmul.f32 %v7497, %v7364
        %v7530 = vmul.f32 %v7498, %v7368
        %v7531 = vmul.f32 %v7499, %v7370
        %v7532 = vmul.f32 %v7500, %v7372
        %v7533 = vmul.f32 %v7501, %v7374
        %v7534 = vmul.f32 %v7502, %v7378
        %v7535 = vmul.f32 %v7503, %v7380
        %v7536 = vmul.f32 %v7504, %v7382
        %v7537 = vmul.f32 %v7505, %v7384
        %v7538 = vmul.f32 %v7506, %v7388
        %v7539 = vmul.f32 %v7507, %v7390
        %v7540 = vmul.f32 %v7508, %v7392
        %v7541 = vmul.f32 %v7509, %v7394
        %v7542 = vmul.f32 %v7510, %v7398
        %v7543 = vmul.f32 %v7511, %v7400
        %v7544 = vmul.f32 %v7512, %v7402
        %v7545 = vmul.f32 %v7513, %v7404
        %v7546 = vmul.f32 %v7514, %v7408
        %v7547 = vmul.f32 %v7515, %v7410
        %v7548 = vmul.f32 %v7516, %v7412
        %v7549 = vmul.f32 %v7517, %v7414
        %v7550 = vmul.f32 %v7518, %v7418
        %v7551 = vmul.f32 %v7519, %v7420
        %v7552 = vmul.f32 %v7520, %v7422
        %v7553 = vmul.f32 %v7521, %v7424
        %v7554 = vadd.f32 %v7348, %v7522
        %v7555 = vadd.f32 %v7350, %v7523
        %v7556 = vadd.f32 %v7352, %v7524
        %v7557 = vadd.f32 %v7354, %v7525
        %v7558 = vadd.f32 %v7358, %v7526
        %v7559 = vadd.f32 %v7360, %v7527
        %v7560 = vadd.f32 %v7362, %v7528
        %v7561 = vadd.f32 %v7364, %v7529
        %v7562 = vadd.f32 %v7368, %v7530
        %v7563 = vadd.f32 %v7370, %v7531
        %v7564 = vadd.f32 %v7372, %v7532
        %v7565 = vadd.f32 %v7374, %v7533
        %v7566 = vadd.f32 %v7378, %v7534
        %v7567 = vadd.f32 %v7380, %v7535
        %v7568 = vadd.f32 %v7382, %v7536
        %v7569 = vadd.f32 %v7384, %v7537
        %v7570 = vadd.f32 %v7388, %v7538
        %v7571 = vadd.f32 %v7390, %v7539
        %v7572 = vadd.f32 %v7392, %v7540
        %v7573 = vadd.f32 %v7394, %v7541
        %v7574 = vadd.f32 %v7398, %v7542
        %v7575 = vadd.f32 %v7400, %v7543
        %v7576 = vadd.f32 %v7402, %v7544
        %v7577 = vadd.f32 %v7404, %v7545
        %v7578 = vadd.f32 %v7408, %v7546
        %v7579 = vadd.f32 %v7410, %v7547
        %v7580 = vadd.f32 %v7412, %v7548
        %v7581 = vadd.f32 %v7414, %v7549
        %v7582 = vadd.f32 %v7418, %v7550
        %v7583 = vadd.f32 %v7420, %v7551
        %v7584 = vadd.f32 %v7422, %v7552
        %v7585 = vadd.f32 %v7424, %v7553
        %v7586 = vmul.f32 %v7554, 0.7978846
        %v7587 = vmul.f32 %v7555, 0.7978846
        %v7588 = vmul.f32 %v7556, 0.7978846
        %v7589 = vmul.f32 %v7557, 0.7978846
        %v7590 = vmul.f32 %v7558, 0.7978846
        %v7591 = vmul.f32 %v7559, 0.7978846
        %v7592 = vmul.f32 %v7560, 0.7978846
        %v7593 = vmul.f32 %v7561, 0.7978846
        %v7594 = vmul.f32 %v7562, 0.7978846
        %v7595 = vmul.f32 %v7563, 0.7978846
        %v7596 = vmul.f32 %v7564, 0.7978846
        %v7597 = vmul.f32 %v7565, 0.7978846
        %v7598 = vmul.f32 %v7566, 0.7978846
        %v7599 = vmul.f32 %v7567, 0.7978846
        %v7600 = vmul.f32 %v7568, 0.7978846
        %v7601 = vmul.f32 %v7569, 0.7978846
        %v7602 = vmul.f32 %v7570, 0.7978846
        %v7603 = vmul.f32 %v7571, 0.7978846
        %v7604 = vmul.f32 %v7572, 0.7978846
        %v7605 = vmul.f32 %v7573, 0.7978846
        %v7606 = vmul.f32 %v7574, 0.7978846
        %v7607 = vmul.f32 %v7575, 0.7978846
        %v7608 = vmul.f32 %v7576, 0.7978846
        %v7609 = vmul.f32 %v7577, 0.7978846
        %v7610 = vmul.f32 %v7578, 0.7978846
        %v7611 = vmul.f32 %v7579, 0.7978846
        %v7612 = vmul.f32 %v7580, 0.7978846
        %v7613 = vmul.f32 %v7581, 0.7978846
        %v7614 = vmul.f32 %v7582, 0.7978846
        %v7615 = vmul.f32 %v7583, 0.7978846
        %v7616 = vmul.f32 %v7584, 0.7978846
        %v7617 = vmul.f32 %v7585, 0.7978846
        %v7618 = vtanh.pop %v7586
        %v7619 = vtanh.pop %v7587
        %v7620 = vtanh.pop %v7588
        %v7621 = vtanh.pop %v7589
        %v7622 = vtanh.pop %v7590
        %v7623 = vtanh.pop %v7591
        %v7624 = vtanh.pop %v7592
        %v7625 = vtanh.pop %v7593
        %v7626 = vtanh.pop %v7594
        %v7627 = vtanh.pop %v7595
        %v7628 = vtanh.pop %v7596
        %v7629 = vtanh.pop %v7597
        %v7630 = vtanh.pop %v7598
        %v7631 = vtanh.pop %v7599
        %v7632 = vtanh.pop %v7600
        %v7633 = vtanh.pop %v7601
        %v7634 = vtanh.pop %v7602
        %v7635 = vtanh.pop %v7603
        %v7636 = vtanh.pop %v7604
        %v7637 = vtanh.pop %v7605
        %v7638 = vtanh.pop %v7606
        %v7639 = vtanh.pop %v7607
        %v7640 = vtanh.pop %v7608
        %v7641 = vtanh.pop %v7609
        %v7642 = vtanh.pop %v7610
        %v7643 = vtanh.pop %v7611
        %v7644 = vtanh.pop %v7612
        %v7645 = vtanh.pop %v7613
        %v7646 = vtanh.pop %v7614
        %v7647 = vtanh.pop %v7615
        %v7648 = vtanh.pop %v7616
        %v7649 = vtanh.pop %v7617
        %v7650 = vadd.f32 %v7618, 1.0
        %v7651 = vadd.f32 %v7619, 1.0
        %v7652 = vadd.f32 %v7620, 1.0
        %v7653 = vadd.f32 %v7621, 1.0
        %v7654 = vadd.f32 %v7622, 1.0
        %v7655 = vadd.f32 %v7623, 1.0
        %v7656 = vadd.f32 %v7624, 1.0
        %v7657 = vadd.f32 %v7625, 1.0
        %v7658 = vadd.f32 %v7626, 1.0
        %v7659 = vadd.f32 %v7627, 1.0
        %v7660 = vadd.f32 %v7628, 1.0
        %v7661 = vadd.f32 %v7629, 1.0
        %v7662 = vadd.f32 %v7630, 1.0
        %v7663 = vadd.f32 %v7631, 1.0
        %v7664 = vadd.f32 %v7632, 1.0
        %v7665 = vadd.f32 %v7633, 1.0
        %v7666 = vadd.f32 %v7634, 1.0
        %v7667 = vadd.f32 %v7635, 1.0
        %v7668 = vadd.f32 %v7636, 1.0
        %v7669 = vadd.f32 %v7637, 1.0
        %v7670 = vadd.f32 %v7638, 1.0
        %v7671 = vadd.f32 %v7639, 1.0
        %v7672 = vadd.f32 %v7640, 1.0
        %v7673 = vadd.f32 %v7641, 1.0
        %v7674 = vadd.f32 %v7642, 1.0
        %v7675 = vadd.f32 %v7643, 1.0
        %v7676 = vadd.f32 %v7644, 1.0
        %v7677 = vadd.f32 %v7645, 1.0
        %v7678 = vadd.f32 %v7646, 1.0
        %v7679 = vadd.f32 %v7647, 1.0
        %v7680 = vadd.f32 %v7648, 1.0
        %v7681 = vadd.f32 %v7649, 1.0
        %v7682 = vmul.f32 %v7426, %v7650
        %v7683 = vmul.f32 %v7427, %v7651
        %v7684 = vmul.f32 %v7428, %v7652
        %v7685 = vmul.f32 %v7429, %v7653
        %v7686 = vmul.f32 %v7430, %v7654
        %v7687 = vmul.f32 %v7431, %v7655
        %v7688 = vmul.f32 %v7432, %v7656
        %v7689 = vmul.f32 %v7433, %v7657
        %v7690 = vmul.f32 %v7434, %v7658
        %v7691 = vmul.f32 %v7435, %v7659
        %v7692 = vmul.f32 %v7436, %v7660
        %v7693 = vmul.f32 %v7437, %v7661
        %v7694 = vmul.f32 %v7438, %v7662
        %v7695 = vmul.f32 %v7439, %v7663
        %v7696 = vmul.f32 %v7440, %v7664
        %v7697 = vmul.f32 %v7441, %v7665
        %v7698 = vmul.f32 %v7442, %v7666
        %v7699 = vmul.f32 %v7443, %v7667
        %v7700 = vmul.f32 %v7444, %v7668
        %v7701 = vmul.f32 %v7445, %v7669
        %v7702 = vmul.f32 %v7446, %v7670
        %v7703 = vmul.f32 %v7447, %v7671
        %v7704 = vmul.f32 %v7448, %v7672
        %v7705 = vmul.f32 %v7449, %v7673
        %v7706 = vmul.f32 %v7450, %v7674
        %v7707 = vmul.f32 %v7451, %v7675
        %v7708 = vmul.f32 %v7452, %v7676
        %v7709 = vmul.f32 %v7453, %v7677
        %v7710 = vmul.f32 %v7454, %v7678
        %v7711 = vmul.f32 %v7455, %v7679
        %v7712 = vmul.f32 %v7456, %v7680
        %v7713 = vmul.f32 %v7457, %v7681
        %v7714 = vpack.c.bf16 %v7684, %v7682
        %v7715 = vpack.c.bf16 %v7685, %v7683
        %v7716 = vpack.c.bf16 %v7688, %v7686
        %v7717 = vpack.c.bf16 %v7689, %v7687
        %v7718 = vpack.c.bf16 %v7692, %v7690
        %v7719 = vpack.c.bf16 %v7693, %v7691
        %v7720 = vpack.c.bf16 %v7696, %v7694
        %v7721 = vpack.c.bf16 %v7697, %v7695
        %v7722 = vpack.c.bf16 %v7700, %v7698
        %v7723 = vpack.c.bf16 %v7701, %v7699
        %v7724 = vpack.c.bf16 %v7704, %v7702
        %v7725 = vpack.c.bf16 %v7705, %v7703
        %v7726 = vpack.c.bf16 %v7708, %v7706
        %v7727 = vpack.c.bf16 %v7709, %v7707
        %v7728 = vpack.c.bf16 %v7712, %v7710
        %v7729 = vpack.c.bf16 %v7713, %v7711
        %s7730 = scalar_lea.vmem %s13, 128
        %v7731 = vld [vmem:[%s7730] sm:$0xf]
        %v7732 = vld [vmem:[%s7730 + $0x4] sm:$0xf]
        %v7733 = vld [vmem:[%s7730 + $0x8] sm:$0xf]
        %v7734 = vld [vmem:[%s7730 + $0xc] sm:$0xf]
        %v7735 = vld [vmem:[%s7730 + $0x10] sm:$0xf]
        %v7736 = vld [vmem:[%s7730 + $0x14] sm:$0xf]
        %v7737 = vld [vmem:[%s7730 + $0x18] sm:$0xf]
        %v7738 = vld [vmem:[%s7730 + $0x1c] sm:$0xf]
        %v7739 = vld [vmem:[%s7730 + $0x20] sm:$0xf]
        %v7740 = vld [vmem:[%s7730 + $0x24] sm:$0xf]
        %v7741 = vld [vmem:[%s7730 + $0x28] sm:$0xf]
        %v7742 = vld [vmem:[%s7730 + $0x2c] sm:$0xf]
        %v7743 = vld [vmem:[%s7730 + $0x30] sm:$0xf]
        %v7744 = vld [vmem:[%s7730 + $0x34] sm:$0xf]
        %v7745 = vld [vmem:[%s7730 + $0x38] sm:$0xf]
        %v7746 = vld [vmem:[%s7730 + $0x3c] sm:$0xf]
        %v7747 = vld [vmem:[%s7730 + $0x40] sm:$0xf]
        %v7748 = vld [vmem:[%s7730 + $0x44] sm:$0xf]
        %v7749 = vld [vmem:[%s7730 + $0x48] sm:$0xf]
        %v7750 = vld [vmem:[%s7730 + $0x4c] sm:$0xf]
        %v7751 = vld [vmem:[%s7730 + $0x50] sm:$0xf]
        %v7752 = vld [vmem:[%s7730 + $0x54] sm:$0xf]
        %v7753 = vld [vmem:[%s7730 + $0x58] sm:$0xf]
        %v7754 = vld [vmem:[%s7730 + $0x5c] sm:$0xf]
        %v7755 = vld [vmem:[%s7730 + $0x60] sm:$0xf]
        %v7756 = vld [vmem:[%s7730 + $0x64] sm:$0xf]
        %v7757 = vld [vmem:[%s7730 + $0x68] sm:$0xf]
        %v7758 = vld [vmem:[%s7730 + $0x6c] sm:$0xf]
        %v7759 = vld [vmem:[%s7730 + $0x70] sm:$0xf]
        %v7760 = vld [vmem:[%s7730 + $0x74] sm:$0xf]
        %v7761 = vld [vmem:[%s7730 + $0x78] sm:$0xf]
        %v7762 = vld [vmem:[%s7730 + $0x7c] sm:$0xf]
        %s7763 = scalar_lea.vmem %s14, 1
        %v7764 = vld [vmem:[%s7763] sm:$0x1]
        %v7766 = vlaneseq
        %v7767 = vshrl.u32 %v7766, 7
        %v7768 = vsub.s32 0, %v7767
        %v7769 = vrot.slane %v7764, %v7768
        %v7803 = vunpack.c.l.b16 %v7731
        %v7804 = vunpack.c.l.b16 %v7732
        %v7805 = vunpack.c.l.b16 %v7733
        %v7806 = vunpack.c.l.b16 %v7734
        %v7807 = vunpack.c.l.b16 %v7735
        %v7808 = vunpack.c.l.b16 %v7736
        %v7809 = vunpack.c.l.b16 %v7737
        %v7810 = vunpack.c.l.b16 %v7738
        %v7811 = vunpack.c.l.b16 %v7739
        %v7812 = vunpack.c.l.b16 %v7740
        %v7813 = vunpack.c.l.b16 %v7741
        %v7814 = vunpack.c.l.b16 %v7742
        %v7815 = vunpack.c.l.b16 %v7743
        %v7816 = vunpack.c.l.b16 %v7744
        %v7817 = vunpack.c.l.b16 %v7745
        %v7818 = vunpack.c.l.b16 %v7746
        %v7819 = vunpack.c.l.b16 %v7747
        %v7820 = vunpack.c.l.b16 %v7748
        %v7821 = vunpack.c.l.b16 %v7749
        %v7822 = vunpack.c.l.b16 %v7750
        %v7823 = vunpack.c.l.b16 %v7751
        %v7824 = vunpack.c.l.b16 %v7752
        %v7825 = vunpack.c.l.b16 %v7753
        %v7826 = vunpack.c.l.b16 %v7754
        %v7827 = vunpack.c.l.b16 %v7755
        %v7828 = vunpack.c.l.b16 %v7756
        %v7829 = vunpack.c.l.b16 %v7757
        %v7830 = vunpack.c.l.b16 %v7758
        %v7831 = vunpack.c.l.b16 %v7759
        %v7832 = vunpack.c.l.b16 %v7760
        %v7833 = vunpack.c.l.b16 %v7761
        %v7834 = vunpack.c.l.b16 %v7762
        %v7835 = vpack.c.b16 %v7804, %v7803
        %v7836 = vpack.c.b16 %v7806, %v7805
        %v7837 = vpack.c.b16 %v7808, %v7807
        %v7838 = vpack.c.b16 %v7810, %v7809
        %v7839 = vpack.c.b16 %v7812, %v7811
        %v7840 = vpack.c.b16 %v7814, %v7813
        %v7841 = vpack.c.b16 %v7816, %v7815
        %v7842 = vpack.c.b16 %v7818, %v7817
        %v7843 = vpack.c.b16 %v7820, %v7819
        %v7844 = vpack.c.b16 %v7822, %v7821
        %v7845 = vpack.c.b16 %v7824, %v7823
        %v7846 = vpack.c.b16 %v7826, %v7825
        %v7847 = vpack.c.b16 %v7828, %v7827
        %v7848 = vpack.c.b16 %v7830, %v7829
        %v7849 = vpack.c.b16 %v7832, %v7831
        %v7850 = vpack.c.b16 %v7834, %v7833
        %7867 = vmatprep.subr.bf16.mxu0 0
        %7868 = vmatpush1.bf16.msra.mxu0 %v7835
        %7869 = vmatprep.subr.bf16.mxu0 0
        %7870 = vmatpush1.bf16.msra.mxu0 %v7836
        %7871 = vmatprep.subr.bf16.mxu0 0
        %7872 = vmatpush1.bf16.msra.mxu0 %v7837
        %7873 = vmatprep.subr.bf16.mxu0 0
        %7874 = vmatpush1.bf16.msra.mxu0 %v7838
        %7875 = vmatprep.subr.bf16.mxu0 0
        %7876 = vmatpush1.bf16.msra.mxu0 %v7839
        %7877 = vmatprep.subr.bf16.mxu0 0
        %7878 = vmatpush1.bf16.msra.mxu0 %v7840
        %7879 = vmatprep.subr.bf16.mxu0 0
        %7880 = vmatpush1.bf16.msra.mxu0 %v7841
        %7881 = vmatprep.subr.bf16.mxu0 0
        %7882 = vmatpush1.bf16.msra.mxu0 %v7842
        %7883 = vmatprep.subr.bf16.mxu0 0
        %7884 = vmatpush1.bf16.msra.mxu0 %v7843
        %7885 = vmatprep.subr.bf16.mxu0 0
        %7886 = vmatpush1.bf16.msra.mxu0 %v7844
        %7887 = vmatprep.subr.bf16.mxu0 0
        %7888 = vmatpush1.bf16.msra.mxu0 %v7845
        %7889 = vmatprep.subr.bf16.mxu0 0
        %7890 = vmatpush1.bf16.msra.mxu0 %v7846
        %7891 = vmatprep.subr.bf16.mxu0 0
        %7892 = vmatpush1.bf16.msra.mxu0 %v7847
        %7893 = vmatprep.subr.bf16.mxu0 0
        %7894 = vmatpush1.bf16.msra.mxu0 %v7848
        %7895 = vmatprep.subr.bf16.mxu0 0
        %7896 = vmatpush1.bf16.msra.mxu0 %v7849
        %7897 = vmatprep.subr.bf16.mxu0 0
        %7898 = vmatpush1.bf16.msra.mxu0 %v7850
        %7899 = vmatprep.mubr.bf16.mxu0 %v7715
        %7900 = vmatmul.mubr.bf16.gmra.mrb[0].mxu0 %v7714
        %v7901 = vpop.f32.mrb[0].mxu0
        %v7902 = vadd.f32 %v7769, %v7901
        %v7903 = vpop.f32.mrb[0].mxu0
        %v7904 = vpop.f32.mrb[0].mxu0
        %v7905 = vadd.f32 %v7769, %v7904
        %v7906 = vpop.f32.mrb[0].mxu0
        %7907 = vmatprep.mubr.bf16.mxu0 %v7717
        %7908 = vmatmul.mubr.bf16.gmra.mrb[0].mxu0 %v7716
        %v7909 = vpop.f32.mrb[0].mxu0
        %v7910 = vadd.f32 %v7769, %v7909
        %v7911 = vpop.f32.mrb[0].mxu0
        %v7912 = vpop.f32.mrb[0].mxu0
        %v7913 = vadd.f32 %v7769, %v7912
        %v7914 = vpop.f32.mrb[0].mxu0
        %7915 = vmatprep.mubr.bf16.mxu0 %v7719
        %7916 = vmatmul.mubr.bf16.gmra.mrb[0].mxu0 %v7718
        %v7917 = vpop.f32.mrb[0].mxu0
        %v7918 = vadd.f32 %v7769, %v7917
        %v7919 = vpop.f32.mrb[0].mxu0
        %v7920 = vpop.f32.mrb[0].mxu0
        %v7921 = vadd.f32 %v7769, %v7920
        %v7922 = vpop.f32.mrb[0].mxu0
        %7923 = vmatprep.mubr.bf16.mxu0 %v7721
        %7924 = vmatmul.mubr.bf16.gmra.mrb[0].mxu0 %v7720
        %v7925 = vpop.f32.mrb[0].mxu0
        %v7926 = vadd.f32 %v7769, %v7925
        %v7927 = vpop.f32.mrb[0].mxu0
        %v7928 = vpop.f32.mrb[0].mxu0
        %v7929 = vadd.f32 %v7769, %v7928
        %v7930 = vpop.f32.mrb[0].mxu0
        %7931 = vmatprep.mubr.bf16.mxu0 %v7723
        %7932 = vmatmul.mubr.bf16.gmra.mrb[0].mxu0 %v7722
        %v7933 = vpop.f32.mrb[0].mxu0
        %v7934 = vadd.f32 %v7769, %v7933
        %v7935 = vpop.f32.mrb[0].mxu0
        %v7936 = vpop.f32.mrb[0].mxu0
        %v7937 = vadd.f32 %v7769, %v7936
        %v7938 = vpop.f32.mrb[0].mxu0
        %7939 = vmatprep.mubr.bf16.mxu0 %v7725
        %7940 = vmatmul.mubr.bf16.gmra.mrb[0].mxu0 %v7724
        %v7941 = vpop.f32.mrb[0].mxu0
        %v7942 = vadd.f32 %v7769, %v7941
        %v7943 = vpop.f32.mrb[0].mxu0
        %v7944 = vpop.f32.mrb[0].mxu0
        %v7945 = vadd.f32 %v7769, %v7944
        %v7946 = vpop.f32.mrb[0].mxu0
        %7947 = vmatprep.mubr.bf16.mxu0 %v7727
        %7948 = vmatmul.mubr.bf16.gmra.mrb[0].mxu0 %v7726
        %v7949 = vpop.f32.mrb[0].mxu0
        %v7950 = vadd.f32 %v7769, %v7949
        %v7951 = vpop.f32.mrb[0].mxu0
        %v7952 = vpop.f32.mrb[0].mxu0
        %v7953 = vadd.f32 %v7769, %v7952
        %v7954 = vpop.f32.mrb[0].mxu0
        %7955 = vmatprep.mubr.bf16.mxu0 %v7729
        %7956 = vmatmul.mubr.bf16.gmra.mrb[0].mxu0 %v7728
        %v7957 = vpop.f32.mrb[0].mxu0
        %v7958 = vadd.f32 %v7769, %v7957
        %v7959 = vpop.f32.mrb[0].mxu0
        %v7960 = vpop.f32.mrb[0].mxu0
        %v7961 = vadd.f32 %v7769, %v7960
        %v7962 = vpop.f32.mrb[0].mxu0
        %7963 = vdwg.mxu0
        %v7964 = vadd.f32 %v7902, %v6911
        %v7965 = vadd.f32 %v7905, %v6912
        %v7966 = vadd.f32 %v7910, %v6913
        %v7967 = vadd.f32 %v7913, %v6914
        %v7968 = vadd.f32 %v7918, %v6915
        %v7969 = vadd.f32 %v7921, %v6916
        %v7970 = vadd.f32 %v7926, %v6917
        %v7971 = vadd.f32 %v7929, %v6918
        %v7972 = vadd.f32 %v7934, %v6919
        %v7973 = vadd.f32 %v7937, %v6920
        %v7974 = vadd.f32 %v7942, %v6921
        %v7975 = vadd.f32 %v7945, %v6922
        %v7976 = vadd.f32 %v7950, %v6923
        %v7977 = vadd.f32 %v7953, %v6924
        %v7978 = vadd.f32 %v7958, %v6925
        %v7979 = vadd.f32 %v7961, %v6926
        %7980 = vst [vmem:[#allocation2] sm:$0xff] %v7964
        %7981 = vst [vmem:[#allocation2 + $0x8] sm:$0xff] %v7965
        %7982 = vst [vmem:[#allocation2 + $0x10] sm:$0xff] %v7966
        %7983 = vst [vmem:[#allocation2 + $0x18] sm:$0xff] %v7967
        %7984 = vst [vmem:[#allocation2 + $0x20] sm:$0xff] %v7968
        %7985 = vst [vmem:[#allocation2 + $0x28] sm:$0xff] %v7969
        %7986 = vst [vmem:[#allocation2 + $0x30] sm:$0xff] %v7970
        %7987 = vst [vmem:[#allocation2 + $0x38] sm:$0xff] %v7971
        %7988 = vst [vmem:[#allocation2 + $0x40] sm:$0xff] %v7972
        %7989 = vst [vmem:[#allocation2 + $0x48] sm:$0xff] %v7973
        %7990 = vst [vmem:[#allocation2 + $0x50] sm:$0xff] %v7974
        %7991 = vst [vmem:[#allocation2 + $0x58] sm:$0xff] %v7975
        %7992 = vst [vmem:[#allocation2 + $0x60] sm:$0xff] %v7976
        %7993 = vst [vmem:[#allocation2 + $0x68] sm:$0xff] %v7977
        %7994 = vst [vmem:[#allocation2 + $0x70] sm:$0xff] %v7978
        %7995 = vst [vmem:[#allocation2 + $0x78] sm:$0xff] %v7979
        %v7996 = vld [vmem:[%s934] sm:$0xff]
        %v7997 = vld [vmem:[%s934 + $0x8] sm:$0xff]
        %v7998 = vld [vmem:[%s934 + $0x10] sm:$0xff]
        %v7999 = vld [vmem:[%s934 + $0x18] sm:$0xff]
        %v8000 = vld [vmem:[%s934 + $0x20] sm:$0xff]
        %v8001 = vld [vmem:[%s934 + $0x28] sm:$0xff]
        %v8002 = vld [vmem:[%s934 + $0x30] sm:$0xff]
        %v8003 = vld [vmem:[%s934 + $0x38] sm:$0xff]
        %v8004 = vld [vmem:[%s934 + $0x40] sm:$0xff]
        %v8005 = vld [vmem:[%s934 + $0x48] sm:$0xff]
        %v8006 = vld [vmem:[%s934 + $0x50] sm:$0xff]
        %v8007 = vld [vmem:[%s934 + $0x58] sm:$0xff]
        %v8008 = vld [vmem:[%s934 + $0x60] sm:$0xff]
        %v8009 = vld [vmem:[%s934 + $0x68] sm:$0xff]
        %v8010 = vld [vmem:[%s934 + $0x70] sm:$0xff]
        %v8011 = vld [vmem:[%s934 + $0x78] sm:$0xff]
        %8012 = vadd.xlane.f32.xlu0 %v7996
        %v8013 = vpop.xlane.xlu0 %8012
        %8014 = vadd.xlane.f32.xlu0 %v7997
        %v8015 = vpop.xlane.xlu0 %8014
        %8016 = vadd.xlane.f32.xlu0 %v7998
        %v8017 = vpop.xlane.xlu0 %8016
        %8018 = vadd.xlane.f32.xlu0 %v7999
        %v8019 = vpop.xlane.xlu0 %8018
        %8020 = vadd.xlane.f32.xlu0 %v8000
        %v8021 = vpop.xlane.xlu0 %8020
        %8022 = vadd.xlane.f32.xlu0 %v8001
        %v8023 = vpop.xlane.xlu0 %8022
        %8024 = vadd.xlane.f32.xlu0 %v8002
        %v8025 = vpop.xlane.xlu0 %8024
        %8026 = vadd.xlane.f32.xlu0 %v8003
        %v8027 = vpop.xlane.xlu0 %8026
        %8028 = vadd.xlane.f32.xlu0 %v8004
        %v8029 = vpop.xlane.xlu0 %8028
        %8030 = vadd.xlane.f32.xlu0 %v8005
        %v8031 = vpop.xlane.xlu0 %8030
        %8032 = vadd.xlane.f32.xlu0 %v8006
        %v8033 = vpop.xlane.xlu0 %8032
        %8034 = vadd.xlane.f32.xlu0 %v8007
        %v8035 = vpop.xlane.xlu0 %8034
        %8036 = vadd.xlane.f32.xlu0 %v8008
        %v8037 = vpop.xlane.xlu0 %8036
        %8038 = vadd.xlane.f32.xlu0 %v8009
        %v8039 = vpop.xlane.xlu0 %8038
        %8040 = vadd.xlane.f32.xlu0 %v8010
        %v8041 = vpop.xlane.xlu0 %8040
        %8042 = vadd.xlane.f32.xlu0 %v8011
        %v8043 = vpop.xlane.xlu0 %8042
        %v8044 = vmul.f32 %v8013, %v977
        %v8045 = vmul.f32 %v8015, %v977
        %v8046 = vmul.f32 %v8017, %v977
        %v8047 = vmul.f32 %v8019, %v977
        %v8048 = vmul.f32 %v8021, %v977
        %v8049 = vmul.f32 %v8023, %v977
        %v8050 = vmul.f32 %v8025, %v977
        %v8051 = vmul.f32 %v8027, %v977
        %v8052 = vmul.f32 %v8029, %v977
        %v8053 = vmul.f32 %v8031, %v977
        %v8054 = vmul.f32 %v8033, %v977
        %v8055 = vmul.f32 %v8035, %v977
        %v8056 = vmul.f32 %v8037, %v977
        %v8057 = vmul.f32 %v8039, %v977
        %v8058 = vmul.f32 %v8041, %v977
        %v8059 = vmul.f32 %v8043, %v977
        %v8060 = vmul.f32 %v7996, %v7996
        %v8061 = vmul.f32 %v7997, %v7997
        %v8062 = vmul.f32 %v7998, %v7998
        %v8063 = vmul.f32 %v7999, %v7999
        %v8064 = vmul.f32 %v8000, %v8000
        %v8065 = vmul.f32 %v8001, %v8001
        %v8066 = vmul.f32 %v8002, %v8002
        %v8067 = vmul.f32 %v8003, %v8003
        %v8068 = vmul.f32 %v8004, %v8004
        %v8069 = vmul.f32 %v8005, %v8005
        %v8070 = vmul.f32 %v8006, %v8006
        %v8071 = vmul.f32 %v8007, %v8007
        %v8072 = vmul.f32 %v8008, %v8008
        %v8073 = vmul.f32 %v8009, %v8009
        %v8074 = vmul.f32 %v8010, %v8010
        %v8075 = vmul.f32 %v8011, %v8011
        %8076 = vadd.xlane.f32.xlu0 %v8060
        %v8077 = vpop.xlane.xlu0 %8076
        %8078 = vadd.xlane.f32.xlu0 %v8061
        %v8079 = vpop.xlane.xlu0 %8078
        %8080 = vadd.xlane.f32.xlu0 %v8062
        %v8081 = vpop.xlane.xlu0 %8080
        %8082 = vadd.xlane.f32.xlu0 %v8063
        %v8083 = vpop.xlane.xlu0 %8082
        %8084 = vadd.xlane.f32.xlu0 %v8064
        %v8085 = vpop.xlane.xlu0 %8084
        %8086 = vadd.xlane.f32.xlu0 %v8065
        %v8087 = vpop.xlane.xlu0 %8086
        %8088 = vadd.xlane.f32.xlu0 %v8066
        %v8089 = vpop.xlane.xlu0 %8088
        %8090 = vadd.xlane.f32.xlu0 %v8067
        %v8091 = vpop.xlane.xlu0 %8090
        %8092 = vadd.xlane.f32.xlu0 %v8068
        %v8093 = vpop.xlane.xlu0 %8092
        %8094 = vadd.xlane.f32.xlu0 %v8069
        %v8095 = vpop.xlane.xlu0 %8094
        %8096 = vadd.xlane.f32.xlu0 %v8070
        %v8097 = vpop.xlane.xlu0 %8096
        %8098 = vadd.xlane.f32.xlu0 %v8071
        %v8099 = vpop.xlane.xlu0 %8098
        %8100 = vadd.xlane.f32.xlu0 %v8072
        %v8101 = vpop.xlane.xlu0 %8100
        %8102 = vadd.xlane.f32.xlu0 %v8073
        %v8103 = vpop.xlane.xlu0 %8102
        %8104 = vadd.xlane.f32.xlu0 %v8074
        %v8105 = vpop.xlane.xlu0 %8104
        %8106 = vadd.xlane.f32.xlu0 %v8075
        %v8107 = vpop.xlane.xlu0 %8106
        %v8108 = vmul.f32 %v8077, %v977
        %v8109 = vmul.f32 %v8079, %v977
        %v8110 = vmul.f32 %v8081, %v977
        %v8111 = vmul.f32 %v8083, %v977
        %v8112 = vmul.f32 %v8085, %v977
        %v8113 = vmul.f32 %v8087, %v977
        %v8114 = vmul.f32 %v8089, %v977
        %v8115 = vmul.f32 %v8091, %v977
        %v8116 = vmul.f32 %v8093, %v977
        %v8117 = vmul.f32 %v8095, %v977
        %v8118 = vmul.f32 %v8097, %v977
        %v8119 = vmul.f32 %v8099, %v977
        %v8120 = vmul.f32 %v8101, %v977
        %v8121 = vmul.f32 %v8103, %v977
        %v8122 = vmul.f32 %v8105, %v977
        %v8123 = vmul.f32 %v8107, %v977
        %v8124 = vmul.f32 %v8044, %v8044
        %v8125 = vmul.f32 %v8045, %v8045
        %v8126 = vmul.f32 %v8046, %v8046
        %v8127 = vmul.f32 %v8047, %v8047
        %v8128 = vmul.f32 %v8048, %v8048
        %v8129 = vmul.f32 %v8049, %v8049
        %v8130 = vmul.f32 %v8050, %v8050
        %v8131 = vmul.f32 %v8051, %v8051
        %v8132 = vmul.f32 %v8052, %v8052
        %v8133 = vmul.f32 %v8053, %v8053
        %v8134 = vmul.f32 %v8054, %v8054
        %v8135 = vmul.f32 %v8055, %v8055
        %v8136 = vmul.f32 %v8056, %v8056
        %v8137 = vmul.f32 %v8057, %v8057
        %v8138 = vmul.f32 %v8058, %v8058
        %v8139 = vmul.f32 %v8059, %v8059
        %v8140 = vsub.f32 %v8108, %v8124
        %v8141 = vsub.f32 %v8109, %v8125
        %v8142 = vsub.f32 %v8110, %v8126
        %v8143 = vsub.f32 %v8111, %v8127
        %v8144 = vsub.f32 %v8112, %v8128
        %v8145 = vsub.f32 %v8113, %v8129
        %v8146 = vsub.f32 %v8114, %v8130
        %v8147 = vsub.f32 %v8115, %v8131
        %v8148 = vsub.f32 %v8116, %v8132
        %v8149 = vsub.f32 %v8117, %v8133
        %v8150 = vsub.f32 %v8118, %v8134
        %v8151 = vsub.f32 %v8119, %v8135
        %v8152 = vsub.f32 %v8120, %v8136
        %v8153 = vsub.f32 %v8121, %v8137
        %v8154 = vsub.f32 %v8122, %v8138
        %v8155 = vsub.f32 %v8123, %v8139
        %v8156 = vmax.f32 %v8140, 0.0
        %v8157 = vmax.f32 %v8141, 0.0
        %v8158 = vmax.f32 %v8142, 0.0
        %v8159 = vmax.f32 %v8143, 0.0
        %v8160 = vmax.f32 %v8144, 0.0
        %v8161 = vmax.f32 %v8145, 0.0
        %v8162 = vmax.f32 %v8146, 0.0
        %v8163 = vmax.f32 %v8147, 0.0
        %v8164 = vmax.f32 %v8148, 0.0
        %v8165 = vmax.f32 %v8149, 0.0
        %v8166 = vmax.f32 %v8150, 0.0
        %v8167 = vmax.f32 %v8151, 0.0
        %v8168 = vmax.f32 %v8152, 0.0
        %v8169 = vmax.f32 %v8153, 0.0
        %v8170 = vmax.f32 %v8154, 0.0
        %v8171 = vmax.f32 %v8155, 0.0
        %v8172 = vsub.f32 %v7996, %v8044
        %v8173 = vsub.f32 %v7997, %v8045
        %v8174 = vsub.f32 %v7998, %v8046
        %v8175 = vsub.f32 %v7999, %v8047
        %v8176 = vsub.f32 %v8000, %v8048
        %v8177 = vsub.f32 %v8001, %v8049
        %v8178 = vsub.f32 %v8002, %v8050
        %v8179 = vsub.f32 %v8003, %v8051
        %v8180 = vsub.f32 %v8004, %v8052
        %v8181 = vsub.f32 %v8005, %v8053
        %v8182 = vsub.f32 %v8006, %v8054
        %v8183 = vsub.f32 %v8007, %v8055
        %v8184 = vsub.f32 %v8008, %v8056
        %v8185 = vsub.f32 %v8009, %v8057
        %v8186 = vsub.f32 %v8010, %v8058
        %v8187 = vsub.f32 %v8011, %v8059
        %v8188 = vadd.f32 %v8156, 1e-05
        %v8189 = vadd.f32 %v8157, 1e-05
        %v8190 = vadd.f32 %v8158, 1e-05
        %v8191 = vadd.f32 %v8159, 1e-05
        %v8192 = vadd.f32 %v8160, 1e-05
        %v8193 = vadd.f32 %v8161, 1e-05
        %v8194 = vadd.f32 %v8162, 1e-05
        %v8195 = vadd.f32 %v8163, 1e-05
        %v8196 = vadd.f32 %v8164, 1e-05
        %v8197 = vadd.f32 %v8165, 1e-05
        %v8198 = vadd.f32 %v8166, 1e-05
        %v8199 = vadd.f32 %v8167, 1e-05
        %v8200 = vadd.f32 %v8168, 1e-05
        %v8201 = vadd.f32 %v8169, 1e-05
        %v8202 = vadd.f32 %v8170, 1e-05
        %v8203 = vadd.f32 %v8171, 1e-05
        %v8204 = vrsqrt.pop %v8188
        %v8205 = vrsqrt.pop %v8189
        %v8206 = vrsqrt.pop %v8190
        %v8207 = vrsqrt.pop %v8191
        %v8208 = vrsqrt.pop %v8192
        %v8209 = vrsqrt.pop %v8193
        %v8210 = vrsqrt.pop %v8194
        %v8211 = vrsqrt.pop %v8195
        %v8212 = vrsqrt.pop %v8196
        %v8213 = vrsqrt.pop %v8197
        %v8214 = vrsqrt.pop %v8198
        %v8215 = vrsqrt.pop %v8199
        %v8216 = vrsqrt.pop %v8200
        %v8217 = vrsqrt.pop %v8201
        %v8218 = vrsqrt.pop %v8202
        %v8219 = vrsqrt.pop %v8203
        %v8220 = vmul.f32 %v8172, %v8204
        %v8221 = vmul.f32 %v8173, %v8205
        %v8222 = vmul.f32 %v8174, %v8206
        %v8223 = vmul.f32 %v8175, %v8207
        %v8224 = vmul.f32 %v8176, %v8208
        %v8225 = vmul.f32 %v8177, %v8209
        %v8226 = vmul.f32 %v8178, %v8210
        %v8227 = vmul.f32 %v8179, %v8211
        %v8228 = vmul.f32 %v8180, %v8212
        %v8229 = vmul.f32 %v8181, %v8213
        %v8230 = vmul.f32 %v8182, %v8214
        %v8231 = vmul.f32 %v8183, %v8215
        %v8232 = vmul.f32 %v8184, %v8216
        %v8233 = vmul.f32 %v8185, %v8217
        %v8234 = vmul.f32 %v8186, %v8218
        %v8235 = vmul.f32 %v8187, %v8219
        %v8236 = vmul.f32 %v8220, %v7155
        %v8237 = vmul.f32 %v8221, %v7155
        %v8238 = vmul.f32 %v8222, %v7155
        %v8239 = vmul.f32 %v8223, %v7155
        %v8240 = vmul.f32 %v8224, %v7155
        %v8241 = vmul.f32 %v8225, %v7155
        %v8242 = vmul.f32 %v8226, %v7155
        %v8243 = vmul.f32 %v8227, %v7155
        %v8244 = vmul.f32 %v8228, %v7155
        %v8245 = vmul.f32 %v8229, %v7155
        %v8246 = vmul.f32 %v8230, %v7155
        %v8247 = vmul.f32 %v8231, %v7155
        %v8248 = vmul.f32 %v8232, %v7155
        %v8249 = vmul.f32 %v8233, %v7155
        %v8250 = vmul.f32 %v8234, %v7155
        %v8251 = vmul.f32 %v8235, %v7155
        %v8252 = vadd.f32 %v8236, %v7177
        %v8253 = vadd.f32 %v8237, %v7177
        %v8254 = vadd.f32 %v8238, %v7177
        %v8255 = vadd.f32 %v8239, %v7177
        %v8256 = vadd.f32 %v8240, %v7177
        %v8257 = vadd.f32 %v8241, %v7177
        %v8258 = vadd.f32 %v8242, %v7177
        %v8259 = vadd.f32 %v8243, %v7177
        %v8260 = vadd.f32 %v8244, %v7177
        %v8261 = vadd.f32 %v8245, %v7177
        %v8262 = vadd.f32 %v8246, %v7177
        %v8263 = vadd.f32 %v8247, %v7177
        %v8264 = vadd.f32 %v8248, %v7177
        %v8265 = vadd.f32 %v8249, %v7177
        %v8266 = vadd.f32 %v8250, %v7177
        %v8267 = vadd.f32 %v8251, %v7177
        %v8268 = vpack.c.bf16 %v8253, %v8252
        %v8269 = vpack.c.bf16 %v8255, %v8254
        %v8270 = vpack.c.bf16 %v8257, %v8256
        %v8271 = vpack.c.bf16 %v8259, %v8258
        %v8272 = vpack.c.bf16 %v8261, %v8260
        %v8273 = vpack.c.bf16 %v8263, %v8262
        %v8274 = vpack.c.bf16 %v8265, %v8264
        %v8275 = vpack.c.bf16 %v8267, %v8266
        %v8276 = vld [vmem:[%s7203] sm:$0xff]
        %v8277 = vld [vmem:[%s7203 + $0x8] sm:$0xff]
        %v8278 = vld [vmem:[%s7203 + $0x10] sm:$0xff]
        %v8279 = vld [vmem:[%s7203 + $0x18] sm:$0xff]
        %v8280 = vld [vmem:[%s7203 + $0x20] sm:$0xff]
        %v8281 = vld [vmem:[%s7203 + $0x28] sm:$0xff]
        %v8282 = vld [vmem:[%s7203 + $0x30] sm:$0xff]
        %v8283 = vld [vmem:[%s7203 + $0x38] sm:$0xff]
        %v8284 = vld [vmem:[%s7203 + $0x40] sm:$0xff]
        %v8285 = vld [vmem:[%s7203 + $0x48] sm:$0xff]
        %v8286 = vld [vmem:[%s7203 + $0x50] sm:$0xff]
        %v8287 = vld [vmem:[%s7203 + $0x58] sm:$0xff]
        %v8288 = vld [vmem:[%s7203 + $0x60] sm:$0xff]
        %v8289 = vld [vmem:[%s7203 + $0x68] sm:$0xff]
        %v8290 = vld [vmem:[%s7203 + $0x70] sm:$0xff]
        %v8291 = vld [vmem:[%s7203 + $0x78] sm:$0xff]
        %v8292 = vld [vmem:[%s7220] sm:$0x3]
        %v8294 = vlaneseq
        %v8295 = vshrl.u32 %v8294, 7
        %v8296 = vsub.s32 0, %v8295
        %v8297 = vrot.slane %v8292, %v8296
        %v8298 = vlaneseq
        %v8299 = vshrl.u32 %v8298, 7
        %v8300 = vsub.s32 1, %v8299
        %v8301 = vrot.slane %v8292, %v8300
        %v8320 = vunpack.c.l.b16 %v8276
        %v8321 = vunpack.c.h.b16 %v8276
        %v8322 = vunpack.c.l.b16 %v8277
        %v8323 = vunpack.c.h.b16 %v8277
        %v8324 = vunpack.c.l.b16 %v8278
        %v8325 = vunpack.c.h.b16 %v8278
        %v8326 = vunpack.c.l.b16 %v8279
        %v8327 = vunpack.c.h.b16 %v8279
        %v8328 = vunpack.c.l.b16 %v8280
        %v8329 = vunpack.c.h.b16 %v8280
        %v8330 = vunpack.c.l.b16 %v8281
        %v8331 = vunpack.c.h.b16 %v8281
        %v8332 = vunpack.c.l.b16 %v8282
        %v8333 = vunpack.c.h.b16 %v8282
        %v8334 = vunpack.c.l.b16 %v8283
        %v8335 = vunpack.c.h.b16 %v8283
        %v8336 = vunpack.c.l.b16 %v8284
        %v8337 = vunpack.c.h.b16 %v8284
        %v8338 = vunpack.c.l.b16 %v8285
        %v8339 = vunpack.c.h.b16 %v8285
        %v8340 = vunpack.c.l.b16 %v8286
        %v8341 = vunpack.c.h.b16 %v8286
        %v8342 = vunpack.c.l.b16 %v8287
        %v8343 = vunpack.c.h.b16 %v8287
        %v8344 = vunpack.c.l.b16 %v8288
        %v8345 = vunpack.c.h.b16 %v8288
        %v8346 = vunpack.c.l.b16 %v8289
        %v8347 = vunpack.c.h.b16 %v8289
        %v8348 = vunpack.c.l.b16 %v8290
        %v8349 = vunpack.c.h.b16 %v8290
        %v8350 = vunpack.c.l.b16 %v8291
        %v8351 = vunpack.c.h.b16 %v8291
        %v8352 = vpack.c.b16 %v8322, %v8320
        %v8353 = vpack.c.b16 %v8323, %v8321
        %v8354 = vpack.c.b16 %v8326, %v8324
        %v8355 = vpack.c.b16 %v8327, %v8325
        %v8356 = vpack.c.b16 %v8330, %v8328
        %v8357 = vpack.c.b16 %v8331, %v8329
        %v8358 = vpack.c.b16 %v8334, %v8332
        %v8359 = vpack.c.b16 %v8335, %v8333
        %v8360 = vpack.c.b16 %v8338, %v8336
        %v8361 = vpack.c.b16 %v8339, %v8337
        %v8362 = vpack.c.b16 %v8342, %v8340
        %v8363 = vpack.c.b16 %v8343, %v8341
        %v8364 = vpack.c.b16 %v8346, %v8344
        %v8365 = vpack.c.b16 %v8347, %v8345
        %v8366 = vpack.c.b16 %v8350, %v8348
        %v8367 = vpack.c.b16 %v8351, %v8349
        %8384 = vmatprep.subr.bf16.mxu0 %v8353
        %8385 = vmatpush1.bf16.msra.mxu0 %v8352
        %8386 = vmatprep.subr.bf16.mxu0 %v8355
        %8387 = vmatpush1.bf16.msra.mxu0 %v8354
        %8388 = vmatprep.subr.bf16.mxu0 %v8357
        %8389 = vmatpush1.bf16.msra.mxu0 %v8356
        %8390 = vmatprep.subr.bf16.mxu0 %v8359
        %8391 = vmatpush1.bf16.msra.mxu0 %v8358
        %8392 = vmatprep.subr.bf16.mxu0 %v8361
        %8393 = vmatpush1.bf16.msra.mxu0 %v8360
        %8394 = vmatprep.subr.bf16.mxu0 %v8363
        %8395 = vmatpush1.bf16.msra.mxu0 %v8362
        %8396 = vmatprep.subr.bf16.mxu0 %v8365
        %8397 = vmatpush1.bf16.msra.mxu0 %v8364
        %8398 = vmatprep.subr.bf16.mxu0 %v8367
        %8399 = vmatpush1.bf16.msra.mxu0 %v8366
        %8400 = vmatprep.subr.bf16.mxu0 0
        %8401 = vmatpush1.bf16.msra.mxu0 0
        %8402 = vmatprep.subr.bf16.mxu0 0
        %8403 = vmatpush1.bf16.msra.mxu0 0
        %8404 = vmatprep.subr.bf16.mxu0 0
        %8405 = vmatpush1.bf16.msra.mxu0 0
        %8406 = vmatprep.subr.bf16.mxu0 0
        %8407 = vmatpush1.bf16.msra.mxu0 0
        %8408 = vmatprep.subr.bf16.mxu0 0
        %8409 = vmatpush1.bf16.msra.mxu0 0
        %8410 = vmatprep.subr.bf16.mxu0 0
        %8411 = vmatpush1.bf16.msra.mxu0 0
        %8412 = vmatprep.subr.bf16.mxu0 0
        %8413 = vmatpush1.bf16.msra.mxu0 0
        %8414 = vmatprep.subr.bf16.mxu0 0
        %8415 = vmatpush1.bf16.msra.mxu0 0
        %8416 = vmatprep.mubr.bf16.mxu0 0
        %8417 = vmatmul.mubr.bf16.gmra.mrb[0].mxu0 %v8268
        %v8418 = vpop.f32.mrb[0].mxu0
        %v8419 = vadd.f32 %v8297, %v8418
        %v8420 = vpop.f32.mrb[0].mxu0
        %v8421 = vadd.f32 %v8301, %v8420
        %v8422 = vpop.f32.mrb[0].mxu0
        %v8423 = vadd.f32 %v8297, %v8422
        %v8424 = vpop.f32.mrb[0].mxu0
        %v8425 = vadd.f32 %v8301, %v8424
        %8426 = vmatprep.mubr.bf16.mxu0 0
        %8427 = vmatmul.mubr.bf16.gmra.mrb[0].mxu0 %v8269
        %v8428 = vpop.f32.mrb[0].mxu0
        %v8429 = vadd.f32 %v8297, %v8428
        %v8430 = vpop.f32.mrb[0].mxu0
        %v8431 = vadd.f32 %v8301, %v8430
        %v8432 = vpop.f32.mrb[0].mxu0
        %v8433 = vadd.f32 %v8297, %v8432
        %v8434 = vpop.f32.mrb[0].mxu0
        %v8435 = vadd.f32 %v8301, %v8434
        %8436 = vmatprep.mubr.bf16.mxu0 0
        %8437 = vmatmul.mubr.bf16.gmra.mrb[0].mxu0 %v8270
        %v8438 = vpop.f32.mrb[0].mxu0
        %v8439 = vadd.f32 %v8297, %v8438
        %v8440 = vpop.f32.mrb[0].mxu0
        %v8441 = vadd.f32 %v8301, %v8440
        %v8442 = vpop.f32.mrb[0].mxu0
        %v8443 = vadd.f32 %v8297, %v8442
        %v8444 = vpop.f32.mrb[0].mxu0
        %v8445 = vadd.f32 %v8301, %v8444
        %8446 = vmatprep.mubr.bf16.mxu0 0
        %8447 = vmatmul.mubr.bf16.gmra.mrb[0].mxu0 %v8271
        %v8448 = vpop.f32.mrb[0].mxu0
        %v8449 = vadd.f32 %v8297, %v8448
        %v8450 = vpop.f32.mrb[0].mxu0
        %v8451 = vadd.f32 %v8301, %v8450
        %v8452 = vpop.f32.mrb[0].mxu0
        %v8453 = vadd.f32 %v8297, %v8452
        %v8454 = vpop.f32.mrb[0].mxu0
        %v8455 = vadd.f32 %v8301, %v8454
        %8456 = vmatprep.mubr.bf16.mxu0 0
        %8457 = vmatmul.mubr.bf16.gmra.mrb[0].mxu0 %v8272
        %v8458 = vpop.f32.mrb[0].mxu0
        %v8459 = vadd.f32 %v8297, %v8458
        %v8460 = vpop.f32.mrb[0].mxu0
        %v8461 = vadd.f32 %v8301, %v8460
        %v8462 = vpop.f32.mrb[0].mxu0
        %v8463 = vadd.f32 %v8297, %v8462
        %v8464 = vpop.f32.mrb[0].mxu0
        %v8465 = vadd.f32 %v8301, %v8464
        %8466 = vmatprep.mubr.bf16.mxu0 0
        %8467 = vmatmul.mubr.bf16.gmra.mrb[0].mxu0 %v8273
        %v8468 = vpop.f32.mrb[0].mxu0
        %v8469 = vadd.f32 %v8297, %v8468
        %v8470 = vpop.f32.mrb[0].mxu0
        %v8471 = vadd.f32 %v8301, %v8470
        %v8472 = vpop.f32.mrb[0].mxu0
        %v8473 = vadd.f32 %v8297, %v8472
        %v8474 = vpop.f32.mrb[0].mxu0
        %v8475 = vadd.f32 %v8301, %v8474
        %8476 = vmatprep.mubr.bf16.mxu0 0
        %8477 = vmatmul.mubr.bf16.gmra.mrb[0].mxu0 %v8274
        %v8478 = vpop.f32.mrb[0].mxu0
        %v8479 = vadd.f32 %v8297, %v8478
        %v8480 = vpop.f32.mrb[0].mxu0
        %v8481 = vadd.f32 %v8301, %v8480
        %v8482 = vpop.f32.mrb[0].mxu0
        %v8483 = vadd.f32 %v8297, %v8482
        %v8484 = vpop.f32.mrb[0].mxu0
        %v8485 = vadd.f32 %v8301, %v8484
        %8486 = vmatprep.mubr.bf16.mxu0 0
        %8487 = vmatmul.mubr.bf16.gmra.mrb[0].mxu0 %v8275
        %v8488 = vpop.f32.mrb[0].mxu0
        %v8489 = vadd.f32 %v8297, %v8488
        %v8490 = vpop.f32.mrb[0].mxu0
        %v8491 = vadd.f32 %v8301, %v8490
        %v8492 = vpop.f32.mrb[0].mxu0
        %v8493 = vadd.f32 %v8297, %v8492
        %v8494 = vpop.f32.mrb[0].mxu0
        %v8495 = vadd.f32 %v8301, %v8494
        %8496 = vdwg.mxu0
        %v8497 = vmul.f32 %v8419, 0.5
        %v8498 = vmul.f32 %v8421, 0.5
        %v8499 = vmul.f32 %v8423, 0.5
        %v8500 = vmul.f32 %v8425, 0.5
        %v8501 = vmul.f32 %v8429, 0.5
        %v8502 = vmul.f32 %v8431, 0.5
        %v8503 = vmul.f32 %v8433, 0.5
        %v8504 = vmul.f32 %v8435, 0.5
        %v8505 = vmul.f32 %v8439, 0.5
        %v8506 = vmul.f32 %v8441, 0.5
        %v8507 = vmul.f32 %v8443, 0.5
        %v8508 = vmul.f32 %v8445, 0.5
        %v8509 = vmul.f32 %v8449, 0.5
        %v8510 = vmul.f32 %v8451, 0.5
        %v8511 = vmul.f32 %v8453, 0.5
        %v8512 = vmul.f32 %v8455, 0.5
        %v8513 = vmul.f32 %v8459, 0.5
        %v8514 = vmul.f32 %v8461, 0.5
        %v8515 = vmul.f32 %v8463, 0.5
        %v8516 = vmul.f32 %v8465, 0.5
        %v8517 = vmul.f32 %v8469, 0.5
        %v8518 = vmul.f32 %v8471, 0.5
        %v8519 = vmul.f32 %v8473, 0.5
        %v8520 = vmul.f32 %v8475, 0.5
        %v8521 = vmul.f32 %v8479, 0.5
        %v8522 = vmul.f32 %v8481, 0.5
        %v8523 = vmul.f32 %v8483, 0.5
        %v8524 = vmul.f32 %v8485, 0.5
        %v8525 = vmul.f32 %v8489, 0.5
        %v8526 = vmul.f32 %v8491, 0.5
        %v8527 = vmul.f32 %v8493, 0.5
        %v8528 = vmul.f32 %v8495, 0.5
        %v8529 = vmul.f32 %v8419, 0.044715
        %v8530 = vmul.f32 %v8421, 0.044715
        %v8531 = vmul.f32 %v8423, 0.044715
        %v8532 = vmul.f32 %v8425, 0.044715
        %v8533 = vmul.f32 %v8429, 0.044715
        %v8534 = vmul.f32 %v8431, 0.044715
        %v8535 = vmul.f32 %v8433, 0.044715
        %v8536 = vmul.f32 %v8435, 0.044715
        %v8537 = vmul.f32 %v8439, 0.044715
        %v8538 = vmul.f32 %v8441, 0.044715
        %v8539 = vmul.f32 %v8443, 0.044715
        %v8540 = vmul.f32 %v8445, 0.044715
        %v8541 = vmul.f32 %v8449, 0.044715
        %v8542 = vmul.f32 %v8451, 0.044715
        %v8543 = vmul.f32 %v8453, 0.044715
        %v8544 = vmul.f32 %v8455, 0.044715
        %v8545 = vmul.f32 %v8459, 0.044715
        %v8546 = vmul.f32 %v8461, 0.044715
        %v8547 = vmul.f32 %v8463, 0.044715
        %v8548 = vmul.f32 %v8465, 0.044715
        %v8549 = vmul.f32 %v8469, 0.044715
        %v8550 = vmul.f32 %v8471, 0.044715
        %v8551 = vmul.f32 %v8473, 0.044715
        %v8552 = vmul.f32 %v8475, 0.044715
        %v8553 = vmul.f32 %v8479, 0.044715
        %v8554 = vmul.f32 %v8481, 0.044715
        %v8555 = vmul.f32 %v8483, 0.044715
        %v8556 = vmul.f32 %v8485, 0.044715
        %v8557 = vmul.f32 %v8489, 0.044715
        %v8558 = vmul.f32 %v8491, 0.044715
        %v8559 = vmul.f32 %v8493, 0.044715
        %v8560 = vmul.f32 %v8495, 0.044715
        %v8561 = vmul.f32 %v8529, %v8419
        %v8562 = vmul.f32 %v8530, %v8421
        %v8563 = vmul.f32 %v8531, %v8423
        %v8564 = vmul.f32 %v8532, %v8425
        %v8565 = vmul.f32 %v8533, %v8429
        %v8566 = vmul.f32 %v8534, %v8431
        %v8567 = vmul.f32 %v8535, %v8433
        %v8568 = vmul.f32 %v8536, %v8435
        %v8569 = vmul.f32 %v8537, %v8439
        %v8570 = vmul.f32 %v8538, %v8441
        %v8571 = vmul.f32 %v8539, %v8443
        %v8572 = vmul.f32 %v8540, %v8445
        %v8573 = vmul.f32 %v8541, %v8449
        %v8574 = vmul.f32 %v8542, %v8451
        %v8575 = vmul.f32 %v8543, %v8453
        %v8576 = vmul.f32 %v8544, %v8455
        %v8577 = vmul.f32 %v8545, %v8459
        %v8578 = vmul.f32 %v8546, %v8461
        %v8579 = vmul.f32 %v8547, %v8463
        %v8580 = vmul.f32 %v8548, %v8465
        %v8581 = vmul.f32 %v8549, %v8469
        %v8582 = vmul.f32 %v8550, %v8471
        %v8583 = vmul.f32 %v8551, %v8473
        %v8584 = vmul.f32 %v8552, %v8475
        %v8585 = vmul.f32 %v8553, %v8479
        %v8586 = vmul.f32 %v8554, %v8481
        %v8587 = vmul.f32 %v8555, %v8483
        %v8588 = vmul.f32 %v8556, %v8485
        %v8589 = vmul.f32 %v8557, %v8489
        %v8590 = vmul.f32 %v8558, %v8491
        %v8591 = vmul.f32 %v8559, %v8493
        %v8592 = vmul.f32 %v8560, %v8495
        %v8593 = vmul.f32 %v8561, %v8419
        %v8594 = vmul.f32 %v8562, %v8421
        %v8595 = vmul.f32 %v8563, %v8423
        %v8596 = vmul.f32 %v8564, %v8425
        %v8597 = vmul.f32 %v8565, %v8429
        %v8598 = vmul.f32 %v8566, %v8431
        %v8599 = vmul.f32 %v8567, %v8433
        %v8600 = vmul.f32 %v8568, %v8435
        %v8601 = vmul.f32 %v8569, %v8439
        %v8602 = vmul.f32 %v8570, %v8441
        %v8603 = vmul.f32 %v8571, %v8443
        %v8604 = vmul.f32 %v8572, %v8445
        %v8605 = vmul.f32 %v8573, %v8449
        %v8606 = vmul.f32 %v8574, %v8451
        %v8607 = vmul.f32 %v8575, %v8453
        %v8608 = vmul.f32 %v8576, %v8455
        %v8609 = vmul.f32 %v8577, %v8459
        %v8610 = vmul.f32 %v8578, %v8461
        %v8611 = vmul.f32 %v8579, %v8463
        %v8612 = vmul.f32 %v8580, %v8465
        %v8613 = vmul.f32 %v8581, %v8469
        %v8614 = vmul.f32 %v8582, %v8471
        %v8615 = vmul.f32 %v8583, %v8473
        %v8616 = vmul.f32 %v8584, %v8475
        %v8617 = vmul.f32 %v8585, %v8479
        %v8618 = vmul.f32 %v8586, %v8481
        %v8619 = vmul.f32 %v8587, %v8483
        %v8620 = vmul.f32 %v8588, %v8485
        %v8621 = vmul.f32 %v8589, %v8489
        %v8622 = vmul.f32 %v8590, %v8491
        %v8623 = vmul.f32 %v8591, %v8493
        %v8624 = vmul.f32 %v8592, %v8495
        %v8625 = vadd.f32 %v8419, %v8593
        %v8626 = vadd.f32 %v8421, %v8594
        %v8627 = vadd.f32 %v8423, %v8595
        %v8628 = vadd.f32 %v8425, %v8596
        %v8629 = vadd.f32 %v8429, %v8597
        %v8630 = vadd.f32 %v8431, %v8598
        %v8631 = vadd.f32 %v8433, %v8599
        %v8632 = vadd.f32 %v8435, %v8600
        %v8633 = vadd.f32 %v8439, %v8601
        %v8634 = vadd.f32 %v8441, %v8602
        %v8635 = vadd.f32 %v8443, %v8603
        %v8636 = vadd.f32 %v8445, %v8604
        %v8637 = vadd.f32 %v8449, %v8605
        %v8638 = vadd.f32 %v8451, %v8606
        %v8639 = vadd.f32 %v8453, %v8607
        %v8640 = vadd.f32 %v8455, %v8608
        %v8641 = vadd.f32 %v8459, %v8609
        %v8642 = vadd.f32 %v8461, %v8610
        %v8643 = vadd.f32 %v8463, %v8611
        %v8644 = vadd.f32 %v8465, %v8612
        %v8645 = vadd.f32 %v8469, %v8613
        %v8646 = vadd.f32 %v8471, %v8614
        %v8647 = vadd.f32 %v8473, %v8615
        %v8648 = vadd.f32 %v8475, %v8616
        %v8649 = vadd.f32 %v8479, %v8617
        %v8650 = vadd.f32 %v8481, %v8618
        %v8651 = vadd.f32 %v8483, %v8619
        %v8652 = vadd.f32 %v8485, %v8620
        %v8653 = vadd.f32 %v8489, %v8621
        %v8654 = vadd.f32 %v8491, %v8622
        %v8655 = vadd.f32 %v8493, %v8623
        %v8656 = vadd.f32 %v8495, %v8624
        %v8657 = vmul.f32 %v8625, 0.7978846
        %v8658 = vmul.f32 %v8626, 0.7978846
        %v8659 = vmul.f32 %v8627, 0.7978846
        %v8660 = vmul.f32 %v8628, 0.7978846
        %v8661 = vmul.f32 %v8629, 0.7978846
        %v8662 = vmul.f32 %v8630, 0.7978846
        %v8663 = vmul.f32 %v8631, 0.7978846
        %v8664 = vmul.f32 %v8632, 0.7978846
        %v8665 = vmul.f32 %v8633, 0.7978846
        %v8666 = vmul.f32 %v8634, 0.7978846
        %v8667 = vmul.f32 %v8635, 0.7978846
        %v8668 = vmul.f32 %v8636, 0.7978846
        %v8669 = vmul.f32 %v8637, 0.7978846
        %v8670 = vmul.f32 %v8638, 0.7978846
        %v8671 = vmul.f32 %v8639, 0.7978846
        %v8672 = vmul.f32 %v8640, 0.7978846
        %v8673 = vmul.f32 %v8641, 0.7978846
        %v8674 = vmul.f32 %v8642, 0.7978846
        %v8675 = vmul.f32 %v8643, 0.7978846
        %v8676 = vmul.f32 %v8644, 0.7978846
        %v8677 = vmul.f32 %v8645, 0.7978846
        %v8678 = vmul.f32 %v8646, 0.7978846
        %v8679 = vmul.f32 %v8647, 0.7978846
        %v8680 = vmul.f32 %v8648, 0.7978846
        %v8681 = vmul.f32 %v8649, 0.7978846
        %v8682 = vmul.f32 %v8650, 0.7978846
        %v8683 = vmul.f32 %v8651, 0.7978846
        %v8684 = vmul.f32 %v8652, 0.7978846
        %v8685 = vmul.f32 %v8653, 0.7978846
        %v8686 = vmul.f32 %v8654, 0.7978846
        %v8687 = vmul.f32 %v8655, 0.7978846
        %v8688 = vmul.f32 %v8656, 0.7978846
        %v8689 = vtanh.pop %v8657
        %v8690 = vtanh.pop %v8658
        %v8691 = vtanh.pop %v8659
        %v8692 = vtanh.pop %v8660
        %v8693 = vtanh.pop %v8661
        %v8694 = vtanh.pop %v8662
        %v8695 = vtanh.pop %v8663
        %v8696 = vtanh.pop %v8664
        %v8697 = vtanh.pop %v8665
        %v8698 = vtanh.pop %v8666
        %v8699 = vtanh.pop %v8667
        %v8700 = vtanh.pop %v8668
        %v8701 = vtanh.pop %v8669
        %v8702 = vtanh.pop %v8670
        %v8703 = vtanh.pop %v8671
        %v8704 = vtanh.pop %v8672
        %v8705 = vtanh.pop %v8673
        %v8706 = vtanh.pop %v8674
        %v8707 = vtanh.pop %v8675
        %v8708 = vtanh.pop %v8676
        %v8709 = vtanh.pop %v8677
        %v8710 = vtanh.pop %v8678
        %v8711 = vtanh.pop %v8679
        %v8712 = vtanh.pop %v8680
        %v8713 = vtanh.pop %v8681
        %v8714 = vtanh.pop %v8682
        %v8715 = vtanh.pop %v8683
        %v8716 = vtanh.pop %v8684
        %v8717 = vtanh.pop %v8685
        %v8718 = vtanh.pop %v8686
        %v8719 = vtanh.pop %v8687
        %v8720 = vtanh.pop %v8688
        %v8721 = vadd.f32 %v8689, 1.0
        %v8722 = vadd.f32 %v8690, 1.0
        %v8723 = vadd.f32 %v8691, 1.0
        %v8724 = vadd.f32 %v8692, 1.0
        %v8725 = vadd.f32 %v8693, 1.0
        %v8726 = vadd.f32 %v8694, 1.0
        %v8727 = vadd.f32 %v8695, 1.0
        %v8728 = vadd.f32 %v8696, 1.0
        %v8729 = vadd.f32 %v8697, 1.0
        %v8730 = vadd.f32 %v8698, 1.0
        %v8731 = vadd.f32 %v8699, 1.0
        %v8732 = vadd.f32 %v8700, 1.0
        %v8733 = vadd.f32 %v8701, 1.0
        %v8734 = vadd.f32 %v8702, 1.0
        %v8735 = vadd.f32 %v8703, 1.0
        %v8736 = vadd.f32 %v8704, 1.0
        %v8737 = vadd.f32 %v8705, 1.0
        %v8738 = vadd.f32 %v8706, 1.0
        %v8739 = vadd.f32 %v8707, 1.0
        %v8740 = vadd.f32 %v8708, 1.0
        %v8741 = vadd.f32 %v8709, 1.0
        %v8742 = vadd.f32 %v8710, 1.0
        %v8743 = vadd.f32 %v8711, 1.0
        %v8744 = vadd.f32 %v8712, 1.0
        %v8745 = vadd.f32 %v8713, 1.0
        %v8746 = vadd.f32 %v8714, 1.0
        %v8747 = vadd.f32 %v8715, 1.0
        %v8748 = vadd.f32 %v8716, 1.0
        %v8749 = vadd.f32 %v8717, 1.0
        %v8750 = vadd.f32 %v8718, 1.0
        %v8751 = vadd.f32 %v8719, 1.0
        %v8752 = vadd.f32 %v8720, 1.0
        %v8753 = vmul.f32 %v8497, %v8721
        %v8754 = vmul.f32 %v8498, %v8722
        %v8755 = vmul.f32 %v8499, %v8723
        %v8756 = vmul.f32 %v8500, %v8724
        %v8757 = vmul.f32 %v8501, %v8725
        %v8758 = vmul.f32 %v8502, %v8726
        %v8759 = vmul.f32 %v8503, %v8727
        %v8760 = vmul.f32 %v8504, %v8728
        %v8761 = vmul.f32 %v8505, %v8729
        %v8762 = vmul.f32 %v8506, %v8730
        %v8763 = vmul.f32 %v8507, %v8731
        %v8764 = vmul.f32 %v8508, %v8732
        %v8765 = vmul.f32 %v8509, %v8733
        %v8766 = vmul.f32 %v8510, %v8734
        %v8767 = vmul.f32 %v8511, %v8735
        %v8768 = vmul.f32 %v8512, %v8736
        %v8769 = vmul.f32 %v8513, %v8737
        %v8770 = vmul.f32 %v8514, %v8738
        %v8771 = vmul.f32 %v8515, %v8739
        %v8772 = vmul.f32 %v8516, %v8740
        %v8773 = vmul.f32 %v8517, %v8741
        %v8774 = vmul.f32 %v8518, %v8742
        %v8775 = vmul.f32 %v8519, %v8743
        %v8776 = vmul.f32 %v8520, %v8744
        %v8777 = vmul.f32 %v8521, %v8745
        %v8778 = vmul.f32 %v8522, %v8746
        %v8779 = vmul.f32 %v8523, %v8747
        %v8780 = vmul.f32 %v8524, %v8748
        %v8781 = vmul.f32 %v8525, %v8749
        %v8782 = vmul.f32 %v8526, %v8750
        %v8783 = vmul.f32 %v8527, %v8751
        %v8784 = vmul.f32 %v8528, %v8752
        %v8785 = vpack.c.bf16 %v8755, %v8753
        %v8786 = vpack.c.bf16 %v8756, %v8754
        %v8787 = vpack.c.bf16 %v8759, %v8757
        %v8788 = vpack.c.bf16 %v8760, %v8758
        %v8789 = vpack.c.bf16 %v8763, %v8761
        %v8790 = vpack.c.bf16 %v8764, %v8762
        %v8791 = vpack.c.bf16 %v8767, %v8765
        %v8792 = vpack.c.bf16 %v8768, %v8766
        %v8793 = vpack.c.bf16 %v8771, %v8769
        %v8794 = vpack.c.bf16 %v8772, %v8770
        %v8795 = vpack.c.bf16 %v8775, %v8773
        %v8796 = vpack.c.bf16 %v8776, %v8774
        %v8797 = vpack.c.bf16 %v8779, %v8777
        %v8798 = vpack.c.bf16 %v8780, %v8778
        %v8799 = vpack.c.bf16 %v8783, %v8781
        %v8800 = vpack.c.bf16 %v8784, %v8782
        %v8801 = vld [vmem:[%s7730] sm:$0xf]
        %v8802 = vld [vmem:[%s7730 + $0x4] sm:$0xf]
        %v8803 = vld [vmem:[%s7730 + $0x8] sm:$0xf]
        %v8804 = vld [vmem:[%s7730 + $0xc] sm:$0xf]
        %v8805 = vld [vmem:[%s7730 + $0x10] sm:$0xf]
        %v8806 = vld [vmem:[%s7730 + $0x14] sm:$0xf]
        %v8807 = vld [vmem:[%s7730 + $0x18] sm:$0xf]
        %v8808 = vld [vmem:[%s7730 + $0x1c] sm:$0xf]
        %v8809 = vld [vmem:[%s7730 + $0x20] sm:$0xf]
        %v8810 = vld [vmem:[%s7730 + $0x24] sm:$0xf]
        %v8811 = vld [vmem:[%s7730 + $0x28] sm:$0xf]
        %v8812 = vld [vmem:[%s7730 + $0x2c] sm:$0xf]
        %v8813 = vld [vmem:[%s7730 + $0x30] sm:$0xf]
        %v8814 = vld [vmem:[%s7730 + $0x34] sm:$0xf]
        %v8815 = vld [vmem:[%s7730 + $0x38] sm:$0xf]
        %v8816 = vld [vmem:[%s7730 + $0x3c] sm:$0xf]
        %v8817 = vld [vmem:[%s7730 + $0x40] sm:$0xf]
        %v8818 = vld [vmem:[%s7730 + $0x44] sm:$0xf]
        %v8819 = vld [vmem:[%s7730 + $0x48] sm:$0xf]
        %v8820 = vld [vmem:[%s7730 + $0x4c] sm:$0xf]
        %v8821 = vld [vmem:[%s7730 + $0x50] sm:$0xf]
        %v8822 = vld [vmem:[%s7730 + $0x54] sm:$0xf]
        %v8823 = vld [vmem:[%s7730 + $0x58] sm:$0xf]
        %v8824 = vld [vmem:[%s7730 + $0x5c] sm:$0xf]
        %v8825 = vld [vmem:[%s7730 + $0x60] sm:$0xf]
        %v8826 = vld [vmem:[%s7730 + $0x64] sm:$0xf]
        %v8827 = vld [vmem:[%s7730 + $0x68] sm:$0xf]
        %v8828 = vld [vmem:[%s7730 + $0x6c] sm:$0xf]
        %v8829 = vld [vmem:[%s7730 + $0x70] sm:$0xf]
        %v8830 = vld [vmem:[%s7730 + $0x74] sm:$0xf]
        %v8831 = vld [vmem:[%s7730 + $0x78] sm:$0xf]
        %v8832 = vld [vmem:[%s7730 + $0x7c] sm:$0xf]
        %v8833 = vld [vmem:[%s7763] sm:$0x1]
        %v8835 = vlaneseq
        %v8836 = vshrl.u32 %v8835, 7
        %v8837 = vsub.s32 0, %v8836
        %v8838 = vrot.slane %v8833, %v8837
        %v8872 = vunpack.c.l.b16 %v8801
        %v8873 = vunpack.c.l.b16 %v8802
        %v8874 = vunpack.c.l.b16 %v8803
        %v8875 = vunpack.c.l.b16 %v8804
        %v8876 = vunpack.c.l.b16 %v8805
        %v8877 = vunpack.c.l.b16 %v8806
        %v8878 = vunpack.c.l.b16 %v8807
        %v8879 = vunpack.c.l.b16 %v8808
        %v8880 = vunpack.c.l.b16 %v8809
        %v8881 = vunpack.c.l.b16 %v8810
        %v8882 = vunpack.c.l.b16 %v8811
        %v8883 = vunpack.c.l.b16 %v8812
        %v8884 = vunpack.c.l.b16 %v8813
        %v8885 = vunpack.c.l.b16 %v8814
        %v8886 = vunpack.c.l.b16 %v8815
        %v8887 = vunpack.c.l.b16 %v8816
        %v8888 = vunpack.c.l.b16 %v8817
        %v8889 = vunpack.c.l.b16 %v8818
        %v8890 = vunpack.c.l.b16 %v8819
        %v8891 = vunpack.c.l.b16 %v8820
        %v8892 = vunpack.c.l.b16 %v8821
        %v8893 = vunpack.c.l.b16 %v8822
        %v8894 = vunpack.c.l.b16 %v8823
        %v8895 = vunpack.c.l.b16 %v8824
        %v8896 = vunpack.c.l.b16 %v8825
        %v8897 = vunpack.c.l.b16 %v8826
        %v8898 = vunpack.c.l.b16 %v8827
        %v8899 = vunpack.c.l.b16 %v8828
        %v8900 = vunpack.c.l.b16 %v8829
        %v8901 = vunpack.c.l.b16 %v8830
        %v8902 = vunpack.c.l.b16 %v8831
        %v8903 = vunpack.c.l.b16 %v8832
        %v8904 = vpack.c.b16 %v8873, %v8872
        %v8905 = vpack.c.b16 %v8875, %v8874
        %v8906 = vpack.c.b16 %v8877, %v8876
        %v8907 = vpack.c.b16 %v8879, %v8878
        %v8908 = vpack.c.b16 %v8881, %v8880
        %v8909 = vpack.c.b16 %v8883, %v8882
        %v8910 = vpack.c.b16 %v8885, %v8884
        %v8911 = vpack.c.b16 %v8887, %v8886
        %v8912 = vpack.c.b16 %v8889, %v8888
        %v8913 = vpack.c.b16 %v8891, %v8890
        %v8914 = vpack.c.b16 %v8893, %v8892
        %v8915 = vpack.c.b16 %v8895, %v8894
        %v8916 = vpack.c.b16 %v8897, %v8896
        %v8917 = vpack.c.b16 %v8899, %v8898
        %v8918 = vpack.c.b16 %v8901, %v8900
        %v8919 = vpack.c.b16 %v8903, %v8902
        %8936 = vmatprep.subr.bf16.mxu0 0
        %8937 = vmatpush1.bf16.msra.mxu0 %v8904
        %8938 = vmatprep.subr.bf16.mxu0 0
        %8939 = vmatpush1.bf16.msra.mxu0 %v8905
        %8940 = vmatprep.subr.bf16.mxu0 0
        %8941 = vmatpush1.bf16.msra.mxu0 %v8906
        %8942 = vmatprep.subr.bf16.mxu0 0
        %8943 = vmatpush1.bf16.msra.mxu0 %v8907
        %8944 = vmatprep.subr.bf16.mxu0 0
        %8945 = vmatpush1.bf16.msra.mxu0 %v8908
        %8946 = vmatprep.subr.bf16.mxu0 0
        %8947 = vmatpush1.bf16.msra.mxu0 %v8909
        %8948 = vmatprep.subr.bf16.mxu0 0
        %8949 = vmatpush1.bf16.msra.mxu0 %v8910
        %8950 = vmatprep.subr.bf16.mxu0 0
        %8951 = vmatpush1.bf16.msra.mxu0 %v8911
        %8952 = vmatprep.subr.bf16.mxu0 0
        %8953 = vmatpush1.bf16.msra.mxu0 %v8912
        %8954 = vmatprep.subr.bf16.mxu0 0
        %8955 = vmatpush1.bf16.msra.mxu0 %v8913
        %8956 = vmatprep.subr.bf16.mxu0 0
        %8957 = vmatpush1.bf16.msra.mxu0 %v8914
        %8958 = vmatprep.subr.bf16.mxu0 0
        %8959 = vmatpush1.bf16.msra.mxu0 %v8915
        %8960 = vmatprep.subr.bf16.mxu0 0
        %8961 = vmatpush1.bf16.msra.mxu0 %v8916
        %8962 = vmatprep.subr.bf16.mxu0 0
        %8963 = vmatpush1.bf16.msra.mxu0 %v8917
        %8964 = vmatprep.subr.bf16.mxu0 0
        %8965 = vmatpush1.bf16.msra.mxu0 %v8918
        %8966 = vmatprep.subr.bf16.mxu0 0
        %8967 = vmatpush1.bf16.msra.mxu0 %v8919
        %8968 = vmatprep.mubr.bf16.mxu0 %v8786
        %8969 = vmatmul.mubr.bf16.gmra.mrb[0].mxu0 %v8785
        %v8970 = vpop.f32.mrb[0].mxu0
        %v8971 = vadd.f32 %v8838, %v8970
        %v8972 = vpop.f32.mrb[0].mxu0
        %v8973 = vpop.f32.mrb[0].mxu0
        %v8974 = vadd.f32 %v8838, %v8973
        %v8975 = vpop.f32.mrb[0].mxu0
        %8976 = vmatprep.mubr.bf16.mxu0 %v8788
        %8977 = vmatmul.mubr.bf16.gmra.mrb[0].mxu0 %v8787
        %v8978 = vpop.f32.mrb[0].mxu0
        %v8979 = vadd.f32 %v8838, %v8978
        %v8980 = vpop.f32.mrb[0].mxu0
        %v8981 = vpop.f32.mrb[0].mxu0
        %v8982 = vadd.f32 %v8838, %v8981
        %v8983 = vpop.f32.mrb[0].mxu0
        %8984 = vmatprep.mubr.bf16.mxu0 %v8790
        %8985 = vmatmul.mubr.bf16.gmra.mrb[0].mxu0 %v8789
        %v8986 = vpop.f32.mrb[0].mxu0
        %v8987 = vadd.f32 %v8838, %v8986
        %v8988 = vpop.f32.mrb[0].mxu0
        %v8989 = vpop.f32.mrb[0].mxu0
        %v8990 = vadd.f32 %v8838, %v8989
        %v8991 = vpop.f32.mrb[0].mxu0
        %8992 = vmatprep.mubr.bf16.mxu0 %v8792
        %8993 = vmatmul.mubr.bf16.gmra.mrb[0].mxu0 %v8791
        %v8994 = vpop.f32.mrb[0].mxu0
        %v8995 = vadd.f32 %v8838, %v8994
        %v8996 = vpop.f32.mrb[0].mxu0
        %v8997 = vpop.f32.mrb[0].mxu0
        %v8998 = vadd.f32 %v8838, %v8997
        %v8999 = vpop.f32.mrb[0].mxu0
        %9000 = vmatprep.mubr.bf16.mxu0 %v8794
        %9001 = vmatmul.mubr.bf16.gmra.mrb[0].mxu0 %v8793
        %v9002 = vpop.f32.mrb[0].mxu0
        %v9003 = vadd.f32 %v8838, %v9002
        %v9004 = vpop.f32.mrb[0].mxu0
        %v9005 = vpop.f32.mrb[0].mxu0
        %v9006 = vadd.f32 %v8838, %v9005
        %v9007 = vpop.f32.mrb[0].mxu0
        %9008 = vmatprep.mubr.bf16.mxu0 %v8796
        %9009 = vmatmul.mubr.bf16.gmra.mrb[0].mxu0 %v8795
        %v9010 = vpop.f32.mrb[0].mxu0
        %v9011 = vadd.f32 %v8838, %v9010
        %v9012 = vpop.f32.mrb[0].mxu0
        %v9013 = vpop.f32.mrb[0].mxu0
        %v9014 = vadd.f32 %v8838, %v9013
        %v9015 = vpop.f32.mrb[0].mxu0
        %9016 = vmatprep.mubr.bf16.mxu0 %v8798
        %9017 = vmatmul.mubr.bf16.gmra.mrb[0].mxu0 %v8797
        %v9018 = vpop.f32.mrb[0].mxu0
        %v9019 = vadd.f32 %v8838, %v9018
        %v9020 = vpop.f32.mrb[0].mxu0
        %v9021 = vpop.f32.mrb[0].mxu0
        %v9022 = vadd.f32 %v8838, %v9021
        %v9023 = vpop.f32.mrb[0].mxu0
        %9024 = vmatprep.mubr.bf16.mxu0 %v8800
        %9025 = vmatmul.mubr.bf16.gmra.mrb[0].mxu0 %v8799
        %v9026 = vpop.f32.mrb[0].mxu0
        %v9027 = vadd.f32 %v8838, %v9026
        %v9028 = vpop.f32.mrb[0].mxu0
        %v9029 = vpop.f32.mrb[0].mxu0
        %v9030 = vadd.f32 %v8838, %v9029
        %v9031 = vpop.f32.mrb[0].mxu0
        %9032 = vdwg.mxu0
        %v9033 = vadd.f32 %v8971, %v7996
        %v9034 = vadd.f32 %v8974, %v7997
        %v9035 = vadd.f32 %v8979, %v7998
        %v9036 = vadd.f32 %v8982, %v7999
        %v9037 = vadd.f32 %v8987, %v8000
        %v9038 = vadd.f32 %v8990, %v8001
        %v9039 = vadd.f32 %v8995, %v8002
        %v9040 = vadd.f32 %v8998, %v8003
        %v9041 = vadd.f32 %v9003, %v8004
        %v9042 = vadd.f32 %v9006, %v8005
        %v9043 = vadd.f32 %v9011, %v8006
        %v9044 = vadd.f32 %v9014, %v8007
        %v9045 = vadd.f32 %v9019, %v8008
        %v9046 = vadd.f32 %v9022, %v8009
        %v9047 = vadd.f32 %v9027, %v8010
        %v9048 = vadd.f32 %v9030, %v8011
        %9049 = vst [vmem:[%s934] sm:$0xff] %v9033
        %9050 = vst [vmem:[%s934 + $0x8] sm:$0xff] %v9034
        %9051 = vst [vmem:[%s934 + $0x10] sm:$0xff] %v9035
        %9052 = vst [vmem:[%s934 + $0x18] sm:$0xff] %v9036
        %9053 = vst [vmem:[%s934 + $0x20] sm:$0xff] %v9037
        %9054 = vst [vmem:[%s934 + $0x28] sm:$0xff] %v9038
        %9055 = vst [vmem:[%s934 + $0x30] sm:$0xff] %v9039
        %9056 = vst [vmem:[%s934 + $0x38] sm:$0xff] %v9040
        %9057 = vst [vmem:[%s934 + $0x40] sm:$0xff] %v9041
        %9058 = vst [vmem:[%s934 + $0x48] sm:$0xff] %v9042
        %9059 = vst [vmem:[%s934 + $0x50] sm:$0xff] %v9043
        %9060 = vst [vmem:[%s934 + $0x58] sm:$0xff] %v9044
        %9061 = vst [vmem:[%s934 + $0x60] sm:$0xff] %v9045
        %9062 = vst [vmem:[%s934 + $0x68] sm:$0xff] %v9046
        %9063 = vst [vmem:[%s934 + $0x70] sm:$0xff] %v9047
        %9064 = vst [vmem:[%s934 + $0x78] sm:$0xff] %v9048
        %v9065 = vld [vmem:[%s15] sm:$0x1]
        %v9066 = vld [vmem:[%s16] sm:$0x1]
        %v9067 = vld [vmem:[#allocation2] sm:$0xff]
        %v9068 = vld [vmem:[#allocation2 + $0x8] sm:$0xff]
        %v9069 = vld [vmem:[#allocation2 + $0x10] sm:$0xff]
        %v9070 = vld [vmem:[#allocation2 + $0x18] sm:$0xff]
        %v9071 = vld [vmem:[#allocation2 + $0x20] sm:$0xff]
        %v9072 = vld [vmem:[#allocation2 + $0x28] sm:$0xff]
        %v9073 = vld [vmem:[#allocation2 + $0x30] sm:$0xff]
        %v9074 = vld [vmem:[#allocation2 + $0x38] sm:$0xff]
        %9075 = vadd.xlane.f32.xlu0 %v9067
        %v9076 = vpop.xlane.xlu0 %9075
        %9077 = vadd.xlane.f32.xlu0 %v9068
        %v9078 = vpop.xlane.xlu0 %9077
        %9079 = vadd.xlane.f32.xlu0 %v9069
        %v9080 = vpop.xlane.xlu0 %9079
        %9081 = vadd.xlane.f32.xlu0 %v9070
        %v9082 = vpop.xlane.xlu0 %9081
        %9083 = vadd.xlane.f32.xlu0 %v9071
        %v9084 = vpop.xlane.xlu0 %9083
        %9085 = vadd.xlane.f32.xlu0 %v9072
        %v9086 = vpop.xlane.xlu0 %9085
        %9087 = vadd.xlane.f32.xlu0 %v9073
        %v9088 = vpop.xlane.xlu0 %9087
        %9089 = vadd.xlane.f32.xlu0 %v9074
        %v9090 = vpop.xlane.xlu0 %9089
        %v9091 = vmul.f32 %v9076, %v977
        %v9092 = vmul.f32 %v9078, %v977
        %v9093 = vmul.f32 %v9080, %v977
        %v9094 = vmul.f32 %v9082, %v977
        %v9095 = vmul.f32 %v9084, %v977
        %v9096 = vmul.f32 %v9086, %v977
        %v9097 = vmul.f32 %v9088, %v977
        %v9098 = vmul.f32 %v9090, %v977
        %v9099 = vmul.f32 %v9067, %v9067
        %v9100 = vmul.f32 %v9068, %v9068
        %v9101 = vmul.f32 %v9069, %v9069
        %v9102 = vmul.f32 %v9070, %v9070
        %v9103 = vmul.f32 %v9071, %v9071
        %v9104 = vmul.f32 %v9072, %v9072
        %v9105 = vmul.f32 %v9073, %v9073
        %v9106 = vmul.f32 %v9074, %v9074
        %9107 = vadd.xlane.f32.xlu0 %v9099
        %v9108 = vpop.xlane.xlu0 %9107
        %9109 = vadd.xlane.f32.xlu0 %v9100
        %v9110 = vpop.xlane.xlu0 %9109
        %9111 = vadd.xlane.f32.xlu0 %v9101
        %v9112 = vpop.xlane.xlu0 %9111
        %9113 = vadd.xlane.f32.xlu0 %v9102
        %v9114 = vpop.xlane.xlu0 %9113
        %9115 = vadd.xlane.f32.xlu0 %v9103
        %v9116 = vpop.xlane.xlu0 %9115
        %9117 = vadd.xlane.f32.xlu0 %v9104
        %v9118 = vpop.xlane.xlu0 %9117
        %9119 = vadd.xlane.f32.xlu0 %v9105
        %v9120 = vpop.xlane.xlu0 %9119
        %9121 = vadd.xlane.f32.xlu0 %v9106
        %v9122 = vpop.xlane.xlu0 %9121
        %v9123 = vmul.f32 %v9108, %v977
        %v9124 = vmul.f32 %v9110, %v977
        %v9125 = vmul.f32 %v9112, %v977
        %v9126 = vmul.f32 %v9114, %v977
        %v9127 = vmul.f32 %v9116, %v977
        %v9128 = vmul.f32 %v9118, %v977
        %v9129 = vmul.f32 %v9120, %v977
        %v9130 = vmul.f32 %v9122, %v977
        %v9131 = vmul.f32 %v9091, %v9091
        %v9132 = vmul.f32 %v9092, %v9092
        %v9133 = vmul.f32 %v9093, %v9093
        %v9134 = vmul.f32 %v9094, %v9094
        %v9135 = vmul.f32 %v9095, %v9095
        %v9136 = vmul.f32 %v9096, %v9096
        %v9137 = vmul.f32 %v9097, %v9097
        %v9138 = vmul.f32 %v9098, %v9098
        %v9139 = vsub.f32 %v9123, %v9131
        %v9140 = vsub.f32 %v9124, %v9132
        %v9141 = vsub.f32 %v9125, %v9133
        %v9142 = vsub.f32 %v9126, %v9134
        %v9143 = vsub.f32 %v9127, %v9135
        %v9144 = vsub.f32 %v9128, %v9136
        %v9145 = vsub.f32 %v9129, %v9137
        %v9146 = vsub.f32 %v9130, %v9138
        %v9147 = vmax.f32 %v9139, 0.0
        %v9148 = vmax.f32 %v9140, 0.0
        %v9149 = vmax.f32 %v9141, 0.0
        %v9150 = vmax.f32 %v9142, 0.0
        %v9151 = vmax.f32 %v9143, 0.0
        %v9152 = vmax.f32 %v9144, 0.0
        %v9153 = vmax.f32 %v9145, 0.0
        %v9154 = vmax.f32 %v9146, 0.0
        %v9155 = vsub.f32 %v9067, %v9091
        %v9156 = vsub.f32 %v9068, %v9092
        %v9157 = vsub.f32 %v9069, %v9093
        %v9158 = vsub.f32 %v9070, %v9094
        %v9159 = vsub.f32 %v9071, %v9095
        %v9160 = vsub.f32 %v9072, %v9096
        %v9161 = vsub.f32 %v9073, %v9097
        %v9162 = vsub.f32 %v9074, %v9098
        %v9163 = vadd.f32 %v9147, 1e-05
        %v9164 = vadd.f32 %v9148, 1e-05
        %v9165 = vadd.f32 %v9149, 1e-05
        %v9166 = vadd.f32 %v9150, 1e-05
        %v9167 = vadd.f32 %v9151, 1e-05
        %v9168 = vadd.f32 %v9152, 1e-05
        %v9169 = vadd.f32 %v9153, 1e-05
        %v9170 = vadd.f32 %v9154, 1e-05
        %v9171 = vrsqrt.pop %v9163
        %v9172 = vrsqrt.pop %v9164
        %v9173 = vrsqrt.pop %v9165
        %v9174 = vrsqrt.pop %v9166
        %v9175 = vrsqrt.pop %v9167
        %v9176 = vrsqrt.pop %v9168
        %v9177 = vrsqrt.pop %v9169
        %v9178 = vrsqrt.pop %v9170
        %v9179 = vmul.f32 %v9155, %v9171
        %v9180 = vmul.f32 %v9156, %v9172
        %v9181 = vmul.f32 %v9157, %v9173
        %v9182 = vmul.f32 %v9158, %v9174
        %v9183 = vmul.f32 %v9159, %v9175
        %v9184 = vmul.f32 %v9160, %v9176
        %v9185 = vmul.f32 %v9161, %v9177
        %v9186 = vmul.f32 %v9162, %v9178
        %v9188 = vlaneseq
        %v9189 = vshrl.u32 %v9188, 7
        %v9190 = vsub.s32 0, %v9189
        %v9191 = vrot.slane %v9065, %v9190
        %v9193 = vmul.f32 %v9179, %v9191
        %v9194 = vmul.f32 %v9180, %v9191
        %v9195 = vmul.f32 %v9181, %v9191
        %v9196 = vmul.f32 %v9182, %v9191
        %v9197 = vmul.f32 %v9183, %v9191
        %v9198 = vmul.f32 %v9184, %v9191
        %v9199 = vmul.f32 %v9185, %v9191
        %v9200 = vmul.f32 %v9186, %v9191
        %v9202 = vlaneseq
        %v9203 = vshrl.u32 %v9202, 7
        %v9204 = vsub.s32 0, %v9203
        %v9205 = vrot.slane %v9066, %v9204
        %v9207 = vadd.f32 %v9193, %v9205
        %v9208 = vadd.f32 %v9194, %v9205
        %v9209 = vadd.f32 %v9195, %v9205
        %v9210 = vadd.f32 %v9196, %v9205
        %v9211 = vadd.f32 %v9197, %v9205
        %v9212 = vadd.f32 %v9198, %v9205
        %v9213 = vadd.f32 %v9199, %v9205
        %v9214 = vadd.f32 %v9200, %v9205
        %v9215 = vadd.f32 %v9207, %v9208
        %v9216 = vadd.f32 %v9215, %v9209
        %v9217 = vadd.f32 %v9216, %v9210
        %v9218 = vadd.f32 %v9217, %v9211
        %v9219 = vadd.f32 %v9218, %v9212
        %v9220 = vadd.f32 %v9219, %v9213
        %v9221 = vadd.f32 %v9220, %v9214
        %v9222 = vrot.slane %v9221, 4
        %v9223 = vadd.f32 %v9221, %v9222
        %v9224 = vrot.slane %v9223, 2
        %v9225 = vadd.f32 %v9223, %v9224
        %v9226 = vrot.slane %v9225, 1
        %v9227 = vadd.f32 %v9225, %v9226
        %v9228 = vrcp.pop 64.0
        %v9229 = vmul.f32 %v9227, %v9228
        %v9230 = vld [vmem:[#allocation2 + $0x40] sm:$0xff]
        %v9231 = vld [vmem:[#allocation2 + $0x48] sm:$0xff]
        %v9232 = vld [vmem:[#allocation2 + $0x50] sm:$0xff]
        %v9233 = vld [vmem:[#allocation2 + $0x58] sm:$0xff]
        %v9234 = vld [vmem:[#allocation2 + $0x60] sm:$0xff]
        %v9235 = vld [vmem:[#allocation2 + $0x68] sm:$0xff]
        %v9236 = vld [vmem:[#allocation2 + $0x70] sm:$0xff]
        %v9237 = vld [vmem:[#allocation2 + $0x78] sm:$0xff]
        %9238 = vadd.xlane.f32.xlu0 %v9230
        %v9239 = vpop.xlane.xlu0 %9238
        %9240 = vadd.xlane.f32.xlu0 %v9231
        %v9241 = vpop.xlane.xlu0 %9240
        %9242 = vadd.xlane.f32.xlu0 %v9232
        %v9243 = vpop.xlane.xlu0 %9242
        %9244 = vadd.xlane.f32.xlu0 %v9233
        %v9245 = vpop.xlane.xlu0 %9244
        %9246 = vadd.xlane.f32.xlu0 %v9234
        %v9247 = vpop.xlane.xlu0 %9246
        %9248 = vadd.xlane.f32.xlu0 %v9235
        %v9249 = vpop.xlane.xlu0 %9248
        %9250 = vadd.xlane.f32.xlu0 %v9236
        %v9251 = vpop.xlane.xlu0 %9250
        %9252 = vadd.xlane.f32.xlu0 %v9237
        %v9253 = vpop.xlane.xlu0 %9252
        %v9254 = vmul.f32 %v9239, %v977
        %v9255 = vmul.f32 %v9241, %v977
        %v9256 = vmul.f32 %v9243, %v977
        %v9257 = vmul.f32 %v9245, %v977
        %v9258 = vmul.f32 %v9247, %v977
        %v9259 = vmul.f32 %v9249, %v977
        %v9260 = vmul.f32 %v9251, %v977
        %v9261 = vmul.f32 %v9253, %v977
        %v9262 = vmul.f32 %v9230, %v9230
        %v9263 = vmul.f32 %v9231, %v9231
        %v9264 = vmul.f32 %v9232, %v9232
        %v9265 = vmul.f32 %v9233, %v9233
        %v9266 = vmul.f32 %v9234, %v9234
        %v9267 = vmul.f32 %v9235, %v9235
        %v9268 = vmul.f32 %v9236, %v9236
        %v9269 = vmul.f32 %v9237, %v9237
        %9270 = vadd.xlane.f32.xlu0 %v9262
        %v9271 = vpop.xlane.xlu0 %9270
        %9272 = vadd.xlane.f32.xlu0 %v9263
        %v9273 = vpop.xlane.xlu0 %9272
        %9274 = vadd.xlane.f32.xlu0 %v9264
        %v9275 = vpop.xlane.xlu0 %9274
        %9276 = vadd.xlane.f32.xlu0 %v9265
        %v9277 = vpop.xlane.xlu0 %9276
        %9278 = vadd.xlane.f32.xlu0 %v9266
        %v9279 = vpop.xlane.xlu0 %9278
        %9280 = vadd.xlane.f32.xlu0 %v9267
        %v9281 = vpop.xlane.xlu0 %9280
        %9282 = vadd.xlane.f32.xlu0 %v9268
        %v9283 = vpop.xlane.xlu0 %9282
        %9284 = vadd.xlane.f32.xlu0 %v9269
        %v9285 = vpop.xlane.xlu0 %9284
        %v9286 = vmul.f32 %v9271, %v977
        %v9287 = vmul.f32 %v9273, %v977
        %v9288 = vmul.f32 %v9275, %v977
        %v9289 = vmul.f32 %v9277, %v977
        %v9290 = vmul.f32 %v9279, %v977
        %v9291 = vmul.f32 %v9281, %v977
        %v9292 = vmul.f32 %v9283, %v977
        %v9293 = vmul.f32 %v9285, %v977
        %v9294 = vmul.f32 %v9254, %v9254
        %v9295 = vmul.f32 %v9255, %v9255
        %v9296 = vmul.f32 %v9256, %v9256
        %v9297 = vmul.f32 %v9257, %v9257
        %v9298 = vmul.f32 %v9258, %v9258
        %v9299 = vmul.f32 %v9259, %v9259
        %v9300 = vmul.f32 %v9260, %v9260
        %v9301 = vmul.f32 %v9261, %v9261
        %v9302 = vsub.f32 %v9286, %v9294
        %v9303 = vsub.f32 %v9287, %v9295
        %v9304 = vsub.f32 %v9288, %v9296
        %v9305 = vsub.f32 %v9289, %v9297
        %v9306 = vsub.f32 %v9290, %v9298
        %v9307 = vsub.f32 %v9291, %v9299
        %v9308 = vsub.f32 %v9292, %v9300
        %v9309 = vsub.f32 %v9293, %v9301
        %v9310 = vmax.f32 %v9302, 0.0
        %v9311 = vmax.f32 %v9303, 0.0
        %v9312 = vmax.f32 %v9304, 0.0
        %v9313 = vmax.f32 %v9305, 0.0
        %v9314 = vmax.f32 %v9306, 0.0
        %v9315 = vmax.f32 %v9307, 0.0
        %v9316 = vmax.f32 %v9308, 0.0
        %v9317 = vmax.f32 %v9309, 0.0
        %v9318 = vsub.f32 %v9230, %v9254
        %v9319 = vsub.f32 %v9231, %v9255
        %v9320 = vsub.f32 %v9232, %v9256
        %v9321 = vsub.f32 %v9233, %v9257
        %v9322 = vsub.f32 %v9234, %v9258
        %v9323 = vsub.f32 %v9235, %v9259
        %v9324 = vsub.f32 %v9236, %v9260
        %v9325 = vsub.f32 %v9237, %v9261
        %v9326 = vadd.f32 %v9310, 1e-05
        %v9327 = vadd.f32 %v9311, 1e-05
        %v9328 = vadd.f32 %v9312, 1e-05
        %v9329 = vadd.f32 %v9313, 1e-05
        %v9330 = vadd.f32 %v9314, 1e-05
        %v9331 = vadd.f32 %v9315, 1e-05
        %v9332 = vadd.f32 %v9316, 1e-05
        %v9333 = vadd.f32 %v9317, 1e-05
        %v9334 = vrsqrt.pop %v9326
        %v9335 = vrsqrt.pop %v9327
        %v9336 = vrsqrt.pop %v9328
        %v9337 = vrsqrt.pop %v9329
        %v9338 = vrsqrt.pop %v9330
        %v9339 = vrsqrt.pop %v9331
        %v9340 = vrsqrt.pop %v9332
        %v9341 = vrsqrt.pop %v9333
        %v9342 = vmul.f32 %v9318, %v9334
        %v9343 = vmul.f32 %v9319, %v9335
        %v9344 = vmul.f32 %v9320, %v9336
        %v9345 = vmul.f32 %v9321, %v9337
        %v9346 = vmul.f32 %v9322, %v9338
        %v9347 = vmul.f32 %v9323, %v9339
        %v9348 = vmul.f32 %v9324, %v9340
        %v9349 = vmul.f32 %v9325, %v9341
        %v9350 = vmul.f32 %v9342, %v9191
        %v9351 = vmul.f32 %v9343, %v9191
        %v9352 = vmul.f32 %v9344, %v9191
        %v9353 = vmul.f32 %v9345, %v9191
        %v9354 = vmul.f32 %v9346, %v9191
        %v9355 = vmul.f32 %v9347, %v9191
        %v9356 = vmul.f32 %v9348, %v9191
        %v9357 = vmul.f32 %v9349, %v9191
        %v9358 = vadd.f32 %v9350, %v9205
        %v9359 = vadd.f32 %v9351, %v9205
        %v9360 = vadd.f32 %v9352, %v9205
        %v9361 = vadd.f32 %v9353, %v9205
        %v9362 = vadd.f32 %v9354, %v9205
        %v9363 = vadd.f32 %v9355, %v9205
        %v9364 = vadd.f32 %v9356, %v9205
        %v9365 = vadd.f32 %v9357, %v9205
        %v9366 = vadd.f32 %v9358, %v9359
        %v9367 = vadd.f32 %v9366, %v9360
        %v9368 = vadd.f32 %v9367, %v9361
        %v9369 = vadd.f32 %v9368, %v9362
        %v9370 = vadd.f32 %v9369, %v9363
        %v9371 = vadd.f32 %v9370, %v9364
        %v9372 = vadd.f32 %v9371, %v9365
        %v9373 = vrot.slane %v9372, 4
        %v9374 = vadd.f32 %v9372, %v9373
        %v9375 = vrot.slane %v9374, 2
        %v9376 = vadd.f32 %v9374, %v9375
        %v9377 = vrot.slane %v9376, 1
        %v9378 = vadd.f32 %v9376, %v9377
        %v9379 = vmul.f32 %v9378, %v9228
        %v9380 = vld [vmem:[#allocation2 + $0x80] sm:$0xff]
        %v9381 = vld [vmem:[#allocation2 + $0x88] sm:$0xff]
        %v9382 = vld [vmem:[#allocation2 + $0x90] sm:$0xff]
        %v9383 = vld [vmem:[#allocation2 + $0x98] sm:$0xff]
        %v9384 = vld [vmem:[#allocation2 + $0xa0] sm:$0xff]
        %v9385 = vld [vmem:[#allocation2 + $0xa8] sm:$0xff]
        %v9386 = vld [vmem:[#allocation2 + $0xb0] sm:$0xff]
        %v9387 = vld [vmem:[#allocation2 + $0xb8] sm:$0xff]
        %9388 = vadd.xlane.f32.xlu0 %v9380
        %v9389 = vpop.xlane.xlu0 %9388
        %9390 = vadd.xlane.f32.xlu0 %v9381
        %v9391 = vpop.xlane.xlu0 %9390
        %9392 = vadd.xlane.f32.xlu0 %v9382
        %v9393 = vpop.xlane.xlu0 %9392
        %9394 = vadd.xlane.f32.xlu0 %v9383
        %v9395 = vpop.xlane.xlu0 %9394
        %9396 = vadd.xlane.f32.xlu0 %v9384
        %v9397 = vpop.xlane.xlu0 %9396
        %9398 = vadd.xlane.f32.xlu0 %v9385
        %v9399 = vpop.xlane.xlu0 %9398
        %9400 = vadd.xlane.f32.xlu0 %v9386
        %v9401 = vpop.xlane.xlu0 %9400
        %9402 = vadd.xlane.f32.xlu0 %v9387
        %v9403 = vpop.xlane.xlu0 %9402
        %v9404 = vmul.f32 %v9389, %v977
        %v9405 = vmul.f32 %v9391, %v977
        %v9406 = vmul.f32 %v9393, %v977
        %v9407 = vmul.f32 %v9395, %v977
        %v9408 = vmul.f32 %v9397, %v977
        %v9409 = vmul.f32 %v9399, %v977
        %v9410 = vmul.f32 %v9401, %v977
        %v9411 = vmul.f32 %v9403, %v977
        %v9412 = vmul.f32 %v9380, %v9380
        %v9413 = vmul.f32 %v9381, %v9381
        %v9414 = vmul.f32 %v9382, %v9382
        %v9415 = vmul.f32 %v9383, %v9383
        %v9416 = vmul.f32 %v9384, %v9384
        %v9417 = vmul.f32 %v9385, %v9385
        %v9418 = vmul.f32 %v9386, %v9386
        %v9419 = vmul.f32 %v9387, %v9387
        %9420 = vadd.xlane.f32.xlu0 %v9412
        %v9421 = vpop.xlane.xlu0 %9420
        %9422 = vadd.xlane.f32.xlu0 %v9413
        %v9423 = vpop.xlane.xlu0 %9422
        %9424 = vadd.xlane.f32.xlu0 %v9414
        %v9425 = vpop.xlane.xlu0 %9424
        %9426 = vadd.xlane.f32.xlu0 %v9415
        %v9427 = vpop.xlane.xlu0 %9426
        %9428 = vadd.xlane.f32.xlu0 %v9416
        %v9429 = vpop.xlane.xlu0 %9428
        %9430 = vadd.xlane.f32.xlu0 %v9417
        %v9431 = vpop.xlane.xlu0 %9430
        %9432 = vadd.xlane.f32.xlu0 %v9418
        %v9433 = vpop.xlane.xlu0 %9432
        %9434 = vadd.xlane.f32.xlu0 %v9419
        %v9435 = vpop.xlane.xlu0 %9434
        %v9436 = vmul.f32 %v9421, %v977
        %v9437 = vmul.f32 %v9423, %v977
        %v9438 = vmul.f32 %v9425, %v977
        %v9439 = vmul.f32 %v9427, %v977
        %v9440 = vmul.f32 %v9429, %v977
        %v9441 = vmul.f32 %v9431, %v977
        %v9442 = vmul.f32 %v9433, %v977
        %v9443 = vmul.f32 %v9435, %v977
        %v9444 = vmul.f32 %v9404, %v9404
        %v9445 = vmul.f32 %v9405, %v9405
        %v9446 = vmul.f32 %v9406, %v9406
        %v9447 = vmul.f32 %v9407, %v9407
        %v9448 = vmul.f32 %v9408, %v9408
        %v9449 = vmul.f32 %v9409, %v9409
        %v9450 = vmul.f32 %v9410, %v9410
        %v9451 = vmul.f32 %v9411, %v9411
        %v9452 = vsub.f32 %v9436, %v9444
        %v9453 = vsub.f32 %v9437, %v9445
        %v9454 = vsub.f32 %v9438, %v9446
        %v9455 = vsub.f32 %v9439, %v9447
        %v9456 = vsub.f32 %v9440, %v9448
        %v9457 = vsub.f32 %v9441, %v9449
        %v9458 = vsub.f32 %v9442, %v9450
        %v9459 = vsub.f32 %v9443, %v9451
        %v9460 = vmax.f32 %v9452, 0.0
        %v9461 = vmax.f32 %v9453, 0.0
        %v9462 = vmax.f32 %v9454, 0.0
        %v9463 = vmax.f32 %v9455, 0.0
        %v9464 = vmax.f32 %v9456, 0.0
        %v9465 = vmax.f32 %v9457, 0.0
        %v9466 = vmax.f32 %v9458, 0.0
        %v9467 = vmax.f32 %v9459, 0.0
        %v9468 = vsub.f32 %v9380, %v9404
        %v9469 = vsub.f32 %v9381, %v9405
        %v9470 = vsub.f32 %v9382, %v9406
        %v9471 = vsub.f32 %v9383, %v9407
        %v9472 = vsub.f32 %v9384, %v9408
        %v9473 = vsub.f32 %v9385, %v9409
        %v9474 = vsub.f32 %v9386, %v9410
        %v9475 = vsub.f32 %v9387, %v9411
        %v9476 = vadd.f32 %v9460, 1e-05
        %v9477 = vadd.f32 %v9461, 1e-05
        %v9478 = vadd.f32 %v9462, 1e-05
        %v9479 = vadd.f32 %v9463, 1e-05
        %v9480 = vadd.f32 %v9464, 1e-05
        %v9481 = vadd.f32 %v9465, 1e-05
        %v9482 = vadd.f32 %v9466, 1e-05
        %v9483 = vadd.f32 %v9467, 1e-05
        %v9484 = vrsqrt.pop %v9476
        %v9485 = vrsqrt.pop %v9477
        %v9486 = vrsqrt.pop %v9478
        %v9487 = vrsqrt.pop %v9479
        %v9488 = vrsqrt.pop %v9480
        %v9489 = vrsqrt.pop %v9481
        %v9490 = vrsqrt.pop %v9482
        %v9491 = vrsqrt.pop %v9483
        %v9492 = vmul.f32 %v9468, %v9484
        %v9493 = vmul.f32 %v9469, %v9485
        %v9494 = vmul.f32 %v9470, %v9486
        %v9495 = vmul.f32 %v9471, %v9487
        %v9496 = vmul.f32 %v9472, %v9488
        %v9497 = vmul.f32 %v9473, %v9489
        %v9498 = vmul.f32 %v9474, %v9490
        %v9499 = vmul.f32 %v9475, %v9491
        %v9500 = vmul.f32 %v9492, %v9191
        %v9501 = vmul.f32 %v9493, %v9191
        %v9502 = vmul.f32 %v9494, %v9191
        %v9503 = vmul.f32 %v9495, %v9191
        %v9504 = vmul.f32 %v9496, %v9191
        %v9505 = vmul.f32 %v9497, %v9191
        %v9506 = vmul.f32 %v9498, %v9191
        %v9507 = vmul.f32 %v9499, %v9191
        %v9508 = vadd.f32 %v9500, %v9205
        %v9509 = vadd.f32 %v9501, %v9205
        %v9510 = vadd.f32 %v9502, %v9205
        %v9511 = vadd.f32 %v9503, %v9205
        %v9512 = vadd.f32 %v9504, %v9205
        %v9513 = vadd.f32 %v9505, %v9205
        %v9514 = vadd.f32 %v9506, %v9205
        %v9515 = vadd.f32 %v9507, %v9205
        %v9516 = vadd.f32 %v9508, %v9509
        %v9517 = vadd.f32 %v9516, %v9510
        %v9518 = vadd.f32 %v9517, %v9511
        %v9519 = vadd.f32 %v9518, %v9512
        %v9520 = vadd.f32 %v9519, %v9513
        %v9521 = vadd.f32 %v9520, %v9514
        %v9522 = vadd.f32 %v9521, %v9515
        %v9523 = vrot.slane %v9522, 4
        %v9524 = vadd.f32 %v9522, %v9523
        %v9525 = vrot.slane %v9524, 2
        %v9526 = vadd.f32 %v9524, %v9525
        %v9527 = vrot.slane %v9526, 1
        %v9528 = vadd.f32 %v9526, %v9527
        %v9529 = vmul.f32 %v9528, %v9228
        %v9530 = vld [vmem:[#allocation2 + $0xc0] sm:$0xff]
        %v9531 = vld [vmem:[#allocation2 + $0xc8] sm:$0xff]
        %v9532 = vld [vmem:[#allocation2 + $0xd0] sm:$0xff]
        %v9533 = vld [vmem:[#allocation2 + $0xd8] sm:$0xff]
        %v9534 = vld [vmem:[#allocation2 + $0xe0] sm:$0xff]
        %v9535 = vld [vmem:[#allocation2 + $0xe8] sm:$0xff]
        %v9536 = vld [vmem:[#allocation2 + $0xf0] sm:$0xff]
        %v9537 = vld [vmem:[#allocation2 + $0xf8] sm:$0xff]
        %9538 = vadd.xlane.f32.xlu0 %v9530
        %v9539 = vpop.xlane.xlu0 %9538
        %9540 = vadd.xlane.f32.xlu0 %v9531
        %v9541 = vpop.xlane.xlu0 %9540
        %9542 = vadd.xlane.f32.xlu0 %v9532
        %v9543 = vpop.xlane.xlu0 %9542
        %9544 = vadd.xlane.f32.xlu0 %v9533
        %v9545 = vpop.xlane.xlu0 %9544
        %9546 = vadd.xlane.f32.xlu0 %v9534
        %v9547 = vpop.xlane.xlu0 %9546
        %9548 = vadd.xlane.f32.xlu0 %v9535
        %v9549 = vpop.xlane.xlu0 %9548
        %9550 = vadd.xlane.f32.xlu0 %v9536
        %v9551 = vpop.xlane.xlu0 %9550
        %9552 = vadd.xlane.f32.xlu0 %v9537
        %v9553 = vpop.xlane.xlu0 %9552
        %v9554 = vmul.f32 %v9539, %v977
        %v9555 = vmul.f32 %v9541, %v977
        %v9556 = vmul.f32 %v9543, %v977
        %v9557 = vmul.f32 %v9545, %v977
        %v9558 = vmul.f32 %v9547, %v977
        %v9559 = vmul.f32 %v9549, %v977
        %v9560 = vmul.f32 %v9551, %v977
        %v9561 = vmul.f32 %v9553, %v977
        %v9562 = vmul.f32 %v9530, %v9530
        %v9563 = vmul.f32 %v9531, %v9531
        %v9564 = vmul.f32 %v9532, %v9532
        %v9565 = vmul.f32 %v9533, %v9533
        %v9566 = vmul.f32 %v9534, %v9534
        %v9567 = vmul.f32 %v9535, %v9535
        %v9568 = vmul.f32 %v9536, %v9536
        %v9569 = vmul.f32 %v9537, %v9537
        %9570 = vadd.xlane.f32.xlu0 %v9562
        %v9571 = vpop.xlane.xlu0 %9570
        %9572 = vadd.xlane.f32.xlu0 %v9563
        %v9573 = vpop.xlane.xlu0 %9572
        %9574 = vadd.xlane.f32.xlu0 %v9564
        %v9575 = vpop.xlane.xlu0 %9574
        %9576 = vadd.xlane.f32.xlu0 %v9565
        %v9577 = vpop.xlane.xlu0 %9576
        %9578 = vadd.xlane.f32.xlu0 %v9566
        %v9579 = vpop.xlane.xlu0 %9578
        %9580 = vadd.xlane.f32.xlu0 %v9567
        %v9581 = vpop.xlane.xlu0 %9580
        %9582 = vadd.xlane.f32.xlu0 %v9568
        %v9583 = vpop.xlane.xlu0 %9582
        %9584 = vadd.xlane.f32.xlu0 %v9569
        %v9585 = vpop.xlane.xlu0 %9584
        %v9586 = vmul.f32 %v9571, %v977
        %v9587 = vmul.f32 %v9573, %v977
        %v9588 = vmul.f32 %v9575, %v977
        %v9589 = vmul.f32 %v9577, %v977
        %v9590 = vmul.f32 %v9579, %v977
        %v9591 = vmul.f32 %v9581, %v977
        %v9592 = vmul.f32 %v9583, %v977
        %v9593 = vmul.f32 %v9585, %v977
        %v9594 = vmul.f32 %v9554, %v9554
        %v9595 = vmul.f32 %v9555, %v9555
        %v9596 = vmul.f32 %v9556, %v9556
        %v9597 = vmul.f32 %v9557, %v9557
        %v9598 = vmul.f32 %v9558, %v9558
        %v9599 = vmul.f32 %v9559, %v9559
        %v9600 = vmul.f32 %v9560, %v9560
        %v9601 = vmul.f32 %v9561, %v9561
        %v9602 = vsub.f32 %v9586, %v9594
        %v9603 = vsub.f32 %v9587, %v9595
        %v9604 = vsub.f32 %v9588, %v9596
        %v9605 = vsub.f32 %v9589, %v9597
        %v9606 = vsub.f32 %v9590, %v9598
        %v9607 = vsub.f32 %v9591, %v9599
        %v9608 = vsub.f32 %v9592, %v9600
        %v9609 = vsub.f32 %v9593, %v9601
        %v9610 = vmax.f32 %v9602, 0.0
        %v9611 = vmax.f32 %v9603, 0.0
        %v9612 = vmax.f32 %v9604, 0.0
        %v9613 = vmax.f32 %v9605, 0.0
        %v9614 = vmax.f32 %v9606, 0.0
        %v9615 = vmax.f32 %v9607, 0.0
        %v9616 = vmax.f32 %v9608, 0.0
        %v9617 = vmax.f32 %v9609, 0.0
        %v9618 = vsub.f32 %v9530, %v9554
        %v9619 = vsub.f32 %v9531, %v9555
        %v9620 = vsub.f32 %v9532, %v9556
        %v9621 = vsub.f32 %v9533, %v9557
        %v9622 = vsub.f32 %v9534, %v9558
        %v9623 = vsub.f32 %v9535, %v9559
        %v9624 = vsub.f32 %v9536, %v9560
        %v9625 = vsub.f32 %v9537, %v9561
        %v9626 = vadd.f32 %v9610, 1e-05
        %v9627 = vadd.f32 %v9611, 1e-05
        %v9628 = vadd.f32 %v9612, 1e-05
        %v9629 = vadd.f32 %v9613, 1e-05
        %v9630 = vadd.f32 %v9614, 1e-05
        %v9631 = vadd.f32 %v9615, 1e-05
        %v9632 = vadd.f32 %v9616, 1e-05
        %v9633 = vadd.f32 %v9617, 1e-05
        %v9634 = vrsqrt.pop %v9626
        %v9635 = vrsqrt.pop %v9627
        %v9636 = vrsqrt.pop %v9628
        %v9637 = vrsqrt.pop %v9629
        %v9638 = vrsqrt.pop %v9630
        %v9639 = vrsqrt.pop %v9631
        %v9640 = vrsqrt.pop %v9632
        %v9641 = vrsqrt.pop %v9633
        %v9642 = vmul.f32 %v9618, %v9634
        %v9643 = vmul.f32 %v9619, %v9635
        %v9644 = vmul.f32 %v9620, %v9636
        %v9645 = vmul.f32 %v9621, %v9637
        %v9646 = vmul.f32 %v9622, %v9638
        %v9647 = vmul.f32 %v9623, %v9639
        %v9648 = vmul.f32 %v9624, %v9640
        %v9649 = vmul.f32 %v9625, %v9641
        %v9650 = vmul.f32 %v9642, %v9191
        %v9651 = vmul.f32 %v9643, %v9191
        %v9652 = vmul.f32 %v9644, %v9191
        %v9653 = vmul.f32 %v9645, %v9191
        %v9654 = vmul.f32 %v9646, %v9191
        %v9655 = vmul.f32 %v9647, %v9191
        %v9656 = vmul.f32 %v9648, %v9191
        %v9657 = vmul.f32 %v9649, %v9191
        %v9658 = vadd.f32 %v9650, %v9205
        %v9659 = vadd.f32 %v9651, %v9205
        %v9660 = vadd.f32 %v9652, %v9205
        %v9661 = vadd.f32 %v9653, %v9205
        %v9662 = vadd.f32 %v9654, %v9205
        %v9663 = vadd.f32 %v9655, %v9205
        %v9664 = vadd.f32 %v9656, %v9205
        %v9665 = vadd.f32 %v9657, %v9205
        %v9666 = vadd.f32 %v9658, %v9659
        %v9667 = vadd.f32 %v9666, %v9660
        %v9668 = vadd.f32 %v9667, %v9661
        %v9669 = vadd.f32 %v9668, %v9662
        %v9670 = vadd.f32 %v9669, %v9663
        %v9671 = vadd.f32 %v9670, %v9664
        %v9672 = vadd.f32 %v9671, %v9665
        %v9673 = vrot.slane %v9672, 4
        %v9674 = vadd.f32 %v9672, %v9673
        %v9675 = vrot.slane %v9674, 2
        %v9676 = vadd.f32 %v9674, %v9675
        %v9677 = vrot.slane %v9676, 1
        %v9678 = vadd.f32 %v9676, %v9677
        %v9679 = vmul.f32 %v9678, %v9228
        %vm9680 = vcmask 1040384
        %v9681 = vsel %vm9680, %v9229, %v9379
        %vm9682 = vcmask 1041408
        %v9683 = vsel %vm9682, %v9681, %v9529
        %vm9684 = vcmask 1042432
        %v9685 = vsel %vm9684, %v9683, %v9679
        %v9686 = vld [vmem:[%s17] sm:$0xff]
        %v9687 = vld [vmem:[%s17 + $0x8] sm:$0xff]
        %v9688 = vld [vmem:[%s17 + $0x10] sm:$0xff]
        %v9689 = vld [vmem:[%s17 + $0x18] sm:$0xff]
        %v9690 = vld [vmem:[%s17 + $0x20] sm:$0xff]
        %v9691 = vld [vmem:[%s17 + $0x28] sm:$0xff]
        %v9692 = vld [vmem:[%s17 + $0x30] sm:$0xff]
        %v9693 = vld [vmem:[%s17 + $0x38] sm:$0xff]
        %v9694 = vld [vmem:[%s17 + $0x40] sm:$0xff]
        %v9695 = vld [vmem:[%s17 + $0x48] sm:$0xff]
        %v9696 = vld [vmem:[%s17 + $0x50] sm:$0xff]
        %v9697 = vld [vmem:[%s17 + $0x58] sm:$0xff]
        %v9698 = vld [vmem:[%s17 + $0x60] sm:$0xff]
        %v9699 = vld [vmem:[%s17 + $0x68] sm:$0xff]
        %v9700 = vld [vmem:[%s17 + $0x70] sm:$0xff]
        %v9701 = vld [vmem:[%s17 + $0x78] sm:$0xff]
        %v9702 = vld [vmem:[%s18] sm:$0x1]
        %v9704 = vlaneseq
        %v9705 = vshrl.u32 %v9704, 7
        %v9706 = vsub.s32 0, %v9705
        %v9707 = vrot.slane %v9702, %v9706
        %9709 = vmatprep.subr.mxu0 0.0
        %9710 = vmatpush1.msra.mxu0 %v9686
        %9711 = vmatprep.subr.mxu0 0.0
        %9712 = vmatpush1.msra.mxu0 %v9687
        %9713 = vmatprep.subr.mxu0 0.0
        %9714 = vmatpush1.msra.mxu0 %v9688
        %9715 = vmatprep.subr.mxu0 0.0
        %9716 = vmatpush1.msra.mxu0 %v9689
        %9717 = vmatprep.subr.mxu0 0.0
        %9718 = vmatpush1.msra.mxu0 %v9690
        %9719 = vmatprep.subr.mxu0 0.0
        %9720 = vmatpush1.msra.mxu0 %v9691
        %9721 = vmatprep.subr.mxu0 0.0
        %9722 = vmatpush1.msra.mxu0 %v9692
        %9723 = vmatprep.subr.mxu0 0.0
        %9724 = vmatpush1.msra.mxu0 %v9693
        %9725 = vmatprep.subr.mxu0 0.0
        %9726 = vmatpush1.msra.mxu0 %v9694
        %9727 = vmatprep.subr.mxu0 0.0
        %9728 = vmatpush1.msra.mxu0 %v9695
        %9729 = vmatprep.subr.mxu0 0.0
        %9730 = vmatpush1.msra.mxu0 %v9696
        %9731 = vmatprep.subr.mxu0 0.0
        %9732 = vmatpush1.msra.mxu0 %v9697
        %9733 = vmatprep.subr.mxu0 0.0
        %9734 = vmatpush1.msra.mxu0 %v9698
        %9735 = vmatprep.subr.mxu0 0.0
        %9736 = vmatpush1.msra.mxu0 %v9699
        %9737 = vmatprep.subr.mxu0 0.0
        %9738 = vmatpush1.msra.mxu0 %v9700
        %9739 = vmatprep.subr.mxu0 0.0
        %9740 = vmatpush1.msra.mxu0 %v9701
        %9741 = vmatprep.subr.mxu0 0.0
        %9742 = vmatpush1.msra.mxu0 0.0
        %9743 = vmatprep.subr.mxu0 0.0
        %9744 = vmatpush1.msra.mxu0 0.0
        %9745 = vmatprep.subr.mxu0 0.0
        %9746 = vmatpush1.msra.mxu0 0.0
        %9747 = vmatprep.subr.mxu0 0.0
        %9748 = vmatpush1.msra.mxu0 0.0
        %9749 = vmatprep.subr.mxu0 0.0
        %9750 = vmatpush1.msra.mxu0 0.0
        %9751 = vmatprep.subr.mxu0 0.0
        %9752 = vmatpush1.msra.mxu0 0.0
        %9753 = vmatprep.subr.mxu0 0.0
        %9754 = vmatpush1.msra.mxu0 0.0
        %9755 = vmatprep.subr.mxu0 0.0
        %9756 = vmatpush1.msra.mxu0 0.0
        %9757 = vmatprep.subr.mxu0 0.0
        %9758 = vmatpush1.msra.mxu0 0.0
        %9759 = vmatprep.subr.mxu0 0.0
        %9760 = vmatpush1.msra.mxu0 0.0
        %9761 = vmatprep.subr.mxu0 0.0
        %9762 = vmatpush1.msra.mxu0 0.0
        %9763 = vmatprep.subr.mxu0 0.0
        %9764 = vmatpush1.msra.mxu0 0.0
        %9765 = vmatprep.subr.mxu0 0.0
        %9766 = vmatpush1.msra.mxu0 0.0
        %9767 = vmatprep.subr.mxu0 0.0
        %9768 = vmatpush1.msra.mxu0 0.0
        %9769 = vmatprep.subr.mxu0 0.0
        %9770 = vmatpush1.msra.mxu0 0.0
        %9771 = vmatprep.subr.mxu0 0.0
        %9772 = vmatpush1.msra.mxu0 0.0
        %9773 = vmatprep.mubr.f32.mxu0 0.0
        %9774 = vmatmul.mubr.f32.gmra.mrb[0].mxu0 %v9685
        %v9775 = vpop.f32.mrb[0].mxu0
        %v9776 = vadd.f32 %v9707, %v9775
        %v9777 = vpop.f32.mrb[0].mxu0
        %9778 = vdwg.mxu0
        %9779 = vst [vmem:[%s596] sm:$0xf] %v9776
        %s9780 = sand.u32 %s445, 1
        %s9781 = scalar_lea.sflag [#allocation4], %s9780
        %s9782 = sand.u32 %s445, 1
        %s9783 = smul.addr %s9782, 4
        %s9784 = scalar_lea.vmem [#allocation3], %s9783
        // Predicated region
        $region97: #{_lambda_.1} parent=95 // pred_check
          %p9785 = pneg %p455
        $region98: #{_lambda_.1} parent=95 // pred_check_branch
          %9787 = sbr.rel (%p9785) target = $region100
        $region99: #{_lambda_.1} parent=95 // pred_region
          %s9789 = ssub.s32 64, 64
          %9790 = vsyncadd %s9781, %s9789
          %s9791 = smul.addr %s33, 64
          %s9792 = scalar_lea.hbm %s19, %s9791
          %s9794 = sshll.u32 %s9784, 4
          %s9795 = int_to_ptr.vmem [resolvable:$true] %s9794
          %9797 = dma.vmem_to_hbm [thread:$0]  %s9795, 64, %s9792, %s9781
        $region100: #{_lambda_.1} parent=95 // pred_fallthru
          _
      $region96: #{_lambda_.1} parent=5 // pred_fallthru
        _
      %p9798 = scmp.le.s32.totalorder 2, %s28
      // Predicated region
      $region101: #{_lambda_.1} parent=5 // pred_check
        %p9799 = pneg %p9798
      $region102: #{_lambda_.1} parent=5 // pred_check_branch
        %9801 = sbr.rel (%p9799) target = $region104
      $region103: #{_lambda_.1} parent=5 // pred_region
        %s9802 = ssub.s32 %s28, 2
        // Predicated region
        $region105: #{_lambda_.1} parent=103 // pred_check
          %p9803 = pneg %p461
        $region106: #{_lambda_.1} parent=103 // pred_check_branch
          %9805 = sbr.rel (%p9803) target = $region108
        $region107: #{_lambda_.1} parent=103 // pred_region
          %s9806 = sand.u32 %s446, 1
          %s9807 = scalar_lea.sflag [#allocation4], %s9806
          %s9808 = sand.u32 %s446, 1
          %s9809 = smul.addr %s9808, 4
          %s9810 = scalar_lea.vmem [#allocation3], %s9809
          %9811 = dma.done %s9807, 64
        $region108: #{_lambda_.1} parent=103 // pred_fallthru
          _
      $region104: #{_lambda_.1} parent=5 // pred_fallthru
        _
    $region6: #{_lambda_.1} parent=1 // loop_footer
      %s32 = sadd.s32 1, %s28
    $region7: #{_lambda_.1} parent=1 // loop_footer_branch
      %27 = sbr.rel target = $region3
    $region8: #{_lambda_.1} parent=1 // loop_exit
      _
    %9812 = vsyncpa [#allocation4], 1
    %s9813 = scalar_lea.sflag [#allocation4], 1
    %9814 = vsyncpa %s9813, 1

</llo_original>
